<compile_context>
chip_gen: v5e
topology: v5e:2x2
jax: 0.10.0
libtpu: 0.0.40
codegen_flags: <defaults>
</compile_context>

<pallas_src>
import jax
import jax.numpy as jnp
import numpy as np
from jax import lax
from jax.experimental import pallas as pl
from jax.experimental.pallas import tpu as pltpu


NUM_CLASSES = 10


# ----------------------------------------------------------------------------
# Generation-aware knobs
# ----------------------------------------------------------------------------
def _pick_vmem_limit():
    """Scoped-VMEM limit: generous on 128 MiB parts (v5e/v6e), conservative on
    v7x (64 MiB physical, shared with the double buffers)."""
    try:
        cap = pltpu.get_tpu_info().vmem_capacity_bytes
        return int(min(96 * 1024 * 1024, max(32 * 1024 * 1024, 0.7 * cap)))
    except Exception:
        return 48 * 1024 * 1024          # safe on every generation


VMEM_LIMIT = _pick_vmem_limit()


def _pick_tile(rows, cap, align=16, target_steps=4):
    """Largest tile <= cap, `align`-aligned, giving >= target_steps grid steps
    when `rows` allows it (keeps both v7x TensorCores busy and the pipeline
    >= 2 deep on all generations)."""
    t = -(-rows // target_steps)          # cdiv(rows, target_steps)
    t = -(-t // align) * align            # round up to alignment
    return max(align, min(cap, t))


def _resident_spec(shape):
    """BlockSpec for an operand resident across the whole grid (constant
    index_map).  Requests a single VMEM buffer when pipeline_mode is
    available; falls back to the default double buffer otherwise."""
    zero_map = lambda *_: (0,) * len(shape)
    try:
        return pl.BlockSpec(shape, zero_map, pipeline_mode=pl.Buffered(1))
    except TypeError:
        return pl.BlockSpec(shape, zero_map)


# ----------------------------------------------------------------------------
# Pallas kernels
# ----------------------------------------------------------------------------
def _conv1_relu_pool_kernel(p_ref, w_ref, b_ref, o_ref):
    """conv1-as-matmul + bias + ReLU + 2x2 max-pool epilogue.

    p_ref: (4, tm, 16) bf16  quadrant-grouped im2col patches
    w_ref: (16, 32)    bf16  conv1 weight (K zero-padded 9->16)
    b_ref: (1, 32)     f32
    o_ref: (tm, 32)    bf16  pooled conv1 output
    """
    w = w_ref[...]
    acc = jnp.dot(p_ref[0], w, preferred_element_type=jnp.float32)
    for q in range(1, 4):
        acc = jnp.maximum(
            acc, jnp.dot(p_ref[q], w, preferred_element_type=jnp.float32))
    # bias is shared by the 4 window positions and ReLU is monotonic, so both
    # commute with the max and are applied once, after pooling.
    o_ref[...] = jnp.maximum(acc + b_ref[...], 0.0).astype(o_ref.dtype)


def _conv2_relu_pool_kernel(x_ref, w_ref, b_ref, o_ref, patch_ref):
    """Fully fused conv2: in-kernel im2col gather + matmul + bias + ReLU +
    2x2 max-pool.  No patch tensor ever touches HBM.

    x_ref:     (tb, 4, 80, 32) bf16  2x2-parity planes of the spatially padded
                                     conv1 output; plane p = py*2+px holds
                                     pad[2*ii+py, 2*jj+px, :] at flattened row
                                     ii*8+jj (rows 64..79 are zero padding).
    w_ref:     (288, 64) bf16        conv2 weight, rows ordered (ky, kx, cin).
    b_ref:     (1, 64)   f32
    o_ref:     (tb*64, 64) bf16      row (img*64 + i*8 + j) = pooled output at
                                     (i, j); rows with i==7 or j==7 are filler.
    patch_ref: (tb*64, 288) bf16     VMEM scratch holding the im2col patch.
    """
    tb = x_ref.shape[0]
    rows = tb * 64
    out = None
    for pb in range(2):                 # pool-window row position
        for pa in range(2):             # pool-window col position
            # Gather the nine shifted windows into a K=288 patch in VMEM.
            for ky in range(3):
                for kx in range(3):
                    sy, sx = pb + ky, pa + kx
                    plane = (sy % 2) * 2 + (sx % 2)       # parity plane
                    off = (sy // 2) * 8 + (sx // 2)       # flattened shift
                    t = ky * 3 + kx
                    win = x_ref[:, plane, off:off + 64, :]      # (tb, 64, 32)
                    patch_ref[:, t * 32:(t + 1) * 32] = win.reshape(rows, 32)
            acc = jnp.dot(patch_ref[...], w_ref[...],
                          preferred_element_type=jnp.float32)    # (rows, 64)
            out = acc if out is None else jnp.maximum(out, acc)
    o_ref[...] = jnp.maximum(out + b_ref[...], 0.0).astype(o_ref.dtype)


def _mlp_head_kernel(x_ref, w1_ref, b1_ref, w2_ref, b2_ref, o_ref):
    """fc1 + ReLU + fc2 for one tile of batch rows (weights stay resident)."""
    h = jnp.dot(x_ref[...], w1_ref[...], preferred_element_type=jnp.float32)
    h = jnp.maximum(h + b1_ref[...], 0.0).astype(jnp.bfloat16)
    o_ref[...] = (jnp.dot(h, w2_ref[...], preferred_element_type=jnp.float32)
                  + b2_ref[...])


# ----------------------------------------------------------------------------
# Pallas wrappers
# ----------------------------------------------------------------------------
def conv1_relu_pool(patches_q, w, b, *, row_cap=2048):
    """patches_q: (4, R, 16) bf16 -> (R, 32) bf16 pooled conv1 output."""
    _, r, k = patches_q.shape
    cout = w.shape[1]
    tm = _pick_tile(r, cap=row_cap, align=16)
    return pl.pallas_call(
        _conv1_relu_pool_kernel,
        out_shape=jax.ShapeDtypeStruct((r, cout), jnp.bfloat16),
        grid_spec=pltpu.PrefetchScalarGridSpec(
            num_scalar_prefetch=0,
            grid=(pl.cdiv(r, tm),),
            in_specs=[
                pl.BlockSpec((4, tm, k), lambda i: (0, i, 0)),
                _resident_spec((k, cout)),
                _resident_spec((1, cout)),
            ],
            out_specs=pl.BlockSpec((tm, cout), lambda i: (i, 0)),
        ),
        compiler_params=pltpu.CompilerParams(
            dimension_semantics=("parallel",),
            vmem_limit_bytes=VMEM_LIMIT,
        ),
    )(patches_q, w, b)


def conv2_relu_pool(planes, w, b, *, img_cap=64):
    """planes: (N, 4, 80, 32) bf16 parity planes -> (N*64, 64) bf16 pooled
    conv2 output (8x8 grid per image, the valid 7x7 is sliced in XLA)."""
    n, nplanes, prows, cin = planes.shape
    cout = w.shape[1]
    tb = _pick_tile(n, cap=img_cap, align=1)
    return pl.pallas_call(
        _conv2_relu_pool_kernel,
        out_shape=jax.ShapeDtypeStruct((n * 64, cout), jnp.bfloat16),
        grid_spec=pltpu.PrefetchScalarGridSpec(
            num_scalar_prefetch=0,
            grid=(pl.cdiv(n, tb),),
            in_specs=[
                pl.BlockSpec((tb, nplanes, prows, cin),
                             lambda i: (i, 0, 0, 0)),
                _resident_spec((9 * cin, cout)),
                _resident_spec((1, cout)),
            ],
            out_specs=pl.BlockSpec((tb * 64, cout), lambda i: (i, 0)),
            scratch_shapes=[pltpu.VMEM((tb * 64, 9 * cin), jnp.bfloat16)],
        ),
        compiler_params=pltpu.CompilerParams(
            dimension_semantics=("parallel",),
            vmem_limit_bytes=VMEM_LIMIT,
        ),
    )(planes, w, b)


def mlp_head(x, w1, b1, w2, b2, *, batch_cap=1024):
    """relu(x @ w1 + b1) @ w2 + b2, tiled over batch rows, weights resident."""
    n, kin = x.shape
    kh = w1.shape[1]
    ncp = w2.shape[1]
    tb = _pick_tile(n, cap=batch_cap, align=16)
    return pl.pallas_call(
        _mlp_head_kernel,
        out_shape=jax.ShapeDtypeStruct((n, ncp), jnp.float32),
        grid_spec=pltpu.PrefetchScalarGridSpec(
            num_scalar_prefetch=0,
            grid=(pl.cdiv(n, tb),),
            in_specs=[
                pl.BlockSpec((tb, kin), lambda i: (i, 0)),
                _resident_spec((kin, kh)),
                _resident_spec((1, kh)),
                _resident_spec((kh, ncp)),
                _resident_spec((1, ncp)),
            ],
            out_specs=pl.BlockSpec((tb, ncp), lambda i: (i, 0)),
        ),
        compiler_params=pltpu.CompilerParams(
            dimension_semantics=("parallel",),
            vmem_limit_bytes=VMEM_LIMIT,
        ),
    )(x, w1, b1, w2, b2)


# ----------------------------------------------------------------------------
# Plain-JAX glue (layout only; all heavy math happens in the kernels)
# ----------------------------------------------------------------------------
def im2col_pool_quadrants(x_nhwc, k_pad_to=None):
    """3x3 / stride-1 / pad-1 im2col with rows grouped by 2x2-pool quadrant.

    (N, H, W, C) -> (4, N*(H//2)*(W//2), 9*C [padded to k_pad_to]); axis 0 is
    the position inside each pool window so the conv1 kernel pools with a
    4-way max.  The K padding is folded into the tap concat (one zero tap)
    instead of a separate pad pass over the whole patch tensor."""
    n, h, w, c = x_nhwc.shape
    xp = jnp.pad(x_nhwc, ((0, 0), (1, 1), (1, 1), (0, 0)))
    taps = [xp[:, ky:ky + h, kx:kx + w, :]
            for ky in range(3) for kx in range(3)]
    if k_pad_to is not None and k_pad_to > 9 * c:
        taps.append(jnp.zeros((n, h, w, k_pad_to - 9 * c), x_nhwc.dtype))
    pat = jnp.concatenate(taps, axis=-1)                        # (N, H, W, K)
    ho, wo = h // 2, w // 2
    quads = [pat[:, b::2, a::2, :].reshape(n * ho * wo, pat.shape[-1])
             for b in range(2) for a in range(2)]
    return jnp.stack(quads, axis=0)


def to_parity_planes(y_nhwc, rows_pad=80):
    """Repack the pooled conv1 output for the fused conv2 kernel.

    (N, 14, 14, C) -> spatial pad to (N, 16, 16, C) -> 2x2-parity planes
    (N, 2, 2, 8, 8, C) -> flatten plane spatial to 64 rows and zero-pad to
    `rows_pad` so the in-kernel shifted windows (offsets {0,1,8,9}) stay in
    bounds.  Same byte count as the activation itself - no im2col blow-up."""
    n, h, w, c = y_nhwc.shape
    yp = jnp.pad(y_nhwc, ((0, 0), (1, 1), (1, 1), (0, 0)))      # (N,16,16,C)
    hp, wp = h + 2, w + 2
    q = yp.reshape(n, hp // 2, 2, wp // 2, 2, c)
    q = jnp.transpose(q, (0, 2, 4, 1, 3, 5))                    # (N,2,2,8,8,C)
    q = q.reshape(n, 4, (hp // 2) * (wp // 2), c)               # (N,4,64,C)
    return jnp.pad(q, ((0, 0), (0, 0), (0, rows_pad - q.shape[2]), (0, 0)))


# ----------------------------------------------------------------------------
# Model parameters
# ----------------------------------------------------------------------------
def init_params(key, num_classes=NUM_CLASSES):
    """Torch-layout f32 params (same semantics as nn.Conv2d / nn.Linear)."""
    ks = jax.random.split(key, 8)

    def uni(k, shape, fan_in):
        bound = 1.0 / np.sqrt(fan_in)
        return jax.random.uniform(k, shape, jnp.float32, -bound, bound)

    w1 = uni(ks[0], (3, 3, 1, 32), 9 * 1).reshape(9 * 1, 32)
    b1 = uni(ks[1], (1, 32), 9 * 1)
    w2 = uni(ks[2], (3, 3, 32, 64), 9 * 32).reshape(9 * 32, 64)
    b2 = uni(ks[3], (1, 64), 9 * 32)
    fc1_w = uni(ks[4], (64 * 7 * 7, 128), 64 * 7 * 7)
    fc1_b = uni(ks[5], (1, 128), 64 * 7 * 7)
    fc2_w = uni(ks[6], (128, num_classes), 128)
    fc2_b = uni(ks[7], (1, num_classes), 128)
    return dict(w1=w1, b1=b1, w2=w2, b2=b2,
                fc1_w=fc1_w, fc1_b=fc1_b, fc2_w=fc2_w, fc2_b=fc2_b)


def prepare_params(params, num_classes=NUM_CLASSES):
    """One-time repack into the kernel layout: bf16 weights, conv1 K padded
    9->16, NO Cout padding on either conv, and the torch NCHW-flatten
    permutation folded into fc1_w at its true K=3136.  Only fc2's output is
    padded (10->128 lanes) and sliced back in the wrapper."""
    ncp = ((num_classes + 127) // 128) * 128

    w1 = jnp.pad(params["w1"], ((0, 16 - 9), (0, 0))).astype(jnp.bfloat16)
    b1 = params["b1"]
    w2 = params["w2"].astype(jnp.bfloat16)                       # (288, 64)
    b2 = params["b2"]

    # torch flatten:  feat[c*49 + s]   (c in [0,64), s = i*7 + j)
    # kernel flatten: feat[s*64 + c]
    fc1_w = (params["fc1_w"].reshape(64, 49, 128)
             .transpose(1, 0, 2).reshape(49 * 64, 128).astype(jnp.bfloat16))
    fc1_b = params["fc1_b"]

    fc2_w = jnp.pad(params["fc2_w"],
                    ((0, 0), (0, ncp - num_classes))).astype(jnp.bfloat16)
    fc2_b = jnp.pad(params["fc2_b"], ((0, 0), (0, ncp - num_classes)))
    return dict(w1=w1, b1=b1, w2=w2, b2=b2,
                fc1_w=fc1_w, fc1_b=fc1_b, fc2_w=fc2_w, fc2_b=fc2_b)


# ----------------------------------------------------------------------------
# Forward pass
# ----------------------------------------------------------------------------
def simple_cnn_forward(x_nchw, kp, num_classes=NUM_CLASSES):
    n = x_nchw.shape[0]
    x = jnp.transpose(x_nchw, (0, 2, 3, 1)).astype(jnp.bfloat16)  # NCHW->NHWC

    # conv1 (1->32) + relu + 2x2 maxpool (XLA im2col + fused Pallas matmul).
    p1 = im2col_pool_quadrants(x, k_pad_to=16)                    # (4, N*196, 16)
    y1 = conv1_relu_pool(p1, kp["w1"], kp["b1"])                  # (N*196, 32)
    y1 = y1.reshape(n, 14, 14, 32)

    # conv2 (32->64) + relu + 2x2 maxpool, im2col fused inside the kernel.
    planes = to_parity_planes(y1)                                 # (N, 4, 80, 32)
    y2 = conv2_relu_pool(planes, kp["w2"], kp["b2"])              # (N*64, 64)
    # drop the 8x8-grid filler rows/cols -> valid 7x7 NHWC, flatten to 3136.
    feat = y2.reshape(n, 8, 8, 64)[:, :7, :7, :].reshape(n, 49 * 64)

    logits = mlp_head(feat, kp["fc1_w"], kp["fc1_b"],
                      kp["fc2_w"], kp["fc2_b"])                   # (N, 128) f32
    return logits[:, :num_classes]


# ----------------------------------------------------------------------------
# Pure-XLA reference (torch semantics) for the correctness check
# ----------------------------------------------------------------------------
def reference_forward(x_nchw, params):
    """Reference rounded to bf16 at the same cut points as the Pallas pipeline
    (weights, inputs and inter-stage activations) so the comparison is tight."""
    r = lambda a: a.astype(jnp.bfloat16).astype(jnp.float32)
    n = x_nchw.shape[0]
    x = r(jnp.transpose(x_nchw, (0, 2, 3, 1)).astype(jnp.float32))
    dn = ("NHWC", "HWIO", "NHWC")

    def conv_relu_pool_ref(inp, w2d, b, cin, cout):
        w = r(w2d).reshape(3, 3, cin, cout)
        y = lax.conv_general_dilated(inp, w, (1, 1), ((1, 1), (1, 1)),
                                     dimension_numbers=dn)
        y = jnp.maximum(y + b.reshape(1, 1, 1, cout), 0.0)
        return lax.reduce_window(y, -jnp.inf, lax.max,
                                 (1, 2, 2, 1), (1, 2, 2, 1), "VALID")

    y = r(conv_relu_pool_ref(x, params["w1"], params["b1"], 1, 32))
    y = r(conv_relu_pool_ref(y, params["w2"], params["b2"], 32, 64))
    feat = jnp.transpose(y, (0, 3, 1, 2)).reshape(n, 64 * 7 * 7)
    h = jnp.maximum(feat @ r(params["fc1_w"]) + params["fc1_b"], 0.0)
    return r(h) @ r(params["fc2_w"]) + params["fc2_b"]


# ----------------------------------------------------------------------------
if __name__ == "__main__":
    key = jax.random.PRNGKey(0)
    k_x, k_p, k_x2 = jax.random.split(key, 3)

    params = init_params(k_p, NUM_CLASSES)
    kparams = prepare_params(params, NUM_CLASSES)    # one-time repack
    fwd = jax.jit(simple_cnn_forward)

    # MNIST-like input implied by fc1(64*7*7): (batch=2, channels=1, 28, 28)
    x = jax.random.normal(k_x, (2, 1, 28, 28), dtype=jnp.float32)
    out = jax.block_until_ready(fwd(x, kparams))
    assert out.shape == (2, NUM_CLASSES), out.shape
    ref = jax.block_until_ready(reference_forward(x, params))
    np.testing.assert_allclose(np.asarray(out), np.asarray(ref),
                               rtol=2e-2, atol=2e-2)

    # Remainder-tile path (batch not divisible by the image/row tiles).
    x11 = jax.random.normal(k_x2, (11, 1, 28, 28), dtype=jnp.float32)
    out11 = jax.block_until_ready(fwd(x11, kparams))
    ref11 = jax.block_until_ready(reference_forward(x11, params))
    np.testing.assert_allclose(np.asarray(out11), np.asarray(ref11),
                               rtol=2e-2, atol=2e-2)

    print("KERNEL_OK")
</pallas_src>

<mosaic_0001>
module attributes {stable_mosaic.version = 11 : i64} {
  func.func @_conv1_relu_pool_kernel(%arg0: i32, %arg1: memref<4x112x16xbf16, #tpu.memory_space<vmem>>, %arg2: memref<16x32xbf16, #tpu.memory_space<vmem>>, %arg3: memref<1x32xf32, #tpu.memory_space<vmem>>, %arg4: memref<112x32xbf16, #tpu.memory_space<vmem>>) attributes {dimension_semantics = [#tpu.dimension_semantics<parallel>], iteration_bounds = array<i64: 4>, scalar_prefetch = 0 : i64, scratch_operands = 0 : i64, tpu.core_type = #tpu.core_type<tc>, window_params = [{transform_indices = @transform_0, window_bounds = array<i64: 4, 112, 16>}, {pipeline_mode = #tpu.pipeline_mode<synchronous>, transform_indices = @transform_1, window_bounds = array<i64: 16, 32>}, {pipeline_mode = #tpu.pipeline_mode<synchronous>, transform_indices = @transform_2, window_bounds = array<i64: 1, 32>}, {transform_indices = @transform_3, window_bounds = array<i64: 112, 32>}]} {
    %c0 = arith.constant 0 : index
    %c0_0 = arith.constant 0 : index
    %0 = vector.load %arg2[%c0, %c0_0] : memref<16x32xbf16, #tpu.memory_space<vmem>>, vector<16x32xbf16>
    %c0_1 = arith.constant 0 : index
    %c0_2 = arith.constant 0 : index
    %c0_3 = arith.constant 0 : index
    %1 = vector.load %arg1[%c0_1, %c0_2, %c0_3] : memref<4x112x16xbf16, #tpu.memory_space<vmem>>, vector<1x112x16xbf16>
    %2 = vector.shape_cast %1 : vector<1x112x16xbf16> to vector<112x16xbf16>
    %cst = arith.constant dense<0.000000e+00> : vector<112x32xf32>
    %3 = tpu.matmul %2, %0, %cst {dimension_numbers = #tpu.dot_dimension_numbers<[1], [0], [0], [1], [0, 0, 1, 1], [], []>} : vector<112x16xbf16>, vector<16x32xbf16>, vector<112x32xf32> -> vector<112x32xf32>
    %c1 = arith.constant 1 : index
    %c0_4 = arith.constant 0 : index
    %c0_5 = arith.constant 0 : index
    %4 = vector.load %arg1[%c1, %c0_4, %c0_5] : memref<4x112x16xbf16, #tpu.memory_space<vmem>>, vector<1x112x16xbf16>
    %5 = vector.shape_cast %4 : vector<1x112x16xbf16> to vector<112x16xbf16>
    %cst_6 = arith.constant dense<0.000000e+00> : vector<112x32xf32>
    %6 = tpu.matmul %5, %0, %cst_6 {dimension_numbers = #tpu.dot_dimension_numbers<[1], [0], [0], [1], [0, 0, 1, 1], [], []>} : vector<112x16xbf16>, vector<16x32xbf16>, vector<112x32xf32> -> vector<112x32xf32>
    %7 = arith.maximumf %3, %6 : vector<112x32xf32>
    %c2 = arith.constant 2 : index
    %c0_7 = arith.constant 0 : index
    %c0_8 = arith.constant 0 : index
    %8 = vector.load %arg1[%c2, %c0_7, %c0_8] : memref<4x112x16xbf16, #tpu.memory_space<vmem>>, vector<1x112x16xbf16>
    %9 = vector.shape_cast %8 : vector<1x112x16xbf16> to vector<112x16xbf16>
    %cst_9 = arith.constant dense<0.000000e+00> : vector<112x32xf32>
    %10 = tpu.matmul %9, %0, %cst_9 {dimension_numbers = #tpu.dot_dimension_numbers<[1], [0], [0], [1], [0, 0, 1, 1], [], []>} : vector<112x16xbf16>, vector<16x32xbf16>, vector<112x32xf32> -> vector<112x32xf32>
    %11 = arith.maximumf %7, %10 : vector<112x32xf32>
    %c3 = arith.constant 3 : index
    %c0_10 = arith.constant 0 : index
    %c0_11 = arith.constant 0 : index
    %12 = vector.load %arg1[%c3, %c0_10, %c0_11] : memref<4x112x16xbf16, #tpu.memory_space<vmem>>, vector<1x112x16xbf16>
    %13 = vector.shape_cast %12 : vector<1x112x16xbf16> to vector<112x16xbf16>
    %cst_12 = arith.constant dense<0.000000e+00> : vector<112x32xf32>
    %14 = tpu.matmul %13, %0, %cst_12 {dimension_numbers = #tpu.dot_dimension_numbers<[1], [0], [0], [1], [0, 0, 1, 1], [], []>} : vector<112x16xbf16>, vector<16x32xbf16>, vector<112x32xf32> -> vector<112x32xf32>
    %15 = arith.maximumf %11, %14 : vector<112x32xf32>
    %c0_13 = arith.constant 0 : index
    %c0_14 = arith.constant 0 : index
    %16 = vector.load %arg3[%c0_13, %c0_14] : memref<1x32xf32, #tpu.memory_space<vmem>>, vector<1x32xf32>
    %17 = vector.broadcast %16 : vector<1x32xf32> to vector<112x32xf32>
    %18 = arith.addf %15, %17 : vector<112x32xf32>
    %cst_15 = arith.constant 0.000000e+00 : f32
    %19 = vector.broadcast %cst_15 : f32 to vector<112x32xf32>
    %20 = arith.maximumf %18, %19 : vector<112x32xf32>
    %21 = arith.truncf %20 : vector<112x32xf32> to vector<112x32xbf16>
    %c0_16 = arith.constant 0 : index
    %c0_17 = arith.constant 0 : index
    %22 = vector.load %arg4[%c0_16, %c0_17] : memref<112x32xbf16, #tpu.memory_space<vmem>>, vector<112x32xbf16>
    tpu.vector_store %arg4[%c0_16, %c0_17], %21 {strides = array<i32>} : memref<112x32xbf16, #tpu.memory_space<vmem>>, vector<112x32xbf16>,
    return
  }
  func.func @transform_0(%arg0: i32) -> (i32, i32, i32) {
    %c0_i32 = arith.constant 0 : i32
    %c0_i32_0 = arith.constant 0 : i32
    %c0_i32_1 = arith.constant 0 : i32
    return %c0_i32, %arg0, %c0_i32_0 : i32, i32, i32
  }
  func.func @transform_1(%arg0: i32) -> (i32, i32) {
    %c0_i32 = arith.constant 0 : i32
    %c0_i32_0 = arith.constant 0 : i32
    %c0_i32_1 = arith.constant 0 : i32
    return %c0_i32, %c0_i32_0 : i32, i32
  }
  func.func @transform_2(%arg0: i32) -> (i32, i32) {
    %c0_i32 = arith.constant 0 : i32
    %c0_i32_0 = arith.constant 0 : i32
    %c0_i32_1 = arith.constant 0 : i32
    return %c0_i32, %c0_i32_0 : i32, i32
  }
  func.func @transform_3(%arg0: i32) -> (i32, i32) {
    %c0_i32 = arith.constant 0 : i32
    %c0_i32_0 = arith.constant 0 : i32
    return %arg0, %c0_i32 : i32, i32
  }
}

module attributes {stable_mosaic.version = 11 : i64} {
  func.func @_conv2_relu_pool_kernel(%arg0: i32, %arg1: memref<1x4x80x32xbf16, #tpu.memory_space<vmem>>, %arg2: memref<288x64xbf16, #tpu.memory_space<vmem>>, %arg3: memref<1x64xf32, #tpu.memory_space<vmem>>, %arg4: memref<64x64xbf16, #tpu.memory_space<vmem>>, %arg5: memref<64x288xbf16, #tpu.memory_space<vmem>>) attributes {dimension_semantics = [#tpu.dimension_semantics<parallel>], iteration_bounds = array<i64: 2>, scalar_prefetch = 0 : i64, scratch_operands = 1 : i64, tpu.core_type = #tpu.core_type<tc>, window_params = [{transform_indices = @transform_0, window_bounds = array<i64: 1, 4, 80, 32>}, {pipeline_mode = #tpu.pipeline_mode<synchronous>, transform_indices = @transform_1, window_bounds = array<i64: 288, 64>}, {pipeline_mode = #tpu.pipeline_mode<synchronous>, transform_indices = @transform_2, window_bounds = array<i64: 1, 64>}, {transform_indices = @transform_3, window_bounds = array<i64: 64, 64>}]} {
    %c0 = arith.constant 0 : index
    %c0_0 = arith.constant 0 : index
    %c0_1 = arith.constant 0 : index
    %c0_2 = arith.constant 0 : index
    %0 = vector.load %arg1[%c0, %c0_0, %c0_1, %c0_2] : memref<1x4x80x32xbf16, #tpu.memory_space<vmem>>, vector<1x1x64x32xbf16>
    %1 = vector.shape_cast %0 : vector<1x1x64x32xbf16> to vector<1x64x32xbf16>
    %2 = vector.shape_cast %1 : vector<1x64x32xbf16> to vector<64x32xbf16>
    %c0_3 = arith.constant 0 : index
    %c0_4 = arith.constant 0 : index
    %3 = vector.load %arg5[%c0_3, %c0_4] : memref<64x288xbf16, #tpu.memory_space<vmem>>, vector<64x32xbf16>
    tpu.vector_store %arg5[%c0_3, %c0_4], %2 {strides = array<i32>} : memref<64x288xbf16, #tpu.memory_space<vmem>>, vector<64x32xbf16>,
    %c0_5 = arith.constant 0 : index
    %c1 = arith.constant 1 : index
    %c0_6 = arith.constant 0 : index
    %c0_7 = arith.constant 0 : index
    %4 = vector.load %arg1[%c0_5, %c1, %c0_6, %c0_7] : memref<1x4x80x32xbf16, #tpu.memory_space<vmem>>, vector<1x1x64x32xbf16>
    %5 = vector.shape_cast %4 : vector<1x1x64x32xbf16> to vector<1x64x32xbf16>
    %6 = vector.shape_cast %5 : vector<1x64x32xbf16> to vector<64x32xbf16>
    %c0_8 = arith.constant 0 : index
    %c32 = arith.constant 32 : index
    %7 = vector.load %arg5[%c0_8, %c32] : memref<64x288xbf16, #tpu.memory_space<vmem>>, vector<64x32xbf16>
    tpu.vector_store %arg5[%c0_8, %c32], %6 {strides = array<i32>} : memref<64x288xbf16, #tpu.memory_space<vmem>>, vector<64x32xbf16>,
    %c0_9 = arith.constant 0 : index
    %c0_10 = arith.constant 0 : index
    %c1_11 = arith.constant 1 : index
    %c0_12 = arith.constant 0 : index
    %8 = vector.load %arg1[%c0_9, %c0_10, %c1_11, %c0_12] : memref<1x4x80x32xbf16, #tpu.memory_space<vmem>>, vector<1x1x64x32xbf16>
    %9 = vector.shape_cast %8 : vector<1x1x64x32xbf16> to vector<1x64x32xbf16>
    %10 = vector.shape_cast %9 : vector<1x64x32xbf16> to vector<64x32xbf16>
    %c0_13 = arith.constant 0 : index
    %c64 = arith.constant 64 : index
    %11 = vector.load %arg5[%c0_13, %c64] : memref<64x288xbf16, #tpu.memory_space<vmem>>, vector<64x32xbf16>
    tpu.vector_store %arg5[%c0_13, %c64], %10 {strides = array<i32>} : memref<64x288xbf16, #tpu.memory_space<vmem>>, vector<64x32xbf16>,
    %c0_14 = arith.constant 0 : index
    %c2 = arith.constant 2 : index
    %c0_15 = arith.constant 0 : index
    %c0_16 = arith.constant 0 : index
    %12 = vector.load %arg1[%c0_14, %c2, %c0_15, %c0_16] : memref<1x4x80x32xbf16, #tpu.memory_space<vmem>>, vector<1x1x64x32xbf16>
    %13 = vector.shape_cast %12 : vector<1x1x64x32xbf16> to vector<1x64x32xbf16>
    %14 = vector.shape_cast %13 : vector<1x64x32xbf16> to vector<64x32xbf16>
    %c0_17 = arith.constant 0 : index
    %c96 = arith.constant 96 : index
    %15 = vector.load %arg5[%c0_17, %c96] : memref<64x288xbf16, #tpu.memory_space<vmem>>, vector<64x32xbf16>
    tpu.vector_store %arg5[%c0_17, %c96], %14 {strides = array<i32>} : memref<64x288xbf16, #tpu.memory_space<vmem>>, vector<64x32xbf16>,
    %c0_18 = arith.constant 0 : index
    %c3 = arith.constant 3 : index
    %c0_19 = arith.constant 0 : index
    %c0_20 = arith.constant 0 : index
    %16 = vector.load %arg1[%c0_18, %c3, %c0_19, %c0_20] : memref<1x4x80x32xbf16, #tpu.memory_space<vmem>>, vector<1x1x64x32xbf16>
    %17 = vector.shape_cast %16 : vector<1x1x64x32xbf16> to vector<1x64x32xbf16>
    %18 = vector.shape_cast %17 : vector<1x64x32xbf16> to vector<64x32xbf16>
    %c0_21 = arith.constant 0 : index
    %c128 = arith.constant 128 : index
    %19 = vector.load %arg5[%c0_21, %c128] : memref<64x288xbf16, #tpu.memory_space<vmem>>, vector<64x32xbf16>
    tpu.vector_store %arg5[%c0_21, %c128], %18 {strides = array<i32>} : memref<64x288xbf16, #tpu.memory_space<vmem>>, vector<64x32xbf16>,
    %c0_22 = arith.constant 0 : index
    %c2_23 = arith.constant 2 : index
    %c1_24 = arith.constant 1 : index
    %c0_25 = arith.constant 0 : index
    %20 = vector.load %arg1[%c0_22, %c2_23, %c1_24, %c0_25] : memref<1x4x80x32xbf16, #tpu.memory_space<vmem>>, vector<1x1x64x32xbf16>
    %21 = vector.shape_cast %20 : vector<1x1x64x32xbf16> to vector<1x64x32xbf16>
    %22 = vector.shape_cast %21 : vector<1x64x32xbf16> to vector<64x32xbf16>
    %c0_26 = arith.constant 0 : index
    %c160 = arith.constant 160 : index
    %23 = vector.load %arg5[%c0_26, %c160] : memref<64x288xbf16, #tpu.memory_space<vmem>>, vector<64x32xbf16>
    tpu.vector_store %arg5[%c0_26, %c160], %22 {strides = array<i32>} : memref<64x288xbf16, #tpu.memory_space<vmem>>, vector<64x32xbf16>,
    %c0_27 = arith.constant 0 : index
    %c0_28 = arith.constant 0 : index
    %c8 = arith.constant 8 : index
    %c0_29 = arith.constant 0 : index
    %24 = vector.load %arg1[%c0_27, %c0_28, %c8, %c0_29] : memref<1x4x80x32xbf16, #tpu.memory_space<vmem>>, vector<1x1x64x32xbf16>
    %25 = vector.shape_cast %24 : vector<1x1x64x32xbf16> to vector<1x64x32xbf16>
    %26 = vector.shape_cast %25 : vector<1x64x32xbf16> to vector<64x32xbf16>
    %c0_30 = arith.constant 0 : index
    %c192 = arith.constant 192 : index
    %27 = vector.load %arg5[%c0_30, %c192] : memref<64x288xbf16, #tpu.memory_space<vmem>>, vector<64x32xbf16>
    tpu.vector_store %arg5[%c0_30, %c192], %26 {strides = array<i32>} : memref<64x288xbf16, #tpu.memory_space<vmem>>, vector<64x32xbf16>,
    %c0_31 = arith.constant 0 : index
    %c1_32 = arith.constant 1 : index
    %c8_33 = arith.constant 8 : index
    %c0_34 = arith.constant 0 : index
    %28 = vector.load %arg1[%c0_31, %c1_32, %c8_33, %c0_34] : memref<1x4x80x32xbf16, #tpu.memory_space<vmem>>, vector<1x1x64x32xbf16>
    %29 = vector.shape_cast %28 : vector<1x1x64x32xbf16> to vector<1x64x32xbf16>
    %30 = vector.shape_cast %29 : vector<1x64x32xbf16> to vector<64x32xbf16>
    %c0_35 = arith.constant 0 : index
    %c224 = arith.constant 224 : index
    %31 = vector.load %arg5[%c0_35, %c224] : memref<64x288xbf16, #tpu.memory_space<vmem>>, vector<64x32xbf16>
    tpu.vector_store %arg5[%c0_35, %c224], %30 {strides = array<i32>} : memref<64x288xbf16, #tpu.memory_space<vmem>>, vector<64x32xbf16>,
    %c0_36 = arith.constant 0 : index
    %c0_37 = arith.constant 0 : index
    %c9 = arith.constant 9 : index
    %c0_38 = arith.constant 0 : index
    %32 = vector.load %arg1[%c0_36, %c0_37, %c9, %c0_38] : memref<1x4x80x32xbf16, #tpu.memory_space<vmem>>, vector<1x1x64x32xbf16>
    %33 = vector.shape_cast %32 : vector<1x1x64x32xbf16> to vector<1x64x32xbf16>
    %34 = vector.shape_cast %33 : vector<1x64x32xbf16> to vector<64x32xbf16>
    %c0_39 = arith.constant 0 : index
    %c256 = arith.constant 256 : index
    %35 = vector.load %arg5[%c0_39, %c256] : memref<64x288xbf16, #tpu.memory_space<vmem>>, vector<64x32xbf16>
    tpu.vector_store %arg5[%c0_39, %c256], %34 {strides = array<i32>} : memref<64x288xbf16, #tpu.memory_space<vmem>>, vector<64x32xbf16>,
    %c0_40 = arith.constant 0 : index
    %c0_41 = arith.constant 0 : index
    %36 = vector.load %arg5[%c0_40, %c0_41] : memref<64x288xbf16, #tpu.memory_space<vmem>>, vector<64x288xbf16>
    %c0_42 = arith.constant 0 : index
    %c0_43 = arith.constant 0 : index
    %37 = vector.load %arg2[%c0_42, %c0_43] : memref<288x64xbf16, #tpu.memory_space<vmem>>, vector<288x64xbf16>
    %cst = arith.constant dense<0.000000e+00> : vector<64x64xf32>
    %38 = tpu.matmul %36, %37, %cst {dimension_numbers = #tpu.dot_dimension_numbers<[1], [0], [0], [1], [0, 0, 1, 1], [], []>} : vector<64x288xbf16>, vector<288x64xbf16>, vector<64x64xf32> -> vector<64x64xf32>
    %c0_44 = arith.constant 0 : index
    %c1_45 = arith.constant 1 : index
    %c0_46 = arith.constant 0 : index
    %c0_47 = arith.constant 0 : index
    %39 = vector.load %arg1[%c0_44, %c1_45, %c0_46, %c0_47] : memref<1x4x80x32xbf16, #tpu.memory_space<vmem>>, vector<1x1x64x32xbf16>
    %40 = vector.shape_cast %39 : vector<1x1x64x32xbf16> to vector<1x64x32xbf16>
    %41 = vector.shape_cast %40 : vector<1x64x32xbf16> to vector<64x32xbf16>
    %c0_48 = arith.constant 0 : index
    %c0_49 = arith.constant 0 : index
    %42 = vector.load %arg5[%c0_48, %c0_49] : memref<64x288xbf16, #tpu.memory_space<vmem>>, vector<64x32xbf16>
    tpu.vector_store %arg5[%c0_48, %c0_49], %41 {strides = array<i32>} : memref<64x288xbf16, #tpu.memory_space<vmem>>, vector<64x32xbf16>,
    %c0_50 = arith.constant 0 : index
    %c0_51 = arith.constant 0 : index
    %c1_52 = arith.constant 1 : index
    %c0_53 = arith.constant 0 : index
    %43 = vector.load %arg1[%c0_50, %c0_51, %c1_52, %c0_53] : memref<1x4x80x32xbf16, #tpu.memory_space<vmem>>, vector<1x1x64x32xbf16>
    %44 = vector.shape_cast %43 : vector<1x1x64x32xbf16> to vector<1x64x32xbf16>
    %45 = vector.shape_cast %44 : vector<1x64x32xbf16> to vector<64x32xbf16>
    %c0_54 = arith.constant 0 : index
    %c32_55 = arith.constant 32 : index
    %46 = vector.load %arg5[%c0_54, %c32_55] : memref<64x288xbf16, #tpu.memory_space<vmem>>, vector<64x32xbf16>
    tpu.vector_store %arg5[%c0_54, %c32_55], %45 {strides = array<i32>} : memref<64x288xbf16, #tpu.memory_space<vmem>>, vector<64x32xbf16>,
    %c0_56 = arith.constant 0 : index
    %c1_57 = arith.constant 1 : index
    %c1_58 = arith.constant 1 : index
    %c0_59 = arith.constant 0 : index
    %47 = vector.load %arg1[%c0_56, %c1_57, %c1_58, %c0_59] : memref<1x4x80x32xbf16, #tpu.memory_space<vmem>>, vector<1x1x64x32xbf16>
    %48 = vector.shape_cast %47 : vector<1x1x64x32xbf16> to vector<1x64x32xbf16>
    %49 = vector.shape_cast %48 : vector<1x64x32xbf16> to vector<64x32xbf16>
    %c0_60 = arith.constant 0 : index
    %c64_61 = arith.constant 64 : index
    %50 = vector.load %arg5[%c0_60, %c64_61] : memref<64x288xbf16, #tpu.memory_space<vmem>>, vector<64x32xbf16>
    tpu.vector_store %arg5[%c0_60, %c64_61], %49 {strides = array<i32>} : memref<64x288xbf16, #tpu.memory_space<vmem>>, vector<64x32xbf16>,
    %c0_62 = arith.constant 0 : index
    %c3_63 = arith.constant 3 : index
    %c0_64 = arith.constant 0 : index
    %c0_65 = arith.constant 0 : index
    %51 = vector.load %arg1[%c0_62, %c3_63, %c0_64, %c0_65] : memref<1x4x80x32xbf16, #tpu.memory_space<vmem>>, vector<1x1x64x32xbf16>
    %52 = vector.shape_cast %51 : vector<1x1x64x32xbf16> to vector<1x64x32xbf16>
    %53 = vector.shape_cast %52 : vector<1x64x32xbf16> to vector<64x32xbf16>
    %c0_66 = arith.constant 0 : index
    %c96_67 = arith.constant 96 : index
    %54 = vector.load %arg5[%c0_66, %c96_67] : memref<64x288xbf16, #tpu.memory_space<vmem>>, vector<64x32xbf16>
    tpu.vector_store %arg5[%c0_66, %c96_67], %53 {strides = array<i32>} : memref<64x288xbf16, #tpu.memory_space<vmem>>, vector<64x32xbf16>,
    %c0_68 = arith.constant 0 : index
    %c2_69 = arith.constant 2 : index
    %c1_70 = arith.constant 1 : index
    %c0_71 = arith.constant 0 : index
    %55 = vector.load %arg1[%c0_68, %c2_69, %c1_70, %c0_71] : memref<1x4x80x32xbf16, #tpu.memory_space<vmem>>, vector<1x1x64x32xbf16>
    %56 = vector.shape_cast %55 : vector<1x1x64x32xbf16> to vector<1x64x32xbf16>
    %57 = vector.shape_cast %56 : vector<1x64x32xbf16> to vector<64x32xbf16>
    %c0_72 = arith.constant 0 : index
    %c128_73 = arith.constant 128 : index
    %58 = vector.load %arg5[%c0_72, %c128_73] : memref<64x288xbf16, #tpu.memory_space<vmem>>, vector<64x32xbf16>
    tpu.vector_store %arg5[%c0_72, %c128_73], %57 {strides = array<i32>} : memref<64x288xbf16, #tpu.memory_space<vmem>>, vector<64x32xbf16>,
    %c0_74 = arith.constant 0 : index
    %c3_75 = arith.constant 3 : index
    %c1_76 = arith.constant 1 : index
    %c0_77 = arith.constant 0 : index
    %59 = vector.load %arg1[%c0_74, %c3_75, %c1_76, %c0_77] : memref<1x4x80x32xbf16, #tpu.memory_space<vmem>>, vector<1x1x64x32xbf16>
    %60 = vector.shape_cast %59 : vector<1x1x64x32xbf16> to vector<1x64x32xbf16>
    %61 = vector.shape_cast %60 : vector<1x64x32xbf16> to vector<64x32xbf16>
    %c0_78 = arith.constant 0 : index
    %c160_79 = arith.constant 160 : index
    %62 = vector.load %arg5[%c0_78, %c160_79] : memref<64x288xbf16, #tpu.memory_space<vmem>>, vector<64x32xbf16>
    tpu.vector_store %arg5[%c0_78, %c160_79], %61 {strides = array<i32>} : memref<64x288xbf16, #tpu.memory_space<vmem>>, vector<64x32xbf16>,
    %c0_80 = arith.constant 0 : index
    %c1_81 = arith.constant 1 : index
    %c8_82 = arith.constant 8 : index
    %c0_83 = arith.constant 0 : index
    %63 = vector.load %arg1[%c0_80, %c1_81, %c8_82, %c0_83] : memref<1x4x80x32xbf16, #tpu.memory_space<vmem>>, vector<1x1x64x32xbf16>
    %64 = vector.shape_cast %63 : vector<1x1x64x32xbf16> to vector<1x64x32xbf16>
    %65 = vector.shape_cast %64 : vector<1x64x32xbf16> to vector<64x32xbf16>
    %c0_84 = arith.constant 0 : index
    %c192_85 = arith.constant 192 : index
    %66 = vector.load %arg5[%c0_84, %c192_85] : memref<64x288xbf16, #tpu.memory_space<vmem>>, vector<64x32xbf16>
    tpu.vector_store %arg5[%c0_84, %c192_85], %65 {strides = array<i32>} : memref<64x288xbf16, #tpu.memory_space<vmem>>, vector<64x32xbf16>,
    %c0_86 = arith.constant 0 : index
    %c0_87 = arith.constant 0 : index
    %c9_88 = arith.constant 9 : index
    %c0_89 = arith.constant 0 : index
    %67 = vector.load %arg1[%c0_86, %c0_87, %c9_88, %c0_89] : memref<1x4x80x32xbf16, #tpu.memory_space<vmem>>, vector<1x1x64x32xbf16>
    %68 = vector.shape_cast %67 : vector<1x1x64x32xbf16> to vector<1x64x32xbf16>
    %69 = vector.shape_cast %68 : vector<1x64x32xbf16> to vector<64x32xbf16>
    %c0_90 = arith.constant 0 : index
    %c224_91 = arith.constant 224 : index
    %70 = vector.load %arg5[%c0_90, %c224_91] : memref<64x288xbf16, #tpu.memory_space<vmem>>, vector<64x32xbf16>
    tpu.vector_store %arg5[%c0_90, %c224_91], %69 {strides = array<i32>} : memref<64x288xbf16, #tpu.memory_space<vmem>>, vector<64x32xbf16>,
    %c0_92 = arith.constant 0 : index
    %c1_93 = arith.constant 1 : index
    %c9_94 = arith.constant 9 : index
    %c0_95 = arith.constant 0 : index
    %71 = vector.load %arg1[%c0_92, %c1_93, %c9_94, %c0_95] : memref<1x4x80x32xbf16, #tpu.memory_space<vmem>>, vector<1x1x64x32xbf16>
    %72 = vector.shape_cast %71 : vector<1x1x64x32xbf16> to vector<1x64x32xbf16>
    %73 = vector.shape_cast %72 : vector<1x64x32xbf16> to vector<64x32xbf16>
    %c0_96 = arith.constant 0 : index
    %c256_97 = arith.constant 256 : index
    %74 = vector.load %arg5[%c0_96, %c256_97] : memref<64x288xbf16, #tpu.memory_space<vmem>>, vector<64x32xbf16>
    tpu.vector_store %arg5[%c0_96, %c256_97], %73 {strides = array<i32>} : memref<64x288xbf16, #tpu.memory_space<vmem>>, vector<64x32xbf16>,
    %c0_98 = arith.constant 0 : index
    %c0_99 = arith.constant 0 : index
    %75 = vector.load %arg5[%c0_98, %c0_99] : memref<64x288xbf16, #tpu.memory_space<vmem>>, vector<64x288xbf16>
    %c0_100 = arith.constant 0 : index
    %c0_101 = arith.constant 0 : index
    %76 = vector.load %arg2[%c0_100, %c0_101] : memref<288x64xbf16, #tpu.memory_space<vmem>>, vector<288x64xbf16>
    %cst_102 = arith.constant dense<0.000000e+00> : vector<64x64xf32>
    %77 = tpu.matmul %75, %76, %cst_102 {dimension_numbers = #tpu.dot_dimension_numbers<[1], [0], [0], [1], [0, 0, 1, 1], [], []>} : vector<64x288xbf16>, vector<288x64xbf16>, vector<64x64xf32> -> vector<64x64xf32>
    %78 = arith.maximumf %38, %77 : vector<64x64xf32>
    %c0_103 = arith.constant 0 : index
    %c2_104 = arith.constant 2 : index
    %c0_105 = arith.constant 0 : index
    %c0_106 = arith.constant 0 : index
    %79 = vector.load %arg1[%c0_103, %c2_104, %c0_105, %c0_106] : memref<1x4x80x32xbf16, #tpu.memory_space<vmem>>, vector<1x1x64x32xbf16>
    %80 = vector.shape_cast %79 : vector<1x1x64x32xbf16> to vector<1x64x32xbf16>
    %81 = vector.shape_cast %80 : vector<1x64x32xbf16> to vector<64x32xbf16>
    %c0_107 = arith.constant 0 : index
    %c0_108 = arith.constant 0 : index
    %82 = vector.load %arg5[%c0_107, %c0_108] : memref<64x288xbf16, #tpu.memory_space<vmem>>, vector<64x32xbf16>
    tpu.vector_store %arg5[%c0_107, %c0_108], %81 {strides = array<i32>} : memref<64x288xbf16, #tpu.memory_space<vmem>>, vector<64x32xbf16>,
    %c0_109 = arith.constant 0 : index
    %c3_110 = arith.constant 3 : index
    %c0_111 = arith.constant 0 : index
    %c0_112 = arith.constant 0 : index
    %83 = vector.load %arg1[%c0_109, %c3_110, %c0_111, %c0_112] : memref<1x4x80x32xbf16, #tpu.memory_space<vmem>>, vector<1x1x64x32xbf16>
    %84 = vector.shape_cast %83 : vector<1x1x64x32xbf16> to vector<1x64x32xbf16>
    %85 = vector.shape_cast %84 : vector<1x64x32xbf16> to vector<64x32xbf16>
    %c0_113 = arith.constant 0 : index
    %c32_114 = arith.constant 32 : index
    %86 = vector.load %arg5[%c0_113, %c32_114] : memref<64x288xbf16, #tpu.memory_space<vmem>>, vector<64x32xbf16>
    tpu.vector_store %arg5[%c0_113, %c32_114], %85 {strides = array<i32>} : memref<64x288xbf16, #tpu.memory_space<vmem>>, vector<64x32xbf16>,
    %c0_115 = arith.constant 0 : index
    %c2_116 = arith.constant 2 : index
    %c1_117 = arith.constant 1 : index
    %c0_118 = arith.constant 0 : index
    %87 = vector.load %arg1[%c0_115, %c2_116, %c1_117, %c0_118] : memref<1x4x80x32xbf16, #tpu.memory_space<vmem>>, vector<1x1x64x32xbf16>
    %88 = vector.shape_cast %87 : vector<1x1x64x32xbf16> to vector<1x64x32xbf16>
    %89 = vector.shape_cast %88 : vector<1x64x32xbf16> to vector<64x32xbf16>
    %c0_119 = arith.constant 0 : index
    %c64_120 = arith.constant 64 : index
    %90 = vector.load %arg5[%c0_119, %c64_120] : memref<64x288xbf16, #tpu.memory_space<vmem>>, vector<64x32xbf16>
    tpu.vector_store %arg5[%c0_119, %c64_120], %89 {strides = array<i32>} : memref<64x288xbf16, #tpu.memory_space<vmem>>, vector<64x32xbf16>,
    %c0_121 = arith.constant 0 : index
    %c0_122 = arith.constant 0 : index
    %c8_123 = arith.constant 8 : index
    %c0_124 = arith.constant 0 : index
    %91 = vector.load %arg1[%c0_121, %c0_122, %c8_123, %c0_124] : memref<1x4x80x32xbf16, #tpu.memory_space<vmem>>, vector<1x1x64x32xbf16>
    %92 = vector.shape_cast %91 : vector<1x1x64x32xbf16> to vector<1x64x32xbf16>
    %93 = vector.shape_cast %92 : vector<1x64x32xbf16> to vector<64x32xbf16>
    %c0_125 = arith.constant 0 : index
    %c96_126 = arith.constant 96 : index
    %94 = vector.load %arg5[%c0_125, %c96_126] : memref<64x288xbf16, #tpu.memory_space<vmem>>, vector<64x32xbf16>
    tpu.vector_store %arg5[%c0_125, %c96_126], %93 {strides = array<i32>} : memref<64x288xbf16, #tpu.memory_space<vmem>>, vector<64x32xbf16>,
    %c0_127 = arith.constant 0 : index
    %c1_128 = arith.constant 1 : index
    %c8_129 = arith.constant 8 : index
    %c0_130 = arith.constant 0 : index
    %95 = vector.load %arg1[%c0_127, %c1_128, %c8_129, %c0_130] : memref<1x4x80x32xbf16, #tpu.memory_space<vmem>>, vector<1x1x64x32xbf16>
    %96 = vector.shape_cast %95 : vector<1x1x64x32xbf16> to vector<1x64x32xbf16>
    %97 = vector.shape_cast %96 : vector<1x64x32xbf16> to vector<64x32xbf16>
    %c0_131 = arith.constant 0 : index
    %c128_132 = arith.constant 128 : index
    %98 = vector.load %arg5[%c0_131, %c128_132] : memref<64x288xbf16, #tpu.memory_space<vmem>>, vector<64x32xbf16>
    tpu.vector_store %arg5[%c0_131, %c128_132], %97 {strides = array<i32>} : memref<64x288xbf16, #tpu.memory_space<vmem>>, vector<64x32xbf16>,
    %c0_133 = arith.constant 0 : index
    %c0_134 = arith.constant 0 : index
    %c9_135 = arith.constant 9 : index
    %c0_136 = arith.constant 0 : index
    %99 = vector.load %arg1[%c0_133, %c0_134, %c9_135, %c0_136] : memref<1x4x80x32xbf16, #tpu.memory_space<vmem>>, vector<1x1x64x32xbf16>
    %100 = vector.shape_cast %99 : vector<1x1x64x32xbf16> to vector<1x64x32xbf16>
    %101 = vector.shape_cast %100 : vector<1x64x32xbf16> to vector<64x32xbf16>
    %c0_137 = arith.constant 0 : index
    %c160_138 = arith.constant 160 : index
    %102 = vector.load %arg5[%c0_137, %c160_138] : memref<64x288xbf16, #tpu.memory_space<vmem>>, vector<64x32xbf16>
    tpu.vector_store %arg5[%c0_137, %c160_138], %101 {strides = array<i32>} : memref<64x288xbf16, #tpu.memory_space<vmem>>, vector<64x32xbf16>,
    %c0_139 = arith.constant 0 : index
    %c2_140 = arith.constant 2 : index
    %c8_141 = arith.constant 8 : index
    %c0_142 = arith.constant 0 : index
    %103 = vector.load %arg1[%c0_139, %c2_140, %c8_141, %c0_142] : memref<1x4x80x32xbf16, #tpu.memory_space<vmem>>, vector<1x1x64x32xbf16>
    %104 = vector.shape_cast %103 : vector<1x1x64x32xbf16> to vector<1x64x32xbf16>
    %105 = vector.shape_cast %104 : vector<1x64x32xbf16> to vector<64x32xbf16>
    %c0_143 = arith.constant 0 : index
    %c192_144 = arith.constant 192 : index
    %106 = vector.load %arg5[%c0_143, %c192_144] : memref<64x288xbf16, #tpu.memory_space<vmem>>, vector<64x32xbf16>
    tpu.vector_store %arg5[%c0_143, %c192_144], %105 {strides = array<i32>} : memref<64x288xbf16, #tpu.memory_space<vmem>>, vector<64x32xbf16>,
    %c0_145 = arith.constant 0 : index
    %c3_146 = arith.constant 3 : index
    %c8_147 = arith.constant 8 : index
    %c0_148 = arith.constant 0 : index
    %107 = vector.load %arg1[%c0_145, %c3_146, %c8_147, %c0_148] : memref<1x4x80x32xbf16, #tpu.memory_space<vmem>>, vector<1x1x64x32xbf16>
    %108 = vector.shape_cast %107 : vector<1x1x64x32xbf16> to vector<1x64x32xbf16>
    %109 = vector.shape_cast %108 : vector<1x64x32xbf16> to vector<64x32xbf16>
    %c0_149 = arith.constant 0 : index
    %c224_150 = arith.constant 224 : index
    %110 = vector.load %arg5[%c0_149, %c224_150] : memref<64x288xbf16, #tpu.memory_space<vmem>>, vector<64x32xbf16>
    tpu.vector_store %arg5[%c0_149, %c224_150], %109 {strides = array<i32>} : memref<64x288xbf16, #tpu.memory_space<vmem>>, vector<64x32xbf16>,
    %c0_151 = arith.constant 0 : index
    %c2_152 = arith.constant 2 : index
    %c9_153 = arith.constant 9 : index
    %c0_154 = arith.constant 0 : index
    %111 = vector.load %arg1[%c0_151, %c2_152, %c9_153, %c0_154] : memref<1x4x80x32xbf16, #tpu.memory_space<vmem>>, vector<1x1x64x32xbf16>
    %112 = vector.shape_cast %111 : vector<1x1x64x32xbf16> to vector<1x64x32xbf16>
    %113 = vector.shape_cast %112 : vector<1x64x32xbf16> to vector<64x32xbf16>
    %c0_155 = arith.constant 0 : index
    %c256_156 = arith.constant 256 : index
    %114 = vector.load %arg5[%c0_155, %c256_156] : memref<64x288xbf16, #tpu.memory_space<vmem>>, vector<64x32xbf16>
    tpu.vector_store %arg5[%c0_155, %c256_156], %113 {strides = array<i32>} : memref<64x288xbf16, #tpu.memory_space<vmem>>, vector<64x32xbf16>,
    %c0_157 = arith.constant 0 : index
    %c0_158 = arith.constant 0 : index
    %115 = vector.load %arg5[%c0_157, %c0_158] : memref<64x288xbf16, #tpu.memory_space<vmem>>, vector<64x288xbf16>
    %c0_159 = arith.constant 0 : index
    %c0_160 = arith.constant 0 : index
    %116 = vector.load %arg2[%c0_159, %c0_160] : memref<288x64xbf16, #tpu.memory_space<vmem>>, vector<288x64xbf16>
    %cst_161 = arith.constant dense<0.000000e+00> : vector<64x64xf32>
    %117 = tpu.matmul %115, %116, %cst_161 {dimension_numbers = #tpu.dot_dimension_numbers<[1], [0], [0], [1], [0, 0, 1, 1], [], []>} : vector<64x288xbf16>, vector<288x64xbf16>, vector<64x64xf32> -> vector<64x64xf32>
    %118 = arith.maximumf %78, %117 : vector<64x64xf32>
    %c0_162 = arith.constant 0 : index
    %c3_163 = arith.constant 3 : index
    %c0_164 = arith.constant 0 : index
    %c0_165 = arith.constant 0 : index
    %119 = vector.load %arg1[%c0_162, %c3_163, %c0_164, %c0_165] : memref<1x4x80x32xbf16, #tpu.memory_space<vmem>>, vector<1x1x64x32xbf16>
    %120 = vector.shape_cast %119 : vector<1x1x64x32xbf16> to vector<1x64x32xbf16>
    %121 = vector.shape_cast %120 : vector<1x64x32xbf16> to vector<64x32xbf16>
    %c0_166 = arith.constant 0 : index
    %c0_167 = arith.constant 0 : index
    %122 = vector.load %arg5[%c0_166, %c0_167] : memref<64x288xbf16, #tpu.memory_space<vmem>>, vector<64x32xbf16>
    tpu.vector_store %arg5[%c0_166, %c0_167], %121 {strides = array<i32>} : memref<64x288xbf16, #tpu.memory_space<vmem>>, vector<64x32xbf16>,
    %c0_168 = arith.constant 0 : index
    %c2_169 = arith.constant 2 : index
    %c1_170 = arith.constant 1 : index
    %c0_171 = arith.constant 0 : index
    %123 = vector.load %arg1[%c0_168, %c2_169, %c1_170, %c0_171] : memref<1x4x80x32xbf16, #tpu.memory_space<vmem>>, vector<1x1x64x32xbf16>
    %124 = vector.shape_cast %123 : vector<1x1x64x32xbf16> to vector<1x64x32xbf16>
    %125 = vector.shape_cast %124 : vector<1x64x32xbf16> to vector<64x32xbf16>
    %c0_172 = arith.constant 0 : index
    %c32_173 = arith.constant 32 : index
    %126 = vector.load %arg5[%c0_172, %c32_173] : memref<64x288xbf16, #tpu.memory_space<vmem>>, vector<64x32xbf16>
    tpu.vector_store %arg5[%c0_172, %c32_173], %125 {strides = array<i32>} : memref<64x288xbf16, #tpu.memory_space<vmem>>, vector<64x32xbf16>,
    %c0_174 = arith.constant 0 : index
    %c3_175 = arith.constant 3 : index
    %c1_176 = arith.constant 1 : index
    %c0_177 = arith.constant 0 : index
    %127 = vector.load %arg1[%c0_174, %c3_175, %c1_176, %c0_177] : memref<1x4x80x32xbf16, #tpu.memory_space<vmem>>, vector<1x1x64x32xbf16>
    %128 = vector.shape_cast %127 : vector<1x1x64x32xbf16> to vector<1x64x32xbf16>
    %129 = vector.shape_cast %128 : vector<1x64x32xbf16> to vector<64x32xbf16>
    %c0_178 = arith.constant 0 : index
    %c64_179 = arith.constant 64 : index
    %130 = vector.load %arg5[%c0_178, %c64_179] : memref<64x288xbf16, #tpu.memory_space<vmem>>, vector<64x32xbf16>
    tpu.vector_store %arg5[%c0_178, %c64_179], %129 {strides = array<i32>} : memref<64x288xbf16, #tpu.memory_space<vmem>>, vector<64x32xbf16>,
    %c0_180 = arith.constant 0 : index
    %c1_181 = arith.constant 1 : index
    %c8_182 = arith.constant 8 : index
    %c0_183 = arith.constant 0 : index
    %131 = vector.load %arg1[%c0_180, %c1_181, %c8_182, %c0_183] : memref<1x4x80x32xbf16, #tpu.memory_space<vmem>>, vector<1x1x64x32xbf16>
    %132 = vector.shape_cast %131 : vector<1x1x64x32xbf16> to vector<1x64x32xbf16>
    %133 = vector.shape_cast %132 : vector<1x64x32xbf16> to vector<64x32xbf16>
    %c0_184 = arith.constant 0 : index
    %c96_185 = arith.constant 96 : index
    %134 = vector.load %arg5[%c0_184, %c96_185] : memref<64x288xbf16, #tpu.memory_space<vmem>>, vector<64x32xbf16>
    tpu.vector_store %arg5[%c0_184, %c96_185], %133 {strides = array<i32>} : memref<64x288xbf16, #tpu.memory_space<vmem>>, vector<64x32xbf16>,
    %c0_186 = arith.constant 0 : index
    %c0_187 = arith.constant 0 : index
    %c9_188 = arith.constant 9 : index
    %c0_189 = arith.constant 0 : index
    %135 = vector.load %arg1[%c0_186, %c0_187, %c9_188, %c0_189] : memref<1x4x80x32xbf16, #tpu.memory_space<vmem>>, vector<1x1x64x32xbf16>
    %136 = vector.shape_cast %135 : vector<1x1x64x32xbf16> to vector<1x64x32xbf16>
    %137 = vector.shape_cast %136 : vector<1x64x32xbf16> to vector<64x32xbf16>
    %c0_190 = arith.constant 0 : index
    %c128_191 = arith.constant 128 : index
    %138 = vector.load %arg5[%c0_190, %c128_191] : memref<64x288xbf16, #tpu.memory_space<vmem>>, vector<64x32xbf16>
    tpu.vector_store %arg5[%c0_190, %c128_191], %137 {strides = array<i32>} : memref<64x288xbf16, #tpu.memory_space<vmem>>, vector<64x32xbf16>,
    %c0_192 = arith.constant 0 : index
    %c1_193 = arith.constant 1 : index
    %c9_194 = arith.constant 9 : index
    %c0_195 = arith.constant 0 : index
    %139 = vector.load %arg1[%c0_192, %c1_193, %c9_194, %c0_195] : memref<1x4x80x32xbf16, #tpu.memory_space<vmem>>, vector<1x1x64x32xbf16>
    %140 = vector.shape_cast %139 : vector<1x1x64x32xbf16> to vector<1x64x32xbf16>
    %141 = vector.shape_cast %140 : vector<1x64x32xbf16> to vector<64x32xbf16>
    %c0_196 = arith.constant 0 : index
    %c160_197 = arith.constant 160 : index
    %142 = vector.load %arg5[%c0_196, %c160_197] : memref<64x288xbf16, #tpu.memory_space<vmem>>, vector<64x32xbf16>
    tpu.vector_store %arg5[%c0_196, %c160_197], %141 {strides = array<i32>} : memref<64x288xbf16, #tpu.memory_space<vmem>>, vector<64x32xbf16>,
    %c0_198 = arith.constant 0 : index
    %c3_199 = arith.constant 3 : index
    %c8_200 = arith.constant 8 : index
    %c0_201 = arith.constant 0 : index
    %143 = vector.load %arg1[%c0_198, %c3_199, %c8_200, %c0_201] : memref<1x4x80x32xbf16, #tpu.memory_space<vmem>>, vector<1x1x64x32xbf16>
    %144 = vector.shape_cast %143 : vector<1x1x64x32xbf16> to vector<1x64x32xbf16>
    %145 = vector.shape_cast %144 : vector<1x64x32xbf16> to vector<64x32xbf16>
    %c0_202 = arith.constant 0 : index
    %c192_203 = arith.constant 192 : index
    %146 = vector.load %arg5[%c0_202, %c192_203] : memref<64x288xbf16, #tpu.memory_space<vmem>>, vector<64x32xbf16>
    tpu.vector_store %arg5[%c0_202, %c192_203], %145 {strides = array<i32>} : memref<64x288xbf16, #tpu.memory_space<vmem>>, vector<64x32xbf16>,
    %c0_204 = arith.constant 0 : index
    %c2_205 = arith.constant 2 : index
    %c9_206 = arith.constant 9 : index
    %c0_207 = arith.constant 0 : index
    %147 = vector.load %arg1[%c0_204, %c2_205, %c9_206, %c0_207] : memref<1x4x80x32xbf16, #tpu.memory_space<vmem>>, vector<1x1x64x32xbf16>
    %148 = vector.shape_cast %147 : vector<1x1x64x32xbf16> to vector<1x64x32xbf16>
    %149 = vector.shape_cast %148 : vector<1x64x32xbf16> to vector<64x32xbf16>
    %c0_208 = arith.constant 0 : index
    %c224_209 = arith.constant 224 : index
    %150 = vector.load %arg5[%c0_208, %c224_209] : memref<64x288xbf16, #tpu.memory_space<vmem>>, vector<64x32xbf16>
    tpu.vector_store %arg5[%c0_208, %c224_209], %149 {strides = array<i32>} : memref<64x288xbf16, #tpu.memory_space<vmem>>, vector<64x32xbf16>,
    %c0_210 = arith.constant 0 : index
    %c3_211 = arith.constant 3 : index
    %c9_212 = arith.constant 9 : index
    %c0_213 = arith.constant 0 : index
    %151 = vector.load %arg1[%c0_210, %c3_211, %c9_212, %c0_213] : memref<1x4x80x32xbf16, #tpu.memory_space<vmem>>, vector<1x1x64x32xbf16>
    %152 = vector.shape_cast %151 : vector<1x1x64x32xbf16> to vector<1x64x32xbf16>
    %153 = vector.shape_cast %152 : vector<1x64x32xbf16> to vector<64x32xbf16>
    %c0_214 = arith.constant 0 : index
    %c256_215 = arith.constant 256 : index
    %154 = vector.load %arg5[%c0_214, %c256_215] : memref<64x288xbf16, #tpu.memory_space<vmem>>, vector<64x32xbf16>
    tpu.vector_store %arg5[%c0_214, %c256_215], %153 {strides = array<i32>} : memref<64x288xbf16, #tpu.memory_space<vmem>>, vector<64x32xbf16>,
    %c0_216 = arith.constant 0 : index
    %c0_217 = arith.constant 0 : index
    %155 = vector.load %arg5[%c0_216, %c0_217] : memref<64x288xbf16, #tpu.memory_space<vmem>>, vector<64x288xbf16>
    %c0_218 = arith.constant 0 : index
    %c0_219 = arith.constant 0 : index
    %156 = vector.load %arg2[%c0_218, %c0_219] : memref<288x64xbf16, #tpu.memory_space<vmem>>, vector<288x64xbf16>
    %cst_220 = arith.constant dense<0.000000e+00> : vector<64x64xf32>
    %157 = tpu.matmul %155, %156, %cst_220 {dimension_numbers = #tpu.dot_dimension_numbers<[1], [0], [0], [1], [0, 0, 1, 1], [], []>} : vector<64x288xbf16>, vector<288x64xbf16>, vector<64x64xf32> -> vector<64x64xf32>
    %158 = arith.maximumf %118, %157 : vector<64x64xf32>
    %c0_221 = arith.constant 0 : index
    %c0_222 = arith.constant 0 : index
    %159 = vector.load %arg3[%c0_221, %c0_222] : memref<1x64xf32, #tpu.memory_space<vmem>>, vector<1x64xf32>
    %160 = vector.broadcast %159 : vector<1x64xf32> to vector<64x64xf32>
    %161 = arith.addf %158, %160 : vector<64x64xf32>
    %cst_223 = arith.constant 0.000000e+00 : f32
    %162 = vector.broadcast %cst_223 : f32 to vector<64x64xf32>
    %163 = arith.maximumf %161, %162 : vector<64x64xf32>
    %164 = arith.truncf %163 : vector<64x64xf32> to vector<64x64xbf16>
    %c0_224 = arith.constant 0 : index
    %c0_225 = arith.constant 0 : index
    %165 = vector.load %arg4[%c0_224, %c0_225] : memref<64x64xbf16, #tpu.memory_space<vmem>>, vector<64x64xbf16>
    tpu.vector_store %arg4[%c0_224, %c0_225], %164 {strides = array<i32>} : memref<64x64xbf16, #tpu.memory_space<vmem>>, vector<64x64xbf16>,
    return
  }
  func.func @transform_0(%arg0: i32) -> (i32, i32, i32, i32) {
    %c0_i32 = arith.constant 0 : i32
    %c0_i32_0 = arith.constant 0 : i32
    %c0_i32_1 = arith.constant 0 : i32
    %c0_i32_2 = arith.constant 0 : i32
    return %arg0, %c0_i32, %c0_i32_0, %c0_i32_1 : i32, i32, i32, i32
  }
  func.func @transform_1(%arg0: i32) -> (i32, i32) {
    %c0_i32 = arith.constant 0 : i32
    %c0_i32_0 = arith.constant 0 : i32
    %c0_i32_1 = arith.constant 0 : i32
    return %c0_i32, %c0_i32_0 : i32, i32
  }
  func.func @transform_2(%arg0: i32) -> (i32, i32) {
    %c0_i32 = arith.constant 0 : i32
    %c0_i32_0 = arith.constant 0 : i32
    %c0_i32_1 = arith.constant 0 : i32
    return %c0_i32, %c0_i32_0 : i32, i32
  }
  func.func @transform_3(%arg0: i32) -> (i32, i32) {
    %c0_i32 = arith.constant 0 : i32
    %c0_i32_0 = arith.constant 0 : i32
    return %arg0, %c0_i32 : i32, i32
  }
}

module attributes {stable_mosaic.version = 11 : i64} {
  func.func @_mlp_head_kernel(%arg0: i32, %arg1: memref<16x3136xbf16, #tpu.memory_space<vmem>>, %arg2: memref<3136x128xbf16, #tpu.memory_space<vmem>>, %arg3: memref<1x128xf32, #tpu.memory_space<vmem>>, %arg4: memref<128x128xbf16, #tpu.memory_space<vmem>>, %arg5: memref<1x128xf32, #tpu.memory_space<vmem>>, %arg6: memref<16x128xf32, #tpu.memory_space<vmem>>) attributes {dimension_semantics = [#tpu.dimension_semantics<parallel>], iteration_bounds = array<i64: 1>, scalar_prefetch = 0 : i64, scratch_operands = 0 : i64, tpu.core_type = #tpu.core_type<tc>, window_params = [{transform_indices = @transform_0, window_bounds = array<i64: 16, 3136>}, {pipeline_mode = #tpu.pipeline_mode<synchronous>, transform_indices = @transform_1, window_bounds = array<i64: 3136, 128>}, {pipeline_mode = #tpu.pipeline_mode<synchronous>, transform_indices = @transform_2, window_bounds = array<i64: 1, 128>}, {pipeline_mode = #tpu.pipeline_mode<synchronous>, transform_indices = @transform_3, window_bounds = array<i64: 128, 128>}, {pipeline_mode = #tpu.pipeline_mode<synchronous>, transform_indices = @transform_4, window_bounds = array<i64: 1, 128>}, {transform_indices = @transform_5, window_bounds = array<i64: 16, 128>}]} {
    %c0 = arith.constant 0 : index
    %c0_0 = arith.constant 0 : index
    %0 = vector.load %arg1[%c0, %c0_0] : memref<16x3136xbf16, #tpu.memory_space<vmem>>, vector<16x3136xbf16>
    %c0_1 = arith.constant 0 : index
    %c0_2 = arith.constant 0 : index
    %1 = vector.load %arg2[%c0_1, %c0_2] : memref<3136x128xbf16, #tpu.memory_space<vmem>>, vector<3136x128xbf16>
    %cst = arith.constant dense<0.000000e+00> : vector<16x128xf32>
    %2 = tpu.matmul %0, %1, %cst {dimension_numbers = #tpu.dot_dimension_numbers<[1], [0], [0], [1], [0, 0, 1, 1], [], []>} : vector<16x3136xbf16>, vector<3136x128xbf16>, vector<16x128xf32> -> vector<16x128xf32>
    %c0_3 = arith.constant 0 : index
    %c0_4 = arith.constant 0 : index
    %3 = vector.load %arg3[%c0_3, %c0_4] : memref<1x128xf32, #tpu.memory_space<vmem>>, vector<1x128xf32>
    %4 = vector.broadcast %3 : vector<1x128xf32> to vector<16x128xf32>
    %5 = arith.addf %2, %4 : vector<16x128xf32>
    %cst_5 = arith.constant 0.000000e+00 : f32
    %6 = vector.broadcast %cst_5 : f32 to vector<16x128xf32>
    %7 = arith.maximumf %5, %6 : vector<16x128xf32>
    %8 = arith.truncf %7 : vector<16x128xf32> to vector<16x128xbf16>
    %c0_6 = arith.constant 0 : index
    %c0_7 = arith.constant 0 : index
    %9 = vector.load %arg4[%c0_6, %c0_7] : memref<128x128xbf16, #tpu.memory_space<vmem>>, vector<128x128xbf16>
    %cst_8 = arith.constant dense<0.000000e+00> : vector<16x128xf32>
    %10 = tpu.matmul %8, %9, %cst_8 {dimension_numbers = #tpu.dot_dimension_numbers<[1], [0], [0], [1], [0, 0, 1, 1], [], []>} : vector<16x128xbf16>, vector<128x128xbf16>, vector<16x128xf32> -> vector<16x128xf32>
    %c0_9 = arith.constant 0 : index
    %c0_10 = arith.constant 0 : index
    %11 = vector.load %arg5[%c0_9, %c0_10] : memref<1x128xf32, #tpu.memory_space<vmem>>, vector<1x128xf32>
    %12 = vector.broadcast %11 : vector<1x128xf32> to vector<16x128xf32>
    %13 = arith.addf %10, %12 : vector<16x128xf32>
    %c0_11 = arith.constant 0 : index
    %c0_12 = arith.constant 0 : index
    %14 = vector.load %arg6[%c0_11, %c0_12] : memref<16x128xf32, #tpu.memory_space<vmem>>, vector<16x128xf32>
    tpu.vector_store %arg6[%c0_11, %c0_12], %13 {strides = array<i32>} : memref<16x128xf32, #tpu.memory_space<vmem>>, vector<16x128xf32>,
    return
  }
  func.func @transform_0(%arg0: i32) -> (i32, i32) {
    %c0_i32 = arith.constant 0 : i32
    %c0_i32_0 = arith.constant 0 : i32
    return %arg0, %c0_i32 : i32, i32
  }
  func.func @transform_1(%arg0: i32) -> (i32, i32) {
    %c0_i32 = arith.constant 0 : i32
    %c0_i32_0 = arith.constant 0 : i32
    %c0_i32_1 = arith.constant 0 : i32
    return %c0_i32, %c0_i32_0 : i32, i32
  }
  func.func @transform_2(%arg0: i32) -> (i32, i32) {
    %c0_i32 = arith.constant 0 : i32
    %c0_i32_0 = arith.constant 0 : i32
    %c0_i32_1 = arith.constant 0 : i32
    return %c0_i32, %c0_i32_0 : i32, i32
  }
  func.func @transform_3(%arg0: i32) -> (i32, i32) {
    %c0_i32 = arith.constant 0 : i32
    %c0_i32_0 = arith.constant 0 : i32
    %c0_i32_1 = arith.constant 0 : i32
    return %c0_i32, %c0_i32_0 : i32, i32
  }
  func.func @transform_4(%arg0: i32) -> (i32, i32) {
    %c0_i32 = arith.constant 0 : i32
    %c0_i32_0 = arith.constant 0 : i32
    %c0_i32_1 = arith.constant 0 : i32
    return %c0_i32, %c0_i32_0 : i32, i32
  }
  func.func @transform_5(%arg0: i32) -> (i32, i32) {
    %c0_i32 = arith.constant 0 : i32
    %c0_i32_0 = arith.constant 0 : i32
    return %arg0, %c0_i32 : i32, i32
  }
}

</mosaic_0001>

<llo_original>
// kernel: simple_cnn_forward.3
$region0: #{simple_cnn_forward.3}
  #allocation0 [shape = 'u32[]', space=smem, size = 0x4, offset = 0x4, fixed_abs, tag = 'smem constant byte address 0x4 - core index']
  #allocation1 [shape = 'u32[72,128]{1,0:T(1,128)}', space=vmem, size = 0x9000, scoped, tag = 'internal scratch']
  %s0 = inlined_call_operand.vmem [shape: bf16[4,392,16], index: 0, kind: input, shape index: {}]
  %s1 = inlined_call_operand.vmem [shape: bf16[16,32], index: 1, kind: input, shape index: {}]
  %s2 = inlined_call_operand.vmem [shape: f32[1,32], index: 2, kind: input, shape index: {}]
  %s3 = inlined_call_operand.vmem [shape: bf16[392,32], index: 3, kind: output, shape index: {}]
  %s4 = sld [smem:[#allocation0]]
  $region151: #{simple_cnn_forward.3} parent=0
    _
  %s6 = ssub.s32 1, %s4
  %s7 = scalar_select 0, %s6, %s4
  $region1: #{simple_cnn_forward.3} parent=0
    #allocation2 [shape = 'u8[229376]{0}', space=vmem, size = 0x38000, scoped, tag = 'input window, operand 0']
    #allocation3 [shape = 'u8[57344]{0}', space=vmem, size = 0xe000, scoped, tag = 'output window, operand 0']
    loop: start=0, step=1, limit=6
    $region2: #{simple_cnn_forward.3} parent=1 // loop_pre_header
      _
    $region3: #{simple_cnn_forward.3} parent=1 // loop_header
      %s9 = sphi 0, %s13
      %p10 = scmp.ge.s32.totalorder %s9, 6
      %s19 = sphi 0, %s21
      %s22 = sphi 0, %s19
      %s23 = sphi 0, %s22
      %s39 = sphi 0, %s23
      %s43 = sphi 0, %s43
      %s45 = sphi 0, %s43
      %s46 = sphi 0, %s45
      %s60 = sphi 0, %s46
      %s64 = sphi 0, %s64
      %s66 = sphi 0, %s64
      %s67 = sphi 0, %s66
      %s81 = sphi 0, %s67
      %s87 = sphi 0, %s89
      %s90 = sphi 0, %s87
      %s91 = sphi 0, %s90
      %s107 = sphi 0, %s91
    $region4: #{simple_cnn_forward.3} parent=1 // loop_header_branch
      %12 = sbr.rel (%p10) target = $region8
    $region5: #{simple_cnn_forward.3} parent=1 // loop_body
      %s14 = ssub.s32 %s9, 1
      %s15 = ssub.s32 %s9, 2
      %s16 = sadd.s32 %s9, 1
      %s17 = ssub.s32 %s9, %s16
      %p18 = scmp.eq.s32.totalorder %s17, 0
      %s20 = sadd.s32 %s19, 1
      %s21 = scalar_select %p18, %s19, %s20
      %p24 = pneg %p18
      %p25 = scmp.eq.s32.totalorder %s9, 3
      %p26 = por %p24, %p25
      %p27 = scmp.ne.s32.totalorder %s19, %s22
      %p28 = scmp.eq.s32.totalorder %s9, 0
      %p29 = por %p27, %p28
      %p30 = scmp.ne.s32.totalorder %s19, %s22
      %p31 = scmp.eq.s32.totalorder %s14, 3
      %p32 = por %p30, %p31
      %p33 = scmp.ne.s32.totalorder %s22, %s23
      %p34 = scmp.eq.s32.totalorder %s14, 0
      %p35 = por %p33, %p34
      %p36 = scmp.ne.s32.totalorder %s22, %s23
      %p37 = scmp.eq.s32.totalorder %s15, 3
      %p38 = por %p36, %p37
      %p40 = scmp.ne.s32.totalorder %s23, %s39
      %p41 = scmp.eq.s32.totalorder %s15, 0
      %p42 = por %p40, %p41
      %s44 = sadd.s32 %s43, 1
      %p47 = scmp.eq.s32.totalorder %s9, 3
      %p48 = scmp.ne.s32.totalorder %s43, %s45
      %p49 = scmp.eq.s32.totalorder %s9, 0
      %p50 = por %p48, %p49
      %p51 = scmp.ne.s32.totalorder %s43, %s45
      %p52 = scmp.eq.s32.totalorder %s14, 3
      %p53 = por %p51, %p52
      %p54 = scmp.ne.s32.totalorder %s45, %s46
      %p55 = scmp.eq.s32.totalorder %s14, 0
      %p56 = por %p54, %p55
      %p57 = scmp.ne.s32.totalorder %s45, %s46
      %p58 = scmp.eq.s32.totalorder %s15, 3
      %p59 = por %p57, %p58
      %p61 = scmp.ne.s32.totalorder %s46, %s60
      %p62 = scmp.eq.s32.totalorder %s15, 0
      %p63 = por %p61, %p62
      %s65 = sadd.s32 %s64, 1
      %p68 = scmp.eq.s32.totalorder %s9, 3
      %p69 = scmp.ne.s32.totalorder %s64, %s66
      %p70 = scmp.eq.s32.totalorder %s9, 0
      %p71 = por %p69, %p70
      %p72 = scmp.ne.s32.totalorder %s64, %s66
      %p73 = scmp.eq.s32.totalorder %s14, 3
      %p74 = por %p72, %p73
      %p75 = scmp.ne.s32.totalorder %s66, %s67
      %p76 = scmp.eq.s32.totalorder %s14, 0
      %p77 = por %p75, %p76
      %p78 = scmp.ne.s32.totalorder %s66, %s67
      %p79 = scmp.eq.s32.totalorder %s15, 3
      %p80 = por %p78, %p79
      %p82 = scmp.ne.s32.totalorder %s67, %s81
      %p83 = scmp.eq.s32.totalorder %s15, 0
      %p84 = por %p82, %p83
      %s85 = ssub.s32 %s9, %s16
      %p86 = scmp.eq.s32.totalorder %s85, 0
      %s88 = sadd.s32 %s87, 1
      %s89 = scalar_select %p86, %s87, %s88
      %p92 = pneg %p86
      %p93 = scmp.eq.s32.totalorder %s9, 3
      %p94 = por %p92, %p93
      %p95 = scmp.ne.s32.totalorder %s87, %s90
      %p96 = scmp.eq.s32.totalorder %s9, 0
      %p97 = por %p95, %p96
      %p98 = scmp.ne.s32.totalorder %s87, %s90
      %p99 = scmp.eq.s32.totalorder %s14, 3
      %p100 = por %p98, %p99
      %p101 = scmp.ne.s32.totalorder %s90, %s91
      %p102 = scmp.eq.s32.totalorder %s14, 0
      %p103 = por %p101, %p102
      %p104 = scmp.ne.s32.totalorder %s90, %s91
      %p105 = scmp.eq.s32.totalorder %s15, 3
      %p106 = por %p104, %p105
      %p108 = scmp.ne.s32.totalorder %s91, %s107
      %p109 = scmp.eq.s32.totalorder %s15, 0
      %p110 = por %p108, %p109
      %p111 = scmp.le.s32.totalorder 1, %s9
      %p112 = scmp.lt.s32.totalorder %s9, 5
      %p113 = pnand %p111, %p112
      %p114 = pneg %p113
      // Predicated region
      $region9: #{simple_cnn_forward.3} parent=5 // pred_check
        _
      $region10: #{simple_cnn_forward.3} parent=5 // pred_check_branch
        %116 = sbr.rel (%p113) target = $region12
      $region11: #{simple_cnn_forward.3} parent=5 // pred_region
        %s117 = ssub.s32 %s9, 1
        // Predicated region
        $region13: #{simple_cnn_forward.3} parent=11 // pred_check
          %p118 = pneg %p56
        $region14: #{simple_cnn_forward.3} parent=11 // pred_check_branch
          %120 = sbr.rel (%p118) target = $region16
        $region15: #{simple_cnn_forward.3} parent=11 // pred_region
          _
        $region16: #{simple_cnn_forward.3} parent=11 // pred_fallthru
          _
        // Predicated region
        $region17: #{simple_cnn_forward.3} parent=11 // pred_check
          %p121 = pneg %p77
        $region18: #{simple_cnn_forward.3} parent=11 // pred_check_branch
          %123 = sbr.rel (%p121) target = $region20
        $region19: #{simple_cnn_forward.3} parent=11 // pred_region
          _
        $region20: #{simple_cnn_forward.3} parent=11 // pred_fallthru
          _
      $region12: #{simple_cnn_forward.3} parent=5 // pred_fallthru
        _
      %p124 = scmp.lt.s32.totalorder %s9, 4
      // Predicated region
      $region21: #{simple_cnn_forward.3} parent=5 // pred_check
        %p125 = pneg %p124
      $region22: #{simple_cnn_forward.3} parent=5 // pred_check_branch
        %127 = sbr.rel (%p125) target = $region24
      $region23: #{simple_cnn_forward.3} parent=5 // pred_region
        // Predicated region
        $region25: #{simple_cnn_forward.3} parent=23 // pred_check
          %p128 = pneg %p29
        $region26: #{simple_cnn_forward.3} parent=23 // pred_check_branch
          %130 = sbr.rel (%p128) target = $region28
        $region27: #{simple_cnn_forward.3} parent=23 // pred_region
          %s131 = sand.u32 %s19, 1
          %s132 = sand.u32 %s19, 1
          %s133 = smul.addr %s132, 224
          %s134 = scalar_lea.vmem [#allocation2], %s133
          %s135 = smul.u32 14, %s9
          %s136 = ssub.s32 49, %s135
          %p137 = scmp.lt.s32.totalorder %s136, 14
          %s138 = scalar_select %p137, %s136, 14
          %s139 = smul.u32 16, %s138
          %p140 = scmp.ne.s32.totalorder 0, %s139
          %s141 = smul.addr %s135, 4
          %s142 = scalar_lea.vmem %s0, %s141
          // Predicated region
          $region29: #{simple_cnn_forward.3} parent=27 // pred_check
            %p143 = pneg %p140
          $region30: #{simple_cnn_forward.3} parent=27 // pred_check_branch
            %145 = sbr.rel (%p143) target = $region32
          $region31: #{simple_cnn_forward.3} parent=27 // pred_region
            // Predicated region
            $region33: #{simple_cnn_forward.3} parent=31 // pred_check
              _
            $region34: #{simple_cnn_forward.3} parent=31 // pred_check_branch
              %147 = sbr.rel target = $region36
            $region35: #{simple_cnn_forward.3} parent=31 // pred_region
              // Predicated region
              $region55: #{simple_cnn_forward.3} parent=35 // pred_check
                _
              $region56: #{simple_cnn_forward.3} parent=35 // pred_check_branch
                %265 = sbr.rel (0) target = $region58
              $region57: #{simple_cnn_forward.3} parent=35 // pred_region
                %s266 = sdiv.u32.pop %s138, 14
                %s267 = srem.u32.pop %s138, 14
                // While loop
                $region59: #{simple_cnn_forward.3} parent=57 // loop_pre_header
                  _
                $region60: #{simple_cnn_forward.3} parent=57 // loop_header
                  %s269 = sphi 0, %s271
                  %p270 = scmp.ge.s32.totalorder %s269, %s266
                  %s274 = sphi 0, %s279
                  %s275 = sphi %s142, %s282
                  %s276 = sphi %s134, %s283
                $region61: #{simple_cnn_forward.3} parent=57 // loop_header_branch
                  %273 = sbr.rel (%p270) target = $region65
                $region62: #{simple_cnn_forward.3} parent=57 // loop_body
                  %s277 = sadd.s32 1, %s274
                  %p278 = scmp.ge.s32.totalorder %s277, %s266
                  %s279 = scalar_select %p278, 0, %s277
                  %s280 = smul.u32 %s279, 56
                  %s281 = smul.u32 %s279, 56
                  %s282 = scalar_lea.vmem %s142, %s280
                  %s283 = scalar_lea.vmem %s134, %s281 [#allocation2]
                $region63: #{simple_cnn_forward.3} parent=57 // loop_footer
                  %s271 = sadd.s32 %s269, 1
                $region64: #{simple_cnn_forward.3} parent=57 // loop_footer_branch
                  %268 = sbr.rel target = $region60
                $region65: #{simple_cnn_forward.3} parent=57 // loop_exit
                  _
                %s284 = sdiv.u32.pop %s138, 14
                %s285 = srem.u32.pop %s138, 14
                %s286 = smul.u32 %s284, 14
                %s287 = smul.u32 4, %s286
                %s288 = scalar_lea.vmem %s142, %s287
                %s289 = smul.u32 4, %s286
                %s290 = scalar_lea.vmem %s134, %s289 [#allocation2]
                // While loop
                $region66: #{simple_cnn_forward.3} parent=57 // loop_pre_header
                  _
                $region67: #{simple_cnn_forward.3} parent=57 // loop_header
                  %s292 = sphi 0, %s294
                  %p293 = scmp.ge.s32.totalorder %s292, %s285
                  %s297 = sphi 0, %s302
                  %s298 = sphi %s288, %s305
                  %s299 = sphi %s290, %s306
                $region68: #{simple_cnn_forward.3} parent=57 // loop_header_branch
                  %296 = sbr.rel (%p293) target = $region72
                $region69: #{simple_cnn_forward.3} parent=57 // loop_body
                  %s300 = sadd.s32 1, %s297
                  %p301 = scmp.ge.s32.totalorder %s300, %s285
                  %s302 = scalar_select %p301, 0, %s300
                  %s303 = smul.u32 %s302, 4
                  %s304 = smul.u32 %s302, 4
                  %s305 = scalar_lea.vmem %s288, %s303
                  %s306 = scalar_lea.vmem %s290, %s304 [#allocation2]
                $region70: #{simple_cnn_forward.3} parent=57 // loop_footer
                  %s294 = sadd.s32 %s292, 1
                $region71: #{simple_cnn_forward.3} parent=57 // loop_footer_branch
                  %291 = sbr.rel target = $region67
                $region72: #{simple_cnn_forward.3} parent=57 // loop_exit
                  _
                %s308 = ssub.s32 16, 1
                %s309 = sshrl.u32 %s138, 3
                // While loop
                $region73: #{simple_cnn_forward.3} parent=57 // loop_pre_header
                  _
                $region74: #{simple_cnn_forward.3} parent=57 // loop_header
                  %s311 = sphi 0, %s313
                  %p312 = scmp.ge.s32.totalorder %s311, %s309
                  %s316 = sphi 0, %s385
                  %s317 = sphi %s142, %s388
                  %s318 = sphi %s134, %s389
                $region75: #{simple_cnn_forward.3} parent=57 // loop_header_branch
                  %315 = sbr.rel (%p312) target = $region79
                $region76: #{simple_cnn_forward.3} parent=57 // loop_body
                  %v319 = vld [vmem:[%s317] sm:%s308]
                  %320 = vst [vmem:[%s318] sm:%s308] %v319
                  %v321 = vld [vmem:[%s317 + $0x4] sm:%s308]
                  %322 = vst [vmem:[%s318 + $0x4] sm:%s308] %v321
                  %v323 = vld [vmem:[%s317 + $0x8] sm:%s308]
                  %324 = vst [vmem:[%s318 + $0x8] sm:%s308] %v323
                  %v325 = vld [vmem:[%s317 + $0xc] sm:%s308]
                  %326 = vst [vmem:[%s318 + $0xc] sm:%s308] %v325
                  %v327 = vld [vmem:[%s317 + $0x10] sm:%s308]
                  %328 = vst [vmem:[%s318 + $0x10] sm:%s308] %v327
                  %v329 = vld [vmem:[%s317 + $0x14] sm:%s308]
                  %330 = vst [vmem:[%s318 + $0x14] sm:%s308] %v329
                  %v331 = vld [vmem:[%s317 + $0x18] sm:%s308]
                  %332 = vst [vmem:[%s318 + $0x18] sm:%s308] %v331
                  %v333 = vld [vmem:[%s317 + $0x1c] sm:%s308]
                  %334 = vst [vmem:[%s318 + $0x1c] sm:%s308] %v333
                  %v335 = vld [vmem:[%s317 + $0xc4] sm:%s308]
                  %336 = vst [vmem:[%s318 + $0x38] sm:%s308] %v335
                  %v337 = vld [vmem:[%s317 + $0xc8] sm:%s308]
                  %338 = vst [vmem:[%s318 + $0x3c] sm:%s308] %v337
                  %v339 = vld [vmem:[%s317 + $0xcc] sm:%s308]
                  %340 = vst [vmem:[%s318 + $0x40] sm:%s308] %v339
                  %v341 = vld [vmem:[%s317 + $0xd0] sm:%s308]
                  %342 = vst [vmem:[%s318 + $0x44] sm:%s308] %v341
                  %v343 = vld [vmem:[%s317 + $0xd4] sm:%s308]
                  %344 = vst [vmem:[%s318 + $0x48] sm:%s308] %v343
                  %v345 = vld [vmem:[%s317 + $0xd8] sm:%s308]
                  %346 = vst [vmem:[%s318 + $0x4c] sm:%s308] %v345
                  %v347 = vld [vmem:[%s317 + $0xdc] sm:%s308]
                  %348 = vst [vmem:[%s318 + $0x50] sm:%s308] %v347
                  %v349 = vld [vmem:[%s317 + $0xe0] sm:%s308]
                  %350 = vst [vmem:[%s318 + $0x54] sm:%s308] %v349
                  %v351 = vld [vmem:[%s317 + $0x188] sm:%s308]
                  %352 = vst [vmem:[%s318 + $0x70] sm:%s308] %v351
                  %v353 = vld [vmem:[%s317 + $0x18c] sm:%s308]
                  %354 = vst [vmem:[%s318 + $0x74] sm:%s308] %v353
                  %v355 = vld [vmem:[%s317 + $0x190] sm:%s308]
                  %356 = vst [vmem:[%s318 + $0x78] sm:%s308] %v355
                  %v357 = vld [vmem:[%s317 + $0x194] sm:%s308]
                  %358 = vst [vmem:[%s318 + $0x7c] sm:%s308] %v357
                  %v359 = vld [vmem:[%s317 + $0x198] sm:%s308]
                  %360 = vst [vmem:[%s318 + $0x80] sm:%s308] %v359
                  %v361 = vld [vmem:[%s317 + $0x19c] sm:%s308]
                  %362 = vst [vmem:[%s318 + $0x84] sm:%s308] %v361
                  %v363 = vld [vmem:[%s317 + $0x1a0] sm:%s308]
                  %364 = vst [vmem:[%s318 + $0x88] sm:%s308] %v363
                  %v365 = vld [vmem:[%s317 + $0x1a4] sm:%s308]
                  %366 = vst [vmem:[%s318 + $0x8c] sm:%s308] %v365
                  %v367 = vld [vmem:[%s317 + $0x24c] sm:%s308]
                  %368 = vst [vmem:[%s318 + $0xa8] sm:%s308] %v367
                  %v369 = vld [vmem:[%s317 + $0x250] sm:%s308]
                  %370 = vst [vmem:[%s318 + $0xac] sm:%s308] %v369
                  %v371 = vld [vmem:[%s317 + $0x254] sm:%s308]
                  %372 = vst [vmem:[%s318 + $0xb0] sm:%s308] %v371
                  %v373 = vld [vmem:[%s317 + $0x258] sm:%s308]
                  %374 = vst [vmem:[%s318 + $0xb4] sm:%s308] %v373
                  %v375 = vld [vmem:[%s317 + $0x25c] sm:%s308]
                  %376 = vst [vmem:[%s318 + $0xb8] sm:%s308] %v375
                  %v377 = vld [vmem:[%s317 + $0x260] sm:%s308]
                  %378 = vst [vmem:[%s318 + $0xbc] sm:%s308] %v377
                  %v379 = vld [vmem:[%s317 + $0x264] sm:%s308]
                  %380 = vst [vmem:[%s318 + $0xc0] sm:%s308] %v379
                  %v381 = vld [vmem:[%s317 + $0x268] sm:%s308]
                  %382 = vst [vmem:[%s318 + $0xc4] sm:%s308] %v381
                  %s383 = sadd.s32 1, %s316
                  %p384 = scmp.ge.s32.totalorder %s383, %s309
                  %s385 = scalar_select %p384, 0, %s383
                  %s386 = smul.u32 %s385, 32
                  %s387 = smul.u32 %s385, 32
                  %s388 = scalar_lea.vmem %s142, %s386
                  %s389 = scalar_lea.vmem %s134, %s387 [#allocation2]
                $region77: #{simple_cnn_forward.3} parent=57 // loop_footer
                  %s313 = sadd.s32 %s311, 1
                $region78: #{simple_cnn_forward.3} parent=57 // loop_footer_branch
                  %310 = sbr.rel target = $region74
                $region79: #{simple_cnn_forward.3} parent=57 // loop_exit
                  _
                %s390 = sshrl.u32 %s138, 3
                %s391 = sand.u32 %s138, 7
                %s392 = smul.u32 %s390, 8
                %s393 = smul.u32 4, %s392
                %s394 = scalar_lea.vmem %s142, %s393
                %s395 = smul.u32 4, %s392
                %s396 = scalar_lea.vmem %s134, %s395 [#allocation2]
                // While loop
                $region80: #{simple_cnn_forward.3} parent=57 // loop_pre_header
                  _
                $region81: #{simple_cnn_forward.3} parent=57 // loop_header
                  %s398 = sphi 0, %s400
                  %p399 = scmp.ge.s32.totalorder %s398, %s391
                  %s403 = sphi 0, %s416
                  %s404 = sphi %s394, %s419
                  %s405 = sphi %s396, %s420
                $region82: #{simple_cnn_forward.3} parent=57 // loop_header_branch
                  %402 = sbr.rel (%p399) target = $region86
                $region83: #{simple_cnn_forward.3} parent=57 // loop_body
                  %v406 = vld [vmem:[%s404] sm:%s308]
                  %407 = vst [vmem:[%s405] sm:%s308] %v406
                  %v408 = vld [vmem:[%s404 + $0xc4] sm:%s308]
                  %409 = vst [vmem:[%s405 + $0x38] sm:%s308] %v408
                  %v410 = vld [vmem:[%s404 + $0x188] sm:%s308]
                  %411 = vst [vmem:[%s405 + $0x70] sm:%s308] %v410
                  %v412 = vld [vmem:[%s404 + $0x24c] sm:%s308]
                  %413 = vst [vmem:[%s405 + $0xa8] sm:%s308] %v412
                  %s414 = sadd.s32 1, %s403
                  %p415 = scmp.ge.s32.totalorder %s414, %s391
                  %s416 = scalar_select %p415, 0, %s414
                  %s417 = smul.u32 %s416, 4
                  %s418 = smul.u32 %s416, 4
                  %s419 = scalar_lea.vmem %s394, %s417
                  %s420 = scalar_lea.vmem %s396, %s418 [#allocation2]
                $region84: #{simple_cnn_forward.3} parent=57 // loop_footer
                  %s400 = sadd.s32 %s398, 1
                $region85: #{simple_cnn_forward.3} parent=57 // loop_footer_branch
                  %397 = sbr.rel target = $region81
                $region86: #{simple_cnn_forward.3} parent=57 // loop_exit
                  _
              $region58: #{simple_cnn_forward.3} parent=35 // pred_fallthru
                _
            $region36: #{simple_cnn_forward.3} parent=31 // pred_fallthru
              _
            // Predicated region
            $region37: #{simple_cnn_forward.3} parent=31 // pred_check
              _
            $region38: #{simple_cnn_forward.3} parent=31 // pred_check_branch
              %149 = sbr.rel (0) target = $region40
            $region39: #{simple_cnn_forward.3} parent=31 // pred_region
              %s151 = ssub.s32 16, 1
              %s152 = sshrl.u32 %s138, 3
              // While loop
              $region41: #{simple_cnn_forward.3} parent=39 // loop_pre_header
                _
              $region42: #{simple_cnn_forward.3} parent=39 // loop_header
                %s154 = sphi 0, %s156
                %p155 = scmp.ge.s32.totalorder %s154, %s152
                %s159 = sphi 0, %s228
                %s160 = sphi %s142, %s231
                %s161 = sphi %s134, %s232
              $region43: #{simple_cnn_forward.3} parent=39 // loop_header_branch
                %158 = sbr.rel (%p155) target = $region47
              $region44: #{simple_cnn_forward.3} parent=39 // loop_body
                %v162 = vld [vmem:[%s160] sm:%s151]
                %163 = vst [vmem:[%s161] sm:%s151] %v162
                %v164 = vld [vmem:[%s160 + $0x4] sm:%s151]
                %165 = vst [vmem:[%s161 + $0x4] sm:%s151] %v164
                %v166 = vld [vmem:[%s160 + $0x8] sm:%s151]
                %167 = vst [vmem:[%s161 + $0x8] sm:%s151] %v166
                %v168 = vld [vmem:[%s160 + $0xc] sm:%s151]
                %169 = vst [vmem:[%s161 + $0xc] sm:%s151] %v168
                %v170 = vld [vmem:[%s160 + $0x10] sm:%s151]
                %171 = vst [vmem:[%s161 + $0x10] sm:%s151] %v170
                %v172 = vld [vmem:[%s160 + $0x14] sm:%s151]
                %173 = vst [vmem:[%s161 + $0x14] sm:%s151] %v172
                %v174 = vld [vmem:[%s160 + $0x18] sm:%s151]
                %175 = vst [vmem:[%s161 + $0x18] sm:%s151] %v174
                %v176 = vld [vmem:[%s160 + $0x1c] sm:%s151]
                %177 = vst [vmem:[%s161 + $0x1c] sm:%s151] %v176
                %v178 = vld [vmem:[%s160 + $0xc4] sm:%s151]
                %179 = vst [vmem:[%s161 + $0x38] sm:%s151] %v178
                %v180 = vld [vmem:[%s160 + $0xc8] sm:%s151]
                %181 = vst [vmem:[%s161 + $0x3c] sm:%s151] %v180
                %v182 = vld [vmem:[%s160 + $0xcc] sm:%s151]
                %183 = vst [vmem:[%s161 + $0x40] sm:%s151] %v182
                %v184 = vld [vmem:[%s160 + $0xd0] sm:%s151]
                %185 = vst [vmem:[%s161 + $0x44] sm:%s151] %v184
                %v186 = vld [vmem:[%s160 + $0xd4] sm:%s151]
                %187 = vst [vmem:[%s161 + $0x48] sm:%s151] %v186
                %v188 = vld [vmem:[%s160 + $0xd8] sm:%s151]
                %189 = vst [vmem:[%s161 + $0x4c] sm:%s151] %v188
                %v190 = vld [vmem:[%s160 + $0xdc] sm:%s151]
                %191 = vst [vmem:[%s161 + $0x50] sm:%s151] %v190
                %v192 = vld [vmem:[%s160 + $0xe0] sm:%s151]
                %193 = vst [vmem:[%s161 + $0x54] sm:%s151] %v192
                %v194 = vld [vmem:[%s160 + $0x188] sm:%s151]
                %195 = vst [vmem:[%s161 + $0x70] sm:%s151] %v194
                %v196 = vld [vmem:[%s160 + $0x18c] sm:%s151]
                %197 = vst [vmem:[%s161 + $0x74] sm:%s151] %v196
                %v198 = vld [vmem:[%s160 + $0x190] sm:%s151]
                %199 = vst [vmem:[%s161 + $0x78] sm:%s151] %v198
                %v200 = vld [vmem:[%s160 + $0x194] sm:%s151]
                %201 = vst [vmem:[%s161 + $0x7c] sm:%s151] %v200
                %v202 = vld [vmem:[%s160 + $0x198] sm:%s151]
                %203 = vst [vmem:[%s161 + $0x80] sm:%s151] %v202
                %v204 = vld [vmem:[%s160 + $0x19c] sm:%s151]
                %205 = vst [vmem:[%s161 + $0x84] sm:%s151] %v204
                %v206 = vld [vmem:[%s160 + $0x1a0] sm:%s151]
                %207 = vst [vmem:[%s161 + $0x88] sm:%s151] %v206
                %v208 = vld [vmem:[%s160 + $0x1a4] sm:%s151]
                %209 = vst [vmem:[%s161 + $0x8c] sm:%s151] %v208
                %v210 = vld [vmem:[%s160 + $0x24c] sm:%s151]
                %211 = vst [vmem:[%s161 + $0xa8] sm:%s151] %v210
                %v212 = vld [vmem:[%s160 + $0x250] sm:%s151]
                %213 = vst [vmem:[%s161 + $0xac] sm:%s151] %v212
                %v214 = vld [vmem:[%s160 + $0x254] sm:%s151]
                %215 = vst [vmem:[%s161 + $0xb0] sm:%s151] %v214
                %v216 = vld [vmem:[%s160 + $0x258] sm:%s151]
                %217 = vst [vmem:[%s161 + $0xb4] sm:%s151] %v216
                %v218 = vld [vmem:[%s160 + $0x25c] sm:%s151]
                %219 = vst [vmem:[%s161 + $0xb8] sm:%s151] %v218
                %v220 = vld [vmem:[%s160 + $0x260] sm:%s151]
                %221 = vst [vmem:[%s161 + $0xbc] sm:%s151] %v220
                %v222 = vld [vmem:[%s160 + $0x264] sm:%s151]
                %223 = vst [vmem:[%s161 + $0xc0] sm:%s151] %v222
                %v224 = vld [vmem:[%s160 + $0x268] sm:%s151]
                %225 = vst [vmem:[%s161 + $0xc4] sm:%s151] %v224
                %s226 = sadd.s32 1, %s159
                %p227 = scmp.ge.s32.totalorder %s226, %s152
                %s228 = scalar_select %p227, 0, %s226
                %s229 = smul.u32 %s228, 32
                %s230 = smul.u32 %s228, 32
                %s231 = scalar_lea.vmem %s142, %s229
                %s232 = scalar_lea.vmem %s134, %s230 [#allocation2]
              $region45: #{simple_cnn_forward.3} parent=39 // loop_footer
                %s156 = sadd.s32 %s154, 1
              $region46: #{simple_cnn_forward.3} parent=39 // loop_footer_branch
                %153 = sbr.rel target = $region42
              $region47: #{simple_cnn_forward.3} parent=39 // loop_exit
                _
              %s233 = sshrl.u32 %s138, 3
              %s234 = sand.u32 %s138, 7
              %s235 = smul.u32 %s233, 8
              %s236 = smul.u32 4, %s235
              %s237 = scalar_lea.vmem %s142, %s236
              %s238 = smul.u32 4, %s235
              %s239 = scalar_lea.vmem %s134, %s238 [#allocation2]
              // While loop
              $region48: #{simple_cnn_forward.3} parent=39 // loop_pre_header
                _
              $region49: #{simple_cnn_forward.3} parent=39 // loop_header
                %s241 = sphi 0, %s243
                %p242 = scmp.ge.s32.totalorder %s241, %s234
                %s246 = sphi 0, %s259
                %s247 = sphi %s237, %s262
                %s248 = sphi %s239, %s263
              $region50: #{simple_cnn_forward.3} parent=39 // loop_header_branch
                %245 = sbr.rel (%p242) target = $region54
              $region51: #{simple_cnn_forward.3} parent=39 // loop_body
                %v249 = vld [vmem:[%s247] sm:%s151]
                %250 = vst [vmem:[%s248] sm:%s151] %v249
                %v251 = vld [vmem:[%s247 + $0xc4] sm:%s151]
                %252 = vst [vmem:[%s248 + $0x38] sm:%s151] %v251
                %v253 = vld [vmem:[%s247 + $0x188] sm:%s151]
                %254 = vst [vmem:[%s248 + $0x70] sm:%s151] %v253
                %v255 = vld [vmem:[%s247 + $0x24c] sm:%s151]
                %256 = vst [vmem:[%s248 + $0xa8] sm:%s151] %v255
                %s257 = sadd.s32 1, %s246
                %p258 = scmp.ge.s32.totalorder %s257, %s234
                %s259 = scalar_select %p258, 0, %s257
                %s260 = smul.u32 %s259, 4
                %s261 = smul.u32 %s259, 4
                %s262 = scalar_lea.vmem %s237, %s260
                %s263 = scalar_lea.vmem %s239, %s261 [#allocation2]
              $region52: #{simple_cnn_forward.3} parent=39 // loop_footer
                %s243 = sadd.s32 %s241, 1
              $region53: #{simple_cnn_forward.3} parent=39 // loop_footer_branch
                %240 = sbr.rel target = $region49
              $region54: #{simple_cnn_forward.3} parent=39 // loop_exit
                _
            $region40: #{simple_cnn_forward.3} parent=31 // pred_fallthru
              _
          $region32: #{simple_cnn_forward.3} parent=27 // pred_fallthru
            _
          %421 = vnop
        $region28: #{simple_cnn_forward.3} parent=23 // pred_fallthru
          _
      $region24: #{simple_cnn_forward.3} parent=5 // pred_fallthru
        _
      %p422 = scmp.le.s32.totalorder 1, %s9
      %p423 = scmp.lt.s32.totalorder %s9, 5
      %p424 = pnand %p422, %p423
      %p425 = pneg %p424
      // Predicated region
      $region87: #{simple_cnn_forward.3} parent=5 // pred_check
        _
      $region88: #{simple_cnn_forward.3} parent=5 // pred_check_branch
        %427 = sbr.rel (%p424) target = $region90
      $region89: #{simple_cnn_forward.3} parent=5 // pred_region
        %s428 = ssub.s32 %s9, 1
        %s429 = sand.u32 %s22, 1
        %s430 = sand.u32 %s22, 1
        %s431 = smul.addr %s430, 224
        %s432 = scalar_lea.vmem [#allocation2], %s431
        // Predicated region
        $region91: #{simple_cnn_forward.3} parent=89 // pred_check
          %p433 = pneg %p35
        $region92: #{simple_cnn_forward.3} parent=89 // pred_check_branch
          %435 = sbr.rel (%p433) target = $region94
        $region93: #{simple_cnn_forward.3} parent=89 // pred_region
          _
        $region94: #{simple_cnn_forward.3} parent=89 // pred_fallthru
          _
        %s436 = sand.u32 %s22, 1
        %s437 = sand.u32 %s22, 1
        %s438 = smul.addr %s437, 224
        %s439 = scalar_lea.vmem [#allocation2], %s438
        %p440 = pneg %p35
        %p441 = pneg %p32
        %p442 = pneg %p56
        %p443 = pneg %p53
        %p444 = pneg %p77
        %p445 = pneg %p74
        %p446 = pneg %p103
        %p447 = pneg %p100
        %s448 = sand.u32 %s90, 1
        %s449 = sand.u32 %s90, 1
        %s450 = smul.addr %s449, 56
        %s451 = scalar_lea.vmem [#allocation3], %s450
        %s452 = smul.u32 14, %s14
        %s453 = ssub.s32 49, %s452
        %p454 = scmp.lt.s32.totalorder %s453, 14
        %s455 = scalar_select %p454, %s453, 14
        %s456 = smul.u32 16, %s455
        %s457 = smul.u32 14, %s14
        %s458 = ssub.s32 49, %s457
        %p459 = scmp.lt.s32.totalorder %s458, 14
        %s460 = scalar_select %p459, %s458, 14
        %s461 = smul.u32 4, %s460
        %v463 = vld [vmem:[%s1] sm:$0xf]
        %v464 = vld [vmem:[%s1 + $0x4] sm:$0xf]
        %v465 = vld [vmem:[%s432] sm:$0xf]
        %v466 = vld [vmem:[%s432 + $0x4] sm:$0xf]
        %v467 = vld [vmem:[%s432 + $0x8] sm:$0xf]
        %v468 = vld [vmem:[%s432 + $0xc] sm:$0xf]
        %v469 = vld [vmem:[%s432 + $0x10] sm:$0xf]
        %v470 = vld [vmem:[%s432 + $0x14] sm:$0xf]
        %v471 = vld [vmem:[%s432 + $0x18] sm:$0xf]
        %v472 = vld [vmem:[%s432 + $0x1c] sm:$0xf]
        %v473 = vld [vmem:[%s432 + $0x20] sm:$0xf]
        %v474 = vld [vmem:[%s432 + $0x24] sm:$0xf]
        %v475 = vld [vmem:[%s432 + $0x28] sm:$0xf]
        %v476 = vld [vmem:[%s432 + $0x2c] sm:$0xf]
        %v477 = vld [vmem:[%s432 + $0x30] sm:$0xf]
        %v478 = vld [vmem:[%s432 + $0x34] sm:$0xf]
        %v493 = vunpack.c.l.b16 %v465
        %v494 = vunpack.c.l.b16 %v466
        %v495 = vunpack.c.l.b16 %v467
        %v496 = vunpack.c.l.b16 %v468
        %v497 = vunpack.c.l.b16 %v469
        %v498 = vunpack.c.l.b16 %v470
        %v499 = vunpack.c.l.b16 %v471
        %v500 = vunpack.c.l.b16 %v472
        %v501 = vunpack.c.l.b16 %v473
        %v502 = vunpack.c.l.b16 %v474
        %v503 = vunpack.c.l.b16 %v475
        %v504 = vunpack.c.l.b16 %v476
        %v505 = vunpack.c.l.b16 %v477
        %v506 = vunpack.c.l.b16 %v478
        %v507 = vpack.c.b16 %v494, %v493
        %v508 = vpack.c.b16 %v496, %v495
        %v509 = vpack.c.b16 %v498, %v497
        %v510 = vpack.c.b16 %v500, %v499
        %v511 = vpack.c.b16 %v502, %v501
        %v512 = vpack.c.b16 %v504, %v503
        %v513 = vpack.c.b16 %v506, %v505
        %v516 = vunpack.c.l.b16 %v463
        %v517 = vunpack.c.l.b16 %v464
        %v518 = vpack.c.b16 %v517, %v516
        %vm520 = vcmask 130048
        %v522 = vsel %vm520, %v507, 0
        %v525 = vsel %vm520, %v508, 0
        %v528 = vsel %vm520, %v509, 0
        %v531 = vsel %vm520, %v510, 0
        %v534 = vsel %vm520, %v511, 0
        %v537 = vsel %vm520, %v512, 0
        %v540 = vsel %vm520, %v513, 0
        %542 = vmatpush.bf16.msra.mxu0 0
        %543 = vmatpush.bf16.msra.mxu0 0
        %544 = vmatpush.bf16.msra.mxu0 0
        %545 = vmatpush.bf16.msra.mxu0 0
        %546 = vmatpush.bf16.msra.mxu0 0
        %547 = vmatpush.bf16.msra.mxu0 0
        %548 = vmatpush.bf16.msra.mxu0 0
        %549 = vmatpush.bf16.msra.mxu0 %v518
        %550 = vmatmul.bf16.gmra.mxu0 %v522
        %v551 = vpop.f32.mrf.mxu0
        %v552 = vadd.f32 0.0, %v551
        %v553 = vpop.f32.mrf.mxu0
        %v554 = vadd.f32 0.0, %v553
        %555 = vmatmul.bf16.gmra.mxu0 %v525
        %v556 = vpop.f32.mrf.mxu0
        %v557 = vadd.f32 0.0, %v556
        %v558 = vpop.f32.mrf.mxu0
        %v559 = vadd.f32 0.0, %v558
        %560 = vmatmul.bf16.gmra.mxu0 %v528
        %v561 = vpop.f32.mrf.mxu0
        %v562 = vadd.f32 0.0, %v561
        %v563 = vpop.f32.mrf.mxu0
        %v564 = vadd.f32 0.0, %v563
        %565 = vmatmul.bf16.gmra.mxu0 %v531
        %v566 = vpop.f32.mrf.mxu0
        %v567 = vadd.f32 0.0, %v566
        %v568 = vpop.f32.mrf.mxu0
        %v569 = vadd.f32 0.0, %v568
        %570 = vmatmul.bf16.gmra.mxu0 %v534
        %v571 = vpop.f32.mrf.mxu0
        %v572 = vadd.f32 0.0, %v571
        %v573 = vpop.f32.mrf.mxu0
        %v574 = vadd.f32 0.0, %v573
        %575 = vmatmul.bf16.gmra.mxu0 %v537
        %v576 = vpop.f32.mrf.mxu0
        %v577 = vadd.f32 0.0, %v576
        %v578 = vpop.f32.mrf.mxu0
        %v579 = vadd.f32 0.0, %v578
        %580 = vmatmul.bf16.gmra.mxu0 %v540
        %v581 = vpop.f32.mrf.mxu0
        %v582 = vadd.f32 0.0, %v581
        %v583 = vpop.f32.mrf.mxu0
        %v584 = vadd.f32 0.0, %v583
        %585 = vdwg.mxu0
        %s586 = scalar_lea.vmem %s432, 56 [#allocation2]
        %v587 = vld [vmem:[%s586] sm:$0xf]
        %v588 = vld [vmem:[%s586 + $0x4] sm:$0xf]
        %v589 = vld [vmem:[%s586 + $0x8] sm:$0xf]
        %v590 = vld [vmem:[%s586 + $0xc] sm:$0xf]
        %v591 = vld [vmem:[%s586 + $0x10] sm:$0xf]
        %v592 = vld [vmem:[%s586 + $0x14] sm:$0xf]
        %v593 = vld [vmem:[%s586 + $0x18] sm:$0xf]
        %v594 = vld [vmem:[%s586 + $0x1c] sm:$0xf]
        %v595 = vld [vmem:[%s586 + $0x20] sm:$0xf]
        %v596 = vld [vmem:[%s586 + $0x24] sm:$0xf]
        %v597 = vld [vmem:[%s586 + $0x28] sm:$0xf]
        %v598 = vld [vmem:[%s586 + $0x2c] sm:$0xf]
        %v599 = vld [vmem:[%s586 + $0x30] sm:$0xf]
        %v600 = vld [vmem:[%s586 + $0x34] sm:$0xf]
        %v615 = vunpack.c.l.b16 %v587
        %v616 = vunpack.c.l.b16 %v588
        %v617 = vunpack.c.l.b16 %v589
        %v618 = vunpack.c.l.b16 %v590
        %v619 = vunpack.c.l.b16 %v591
        %v620 = vunpack.c.l.b16 %v592
        %v621 = vunpack.c.l.b16 %v593
        %v622 = vunpack.c.l.b16 %v594
        %v623 = vunpack.c.l.b16 %v595
        %v624 = vunpack.c.l.b16 %v596
        %v625 = vunpack.c.l.b16 %v597
        %v626 = vunpack.c.l.b16 %v598
        %v627 = vunpack.c.l.b16 %v599
        %v628 = vunpack.c.l.b16 %v600
        %v629 = vpack.c.b16 %v616, %v615
        %v630 = vpack.c.b16 %v618, %v617
        %v631 = vpack.c.b16 %v620, %v619
        %v632 = vpack.c.b16 %v622, %v621
        %v633 = vpack.c.b16 %v624, %v623
        %v634 = vpack.c.b16 %v626, %v625
        %v635 = vpack.c.b16 %v628, %v627
        %v637 = vsel %vm520, %v629, 0
        %v640 = vsel %vm520, %v630, 0
        %v643 = vsel %vm520, %v631, 0
        %v646 = vsel %vm520, %v632, 0
        %v649 = vsel %vm520, %v633, 0
        %v652 = vsel %vm520, %v634, 0
        %v655 = vsel %vm520, %v635, 0
        %657 = vmatpush.bf16.msra.mxu0 0
        %658 = vmatpush.bf16.msra.mxu0 0
        %659 = vmatpush.bf16.msra.mxu0 0
        %660 = vmatpush.bf16.msra.mxu0 0
        %661 = vmatpush.bf16.msra.mxu0 0
        %662 = vmatpush.bf16.msra.mxu0 0
        %663 = vmatpush.bf16.msra.mxu0 0
        %664 = vmatpush.bf16.msra.mxu0 %v518
        %665 = vmatmul.bf16.gmra.mxu0 %v637
        %v666 = vpop.f32.mrf.mxu0
        %v667 = vadd.f32 0.0, %v666
        %v668 = vpop.f32.mrf.mxu0
        %v669 = vadd.f32 0.0, %v668
        %670 = vmatmul.bf16.gmra.mxu0 %v640
        %v671 = vpop.f32.mrf.mxu0
        %v672 = vadd.f32 0.0, %v671
        %v673 = vpop.f32.mrf.mxu0
        %v674 = vadd.f32 0.0, %v673
        %675 = vmatmul.bf16.gmra.mxu0 %v643
        %v676 = vpop.f32.mrf.mxu0
        %v677 = vadd.f32 0.0, %v676
        %v678 = vpop.f32.mrf.mxu0
        %v679 = vadd.f32 0.0, %v678
        %680 = vmatmul.bf16.gmra.mxu0 %v646
        %v681 = vpop.f32.mrf.mxu0
        %v682 = vadd.f32 0.0, %v681
        %v683 = vpop.f32.mrf.mxu0
        %v684 = vadd.f32 0.0, %v683
        %685 = vmatmul.bf16.gmra.mxu0 %v649
        %v686 = vpop.f32.mrf.mxu0
        %v687 = vadd.f32 0.0, %v686
        %v688 = vpop.f32.mrf.mxu0
        %v689 = vadd.f32 0.0, %v688
        %690 = vmatmul.bf16.gmra.mxu0 %v652
        %v691 = vpop.f32.mrf.mxu0
        %v692 = vadd.f32 0.0, %v691
        %v693 = vpop.f32.mrf.mxu0
        %v694 = vadd.f32 0.0, %v693
        %695 = vmatmul.bf16.gmra.mxu0 %v655
        %v696 = vpop.f32.mrf.mxu0
        %v697 = vadd.f32 0.0, %v696
        %v698 = vpop.f32.mrf.mxu0
        %v699 = vadd.f32 0.0, %v698
        %700 = vdwg.mxu0
        %v701 = vmax.f32 %v552, %v667
        %v702 = vmax.f32 %v554, %v669
        %v703 = vmax.f32 %v557, %v672
        %v704 = vmax.f32 %v559, %v674
        %v705 = vmax.f32 %v562, %v677
        %v706 = vmax.f32 %v564, %v679
        %v707 = vmax.f32 %v567, %v682
        %v708 = vmax.f32 %v569, %v684
        %v709 = vmax.f32 %v572, %v687
        %v710 = vmax.f32 %v574, %v689
        %v711 = vmax.f32 %v577, %v692
        %v712 = vmax.f32 %v579, %v694
        %v713 = vmax.f32 %v582, %v697
        %v714 = vmax.f32 %v584, %v699
        %s715 = scalar_lea.vmem %s432, 112 [#allocation2]
        %v716 = vld [vmem:[%s715] sm:$0xf]
        %v717 = vld [vmem:[%s715 + $0x4] sm:$0xf]
        %v718 = vld [vmem:[%s715 + $0x8] sm:$0xf]
        %v719 = vld [vmem:[%s715 + $0xc] sm:$0xf]
        %v720 = vld [vmem:[%s715 + $0x10] sm:$0xf]
        %v721 = vld [vmem:[%s715 + $0x14] sm:$0xf]
        %v722 = vld [vmem:[%s715 + $0x18] sm:$0xf]
        %v723 = vld [vmem:[%s715 + $0x1c] sm:$0xf]
        %v724 = vld [vmem:[%s715 + $0x20] sm:$0xf]
        %v725 = vld [vmem:[%s715 + $0x24] sm:$0xf]
        %v726 = vld [vmem:[%s715 + $0x28] sm:$0xf]
        %v727 = vld [vmem:[%s715 + $0x2c] sm:$0xf]
        %v728 = vld [vmem:[%s715 + $0x30] sm:$0xf]
        %v729 = vld [vmem:[%s715 + $0x34] sm:$0xf]
        %v744 = vunpack.c.l.b16 %v716
        %v745 = vunpack.c.l.b16 %v717
        %v746 = vunpack.c.l.b16 %v718
        %v747 = vunpack.c.l.b16 %v719
        %v748 = vunpack.c.l.b16 %v720
        %v749 = vunpack.c.l.b16 %v721
        %v750 = vunpack.c.l.b16 %v722
        %v751 = vunpack.c.l.b16 %v723
        %v752 = vunpack.c.l.b16 %v724
        %v753 = vunpack.c.l.b16 %v725
        %v754 = vunpack.c.l.b16 %v726
        %v755 = vunpack.c.l.b16 %v727
        %v756 = vunpack.c.l.b16 %v728
        %v757 = vunpack.c.l.b16 %v729
        %v758 = vpack.c.b16 %v745, %v744
        %v759 = vpack.c.b16 %v747, %v746
        %v760 = vpack.c.b16 %v749, %v748
        %v761 = vpack.c.b16 %v751, %v750
        %v762 = vpack.c.b16 %v753, %v752
        %v763 = vpack.c.b16 %v755, %v754
        %v764 = vpack.c.b16 %v757, %v756
        %v766 = vsel %vm520, %v758, 0
        %v769 = vsel %vm520, %v759, 0
        %v772 = vsel %vm520, %v760, 0
        %v775 = vsel %vm520, %v761, 0
        %v778 = vsel %vm520, %v762, 0
        %v781 = vsel %vm520, %v763, 0
        %v784 = vsel %vm520, %v764, 0
        %786 = vmatpush.bf16.msra.mxu0 0
        %787 = vmatpush.bf16.msra.mxu0 0
        %788 = vmatpush.bf16.msra.mxu0 0
        %789 = vmatpush.bf16.msra.mxu0 0
        %790 = vmatpush.bf16.msra.mxu0 0
        %791 = vmatpush.bf16.msra.mxu0 0
        %792 = vmatpush.bf16.msra.mxu0 0
        %793 = vmatpush.bf16.msra.mxu0 %v518
        %794 = vmatmul.bf16.gmra.mxu0 %v766
        %v795 = vpop.f32.mrf.mxu0
        %v796 = vadd.f32 0.0, %v795
        %v797 = vpop.f32.mrf.mxu0
        %v798 = vadd.f32 0.0, %v797
        %799 = vmatmul.bf16.gmra.mxu0 %v769
        %v800 = vpop.f32.mrf.mxu0
        %v801 = vadd.f32 0.0, %v800
        %v802 = vpop.f32.mrf.mxu0
        %v803 = vadd.f32 0.0, %v802
        %804 = vmatmul.bf16.gmra.mxu0 %v772
        %v805 = vpop.f32.mrf.mxu0
        %v806 = vadd.f32 0.0, %v805
        %v807 = vpop.f32.mrf.mxu0
        %v808 = vadd.f32 0.0, %v807
        %809 = vmatmul.bf16.gmra.mxu0 %v775
        %v810 = vpop.f32.mrf.mxu0
        %v811 = vadd.f32 0.0, %v810
        %v812 = vpop.f32.mrf.mxu0
        %v813 = vadd.f32 0.0, %v812
        %814 = vmatmul.bf16.gmra.mxu0 %v778
        %v815 = vpop.f32.mrf.mxu0
        %v816 = vadd.f32 0.0, %v815
        %v817 = vpop.f32.mrf.mxu0
        %v818 = vadd.f32 0.0, %v817
        %819 = vmatmul.bf16.gmra.mxu0 %v781
        %v820 = vpop.f32.mrf.mxu0
        %v821 = vadd.f32 0.0, %v820
        %v822 = vpop.f32.mrf.mxu0
        %v823 = vadd.f32 0.0, %v822
        %824 = vmatmul.bf16.gmra.mxu0 %v784
        %v825 = vpop.f32.mrf.mxu0
        %v826 = vadd.f32 0.0, %v825
        %v827 = vpop.f32.mrf.mxu0
        %v828 = vadd.f32 0.0, %v827
        %829 = vdwg.mxu0
        %v830 = vmax.f32 %v701, %v796
        %v831 = vmax.f32 %v702, %v798
        %v832 = vmax.f32 %v703, %v801
        %v833 = vmax.f32 %v704, %v803
        %v834 = vmax.f32 %v705, %v806
        %v835 = vmax.f32 %v706, %v808
        %v836 = vmax.f32 %v707, %v811
        %v837 = vmax.f32 %v708, %v813
        %v838 = vmax.f32 %v709, %v816
        %v839 = vmax.f32 %v710, %v818
        %v840 = vmax.f32 %v711, %v821
        %v841 = vmax.f32 %v712, %v823
        %v842 = vmax.f32 %v713, %v826
        %v843 = vmax.f32 %v714, %v828
        %s844 = scalar_lea.vmem %s432, 168 [#allocation2]
        %v845 = vld [vmem:[%s844] sm:$0xf]
        %v846 = vld [vmem:[%s844 + $0x4] sm:$0xf]
        %v847 = vld [vmem:[%s844 + $0x8] sm:$0xf]
        %v848 = vld [vmem:[%s844 + $0xc] sm:$0xf]
        %v849 = vld [vmem:[%s844 + $0x10] sm:$0xf]
        %v850 = vld [vmem:[%s844 + $0x14] sm:$0xf]
        %v851 = vld [vmem:[%s844 + $0x18] sm:$0xf]
        %v852 = vld [vmem:[%s844 + $0x1c] sm:$0xf]
        %v853 = vld [vmem:[%s844 + $0x20] sm:$0xf]
        %v854 = vld [vmem:[%s844 + $0x24] sm:$0xf]
        %v855 = vld [vmem:[%s844 + $0x28] sm:$0xf]
        %v856 = vld [vmem:[%s844 + $0x2c] sm:$0xf]
        %v857 = vld [vmem:[%s844 + $0x30] sm:$0xf]
        %v858 = vld [vmem:[%s844 + $0x34] sm:$0xf]
        %v873 = vunpack.c.l.b16 %v845
        %v874 = vunpack.c.l.b16 %v846
        %v875 = vunpack.c.l.b16 %v847
        %v876 = vunpack.c.l.b16 %v848
        %v877 = vunpack.c.l.b16 %v849
        %v878 = vunpack.c.l.b16 %v850
        %v879 = vunpack.c.l.b16 %v851
        %v880 = vunpack.c.l.b16 %v852
        %v881 = vunpack.c.l.b16 %v853
        %v882 = vunpack.c.l.b16 %v854
        %v883 = vunpack.c.l.b16 %v855
        %v884 = vunpack.c.l.b16 %v856
        %v885 = vunpack.c.l.b16 %v857
        %v886 = vunpack.c.l.b16 %v858
        %v887 = vpack.c.b16 %v874, %v873
        %v888 = vpack.c.b16 %v876, %v875
        %v889 = vpack.c.b16 %v878, %v877
        %v890 = vpack.c.b16 %v880, %v879
        %v891 = vpack.c.b16 %v882, %v881
        %v892 = vpack.c.b16 %v884, %v883
        %v893 = vpack.c.b16 %v886, %v885
        %v895 = vsel %vm520, %v887, 0
        %v898 = vsel %vm520, %v888, 0
        %v901 = vsel %vm520, %v889, 0
        %v904 = vsel %vm520, %v890, 0
        %v907 = vsel %vm520, %v891, 0
        %v910 = vsel %vm520, %v892, 0
        %v913 = vsel %vm520, %v893, 0
        %915 = vmatpush.bf16.msra.mxu0 0
        %916 = vmatpush.bf16.msra.mxu0 0
        %917 = vmatpush.bf16.msra.mxu0 0
        %918 = vmatpush.bf16.msra.mxu0 0
        %919 = vmatpush.bf16.msra.mxu0 0
        %920 = vmatpush.bf16.msra.mxu0 0
        %921 = vmatpush.bf16.msra.mxu0 0
        %922 = vmatpush.bf16.msra.mxu0 %v518
        %923 = vmatmul.bf16.gmra.mxu0 %v895
        %v924 = vpop.f32.mrf.mxu0
        %v925 = vadd.f32 0.0, %v924
        %v926 = vpop.f32.mrf.mxu0
        %v927 = vadd.f32 0.0, %v926
        %928 = vmatmul.bf16.gmra.mxu0 %v898
        %v929 = vpop.f32.mrf.mxu0
        %v930 = vadd.f32 0.0, %v929
        %v931 = vpop.f32.mrf.mxu0
        %v932 = vadd.f32 0.0, %v931
        %933 = vmatmul.bf16.gmra.mxu0 %v901
        %v934 = vpop.f32.mrf.mxu0
        %v935 = vadd.f32 0.0, %v934
        %v936 = vpop.f32.mrf.mxu0
        %v937 = vadd.f32 0.0, %v936
        %938 = vmatmul.bf16.gmra.mxu0 %v904
        %v939 = vpop.f32.mrf.mxu0
        %v940 = vadd.f32 0.0, %v939
        %v941 = vpop.f32.mrf.mxu0
        %v942 = vadd.f32 0.0, %v941
        %943 = vmatmul.bf16.gmra.mxu0 %v907
        %v944 = vpop.f32.mrf.mxu0
        %v945 = vadd.f32 0.0, %v944
        %v946 = vpop.f32.mrf.mxu0
        %v947 = vadd.f32 0.0, %v946
        %948 = vmatmul.bf16.gmra.mxu0 %v910
        %v949 = vpop.f32.mrf.mxu0
        %v950 = vadd.f32 0.0, %v949
        %v951 = vpop.f32.mrf.mxu0
        %v952 = vadd.f32 0.0, %v951
        %953 = vmatmul.bf16.gmra.mxu0 %v913
        %v954 = vpop.f32.mrf.mxu0
        %v955 = vadd.f32 0.0, %v954
        %v956 = vpop.f32.mrf.mxu0
        %v957 = vadd.f32 0.0, %v956
        %958 = vdwg.mxu0
        %v959 = vmax.f32 %v830, %v925
        %v960 = vmax.f32 %v831, %v927
        %v961 = vmax.f32 %v832, %v930
        %v962 = vmax.f32 %v833, %v932
        %v963 = vmax.f32 %v834, %v935
        %v964 = vmax.f32 %v835, %v937
        %v965 = vmax.f32 %v836, %v940
        %v966 = vmax.f32 %v837, %v942
        %v967 = vmax.f32 %v838, %v945
        %v968 = vmax.f32 %v839, %v947
        %v969 = vmax.f32 %v840, %v950
        %v970 = vmax.f32 %v841, %v952
        %v971 = vmax.f32 %v842, %v955
        %v972 = vmax.f32 %v843, %v957
        %v973 = vld [vmem:[%s2] sm:$0x1]
        %v975 = vperm.slane %v973, 0
        %v977 = vadd.f32 %v959, %v975
        %v978 = vadd.f32 %v960, %v975
        %v979 = vadd.f32 %v961, %v975
        %v980 = vadd.f32 %v962, %v975
        %v981 = vadd.f32 %v963, %v975
        %v982 = vadd.f32 %v964, %v975
        %v983 = vadd.f32 %v965, %v975
        %v984 = vadd.f32 %v966, %v975
        %v985 = vadd.f32 %v967, %v975
        %v986 = vadd.f32 %v968, %v975
        %v987 = vadd.f32 %v969, %v975
        %v988 = vadd.f32 %v970, %v975
        %v989 = vadd.f32 %v971, %v975
        %v990 = vadd.f32 %v972, %v975
        %v991 = vmax.f32 %v977, 0.0
        %v992 = vmax.f32 %v978, 0.0
        %v993 = vmax.f32 %v979, 0.0
        %v994 = vmax.f32 %v980, 0.0
        %v995 = vmax.f32 %v981, 0.0
        %v996 = vmax.f32 %v982, 0.0
        %v997 = vmax.f32 %v983, 0.0
        %v998 = vmax.f32 %v984, 0.0
        %v999 = vmax.f32 %v985, 0.0
        %v1000 = vmax.f32 %v986, 0.0
        %v1001 = vmax.f32 %v987, 0.0
        %v1002 = vmax.f32 %v988, 0.0
        %v1003 = vmax.f32 %v989, 0.0
        %v1004 = vmax.f32 %v990, 0.0
        %v1005 = vpack.c.bf16 %v991, %v991
        %v1006 = vpack.c.bf16 %v992, %v992
        %v1007 = vpack.c.bf16 %v993, %v993
        %v1008 = vpack.c.bf16 %v994, %v994
        %v1009 = vpack.c.bf16 %v995, %v995
        %v1010 = vpack.c.bf16 %v996, %v996
        %v1011 = vpack.c.bf16 %v997, %v997
        %v1012 = vpack.c.bf16 %v998, %v998
        %v1013 = vpack.c.bf16 %v999, %v999
        %v1014 = vpack.c.bf16 %v1000, %v1000
        %v1015 = vpack.c.bf16 %v1001, %v1001
        %v1016 = vpack.c.bf16 %v1002, %v1002
        %v1017 = vpack.c.bf16 %v1003, %v1003
        %v1018 = vpack.c.bf16 %v1004, %v1004
        %vm1019 = vcmask 257024
        %1020 = vst.msk [vmem:[%s451] sm:$0xf] %vm1019, %v1005
        %1021 = vst.msk [vmem:[%s451 + $0x4] sm:$0xf] %vm1019, %v1006
        %1022 = vst.msk [vmem:[%s451 + $0x8] sm:$0xf] %vm1019, %v1007
        %1023 = vst.msk [vmem:[%s451 + $0xc] sm:$0xf] %vm1019, %v1008
        %1024 = vst.msk [vmem:[%s451 + $0x10] sm:$0xf] %vm1019, %v1009
        %1025 = vst.msk [vmem:[%s451 + $0x14] sm:$0xf] %vm1019, %v1010
        %1026 = vst.msk [vmem:[%s451 + $0x18] sm:$0xf] %vm1019, %v1011
        %1027 = vst.msk [vmem:[%s451 + $0x1c] sm:$0xf] %vm1019, %v1012
        %1028 = vst.msk [vmem:[%s451 + $0x20] sm:$0xf] %vm1019, %v1013
        %1029 = vst.msk [vmem:[%s451 + $0x24] sm:$0xf] %vm1019, %v1014
        %1030 = vst.msk [vmem:[%s451 + $0x28] sm:$0xf] %vm1019, %v1015
        %1031 = vst.msk [vmem:[%s451 + $0x2c] sm:$0xf] %vm1019, %v1016
        %1032 = vst.msk [vmem:[%s451 + $0x30] sm:$0xf] %vm1019, %v1017
        %1033 = vst.msk [vmem:[%s451 + $0x34] sm:$0xf] %vm1019, %v1018
        %s1034 = sand.u32 %s90, 1
        %s1035 = sand.u32 %s90, 1
        %s1036 = smul.addr %s1035, 56
        %s1037 = scalar_lea.vmem [#allocation3], %s1036
        // Predicated region
        $region95: #{simple_cnn_forward.3} parent=89 // pred_check
          %p1038 = pneg %p100
        $region96: #{simple_cnn_forward.3} parent=89 // pred_check_branch
          %1040 = sbr.rel (%p1038) target = $region98
        $region97: #{simple_cnn_forward.3} parent=89 // pred_region
          %s1041 = smul.u32 14, %s14
          %s1042 = ssub.s32 49, %s1041
          %p1043 = scmp.lt.s32.totalorder %s1042, 14
          %s1044 = scalar_select %p1043, %s1042, 14
          %s1045 = smul.u32 4, %s1044
          %p1046 = scmp.ne.s32.totalorder 0, %s1045
          %s1047 = smul.addr %s1041, 4
          %s1048 = scalar_lea.vmem %s3, %s1047
          // Predicated region
          $region99: #{simple_cnn_forward.3} parent=97 // pred_check
            %p1049 = pneg %p1046
          $region100: #{simple_cnn_forward.3} parent=97 // pred_check_branch
            %1051 = sbr.rel (%p1049) target = $region102
          $region101: #{simple_cnn_forward.3} parent=97 // pred_region
            // Predicated region
            $region103: #{simple_cnn_forward.3} parent=101 // pred_check
              _
            $region104: #{simple_cnn_forward.3} parent=101 // pred_check_branch
              %1053 = sbr.rel target = $region106
            $region105: #{simple_cnn_forward.3} parent=101 // pred_region
              // Predicated region
              $region125: #{simple_cnn_forward.3} parent=105 // pred_check
                _
              $region126: #{simple_cnn_forward.3} parent=105 // pred_check_branch
                %1130 = sbr.rel (0) target = $region128
              $region127: #{simple_cnn_forward.3} parent=105 // pred_region
                %s1132 = ssub.s32 16, 1
                %s1133 = sdiv.u32.pop %s1044, 14
                %s1134 = srem.u32.pop %s1044, 14
                // While loop
                $region129: #{simple_cnn_forward.3} parent=127 // loop_pre_header
                  _
                $region130: #{simple_cnn_forward.3} parent=127 // loop_header
                  %s1136 = sphi 0, %s1138
                  %p1137 = scmp.ge.s32.totalorder %s1136, %s1133
                  %s1141 = sphi 0, %s1174
                  %s1142 = sphi %s1037, %s1177
                  %s1143 = sphi %s1048, %s1178
                $region131: #{simple_cnn_forward.3} parent=127 // loop_header_branch
                  %1140 = sbr.rel (%p1137) target = $region135
                $region132: #{simple_cnn_forward.3} parent=127 // loop_body
                  %v1144 = vld [vmem:[%s1142] sm:%s1132]
                  %1145 = vst [vmem:[%s1143] sm:%s1132] %v1144
                  %v1146 = vld [vmem:[%s1142 + $0x4] sm:%s1132]
                  %1147 = vst [vmem:[%s1143 + $0x4] sm:%s1132] %v1146
                  %v1148 = vld [vmem:[%s1142 + $0x8] sm:%s1132]
                  %1149 = vst [vmem:[%s1143 + $0x8] sm:%s1132] %v1148
                  %v1150 = vld [vmem:[%s1142 + $0xc] sm:%s1132]
                  %1151 = vst [vmem:[%s1143 + $0xc] sm:%s1132] %v1150
                  %v1152 = vld [vmem:[%s1142 + $0x10] sm:%s1132]
                  %1153 = vst [vmem:[%s1143 + $0x10] sm:%s1132] %v1152
                  %v1154 = vld [vmem:[%s1142 + $0x14] sm:%s1132]
                  %1155 = vst [vmem:[%s1143 + $0x14] sm:%s1132] %v1154
                  %v1156 = vld [vmem:[%s1142 + $0x18] sm:%s1132]
                  %1157 = vst [vmem:[%s1143 + $0x18] sm:%s1132] %v1156
                  %v1158 = vld [vmem:[%s1142 + $0x1c] sm:%s1132]
                  %1159 = vst [vmem:[%s1143 + $0x1c] sm:%s1132] %v1158
                  %v1160 = vld [vmem:[%s1142 + $0x20] sm:%s1132]
                  %1161 = vst [vmem:[%s1143 + $0x20] sm:%s1132] %v1160
                  %v1162 = vld [vmem:[%s1142 + $0x24] sm:%s1132]
                  %1163 = vst [vmem:[%s1143 + $0x24] sm:%s1132] %v1162
                  %v1164 = vld [vmem:[%s1142 + $0x28] sm:%s1132]
                  %1165 = vst [vmem:[%s1143 + $0x28] sm:%s1132] %v1164
                  %v1166 = vld [vmem:[%s1142 + $0x2c] sm:%s1132]
                  %1167 = vst [vmem:[%s1143 + $0x2c] sm:%s1132] %v1166
                  %v1168 = vld [vmem:[%s1142 + $0x30] sm:%s1132]
                  %1169 = vst [vmem:[%s1143 + $0x30] sm:%s1132] %v1168
                  %v1170 = vld [vmem:[%s1142 + $0x34] sm:%s1132]
                  %1171 = vst [vmem:[%s1143 + $0x34] sm:%s1132] %v1170
                  %s1172 = sadd.s32 1, %s1141
                  %p1173 = scmp.ge.s32.totalorder %s1172, %s1133
                  %s1174 = scalar_select %p1173, 0, %s1172
                  %s1175 = smul.u32 %s1174, 56
                  %s1176 = smul.u32 %s1174, 56
                  %s1177 = scalar_lea.vmem %s1037, %s1175 [#allocation3]
                  %s1178 = scalar_lea.vmem %s1048, %s1176
                $region133: #{simple_cnn_forward.3} parent=127 // loop_footer
                  %s1138 = sadd.s32 %s1136, 1
                $region134: #{simple_cnn_forward.3} parent=127 // loop_footer_branch
                  %1135 = sbr.rel target = $region130
                $region135: #{simple_cnn_forward.3} parent=127 // loop_exit
                  _
                %s1179 = sdiv.u32.pop %s1044, 14
                %s1180 = srem.u32.pop %s1044, 14
                %s1181 = smul.u32 %s1179, 14
                %s1182 = smul.u32 4, %s1181
                %s1183 = scalar_lea.vmem %s1037, %s1182 [#allocation3]
                %s1184 = smul.u32 4, %s1181
                %s1185 = scalar_lea.vmem %s1048, %s1184
                // While loop
                $region136: #{simple_cnn_forward.3} parent=127 // loop_pre_header
                  _
                $region137: #{simple_cnn_forward.3} parent=127 // loop_header
                  %s1187 = sphi 0, %s1189
                  %p1188 = scmp.ge.s32.totalorder %s1187, %s1180
                  %s1192 = sphi 0, %s1199
                  %s1193 = sphi %s1183, %s1202
                  %s1194 = sphi %s1185, %s1203
                $region138: #{simple_cnn_forward.3} parent=127 // loop_header_branch
                  %1191 = sbr.rel (%p1188) target = $region142
                $region139: #{simple_cnn_forward.3} parent=127 // loop_body
                  %v1195 = vld [vmem:[%s1193] sm:%s1132]
                  %1196 = vst [vmem:[%s1194] sm:%s1132] %v1195
                  %s1197 = sadd.s32 1, %s1192
                  %p1198 = scmp.ge.s32.totalorder %s1197, %s1180
                  %s1199 = scalar_select %p1198, 0, %s1197
                  %s1200 = smul.u32 %s1199, 4
                  %s1201 = smul.u32 %s1199, 4
                  %s1202 = scalar_lea.vmem %s1183, %s1200 [#allocation3]
                  %s1203 = scalar_lea.vmem %s1185, %s1201
                $region140: #{simple_cnn_forward.3} parent=127 // loop_footer
                  %s1189 = sadd.s32 %s1187, 1
                $region141: #{simple_cnn_forward.3} parent=127 // loop_footer_branch
                  %1186 = sbr.rel target = $region137
                $region142: #{simple_cnn_forward.3} parent=127 // loop_exit
                  _
              $region128: #{simple_cnn_forward.3} parent=105 // pred_fallthru
                _
            $region106: #{simple_cnn_forward.3} parent=101 // pred_fallthru
              _
            // Predicated region
            $region107: #{simple_cnn_forward.3} parent=101 // pred_check
              _
            $region108: #{simple_cnn_forward.3} parent=101 // pred_check_branch
              %1055 = sbr.rel (0) target = $region110
            $region109: #{simple_cnn_forward.3} parent=101 // pred_region
              %s1057 = ssub.s32 16, 1
              %s1058 = sdiv.u32.pop %s1044, 14
              %s1059 = srem.u32.pop %s1044, 14
              // While loop
              $region111: #{simple_cnn_forward.3} parent=109 // loop_pre_header
                _
              $region112: #{simple_cnn_forward.3} parent=109 // loop_header
                %s1061 = sphi 0, %s1063
                %p1062 = scmp.ge.s32.totalorder %s1061, %s1058
                %s1066 = sphi 0, %s1099
                %s1067 = sphi %s1037, %s1102
                %s1068 = sphi %s1048, %s1103
              $region113: #{simple_cnn_forward.3} parent=109 // loop_header_branch
                %1065 = sbr.rel (%p1062) target = $region117
              $region114: #{simple_cnn_forward.3} parent=109 // loop_body
                %v1069 = vld [vmem:[%s1067] sm:%s1057]
                %1070 = vst [vmem:[%s1068] sm:%s1057] %v1069
                %v1071 = vld [vmem:[%s1067 + $0x4] sm:%s1057]
                %1072 = vst [vmem:[%s1068 + $0x4] sm:%s1057] %v1071
                %v1073 = vld [vmem:[%s1067 + $0x8] sm:%s1057]
                %1074 = vst [vmem:[%s1068 + $0x8] sm:%s1057] %v1073
                %v1075 = vld [vmem:[%s1067 + $0xc] sm:%s1057]
                %1076 = vst [vmem:[%s1068 + $0xc] sm:%s1057] %v1075
                %v1077 = vld [vmem:[%s1067 + $0x10] sm:%s1057]
                %1078 = vst [vmem:[%s1068 + $0x10] sm:%s1057] %v1077
                %v1079 = vld [vmem:[%s1067 + $0x14] sm:%s1057]
                %1080 = vst [vmem:[%s1068 + $0x14] sm:%s1057] %v1079
                %v1081 = vld [vmem:[%s1067 + $0x18] sm:%s1057]
                %1082 = vst [vmem:[%s1068 + $0x18] sm:%s1057] %v1081
                %v1083 = vld [vmem:[%s1067 + $0x1c] sm:%s1057]
                %1084 = vst [vmem:[%s1068 + $0x1c] sm:%s1057] %v1083
                %v1085 = vld [vmem:[%s1067 + $0x20] sm:%s1057]
                %1086 = vst [vmem:[%s1068 + $0x20] sm:%s1057] %v1085
                %v1087 = vld [vmem:[%s1067 + $0x24] sm:%s1057]
                %1088 = vst [vmem:[%s1068 + $0x24] sm:%s1057] %v1087
                %v1089 = vld [vmem:[%s1067 + $0x28] sm:%s1057]
                %1090 = vst [vmem:[%s1068 + $0x28] sm:%s1057] %v1089
                %v1091 = vld [vmem:[%s1067 + $0x2c] sm:%s1057]
                %1092 = vst [vmem:[%s1068 + $0x2c] sm:%s1057] %v1091
                %v1093 = vld [vmem:[%s1067 + $0x30] sm:%s1057]
                %1094 = vst [vmem:[%s1068 + $0x30] sm:%s1057] %v1093
                %v1095 = vld [vmem:[%s1067 + $0x34] sm:%s1057]
                %1096 = vst [vmem:[%s1068 + $0x34] sm:%s1057] %v1095
                %s1097 = sadd.s32 1, %s1066
                %p1098 = scmp.ge.s32.totalorder %s1097, %s1058
                %s1099 = scalar_select %p1098, 0, %s1097
                %s1100 = smul.u32 %s1099, 56
                %s1101 = smul.u32 %s1099, 56
                %s1102 = scalar_lea.vmem %s1037, %s1100 [#allocation3]
                %s1103 = scalar_lea.vmem %s1048, %s1101
              $region115: #{simple_cnn_forward.3} parent=109 // loop_footer
                %s1063 = sadd.s32 %s1061, 1
              $region116: #{simple_cnn_forward.3} parent=109 // loop_footer_branch
                %1060 = sbr.rel target = $region112
              $region117: #{simple_cnn_forward.3} parent=109 // loop_exit
                _
              %s1104 = sdiv.u32.pop %s1044, 14
              %s1105 = srem.u32.pop %s1044, 14
              %s1106 = smul.u32 %s1104, 14
              %s1107 = smul.u32 4, %s1106
              %s1108 = scalar_lea.vmem %s1037, %s1107 [#allocation3]
              %s1109 = smul.u32 4, %s1106
              %s1110 = scalar_lea.vmem %s1048, %s1109
              // While loop
              $region118: #{simple_cnn_forward.3} parent=109 // loop_pre_header
                _
              $region119: #{simple_cnn_forward.3} parent=109 // loop_header
                %s1112 = sphi 0, %s1114
                %p1113 = scmp.ge.s32.totalorder %s1112, %s1105
                %s1117 = sphi 0, %s1124
                %s1118 = sphi %s1108, %s1127
                %s1119 = sphi %s1110, %s1128
              $region120: #{simple_cnn_forward.3} parent=109 // loop_header_branch
                %1116 = sbr.rel (%p1113) target = $region124
              $region121: #{simple_cnn_forward.3} parent=109 // loop_body
                %v1120 = vld [vmem:[%s1118] sm:%s1057]
                %1121 = vst [vmem:[%s1119] sm:%s1057] %v1120
                %s1122 = sadd.s32 1, %s1117
                %p1123 = scmp.ge.s32.totalorder %s1122, %s1105
                %s1124 = scalar_select %p1123, 0, %s1122
                %s1125 = smul.u32 %s1124, 4
                %s1126 = smul.u32 %s1124, 4
                %s1127 = scalar_lea.vmem %s1108, %s1125 [#allocation3]
                %s1128 = scalar_lea.vmem %s1110, %s1126
              $region122: #{simple_cnn_forward.3} parent=109 // loop_footer
                %s1114 = sadd.s32 %s1112, 1
              $region123: #{simple_cnn_forward.3} parent=109 // loop_footer_branch
                %1111 = sbr.rel target = $region119
              $region124: #{simple_cnn_forward.3} parent=109 // loop_exit
                _
            $region110: #{simple_cnn_forward.3} parent=101 // pred_fallthru
              _
          $region102: #{simple_cnn_forward.3} parent=97 // pred_fallthru
            _
          %1204 = vnop
        $region98: #{simple_cnn_forward.3} parent=89 // pred_fallthru
          _
      $region90: #{simple_cnn_forward.3} parent=5 // pred_fallthru
        _
      %p1205 = scmp.le.s32.totalorder 2, %s9
      // Predicated region
      $region143: #{simple_cnn_forward.3} parent=5 // pred_check
        %p1206 = pneg %p1205
      $region144: #{simple_cnn_forward.3} parent=5 // pred_check_branch
        %1208 = sbr.rel (%p1206) target = $region146
      $region145: #{simple_cnn_forward.3} parent=5 // pred_region
        %s1209 = ssub.s32 %s9, 2
        // Predicated region
        $region147: #{simple_cnn_forward.3} parent=145 // pred_check
          %p1210 = pneg %p106
        $region148: #{simple_cnn_forward.3} parent=145 // pred_check_branch
          %1212 = sbr.rel (%p1210) target = $region150
        $region149: #{simple_cnn_forward.3} parent=145 // pred_region
          %s1213 = sand.u32 %s91, 1
          %s1214 = sand.u32 %s91, 1
          %s1215 = smul.addr %s1214, 56
          %s1216 = scalar_lea.vmem [#allocation3], %s1215
        $region150: #{simple_cnn_forward.3} parent=145 // pred_fallthru
          _
      $region146: #{simple_cnn_forward.3} parent=5 // pred_fallthru
        _
    $region6: #{simple_cnn_forward.3} parent=1 // loop_footer
      %s13 = sadd.s32 1, %s9
    $region7: #{simple_cnn_forward.3} parent=1 // loop_footer_branch
      %8 = sbr.rel target = $region3
    $region8: #{simple_cnn_forward.3} parent=1 // loop_exit
      _

// kernel: simple_cnn_forward.5
$region0: #{simple_cnn_forward.5}
  #allocation0 [shape = 'u32[]', space=smem, size = 0x4, offset = 0x4, fixed_abs, tag = 'smem constant byte address 0x4 - core index']
  #allocation1 [shape = 'u32[72,128]{1,0:T(1,128)}', space=vmem, size = 0x9000, scoped, tag = 'internal scratch']
  %s0 = inlined_call_operand.vmem [shape: bf16[2,3136], index: 0, kind: input, shape index: {}]
  %s1 = inlined_call_operand.vmem [shape: bf16[3136,128], index: 1, kind: input, shape index: {}]
  %s2 = inlined_call_operand.vmem [shape: f32[1,128], index: 2, kind: input, shape index: {}]
  %s3 = inlined_call_operand.vmem [shape: bf16[128,128], index: 3, kind: input, shape index: {}]
  %s4 = inlined_call_operand.vmem [shape: f32[1,128], index: 4, kind: input, shape index: {}]
  %s5 = inlined_call_operand.hbm [shape: f32[2,128], index: 5, kind: output, shape index: {}]
  %s6 = sld [smem:[#allocation0]]
  $region30: #{simple_cnn_forward.5} parent=0
    _
  %s8 = ssub.s32 1, %s6
  %s9 = scalar_select 0, %s8, %s6
  $region1: #{simple_cnn_forward.5} parent=0
    #allocation2 [shape = 'u8[8192]{0}', space=vmem, size = 0x2000, scoped, tag = 'output window, operand 0, single buffered']
    #allocation3 [shape = 's32[1]{0}', space=sflag, size = 0x4, scoped, tag = 'scoped memory for simple_cnn_forward.5']
    %10 = vsyncpa [#allocation3], 0
    // Predicated region
    $region2: #{simple_cnn_forward.5} parent=1 // pred_check
      _
    $region3: #{simple_cnn_forward.5} parent=1 // pred_check_branch
      %12 = sbr.rel (0) target = $region5
    $region4: #{simple_cnn_forward.5} parent=1 // pred_region
      _
    $region5: #{simple_cnn_forward.5} parent=1 // pred_fallthru
      _
    // Predicated region
    $region6: #{simple_cnn_forward.5} parent=1 // pred_check
      _
    $region7: #{simple_cnn_forward.5} parent=1 // pred_check_branch
      %14 = sbr.rel (0) target = $region9
    $region8: #{simple_cnn_forward.5} parent=1 // pred_region
      _
    $region9: #{simple_cnn_forward.5} parent=1 // pred_fallthru
      _
    // Predicated region
    $region10: #{simple_cnn_forward.5} parent=1 // pred_check
      _
    $region11: #{simple_cnn_forward.5} parent=1 // pred_check_branch
      %16 = sbr.rel (0) target = $region13
    $region12: #{simple_cnn_forward.5} parent=1 // pred_region
      _
    $region13: #{simple_cnn_forward.5} parent=1 // pred_fallthru
      _
    // Predicated region
    $region14: #{simple_cnn_forward.5} parent=1 // pred_check
      _
    $region15: #{simple_cnn_forward.5} parent=1 // pred_check_branch
      %18 = sbr.rel (0) target = $region17
    $region16: #{simple_cnn_forward.5} parent=1 // pred_region
      _
    $region17: #{simple_cnn_forward.5} parent=1 // pred_fallthru
      _
    // Predicated region
    $region18: #{simple_cnn_forward.5} parent=1 // pred_check
      _
    $region19: #{simple_cnn_forward.5} parent=1 // pred_check_branch
      %20 = sbr.rel (0) target = $region21
    $region20: #{simple_cnn_forward.5} parent=1 // pred_region
      _
    $region21: #{simple_cnn_forward.5} parent=1 // pred_fallthru
      _
    %v22 = vld [vmem:[%s0] sm:$0xff]
    %v23 = vld [vmem:[%s0 + $0x8] sm:$0xff]
    %v24 = vld [vmem:[%s0 + $0x10] sm:$0xff]
    %v25 = vld [vmem:[%s0 + $0x18] sm:$0x1]
    %v26 = vld [vmem:[%s0 + $0x19] sm:$0xff]
    %v27 = vld [vmem:[%s0 + $0x21] sm:$0xff]
    %v28 = vld [vmem:[%s0 + $0x29] sm:$0xff]
    %v29 = vld [vmem:[%s0 + $0x31] sm:$0x1]
    %v30 = vld [vmem:[%s0 + $0x32] sm:$0xff]
    %v31 = vld [vmem:[%s0 + $0x3a] sm:$0xff]
    %v32 = vld [vmem:[%s0 + $0x42] sm:$0xff]
    %v33 = vld [vmem:[%s0 + $0x4a] sm:$0x1]
    %v34 = vld [vmem:[%s0 + $0x4b] sm:$0xff]
    %v35 = vld [vmem:[%s0 + $0x53] sm:$0xff]
    %v36 = vld [vmem:[%s0 + $0x5b] sm:$0xff]
    %v37 = vld [vmem:[%s0 + $0x63] sm:$0x1]
    %v38 = vld [vmem:[%s0 + $0x64] sm:$0xff]
    %v39 = vld [vmem:[%s0 + $0x6c] sm:$0xff]
    %v40 = vld [vmem:[%s0 + $0x74] sm:$0xff]
    %v41 = vld [vmem:[%s0 + $0x7c] sm:$0x1]
    %v42 = vld [vmem:[%s0 + $0x7d] sm:$0xff]
    %v43 = vld [vmem:[%s0 + $0x85] sm:$0xff]
    %v44 = vld [vmem:[%s0 + $0x8d] sm:$0xff]
    %v45 = vld [vmem:[%s0 + $0x95] sm:$0x1]
    %v46 = vld [vmem:[%s0 + $0x96] sm:$0xff]
    %v47 = vld [vmem:[%s0 + $0x9e] sm:$0xff]
    %v48 = vld [vmem:[%s0 + $0xa6] sm:$0xff]
    %v49 = vld [vmem:[%s0 + $0xae] sm:$0x1]
    %v50 = vld [vmem:[%s0 + $0xaf] sm:$0xff]
    %v51 = vld [vmem:[%s0 + $0xb7] sm:$0xff]
    %v52 = vld [vmem:[%s0 + $0xbf] sm:$0xff]
    %v53 = vld [vmem:[%s0 + $0xc7] sm:$0x1]
    %v54 = vld [vmem:[%s1] sm:$0xf]
    %v55 = vld [vmem:[%s1 + $0x4] sm:$0xf]
    %v56 = vld [vmem:[%s1 + $0x8] sm:$0xf]
    %v57 = vld [vmem:[%s1 + $0xc] sm:$0xf]
    %v58 = vld [vmem:[%s1 + $0x10] sm:$0xf]
    %v59 = vld [vmem:[%s1 + $0x14] sm:$0xf]
    %v60 = vld [vmem:[%s1 + $0x18] sm:$0xf]
    %v61 = vld [vmem:[%s1 + $0x1c] sm:$0xf]
    %v62 = vld [vmem:[%s1 + $0x20] sm:$0xf]
    %v63 = vld [vmem:[%s1 + $0x24] sm:$0xf]
    %v64 = vld [vmem:[%s1 + $0x28] sm:$0xf]
    %v65 = vld [vmem:[%s1 + $0x2c] sm:$0xf]
    %v66 = vld [vmem:[%s1 + $0x30] sm:$0xf]
    %v67 = vld [vmem:[%s1 + $0x34] sm:$0xf]
    %v68 = vld [vmem:[%s1 + $0x38] sm:$0xf]
    %v69 = vld [vmem:[%s1 + $0x3c] sm:$0xf]
    %v70 = vld [vmem:[%s1 + $0x40] sm:$0xf]
    %v71 = vld [vmem:[%s1 + $0x44] sm:$0xf]
    %v72 = vld [vmem:[%s1 + $0x48] sm:$0xf]
    %v73 = vld [vmem:[%s1 + $0x4c] sm:$0xf]
    %v74 = vld [vmem:[%s1 + $0x50] sm:$0xf]
    %v75 = vld [vmem:[%s1 + $0x54] sm:$0xf]
    %v76 = vld [vmem:[%s1 + $0x58] sm:$0xf]
    %v77 = vld [vmem:[%s1 + $0x5c] sm:$0xf]
    %v78 = vld [vmem:[%s1 + $0x60] sm:$0xf]
    %v79 = vld [vmem:[%s1 + $0x64] sm:$0xf]
    %v80 = vld [vmem:[%s1 + $0x68] sm:$0xf]
    %v81 = vld [vmem:[%s1 + $0x6c] sm:$0xf]
    %v82 = vld [vmem:[%s1 + $0x70] sm:$0xf]
    %v83 = vld [vmem:[%s1 + $0x74] sm:$0xf]
    %v84 = vld [vmem:[%s1 + $0x78] sm:$0xf]
    %v85 = vld [vmem:[%s1 + $0x7c] sm:$0xf]
    %v86 = vld [vmem:[%s1 + $0x80] sm:$0xf]
    %v87 = vld [vmem:[%s1 + $0x84] sm:$0xf]
    %v88 = vld [vmem:[%s1 + $0x88] sm:$0xf]
    %v89 = vld [vmem:[%s1 + $0x8c] sm:$0xf]
    %v90 = vld [vmem:[%s1 + $0x90] sm:$0xf]
    %v91 = vld [vmem:[%s1 + $0x94] sm:$0xf]
    %v92 = vld [vmem:[%s1 + $0x98] sm:$0xf]
    %v93 = vld [vmem:[%s1 + $0x9c] sm:$0xf]
    %v94 = vld [vmem:[%s1 + $0xa0] sm:$0xf]
    %v95 = vld [vmem:[%s1 + $0xa4] sm:$0xf]
    %v96 = vld [vmem:[%s1 + $0xa8] sm:$0xf]
    %v97 = vld [vmem:[%s1 + $0xac] sm:$0xf]
    %v98 = vld [vmem:[%s1 + $0xb0] sm:$0xf]
    %v99 = vld [vmem:[%s1 + $0xb4] sm:$0xf]
    %v100 = vld [vmem:[%s1 + $0xb8] sm:$0xf]
    %v101 = vld [vmem:[%s1 + $0xbc] sm:$0xf]
    %v102 = vld [vmem:[%s1 + $0xc0] sm:$0xf]
    %v103 = vld [vmem:[%s1 + $0xc4] sm:$0xf]
    %v104 = vld [vmem:[%s1 + $0xc8] sm:$0xf]
    %v105 = vld [vmem:[%s1 + $0xcc] sm:$0xf]
    %v106 = vld [vmem:[%s1 + $0xd0] sm:$0xf]
    %v107 = vld [vmem:[%s1 + $0xd4] sm:$0xf]
    %v108 = vld [vmem:[%s1 + $0xd8] sm:$0xf]
    %v109 = vld [vmem:[%s1 + $0xdc] sm:$0xf]
    %v110 = vld [vmem:[%s1 + $0xe0] sm:$0xf]
    %v111 = vld [vmem:[%s1 + $0xe4] sm:$0xf]
    %v112 = vld [vmem:[%s1 + $0xe8] sm:$0xf]
    %v113 = vld [vmem:[%s1 + $0xec] sm:$0xf]
    %v114 = vld [vmem:[%s1 + $0xf0] sm:$0xf]
    %v115 = vld [vmem:[%s1 + $0xf4] sm:$0xf]
    %v116 = vld [vmem:[%s1 + $0xf8] sm:$0xf]
    %v117 = vld [vmem:[%s1 + $0xfc] sm:$0xf]
    %v118 = vld [vmem:[%s1 + $0x100] sm:$0xf]
    %v119 = vld [vmem:[%s1 + $0x104] sm:$0xf]
    %v120 = vld [vmem:[%s1 + $0x108] sm:$0xf]
    %v121 = vld [vmem:[%s1 + $0x10c] sm:$0xf]
    %v122 = vld [vmem:[%s1 + $0x110] sm:$0xf]
    %v123 = vld [vmem:[%s1 + $0x114] sm:$0xf]
    %v124 = vld [vmem:[%s1 + $0x118] sm:$0xf]
    %v125 = vld [vmem:[%s1 + $0x11c] sm:$0xf]
    %v126 = vld [vmem:[%s1 + $0x120] sm:$0xf]
    %v127 = vld [vmem:[%s1 + $0x124] sm:$0xf]
    %v128 = vld [vmem:[%s1 + $0x128] sm:$0xf]
    %v129 = vld [vmem:[%s1 + $0x12c] sm:$0xf]
    %v130 = vld [vmem:[%s1 + $0x130] sm:$0xf]
    %v131 = vld [vmem:[%s1 + $0x134] sm:$0xf]
    %v132 = vld [vmem:[%s1 + $0x138] sm:$0xf]
    %v133 = vld [vmem:[%s1 + $0x13c] sm:$0xf]
    %v134 = vld [vmem:[%s1 + $0x140] sm:$0xf]
    %v135 = vld [vmem:[%s1 + $0x144] sm:$0xf]
    %v136 = vld [vmem:[%s1 + $0x148] sm:$0xf]
    %v137 = vld [vmem:[%s1 + $0x14c] sm:$0xf]
    %v138 = vld [vmem:[%s1 + $0x150] sm:$0xf]
    %v139 = vld [vmem:[%s1 + $0x154] sm:$0xf]
    %v140 = vld [vmem:[%s1 + $0x158] sm:$0xf]
    %v141 = vld [vmem:[%s1 + $0x15c] sm:$0xf]
    %v142 = vld [vmem:[%s1 + $0x160] sm:$0xf]
    %v143 = vld [vmem:[%s1 + $0x164] sm:$0xf]
    %v144 = vld [vmem:[%s1 + $0x168] sm:$0xf]
    %v145 = vld [vmem:[%s1 + $0x16c] sm:$0xf]
    %v146 = vld [vmem:[%s1 + $0x170] sm:$0xf]
    %v147 = vld [vmem:[%s1 + $0x174] sm:$0xf]
    %v148 = vld [vmem:[%s1 + $0x178] sm:$0xf]
    %v149 = vld [vmem:[%s1 + $0x17c] sm:$0xf]
    %v150 = vld [vmem:[%s1 + $0x180] sm:$0xf]
    %v151 = vld [vmem:[%s1 + $0x184] sm:$0xf]
    %v152 = vld [vmem:[%s1 + $0x188] sm:$0xf]
    %v153 = vld [vmem:[%s1 + $0x18c] sm:$0xf]
    %v154 = vld [vmem:[%s1 + $0x190] sm:$0xf]
    %v155 = vld [vmem:[%s1 + $0x194] sm:$0xf]
    %v156 = vld [vmem:[%s1 + $0x198] sm:$0xf]
    %v157 = vld [vmem:[%s1 + $0x19c] sm:$0xf]
    %v158 = vld [vmem:[%s1 + $0x1a0] sm:$0xf]
    %v159 = vld [vmem:[%s1 + $0x1a4] sm:$0xf]
    %v160 = vld [vmem:[%s1 + $0x1a8] sm:$0xf]
    %v161 = vld [vmem:[%s1 + $0x1ac] sm:$0xf]
    %v162 = vld [vmem:[%s1 + $0x1b0] sm:$0xf]
    %v163 = vld [vmem:[%s1 + $0x1b4] sm:$0xf]
    %v164 = vld [vmem:[%s1 + $0x1b8] sm:$0xf]
    %v165 = vld [vmem:[%s1 + $0x1bc] sm:$0xf]
    %v166 = vld [vmem:[%s1 + $0x1c0] sm:$0xf]
    %v167 = vld [vmem:[%s1 + $0x1c4] sm:$0xf]
    %v168 = vld [vmem:[%s1 + $0x1c8] sm:$0xf]
    %v169 = vld [vmem:[%s1 + $0x1cc] sm:$0xf]
    %v170 = vld [vmem:[%s1 + $0x1d0] sm:$0xf]
    %v171 = vld [vmem:[%s1 + $0x1d4] sm:$0xf]
    %v172 = vld [vmem:[%s1 + $0x1d8] sm:$0xf]
    %v173 = vld [vmem:[%s1 + $0x1dc] sm:$0xf]
    %v174 = vld [vmem:[%s1 + $0x1e0] sm:$0xf]
    %v175 = vld [vmem:[%s1 + $0x1e4] sm:$0xf]
    %v176 = vld [vmem:[%s1 + $0x1e8] sm:$0xf]
    %v177 = vld [vmem:[%s1 + $0x1ec] sm:$0xf]
    %v178 = vld [vmem:[%s1 + $0x1f0] sm:$0xf]
    %v179 = vld [vmem:[%s1 + $0x1f4] sm:$0xf]
    %v180 = vld [vmem:[%s1 + $0x1f8] sm:$0xf]
    %v181 = vld [vmem:[%s1 + $0x1fc] sm:$0xf]
    %v182 = vld [vmem:[%s1 + $0x200] sm:$0xf]
    %v183 = vld [vmem:[%s1 + $0x204] sm:$0xf]
    %v184 = vld [vmem:[%s1 + $0x208] sm:$0xf]
    %v185 = vld [vmem:[%s1 + $0x20c] sm:$0xf]
    %v186 = vld [vmem:[%s1 + $0x210] sm:$0xf]
    %v187 = vld [vmem:[%s1 + $0x214] sm:$0xf]
    %v188 = vld [vmem:[%s1 + $0x218] sm:$0xf]
    %v189 = vld [vmem:[%s1 + $0x21c] sm:$0xf]
    %v190 = vld [vmem:[%s1 + $0x220] sm:$0xf]
    %v191 = vld [vmem:[%s1 + $0x224] sm:$0xf]
    %v192 = vld [vmem:[%s1 + $0x228] sm:$0xf]
    %v193 = vld [vmem:[%s1 + $0x22c] sm:$0xf]
    %v194 = vld [vmem:[%s1 + $0x230] sm:$0xf]
    %v195 = vld [vmem:[%s1 + $0x234] sm:$0xf]
    %v196 = vld [vmem:[%s1 + $0x238] sm:$0xf]
    %v197 = vld [vmem:[%s1 + $0x23c] sm:$0xf]
    %v198 = vld [vmem:[%s1 + $0x240] sm:$0xf]
    %v199 = vld [vmem:[%s1 + $0x244] sm:$0xf]
    %v200 = vld [vmem:[%s1 + $0x248] sm:$0xf]
    %v201 = vld [vmem:[%s1 + $0x24c] sm:$0xf]
    %v202 = vld [vmem:[%s1 + $0x250] sm:$0xf]
    %v203 = vld [vmem:[%s1 + $0x254] sm:$0xf]
    %v204 = vld [vmem:[%s1 + $0x258] sm:$0xf]
    %v205 = vld [vmem:[%s1 + $0x25c] sm:$0xf]
    %v206 = vld [vmem:[%s1 + $0x260] sm:$0xf]
    %v207 = vld [vmem:[%s1 + $0x264] sm:$0xf]
    %v208 = vld [vmem:[%s1 + $0x268] sm:$0xf]
    %v209 = vld [vmem:[%s1 + $0x26c] sm:$0xf]
    %v210 = vld [vmem:[%s1 + $0x270] sm:$0xf]
    %v211 = vld [vmem:[%s1 + $0x274] sm:$0xf]
    %v212 = vld [vmem:[%s1 + $0x278] sm:$0xf]
    %v213 = vld [vmem:[%s1 + $0x27c] sm:$0xf]
    %v214 = vld [vmem:[%s1 + $0x280] sm:$0xf]
    %v215 = vld [vmem:[%s1 + $0x284] sm:$0xf]
    %v216 = vld [vmem:[%s1 + $0x288] sm:$0xf]
    %v217 = vld [vmem:[%s1 + $0x28c] sm:$0xf]
    %v218 = vld [vmem:[%s1 + $0x290] sm:$0xf]
    %v219 = vld [vmem:[%s1 + $0x294] sm:$0xf]
    %v220 = vld [vmem:[%s1 + $0x298] sm:$0xf]
    %v221 = vld [vmem:[%s1 + $0x29c] sm:$0xf]
    %v222 = vld [vmem:[%s1 + $0x2a0] sm:$0xf]
    %v223 = vld [vmem:[%s1 + $0x2a4] sm:$0xf]
    %v224 = vld [vmem:[%s1 + $0x2a8] sm:$0xf]
    %v225 = vld [vmem:[%s1 + $0x2ac] sm:$0xf]
    %v226 = vld [vmem:[%s1 + $0x2b0] sm:$0xf]
    %v227 = vld [vmem:[%s1 + $0x2b4] sm:$0xf]
    %v228 = vld [vmem:[%s1 + $0x2b8] sm:$0xf]
    %v229 = vld [vmem:[%s1 + $0x2bc] sm:$0xf]
    %v230 = vld [vmem:[%s1 + $0x2c0] sm:$0xf]
    %v231 = vld [vmem:[%s1 + $0x2c4] sm:$0xf]
    %v232 = vld [vmem:[%s1 + $0x2c8] sm:$0xf]
    %v233 = vld [vmem:[%s1 + $0x2cc] sm:$0xf]
    %v234 = vld [vmem:[%s1 + $0x2d0] sm:$0xf]
    %v235 = vld [vmem:[%s1 + $0x2d4] sm:$0xf]
    %v236 = vld [vmem:[%s1 + $0x2d8] sm:$0xf]
    %v237 = vld [vmem:[%s1 + $0x2dc] sm:$0xf]
    %v238 = vld [vmem:[%s1 + $0x2e0] sm:$0xf]
    %v239 = vld [vmem:[%s1 + $0x2e4] sm:$0xf]
    %v240 = vld [vmem:[%s1 + $0x2e8] sm:$0xf]
    %v241 = vld [vmem:[%s1 + $0x2ec] sm:$0xf]
    %v242 = vld [vmem:[%s1 + $0x2f0] sm:$0xf]
    %v243 = vld [vmem:[%s1 + $0x2f4] sm:$0xf]
    %v244 = vld [vmem:[%s1 + $0x2f8] sm:$0xf]
    %v245 = vld [vmem:[%s1 + $0x2fc] sm:$0xf]
    %v246 = vld [vmem:[%s1 + $0x300] sm:$0xf]
    %v247 = vld [vmem:[%s1 + $0x304] sm:$0xf]
    %v248 = vld [vmem:[%s1 + $0x308] sm:$0xf]
    %v249 = vld [vmem:[%s1 + $0x30c] sm:$0xf]
    %v250 = vld [vmem:[%s1 + $0x310] sm:$0xf]
    %v251 = vld [vmem:[%s1 + $0x314] sm:$0xf]
    %v252 = vld [vmem:[%s1 + $0x318] sm:$0xf]
    %v253 = vld [vmem:[%s1 + $0x31c] sm:$0xf]
    %v254 = vld [vmem:[%s1 + $0x320] sm:$0xf]
    %v255 = vld [vmem:[%s1 + $0x324] sm:$0xf]
    %v256 = vld [vmem:[%s1 + $0x328] sm:$0xf]
    %v257 = vld [vmem:[%s1 + $0x32c] sm:$0xf]
    %v258 = vld [vmem:[%s1 + $0x330] sm:$0xf]
    %v259 = vld [vmem:[%s1 + $0x334] sm:$0xf]
    %v260 = vld [vmem:[%s1 + $0x338] sm:$0xf]
    %v261 = vld [vmem:[%s1 + $0x33c] sm:$0xf]
    %v262 = vld [vmem:[%s1 + $0x340] sm:$0xf]
    %v263 = vld [vmem:[%s1 + $0x344] sm:$0xf]
    %v264 = vld [vmem:[%s1 + $0x348] sm:$0xf]
    %v265 = vld [vmem:[%s1 + $0x34c] sm:$0xf]
    %v266 = vld [vmem:[%s1 + $0x350] sm:$0xf]
    %v267 = vld [vmem:[%s1 + $0x354] sm:$0xf]
    %v268 = vld [vmem:[%s1 + $0x358] sm:$0xf]
    %v269 = vld [vmem:[%s1 + $0x35c] sm:$0xf]
    %v270 = vld [vmem:[%s1 + $0x360] sm:$0xf]
    %v271 = vld [vmem:[%s1 + $0x364] sm:$0xf]
    %v272 = vld [vmem:[%s1 + $0x368] sm:$0xf]
    %v273 = vld [vmem:[%s1 + $0x36c] sm:$0xf]
    %v274 = vld [vmem:[%s1 + $0x370] sm:$0xf]
    %v275 = vld [vmem:[%s1 + $0x374] sm:$0xf]
    %v276 = vld [vmem:[%s1 + $0x378] sm:$0xf]
    %v277 = vld [vmem:[%s1 + $0x37c] sm:$0xf]
    %v278 = vld [vmem:[%s1 + $0x380] sm:$0xf]
    %v279 = vld [vmem:[%s1 + $0x384] sm:$0xf]
    %v280 = vld [vmem:[%s1 + $0x388] sm:$0xf]
    %v281 = vld [vmem:[%s1 + $0x38c] sm:$0xf]
    %v282 = vld [vmem:[%s1 + $0x390] sm:$0xf]
    %v283 = vld [vmem:[%s1 + $0x394] sm:$0xf]
    %v284 = vld [vmem:[%s1 + $0x398] sm:$0xf]
    %v285 = vld [vmem:[%s1 + $0x39c] sm:$0xf]
    %v286 = vld [vmem:[%s1 + $0x3a0] sm:$0xf]
    %v287 = vld [vmem:[%s1 + $0x3a4] sm:$0xf]
    %v288 = vld [vmem:[%s1 + $0x3a8] sm:$0xf]
    %v289 = vld [vmem:[%s1 + $0x3ac] sm:$0xf]
    %v290 = vld [vmem:[%s1 + $0x3b0] sm:$0xf]
    %v291 = vld [vmem:[%s1 + $0x3b4] sm:$0xf]
    %v292 = vld [vmem:[%s1 + $0x3b8] sm:$0xf]
    %v293 = vld [vmem:[%s1 + $0x3bc] sm:$0xf]
    %v294 = vld [vmem:[%s1 + $0x3c0] sm:$0xf]
    %v295 = vld [vmem:[%s1 + $0x3c4] sm:$0xf]
    %v296 = vld [vmem:[%s1 + $0x3c8] sm:$0xf]
    %v297 = vld [vmem:[%s1 + $0x3cc] sm:$0xf]
    %v298 = vld [vmem:[%s1 + $0x3d0] sm:$0xf]
    %v299 = vld [vmem:[%s1 + $0x3d4] sm:$0xf]
    %v300 = vld [vmem:[%s1 + $0x3d8] sm:$0xf]
    %v301 = vld [vmem:[%s1 + $0x3dc] sm:$0xf]
    %v302 = vld [vmem:[%s1 + $0x3e0] sm:$0xf]
    %v303 = vld [vmem:[%s1 + $0x3e4] sm:$0xf]
    %v304 = vld [vmem:[%s1 + $0x3e8] sm:$0xf]
    %v305 = vld [vmem:[%s1 + $0x3ec] sm:$0xf]
    %v306 = vld [vmem:[%s1 + $0x3f0] sm:$0xf]
    %v307 = vld [vmem:[%s1 + $0x3f4] sm:$0xf]
    %v308 = vld [vmem:[%s1 + $0x3f8] sm:$0xf]
    %v309 = vld [vmem:[%s1 + $0x3fc] sm:$0xf]
    %v310 = vld [vmem:[%s1 + $0x400] sm:$0xf]
    %v311 = vld [vmem:[%s1 + $0x404] sm:$0xf]
    %v312 = vld [vmem:[%s1 + $0x408] sm:$0xf]
    %v313 = vld [vmem:[%s1 + $0x40c] sm:$0xf]
    %v314 = vld [vmem:[%s1 + $0x410] sm:$0xf]
    %v315 = vld [vmem:[%s1 + $0x414] sm:$0xf]
    %v316 = vld [vmem:[%s1 + $0x418] sm:$0xf]
    %v317 = vld [vmem:[%s1 + $0x41c] sm:$0xf]
    %v318 = vld [vmem:[%s1 + $0x420] sm:$0xf]
    %v319 = vld [vmem:[%s1 + $0x424] sm:$0xf]
    %v320 = vld [vmem:[%s1 + $0x428] sm:$0xf]
    %v321 = vld [vmem:[%s1 + $0x42c] sm:$0xf]
    %v322 = vld [vmem:[%s1 + $0x430] sm:$0xf]
    %v323 = vld [vmem:[%s1 + $0x434] sm:$0xf]
    %v324 = vld [vmem:[%s1 + $0x438] sm:$0xf]
    %v325 = vld [vmem:[%s1 + $0x43c] sm:$0xf]
    %v326 = vld [vmem:[%s1 + $0x440] sm:$0xf]
    %v327 = vld [vmem:[%s1 + $0x444] sm:$0xf]
    %v328 = vld [vmem:[%s1 + $0x448] sm:$0xf]
    %v329 = vld [vmem:[%s1 + $0x44c] sm:$0xf]
    %v330 = vld [vmem:[%s1 + $0x450] sm:$0xf]
    %v331 = vld [vmem:[%s1 + $0x454] sm:$0xf]
    %v332 = vld [vmem:[%s1 + $0x458] sm:$0xf]
    %v333 = vld [vmem:[%s1 + $0x45c] sm:$0xf]
    %v334 = vld [vmem:[%s1 + $0x460] sm:$0xf]
    %v335 = vld [vmem:[%s1 + $0x464] sm:$0xf]
    %v336 = vld [vmem:[%s1 + $0x468] sm:$0xf]
    %v337 = vld [vmem:[%s1 + $0x46c] sm:$0xf]
    %v338 = vld [vmem:[%s1 + $0x470] sm:$0xf]
    %v339 = vld [vmem:[%s1 + $0x474] sm:$0xf]
    %v340 = vld [vmem:[%s1 + $0x478] sm:$0xf]
    %v341 = vld [vmem:[%s1 + $0x47c] sm:$0xf]
    %v342 = vld [vmem:[%s1 + $0x480] sm:$0xf]
    %v343 = vld [vmem:[%s1 + $0x484] sm:$0xf]
    %v344 = vld [vmem:[%s1 + $0x488] sm:$0xf]
    %v345 = vld [vmem:[%s1 + $0x48c] sm:$0xf]
    %v346 = vld [vmem:[%s1 + $0x490] sm:$0xf]
    %v347 = vld [vmem:[%s1 + $0x494] sm:$0xf]
    %v348 = vld [vmem:[%s1 + $0x498] sm:$0xf]
    %v349 = vld [vmem:[%s1 + $0x49c] sm:$0xf]
    %v350 = vld [vmem:[%s1 + $0x4a0] sm:$0xf]
    %v351 = vld [vmem:[%s1 + $0x4a4] sm:$0xf]
    %v352 = vld [vmem:[%s1 + $0x4a8] sm:$0xf]
    %v353 = vld [vmem:[%s1 + $0x4ac] sm:$0xf]
    %v354 = vld [vmem:[%s1 + $0x4b0] sm:$0xf]
    %v355 = vld [vmem:[%s1 + $0x4b4] sm:$0xf]
    %v356 = vld [vmem:[%s1 + $0x4b8] sm:$0xf]
    %v357 = vld [vmem:[%s1 + $0x4bc] sm:$0xf]
    %v358 = vld [vmem:[%s1 + $0x4c0] sm:$0xf]
    %v359 = vld [vmem:[%s1 + $0x4c4] sm:$0xf]
    %v360 = vld [vmem:[%s1 + $0x4c8] sm:$0xf]
    %v361 = vld [vmem:[%s1 + $0x4cc] sm:$0xf]
    %v362 = vld [vmem:[%s1 + $0x4d0] sm:$0xf]
    %v363 = vld [vmem:[%s1 + $0x4d4] sm:$0xf]
    %v364 = vld [vmem:[%s1 + $0x4d8] sm:$0xf]
    %v365 = vld [vmem:[%s1 + $0x4dc] sm:$0xf]
    %v366 = vld [vmem:[%s1 + $0x4e0] sm:$0xf]
    %v367 = vld [vmem:[%s1 + $0x4e4] sm:$0xf]
    %v368 = vld [vmem:[%s1 + $0x4e8] sm:$0xf]
    %v369 = vld [vmem:[%s1 + $0x4ec] sm:$0xf]
    %v370 = vld [vmem:[%s1 + $0x4f0] sm:$0xf]
    %v371 = vld [vmem:[%s1 + $0x4f4] sm:$0xf]
    %v372 = vld [vmem:[%s1 + $0x4f8] sm:$0xf]
    %v373 = vld [vmem:[%s1 + $0x4fc] sm:$0xf]
    %v374 = vld [vmem:[%s1 + $0x500] sm:$0xf]
    %v375 = vld [vmem:[%s1 + $0x504] sm:$0xf]
    %v376 = vld [vmem:[%s1 + $0x508] sm:$0xf]
    %v377 = vld [vmem:[%s1 + $0x50c] sm:$0xf]
    %v378 = vld [vmem:[%s1 + $0x510] sm:$0xf]
    %v379 = vld [vmem:[%s1 + $0x514] sm:$0xf]
    %v380 = vld [vmem:[%s1 + $0x518] sm:$0xf]
    %v381 = vld [vmem:[%s1 + $0x51c] sm:$0xf]
    %v382 = vld [vmem:[%s1 + $0x520] sm:$0xf]
    %v383 = vld [vmem:[%s1 + $0x524] sm:$0xf]
    %v384 = vld [vmem:[%s1 + $0x528] sm:$0xf]
    %v385 = vld [vmem:[%s1 + $0x52c] sm:$0xf]
    %v386 = vld [vmem:[%s1 + $0x530] sm:$0xf]
    %v387 = vld [vmem:[%s1 + $0x534] sm:$0xf]
    %v388 = vld [vmem:[%s1 + $0x538] sm:$0xf]
    %v389 = vld [vmem:[%s1 + $0x53c] sm:$0xf]
    %v390 = vld [vmem:[%s1 + $0x540] sm:$0xf]
    %v391 = vld [vmem:[%s1 + $0x544] sm:$0xf]
    %v392 = vld [vmem:[%s1 + $0x548] sm:$0xf]
    %v393 = vld [vmem:[%s1 + $0x54c] sm:$0xf]
    %v394 = vld [vmem:[%s1 + $0x550] sm:$0xf]
    %v395 = vld [vmem:[%s1 + $0x554] sm:$0xf]
    %v396 = vld [vmem:[%s1 + $0x558] sm:$0xf]
    %v397 = vld [vmem:[%s1 + $0x55c] sm:$0xf]
    %v398 = vld [vmem:[%s1 + $0x560] sm:$0xf]
    %v399 = vld [vmem:[%s1 + $0x564] sm:$0xf]
    %v400 = vld [vmem:[%s1 + $0x568] sm:$0xf]
    %v401 = vld [vmem:[%s1 + $0x56c] sm:$0xf]
    %v402 = vld [vmem:[%s1 + $0x570] sm:$0xf]
    %v403 = vld [vmem:[%s1 + $0x574] sm:$0xf]
    %v404 = vld [vmem:[%s1 + $0x578] sm:$0xf]
    %v405 = vld [vmem:[%s1 + $0x57c] sm:$0xf]
    %v406 = vld [vmem:[%s1 + $0x580] sm:$0xf]
    %v407 = vld [vmem:[%s1 + $0x584] sm:$0xf]
    %v408 = vld [vmem:[%s1 + $0x588] sm:$0xf]
    %v409 = vld [vmem:[%s1 + $0x58c] sm:$0xf]
    %v410 = vld [vmem:[%s1 + $0x590] sm:$0xf]
    %v411 = vld [vmem:[%s1 + $0x594] sm:$0xf]
    %v412 = vld [vmem:[%s1 + $0x598] sm:$0xf]
    %v413 = vld [vmem:[%s1 + $0x59c] sm:$0xf]
    %v414 = vld [vmem:[%s1 + $0x5a0] sm:$0xf]
    %v415 = vld [vmem:[%s1 + $0x5a4] sm:$0xf]
    %v416 = vld [vmem:[%s1 + $0x5a8] sm:$0xf]
    %v417 = vld [vmem:[%s1 + $0x5ac] sm:$0xf]
    %v418 = vld [vmem:[%s1 + $0x5b0] sm:$0xf]
    %v419 = vld [vmem:[%s1 + $0x5b4] sm:$0xf]
    %v420 = vld [vmem:[%s1 + $0x5b8] sm:$0xf]
    %v421 = vld [vmem:[%s1 + $0x5bc] sm:$0xf]
    %v422 = vld [vmem:[%s1 + $0x5c0] sm:$0xf]
    %v423 = vld [vmem:[%s1 + $0x5c4] sm:$0xf]
    %v424 = vld [vmem:[%s1 + $0x5c8] sm:$0xf]
    %v425 = vld [vmem:[%s1 + $0x5cc] sm:$0xf]
    %v426 = vld [vmem:[%s1 + $0x5d0] sm:$0xf]
    %v427 = vld [vmem:[%s1 + $0x5d4] sm:$0xf]
    %v428 = vld [vmem:[%s1 + $0x5d8] sm:$0xf]
    %v429 = vld [vmem:[%s1 + $0x5dc] sm:$0xf]
    %v430 = vld [vmem:[%s1 + $0x5e0] sm:$0xf]
    %v431 = vld [vmem:[%s1 + $0x5e4] sm:$0xf]
    %v432 = vld [vmem:[%s1 + $0x5e8] sm:$0xf]
    %v433 = vld [vmem:[%s1 + $0x5ec] sm:$0xf]
    %v434 = vld [vmem:[%s1 + $0x5f0] sm:$0xf]
    %v435 = vld [vmem:[%s1 + $0x5f4] sm:$0xf]
    %v436 = vld [vmem:[%s1 + $0x5f8] sm:$0xf]
    %v437 = vld [vmem:[%s1 + $0x5fc] sm:$0xf]
    %v438 = vld [vmem:[%s1 + $0x600] sm:$0xf]
    %v439 = vld [vmem:[%s1 + $0x604] sm:$0xf]
    %v440 = vld [vmem:[%s1 + $0x608] sm:$0xf]
    %v441 = vld [vmem:[%s1 + $0x60c] sm:$0xf]
    %v442 = vld [vmem:[%s1 + $0x610] sm:$0xf]
    %v443 = vld [vmem:[%s1 + $0x614] sm:$0xf]
    %v444 = vld [vmem:[%s1 + $0x618] sm:$0xf]
    %v445 = vld [vmem:[%s1 + $0x61c] sm:$0xf]
    %v446 = vld [vmem:[%s2] sm:$0x1]
    %v448 = vperm.slane %v446, 0
    %451 = vst [vmem:[#allocation1] ss:$9 sm:$0xff] %v22
    %s453 = scalar_lea.vmem [#allocation1], 1
    %454 = vst [vmem:[%s453] ss:$9 sm:$0xff] %v26
    %s456 = scalar_lea.vmem [#allocation1], 2
    %457 = vst [vmem:[%s456] ss:$9 sm:$0xff] %v30
    %s459 = scalar_lea.vmem [#allocation1], 3
    %460 = vst [vmem:[%s459] ss:$9 sm:$0xff] %v34
    %s462 = scalar_lea.vmem [#allocation1], 4
    %463 = vst [vmem:[%s462] ss:$9 sm:$0xff] %v38
    %s465 = scalar_lea.vmem [#allocation1], 5
    %466 = vst [vmem:[%s465] ss:$9 sm:$0xff] %v42
    %s468 = scalar_lea.vmem [#allocation1], 6
    %469 = vst [vmem:[%s468] ss:$9 sm:$0xff] %v46
    %s471 = scalar_lea.vmem [#allocation1], 7
    %472 = vst [vmem:[%s471] ss:$9 sm:$0xff] %v50
    %v473 = vld [vmem:[#allocation1] sm:$0xff]
    %v474 = vld [vmem:[#allocation1 + $0x9] sm:$0xff]
    %v475 = vld [vmem:[#allocation1 + $0x12] sm:$0xff]
    %v476 = vld [vmem:[#allocation1 + $0x1b] sm:$0xff]
    %v477 = vld [vmem:[#allocation1 + $0x24] sm:$0xff]
    %v478 = vld [vmem:[#allocation1 + $0x2d] sm:$0xff]
    %v479 = vld [vmem:[#allocation1 + $0x36] sm:$0xff]
    %v480 = vld [vmem:[#allocation1 + $0x3f] sm:$0xff]
    %482 = vst [vmem:[#allocation1] ss:$9 sm:$0xff] %v23
    %484 = vst [vmem:[%s453] ss:$9 sm:$0xff] %v27
    %486 = vst [vmem:[%s456] ss:$9 sm:$0xff] %v31
    %488 = vst [vmem:[%s459] ss:$9 sm:$0xff] %v35
    %490 = vst [vmem:[%s462] ss:$9 sm:$0xff] %v39
    %492 = vst [vmem:[%s465] ss:$9 sm:$0xff] %v43
    %494 = vst [vmem:[%s468] ss:$9 sm:$0xff] %v47
    %496 = vst [vmem:[%s471] ss:$9 sm:$0xff] %v51
    %v497 = vld [vmem:[#allocation1] sm:$0xff]
    %v498 = vld [vmem:[#allocation1 + $0x9] sm:$0xff]
    %v499 = vld [vmem:[#allocation1 + $0x12] sm:$0xff]
    %v500 = vld [vmem:[#allocation1 + $0x1b] sm:$0xff]
    %v501 = vld [vmem:[#allocation1 + $0x24] sm:$0xff]
    %v502 = vld [vmem:[#allocation1 + $0x2d] sm:$0xff]
    %v503 = vld [vmem:[#allocation1 + $0x36] sm:$0xff]
    %v504 = vld [vmem:[#allocation1 + $0x3f] sm:$0xff]
    %506 = vst [vmem:[#allocation1] ss:$9 sm:$0xff] %v24
    %508 = vst [vmem:[%s453] ss:$9 sm:$0xff] %v28
    %510 = vst [vmem:[%s456] ss:$9 sm:$0xff] %v32
    %512 = vst [vmem:[%s459] ss:$9 sm:$0xff] %v36
    %514 = vst [vmem:[%s462] ss:$9 sm:$0xff] %v40
    %516 = vst [vmem:[%s465] ss:$9 sm:$0xff] %v44
    %518 = vst [vmem:[%s468] ss:$9 sm:$0xff] %v48
    %520 = vst [vmem:[%s471] ss:$9 sm:$0xff] %v52
    %v521 = vld [vmem:[#allocation1] sm:$0xff]
    %v522 = vld [vmem:[#allocation1 + $0x9] sm:$0xff]
    %v523 = vld [vmem:[#allocation1 + $0x12] sm:$0xff]
    %v524 = vld [vmem:[#allocation1 + $0x1b] sm:$0xff]
    %v525 = vld [vmem:[#allocation1 + $0x24] sm:$0xff]
    %v526 = vld [vmem:[#allocation1 + $0x2d] sm:$0xff]
    %v527 = vld [vmem:[#allocation1 + $0x36] sm:$0xff]
    %v528 = vld [vmem:[#allocation1 + $0x3f] sm:$0xff]
    %530 = vst [vmem:[#allocation1] ss:$9 sm:$0xff] %v25
    %532 = vst [vmem:[%s453] ss:$9 sm:$0xff] %v29
    %534 = vst [vmem:[%s456] ss:$9 sm:$0xff] %v33
    %536 = vst [vmem:[%s459] ss:$9 sm:$0xff] %v37
    %538 = vst [vmem:[%s462] ss:$9 sm:$0xff] %v41
    %540 = vst [vmem:[%s465] ss:$9 sm:$0xff] %v45
    %542 = vst [vmem:[%s468] ss:$9 sm:$0xff] %v49
    %544 = vst [vmem:[%s471] ss:$9 sm:$0xff] %v53
    %v545 = vld [vmem:[#allocation1] sm:$0xff]
    %v962 = vunpack.c.l.b16 %v54
    %v963 = vunpack.c.l.b16 %v55
    %v964 = vunpack.c.l.b16 %v56
    %v965 = vunpack.c.l.b16 %v57
    %v966 = vunpack.c.l.b16 %v58
    %v967 = vunpack.c.l.b16 %v59
    %v968 = vunpack.c.l.b16 %v60
    %v969 = vunpack.c.l.b16 %v61
    %v970 = vunpack.c.l.b16 %v62
    %v971 = vunpack.c.l.b16 %v63
    %v972 = vunpack.c.l.b16 %v64
    %v973 = vunpack.c.l.b16 %v65
    %v974 = vunpack.c.l.b16 %v66
    %v975 = vunpack.c.l.b16 %v67
    %v976 = vunpack.c.l.b16 %v68
    %v977 = vunpack.c.l.b16 %v69
    %v978 = vunpack.c.l.b16 %v70
    %v979 = vunpack.c.l.b16 %v71
    %v980 = vunpack.c.l.b16 %v72
    %v981 = vunpack.c.l.b16 %v73
    %v982 = vunpack.c.l.b16 %v74
    %v983 = vunpack.c.l.b16 %v75
    %v984 = vunpack.c.l.b16 %v76
    %v985 = vunpack.c.l.b16 %v77
    %v986 = vunpack.c.l.b16 %v78
    %v987 = vunpack.c.l.b16 %v79
    %v988 = vunpack.c.l.b16 %v80
    %v989 = vunpack.c.l.b16 %v81
    %v990 = vunpack.c.l.b16 %v82
    %v991 = vunpack.c.l.b16 %v83
    %v992 = vunpack.c.l.b16 %v84
    %v993 = vunpack.c.l.b16 %v85
    %v994 = vunpack.c.l.b16 %v86
    %v995 = vunpack.c.l.b16 %v87
    %v996 = vunpack.c.l.b16 %v88
    %v997 = vunpack.c.l.b16 %v89
    %v998 = vunpack.c.l.b16 %v90
    %v999 = vunpack.c.l.b16 %v91
    %v1000 = vunpack.c.l.b16 %v92
    %v1001 = vunpack.c.l.b16 %v93
    %v1002 = vunpack.c.l.b16 %v94
    %v1003 = vunpack.c.l.b16 %v95
    %v1004 = vunpack.c.l.b16 %v96
    %v1005 = vunpack.c.l.b16 %v97
    %v1006 = vunpack.c.l.b16 %v98
    %v1007 = vunpack.c.l.b16 %v99
    %v1008 = vunpack.c.l.b16 %v100
    %v1009 = vunpack.c.l.b16 %v101
    %v1010 = vunpack.c.l.b16 %v102
    %v1011 = vunpack.c.l.b16 %v103
    %v1012 = vunpack.c.l.b16 %v104
    %v1013 = vunpack.c.l.b16 %v105
    %v1014 = vunpack.c.l.b16 %v106
    %v1015 = vunpack.c.l.b16 %v107
    %v1016 = vunpack.c.l.b16 %v108
    %v1017 = vunpack.c.l.b16 %v109
    %v1018 = vunpack.c.l.b16 %v110
    %v1019 = vunpack.c.l.b16 %v111
    %v1020 = vunpack.c.l.b16 %v112
    %v1021 = vunpack.c.l.b16 %v113
    %v1022 = vunpack.c.l.b16 %v114
    %v1023 = vunpack.c.l.b16 %v115
    %v1024 = vunpack.c.l.b16 %v116
    %v1025 = vunpack.c.l.b16 %v117
    %v1026 = vunpack.c.l.b16 %v118
    %v1027 = vunpack.c.l.b16 %v119
    %v1028 = vunpack.c.l.b16 %v120
    %v1029 = vunpack.c.l.b16 %v121
    %v1030 = vunpack.c.l.b16 %v122
    %v1031 = vunpack.c.l.b16 %v123
    %v1032 = vunpack.c.l.b16 %v124
    %v1033 = vunpack.c.l.b16 %v125
    %v1034 = vunpack.c.l.b16 %v126
    %v1035 = vunpack.c.l.b16 %v127
    %v1036 = vunpack.c.l.b16 %v128
    %v1037 = vunpack.c.l.b16 %v129
    %v1038 = vunpack.c.l.b16 %v130
    %v1039 = vunpack.c.l.b16 %v131
    %v1040 = vunpack.c.l.b16 %v132
    %v1041 = vunpack.c.l.b16 %v133
    %v1042 = vunpack.c.l.b16 %v134
    %v1043 = vunpack.c.l.b16 %v135
    %v1044 = vunpack.c.l.b16 %v136
    %v1045 = vunpack.c.l.b16 %v137
    %v1046 = vunpack.c.l.b16 %v138
    %v1047 = vunpack.c.l.b16 %v139
    %v1048 = vunpack.c.l.b16 %v140
    %v1049 = vunpack.c.l.b16 %v141
    %v1050 = vunpack.c.l.b16 %v142
    %v1051 = vunpack.c.l.b16 %v143
    %v1052 = vunpack.c.l.b16 %v144
    %v1053 = vunpack.c.l.b16 %v145
    %v1054 = vunpack.c.l.b16 %v146
    %v1055 = vunpack.c.l.b16 %v147
    %v1056 = vunpack.c.l.b16 %v148
    %v1057 = vunpack.c.l.b16 %v149
    %v1058 = vunpack.c.l.b16 %v150
    %v1059 = vunpack.c.l.b16 %v151
    %v1060 = vunpack.c.l.b16 %v152
    %v1061 = vunpack.c.l.b16 %v153
    %v1062 = vunpack.c.l.b16 %v154
    %v1063 = vunpack.c.l.b16 %v155
    %v1064 = vunpack.c.l.b16 %v156
    %v1065 = vunpack.c.l.b16 %v157
    %v1066 = vunpack.c.l.b16 %v158
    %v1067 = vunpack.c.l.b16 %v159
    %v1068 = vunpack.c.l.b16 %v160
    %v1069 = vunpack.c.l.b16 %v161
    %v1070 = vunpack.c.l.b16 %v162
    %v1071 = vunpack.c.l.b16 %v163
    %v1072 = vunpack.c.l.b16 %v164
    %v1073 = vunpack.c.l.b16 %v165
    %v1074 = vunpack.c.l.b16 %v166
    %v1075 = vunpack.c.l.b16 %v167
    %v1076 = vunpack.c.l.b16 %v168
    %v1077 = vunpack.c.l.b16 %v169
    %v1078 = vunpack.c.l.b16 %v170
    %v1079 = vunpack.c.l.b16 %v171
    %v1080 = vunpack.c.l.b16 %v172
    %v1081 = vunpack.c.l.b16 %v173
    %v1082 = vunpack.c.l.b16 %v174
    %v1083 = vunpack.c.l.b16 %v175
    %v1084 = vunpack.c.l.b16 %v176
    %v1085 = vunpack.c.l.b16 %v177
    %v1086 = vunpack.c.l.b16 %v178
    %v1087 = vunpack.c.l.b16 %v179
    %v1088 = vunpack.c.l.b16 %v180
    %v1089 = vunpack.c.l.b16 %v181
    %v1090 = vunpack.c.l.b16 %v182
    %v1091 = vunpack.c.l.b16 %v183
    %v1092 = vunpack.c.l.b16 %v184
    %v1093 = vunpack.c.l.b16 %v185
    %v1094 = vunpack.c.l.b16 %v186
    %v1095 = vunpack.c.l.b16 %v187
    %v1096 = vunpack.c.l.b16 %v188
    %v1097 = vunpack.c.l.b16 %v189
    %v1098 = vunpack.c.l.b16 %v190
    %v1099 = vunpack.c.l.b16 %v191
    %v1100 = vunpack.c.l.b16 %v192
    %v1101 = vunpack.c.l.b16 %v193
    %v1102 = vunpack.c.l.b16 %v194
    %v1103 = vunpack.c.l.b16 %v195
    %v1104 = vunpack.c.l.b16 %v196
    %v1105 = vunpack.c.l.b16 %v197
    %v1106 = vunpack.c.l.b16 %v198
    %v1107 = vunpack.c.l.b16 %v199
    %v1108 = vunpack.c.l.b16 %v200
    %v1109 = vunpack.c.l.b16 %v201
    %v1110 = vunpack.c.l.b16 %v202
    %v1111 = vunpack.c.l.b16 %v203
    %v1112 = vunpack.c.l.b16 %v204
    %v1113 = vunpack.c.l.b16 %v205
    %v1114 = vunpack.c.l.b16 %v206
    %v1115 = vunpack.c.l.b16 %v207
    %v1116 = vunpack.c.l.b16 %v208
    %v1117 = vunpack.c.l.b16 %v209
    %v1118 = vunpack.c.l.b16 %v210
    %v1119 = vunpack.c.l.b16 %v211
    %v1120 = vunpack.c.l.b16 %v212
    %v1121 = vunpack.c.l.b16 %v213
    %v1122 = vunpack.c.l.b16 %v214
    %v1123 = vunpack.c.l.b16 %v215
    %v1124 = vunpack.c.l.b16 %v216
    %v1125 = vunpack.c.l.b16 %v217
    %v1126 = vunpack.c.l.b16 %v218
    %v1127 = vunpack.c.l.b16 %v219
    %v1128 = vunpack.c.l.b16 %v220
    %v1129 = vunpack.c.l.b16 %v221
    %v1130 = vunpack.c.l.b16 %v222
    %v1131 = vunpack.c.l.b16 %v223
    %v1132 = vunpack.c.l.b16 %v224
    %v1133 = vunpack.c.l.b16 %v225
    %v1134 = vunpack.c.l.b16 %v226
    %v1135 = vunpack.c.l.b16 %v227
    %v1136 = vunpack.c.l.b16 %v228
    %v1137 = vunpack.c.l.b16 %v229
    %v1138 = vunpack.c.l.b16 %v230
    %v1139 = vunpack.c.l.b16 %v231
    %v1140 = vunpack.c.l.b16 %v232
    %v1141 = vunpack.c.l.b16 %v233
    %v1142 = vunpack.c.l.b16 %v234
    %v1143 = vunpack.c.l.b16 %v235
    %v1144 = vunpack.c.l.b16 %v236
    %v1145 = vunpack.c.l.b16 %v237
    %v1146 = vunpack.c.l.b16 %v238
    %v1147 = vunpack.c.l.b16 %v239
    %v1148 = vunpack.c.l.b16 %v240
    %v1149 = vunpack.c.l.b16 %v241
    %v1150 = vunpack.c.l.b16 %v242
    %v1151 = vunpack.c.l.b16 %v243
    %v1152 = vunpack.c.l.b16 %v244
    %v1153 = vunpack.c.l.b16 %v245
    %v1154 = vunpack.c.l.b16 %v246
    %v1155 = vunpack.c.l.b16 %v247
    %v1156 = vunpack.c.l.b16 %v248
    %v1157 = vunpack.c.l.b16 %v249
    %v1158 = vunpack.c.l.b16 %v250
    %v1159 = vunpack.c.l.b16 %v251
    %v1160 = vunpack.c.l.b16 %v252
    %v1161 = vunpack.c.l.b16 %v253
    %v1162 = vunpack.c.l.b16 %v254
    %v1163 = vunpack.c.l.b16 %v255
    %v1164 = vunpack.c.l.b16 %v256
    %v1165 = vunpack.c.l.b16 %v257
    %v1166 = vunpack.c.l.b16 %v258
    %v1167 = vunpack.c.l.b16 %v259
    %v1168 = vunpack.c.l.b16 %v260
    %v1169 = vunpack.c.l.b16 %v261
    %v1170 = vunpack.c.l.b16 %v262
    %v1171 = vunpack.c.l.b16 %v263
    %v1172 = vunpack.c.l.b16 %v264
    %v1173 = vunpack.c.l.b16 %v265
    %v1174 = vunpack.c.l.b16 %v266
    %v1175 = vunpack.c.l.b16 %v267
    %v1176 = vunpack.c.l.b16 %v268
    %v1177 = vunpack.c.l.b16 %v269
    %v1178 = vunpack.c.l.b16 %v270
    %v1179 = vunpack.c.l.b16 %v271
    %v1180 = vunpack.c.l.b16 %v272
    %v1181 = vunpack.c.l.b16 %v273
    %v1182 = vunpack.c.l.b16 %v274
    %v1183 = vunpack.c.l.b16 %v275
    %v1184 = vunpack.c.l.b16 %v276
    %v1185 = vunpack.c.l.b16 %v277
    %v1186 = vunpack.c.l.b16 %v278
    %v1187 = vunpack.c.l.b16 %v279
    %v1188 = vunpack.c.l.b16 %v280
    %v1189 = vunpack.c.l.b16 %v281
    %v1190 = vunpack.c.l.b16 %v282
    %v1191 = vunpack.c.l.b16 %v283
    %v1192 = vunpack.c.l.b16 %v284
    %v1193 = vunpack.c.l.b16 %v285
    %v1194 = vunpack.c.l.b16 %v286
    %v1195 = vunpack.c.l.b16 %v287
    %v1196 = vunpack.c.l.b16 %v288
    %v1197 = vunpack.c.l.b16 %v289
    %v1198 = vunpack.c.l.b16 %v290
    %v1199 = vunpack.c.l.b16 %v291
    %v1200 = vunpack.c.l.b16 %v292
    %v1201 = vunpack.c.l.b16 %v293
    %v1202 = vunpack.c.l.b16 %v294
    %v1203 = vunpack.c.l.b16 %v295
    %v1204 = vunpack.c.l.b16 %v296
    %v1205 = vunpack.c.l.b16 %v297
    %v1206 = vunpack.c.l.b16 %v298
    %v1207 = vunpack.c.l.b16 %v299
    %v1208 = vunpack.c.l.b16 %v300
    %v1209 = vunpack.c.l.b16 %v301
    %v1210 = vunpack.c.l.b16 %v302
    %v1211 = vunpack.c.l.b16 %v303
    %v1212 = vunpack.c.l.b16 %v304
    %v1213 = vunpack.c.l.b16 %v305
    %v1214 = vunpack.c.l.b16 %v306
    %v1215 = vunpack.c.l.b16 %v307
    %v1216 = vunpack.c.l.b16 %v308
    %v1217 = vunpack.c.l.b16 %v309
    %v1218 = vunpack.c.l.b16 %v310
    %v1219 = vunpack.c.l.b16 %v311
    %v1220 = vunpack.c.l.b16 %v312
    %v1221 = vunpack.c.l.b16 %v313
    %v1222 = vunpack.c.l.b16 %v314
    %v1223 = vunpack.c.l.b16 %v315
    %v1224 = vunpack.c.l.b16 %v316
    %v1225 = vunpack.c.l.b16 %v317
    %v1226 = vunpack.c.l.b16 %v318
    %v1227 = vunpack.c.l.b16 %v319
    %v1228 = vunpack.c.l.b16 %v320
    %v1229 = vunpack.c.l.b16 %v321
    %v1230 = vunpack.c.l.b16 %v322
    %v1231 = vunpack.c.l.b16 %v323
    %v1232 = vunpack.c.l.b16 %v324
    %v1233 = vunpack.c.l.b16 %v325
    %v1234 = vunpack.c.l.b16 %v326
    %v1235 = vunpack.c.l.b16 %v327
    %v1236 = vunpack.c.l.b16 %v328
    %v1237 = vunpack.c.l.b16 %v329
    %v1238 = vunpack.c.l.b16 %v330
    %v1239 = vunpack.c.l.b16 %v331
    %v1240 = vunpack.c.l.b16 %v332
    %v1241 = vunpack.c.l.b16 %v333
    %v1242 = vunpack.c.l.b16 %v334
    %v1243 = vunpack.c.l.b16 %v335
    %v1244 = vunpack.c.l.b16 %v336
    %v1245 = vunpack.c.l.b16 %v337
    %v1246 = vunpack.c.l.b16 %v338
    %v1247 = vunpack.c.l.b16 %v339
    %v1248 = vunpack.c.l.b16 %v340
    %v1249 = vunpack.c.l.b16 %v341
    %v1250 = vunpack.c.l.b16 %v342
    %v1251 = vunpack.c.l.b16 %v343
    %v1252 = vunpack.c.l.b16 %v344
    %v1253 = vunpack.c.l.b16 %v345
    %v1254 = vunpack.c.l.b16 %v346
    %v1255 = vunpack.c.l.b16 %v347
    %v1256 = vunpack.c.l.b16 %v348
    %v1257 = vunpack.c.l.b16 %v349
    %v1258 = vunpack.c.l.b16 %v350
    %v1259 = vunpack.c.l.b16 %v351
    %v1260 = vunpack.c.l.b16 %v352
    %v1261 = vunpack.c.l.b16 %v353
    %v1262 = vunpack.c.l.b16 %v354
    %v1263 = vunpack.c.l.b16 %v355
    %v1264 = vunpack.c.l.b16 %v356
    %v1265 = vunpack.c.l.b16 %v357
    %v1266 = vunpack.c.l.b16 %v358
    %v1267 = vunpack.c.l.b16 %v359
    %v1268 = vunpack.c.l.b16 %v360
    %v1269 = vunpack.c.l.b16 %v361
    %v1270 = vunpack.c.l.b16 %v362
    %v1271 = vunpack.c.l.b16 %v363
    %v1272 = vunpack.c.l.b16 %v364
    %v1273 = vunpack.c.l.b16 %v365
    %v1274 = vunpack.c.l.b16 %v366
    %v1275 = vunpack.c.l.b16 %v367
    %v1276 = vunpack.c.l.b16 %v368
    %v1277 = vunpack.c.l.b16 %v369
    %v1278 = vunpack.c.l.b16 %v370
    %v1279 = vunpack.c.l.b16 %v371
    %v1280 = vunpack.c.l.b16 %v372
    %v1281 = vunpack.c.l.b16 %v373
    %v1282 = vunpack.c.l.b16 %v374
    %v1283 = vunpack.c.l.b16 %v375
    %v1284 = vunpack.c.l.b16 %v376
    %v1285 = vunpack.c.l.b16 %v377
    %v1286 = vunpack.c.l.b16 %v378
    %v1287 = vunpack.c.l.b16 %v379
    %v1288 = vunpack.c.l.b16 %v380
    %v1289 = vunpack.c.l.b16 %v381
    %v1290 = vunpack.c.l.b16 %v382
    %v1291 = vunpack.c.l.b16 %v383
    %v1292 = vunpack.c.l.b16 %v384
    %v1293 = vunpack.c.l.b16 %v385
    %v1294 = vunpack.c.l.b16 %v386
    %v1295 = vunpack.c.l.b16 %v387
    %v1296 = vunpack.c.l.b16 %v388
    %v1297 = vunpack.c.l.b16 %v389
    %v1298 = vunpack.c.l.b16 %v390
    %v1299 = vunpack.c.l.b16 %v391
    %v1300 = vunpack.c.l.b16 %v392
    %v1301 = vunpack.c.l.b16 %v393
    %v1302 = vunpack.c.l.b16 %v394
    %v1303 = vunpack.c.l.b16 %v395
    %v1304 = vunpack.c.l.b16 %v396
    %v1305 = vunpack.c.l.b16 %v397
    %v1306 = vunpack.c.l.b16 %v398
    %v1307 = vunpack.c.l.b16 %v399
    %v1308 = vunpack.c.l.b16 %v400
    %v1309 = vunpack.c.l.b16 %v401
    %v1310 = vunpack.c.l.b16 %v402
    %v1311 = vunpack.c.l.b16 %v403
    %v1312 = vunpack.c.l.b16 %v404
    %v1313 = vunpack.c.l.b16 %v405
    %v1314 = vunpack.c.l.b16 %v406
    %v1315 = vunpack.c.l.b16 %v407
    %v1316 = vunpack.c.l.b16 %v408
    %v1317 = vunpack.c.l.b16 %v409
    %v1318 = vunpack.c.l.b16 %v410
    %v1319 = vunpack.c.l.b16 %v411
    %v1320 = vunpack.c.l.b16 %v412
    %v1321 = vunpack.c.l.b16 %v413
    %v1322 = vunpack.c.l.b16 %v414
    %v1323 = vunpack.c.l.b16 %v415
    %v1324 = vunpack.c.l.b16 %v416
    %v1325 = vunpack.c.l.b16 %v417
    %v1326 = vunpack.c.l.b16 %v418
    %v1327 = vunpack.c.l.b16 %v419
    %v1328 = vunpack.c.l.b16 %v420
    %v1329 = vunpack.c.l.b16 %v421
    %v1330 = vunpack.c.l.b16 %v422
    %v1331 = vunpack.c.l.b16 %v423
    %v1332 = vunpack.c.l.b16 %v424
    %v1333 = vunpack.c.l.b16 %v425
    %v1334 = vunpack.c.l.b16 %v426
    %v1335 = vunpack.c.l.b16 %v427
    %v1336 = vunpack.c.l.b16 %v428
    %v1337 = vunpack.c.l.b16 %v429
    %v1338 = vunpack.c.l.b16 %v430
    %v1339 = vunpack.c.l.b16 %v431
    %v1340 = vunpack.c.l.b16 %v432
    %v1341 = vunpack.c.l.b16 %v433
    %v1342 = vunpack.c.l.b16 %v434
    %v1343 = vunpack.c.l.b16 %v435
    %v1344 = vunpack.c.l.b16 %v436
    %v1345 = vunpack.c.l.b16 %v437
    %v1346 = vunpack.c.l.b16 %v438
    %v1347 = vunpack.c.l.b16 %v439
    %v1348 = vunpack.c.l.b16 %v440
    %v1349 = vunpack.c.l.b16 %v441
    %v1350 = vunpack.c.l.b16 %v442
    %v1351 = vunpack.c.l.b16 %v443
    %v1352 = vunpack.c.l.b16 %v444
    %v1353 = vunpack.c.l.b16 %v445
    %v1354 = vpack.c.b16 %v963, %v962
    %v1355 = vpack.c.b16 %v965, %v964
    %v1356 = vpack.c.b16 %v967, %v966
    %v1357 = vpack.c.b16 %v969, %v968
    %v1358 = vpack.c.b16 %v971, %v970
    %v1359 = vpack.c.b16 %v973, %v972
    %v1360 = vpack.c.b16 %v975, %v974
    %v1361 = vpack.c.b16 %v977, %v976
    %v1362 = vpack.c.b16 %v979, %v978
    %v1363 = vpack.c.b16 %v981, %v980
    %v1364 = vpack.c.b16 %v983, %v982
    %v1365 = vpack.c.b16 %v985, %v984
    %v1366 = vpack.c.b16 %v987, %v986
    %v1367 = vpack.c.b16 %v989, %v988
    %v1368 = vpack.c.b16 %v991, %v990
    %v1369 = vpack.c.b16 %v993, %v992
    %v1370 = vpack.c.b16 %v995, %v994
    %v1371 = vpack.c.b16 %v997, %v996
    %v1372 = vpack.c.b16 %v999, %v998
    %v1373 = vpack.c.b16 %v1001, %v1000
    %v1374 = vpack.c.b16 %v1003, %v1002
    %v1375 = vpack.c.b16 %v1005, %v1004
    %v1376 = vpack.c.b16 %v1007, %v1006
    %v1377 = vpack.c.b16 %v1009, %v1008
    %v1378 = vpack.c.b16 %v1011, %v1010
    %v1379 = vpack.c.b16 %v1013, %v1012
    %v1380 = vpack.c.b16 %v1015, %v1014
    %v1381 = vpack.c.b16 %v1017, %v1016
    %v1382 = vpack.c.b16 %v1019, %v1018
    %v1383 = vpack.c.b16 %v1021, %v1020
    %v1384 = vpack.c.b16 %v1023, %v1022
    %v1385 = vpack.c.b16 %v1025, %v1024
    %v1386 = vpack.c.b16 %v1027, %v1026
    %v1387 = vpack.c.b16 %v1029, %v1028
    %v1388 = vpack.c.b16 %v1031, %v1030
    %v1389 = vpack.c.b16 %v1033, %v1032
    %v1390 = vpack.c.b16 %v1035, %v1034
    %v1391 = vpack.c.b16 %v1037, %v1036
    %v1392 = vpack.c.b16 %v1039, %v1038
    %v1393 = vpack.c.b16 %v1041, %v1040
    %v1394 = vpack.c.b16 %v1043, %v1042
    %v1395 = vpack.c.b16 %v1045, %v1044
    %v1396 = vpack.c.b16 %v1047, %v1046
    %v1397 = vpack.c.b16 %v1049, %v1048
    %v1398 = vpack.c.b16 %v1051, %v1050
    %v1399 = vpack.c.b16 %v1053, %v1052
    %v1400 = vpack.c.b16 %v1055, %v1054
    %v1401 = vpack.c.b16 %v1057, %v1056
    %v1402 = vpack.c.b16 %v1059, %v1058
    %v1403 = vpack.c.b16 %v1061, %v1060
    %v1404 = vpack.c.b16 %v1063, %v1062
    %v1405 = vpack.c.b16 %v1065, %v1064
    %v1406 = vpack.c.b16 %v1067, %v1066
    %v1407 = vpack.c.b16 %v1069, %v1068
    %v1408 = vpack.c.b16 %v1071, %v1070
    %v1409 = vpack.c.b16 %v1073, %v1072
    %v1410 = vpack.c.b16 %v1075, %v1074
    %v1411 = vpack.c.b16 %v1077, %v1076
    %v1412 = vpack.c.b16 %v1079, %v1078
    %v1413 = vpack.c.b16 %v1081, %v1080
    %v1414 = vpack.c.b16 %v1083, %v1082
    %v1415 = vpack.c.b16 %v1085, %v1084
    %v1416 = vpack.c.b16 %v1087, %v1086
    %v1417 = vpack.c.b16 %v1089, %v1088
    %v1418 = vpack.c.b16 %v1091, %v1090
    %v1419 = vpack.c.b16 %v1093, %v1092
    %v1420 = vpack.c.b16 %v1095, %v1094
    %v1421 = vpack.c.b16 %v1097, %v1096
    %v1422 = vpack.c.b16 %v1099, %v1098
    %v1423 = vpack.c.b16 %v1101, %v1100
    %v1424 = vpack.c.b16 %v1103, %v1102
    %v1425 = vpack.c.b16 %v1105, %v1104
    %v1426 = vpack.c.b16 %v1107, %v1106
    %v1427 = vpack.c.b16 %v1109, %v1108
    %v1428 = vpack.c.b16 %v1111, %v1110
    %v1429 = vpack.c.b16 %v1113, %v1112
    %v1430 = vpack.c.b16 %v1115, %v1114
    %v1431 = vpack.c.b16 %v1117, %v1116
    %v1432 = vpack.c.b16 %v1119, %v1118
    %v1433 = vpack.c.b16 %v1121, %v1120
    %v1434 = vpack.c.b16 %v1123, %v1122
    %v1435 = vpack.c.b16 %v1125, %v1124
    %v1436 = vpack.c.b16 %v1127, %v1126
    %v1437 = vpack.c.b16 %v1129, %v1128
    %v1438 = vpack.c.b16 %v1131, %v1130
    %v1439 = vpack.c.b16 %v1133, %v1132
    %v1440 = vpack.c.b16 %v1135, %v1134
    %v1441 = vpack.c.b16 %v1137, %v1136
    %v1442 = vpack.c.b16 %v1139, %v1138
    %v1443 = vpack.c.b16 %v1141, %v1140
    %v1444 = vpack.c.b16 %v1143, %v1142
    %v1445 = vpack.c.b16 %v1145, %v1144
    %v1446 = vpack.c.b16 %v1147, %v1146
    %v1447 = vpack.c.b16 %v1149, %v1148
    %v1448 = vpack.c.b16 %v1151, %v1150
    %v1449 = vpack.c.b16 %v1153, %v1152
    %v1450 = vpack.c.b16 %v1155, %v1154
    %v1451 = vpack.c.b16 %v1157, %v1156
    %v1452 = vpack.c.b16 %v1159, %v1158
    %v1453 = vpack.c.b16 %v1161, %v1160
    %v1454 = vpack.c.b16 %v1163, %v1162
    %v1455 = vpack.c.b16 %v1165, %v1164
    %v1456 = vpack.c.b16 %v1167, %v1166
    %v1457 = vpack.c.b16 %v1169, %v1168
    %v1458 = vpack.c.b16 %v1171, %v1170
    %v1459 = vpack.c.b16 %v1173, %v1172
    %v1460 = vpack.c.b16 %v1175, %v1174
    %v1461 = vpack.c.b16 %v1177, %v1176
    %v1462 = vpack.c.b16 %v1179, %v1178
    %v1463 = vpack.c.b16 %v1181, %v1180
    %v1464 = vpack.c.b16 %v1183, %v1182
    %v1465 = vpack.c.b16 %v1185, %v1184
    %v1466 = vpack.c.b16 %v1187, %v1186
    %v1467 = vpack.c.b16 %v1189, %v1188
    %v1468 = vpack.c.b16 %v1191, %v1190
    %v1469 = vpack.c.b16 %v1193, %v1192
    %v1470 = vpack.c.b16 %v1195, %v1194
    %v1471 = vpack.c.b16 %v1197, %v1196
    %v1472 = vpack.c.b16 %v1199, %v1198
    %v1473 = vpack.c.b16 %v1201, %v1200
    %v1474 = vpack.c.b16 %v1203, %v1202
    %v1475 = vpack.c.b16 %v1205, %v1204
    %v1476 = vpack.c.b16 %v1207, %v1206
    %v1477 = vpack.c.b16 %v1209, %v1208
    %v1478 = vpack.c.b16 %v1211, %v1210
    %v1479 = vpack.c.b16 %v1213, %v1212
    %v1480 = vpack.c.b16 %v1215, %v1214
    %v1481 = vpack.c.b16 %v1217, %v1216
    %v1482 = vpack.c.b16 %v1219, %v1218
    %v1483 = vpack.c.b16 %v1221, %v1220
    %v1484 = vpack.c.b16 %v1223, %v1222
    %v1485 = vpack.c.b16 %v1225, %v1224
    %v1486 = vpack.c.b16 %v1227, %v1226
    %v1487 = vpack.c.b16 %v1229, %v1228
    %v1488 = vpack.c.b16 %v1231, %v1230
    %v1489 = vpack.c.b16 %v1233, %v1232
    %v1490 = vpack.c.b16 %v1235, %v1234
    %v1491 = vpack.c.b16 %v1237, %v1236
    %v1492 = vpack.c.b16 %v1239, %v1238
    %v1493 = vpack.c.b16 %v1241, %v1240
    %v1494 = vpack.c.b16 %v1243, %v1242
    %v1495 = vpack.c.b16 %v1245, %v1244
    %v1496 = vpack.c.b16 %v1247, %v1246
    %v1497 = vpack.c.b16 %v1249, %v1248
    %v1498 = vpack.c.b16 %v1251, %v1250
    %v1499 = vpack.c.b16 %v1253, %v1252
    %v1500 = vpack.c.b16 %v1255, %v1254
    %v1501 = vpack.c.b16 %v1257, %v1256
    %v1502 = vpack.c.b16 %v1259, %v1258
    %v1503 = vpack.c.b16 %v1261, %v1260
    %v1504 = vpack.c.b16 %v1263, %v1262
    %v1505 = vpack.c.b16 %v1265, %v1264
    %v1506 = vpack.c.b16 %v1267, %v1266
    %v1507 = vpack.c.b16 %v1269, %v1268
    %v1508 = vpack.c.b16 %v1271, %v1270
    %v1509 = vpack.c.b16 %v1273, %v1272
    %v1510 = vpack.c.b16 %v1275, %v1274
    %v1511 = vpack.c.b16 %v1277, %v1276
    %v1512 = vpack.c.b16 %v1279, %v1278
    %v1513 = vpack.c.b16 %v1281, %v1280
    %v1514 = vpack.c.b16 %v1283, %v1282
    %v1515 = vpack.c.b16 %v1285, %v1284
    %v1516 = vpack.c.b16 %v1287, %v1286
    %v1517 = vpack.c.b16 %v1289, %v1288
    %v1518 = vpack.c.b16 %v1291, %v1290
    %v1519 = vpack.c.b16 %v1293, %v1292
    %v1520 = vpack.c.b16 %v1295, %v1294
    %v1521 = vpack.c.b16 %v1297, %v1296
    %v1522 = vpack.c.b16 %v1299, %v1298
    %v1523 = vpack.c.b16 %v1301, %v1300
    %v1524 = vpack.c.b16 %v1303, %v1302
    %v1525 = vpack.c.b16 %v1305, %v1304
    %v1526 = vpack.c.b16 %v1307, %v1306
    %v1527 = vpack.c.b16 %v1309, %v1308
    %v1528 = vpack.c.b16 %v1311, %v1310
    %v1529 = vpack.c.b16 %v1313, %v1312
    %v1530 = vpack.c.b16 %v1315, %v1314
    %v1531 = vpack.c.b16 %v1317, %v1316
    %v1532 = vpack.c.b16 %v1319, %v1318
    %v1533 = vpack.c.b16 %v1321, %v1320
    %v1534 = vpack.c.b16 %v1323, %v1322
    %v1535 = vpack.c.b16 %v1325, %v1324
    %v1536 = vpack.c.b16 %v1327, %v1326
    %v1537 = vpack.c.b16 %v1329, %v1328
    %v1538 = vpack.c.b16 %v1331, %v1330
    %v1539 = vpack.c.b16 %v1333, %v1332
    %v1540 = vpack.c.b16 %v1335, %v1334
    %v1541 = vpack.c.b16 %v1337, %v1336
    %v1542 = vpack.c.b16 %v1339, %v1338
    %v1543 = vpack.c.b16 %v1341, %v1340
    %v1544 = vpack.c.b16 %v1343, %v1342
    %v1545 = vpack.c.b16 %v1345, %v1344
    %v1546 = vpack.c.b16 %v1347, %v1346
    %v1547 = vpack.c.b16 %v1349, %v1348
    %v1548 = vpack.c.b16 %v1351, %v1350
    %v1549 = vpack.c.b16 %v1353, %v1352
    %vm1746 = vcmask 523264
    %v1747 = vsel %vm1746, %v545, 0
    %1749 = vmatpush.bf16.msra.mxu0 %v1361
    %1750 = vmatpush.bf16.msra.mxu0 %v1360
    %1751 = vmatpush.bf16.msra.mxu0 %v1359
    %1752 = vmatpush.bf16.msra.mxu0 %v1358
    %1753 = vmatpush.bf16.msra.mxu0 %v1357
    %1754 = vmatpush.bf16.msra.mxu0 %v1356
    %1755 = vmatpush.bf16.msra.mxu0 %v1355
    %1756 = vmatpush.bf16.msra.mxu0 %v1354
    %1757 = vmatmul.bf16.gmra.mxu0 %v473
    %v1758 = vpop.f32.mrf.mxu0
    %v1759 = vadd.f32 %v448, %v1758
    %v1760 = vpop.f32.mrf.mxu0
    %v1761 = vadd.f32 %v448, %v1760
    %1762 = vdwg.mxu0
    %1763 = vmatpush.bf16.msra.mxu0 %v1369
    %1764 = vmatpush.bf16.msra.mxu0 %v1368
    %1765 = vmatpush.bf16.msra.mxu0 %v1367
    %1766 = vmatpush.bf16.msra.mxu0 %v1366
    %1767 = vmatpush.bf16.msra.mxu0 %v1365
    %1768 = vmatpush.bf16.msra.mxu0 %v1364
    %1769 = vmatpush.bf16.msra.mxu0 %v1363
    %1770 = vmatpush.bf16.msra.mxu0 %v1362
    %1771 = vmatmul.bf16.gmra.mxu0 %v474
    %v1772 = vpop.f32.mrf.mxu0
    %v1773 = vadd.f32 %v1759, %v1772
    %v1774 = vpop.f32.mrf.mxu0
    %v1775 = vadd.f32 %v1761, %v1774
    %1776 = vdwg.mxu0
    %1777 = vmatpush.bf16.msra.mxu0 %v1377
    %1778 = vmatpush.bf16.msra.mxu0 %v1376
    %1779 = vmatpush.bf16.msra.mxu0 %v1375
    %1780 = vmatpush.bf16.msra.mxu0 %v1374
    %1781 = vmatpush.bf16.msra.mxu0 %v1373
    %1782 = vmatpush.bf16.msra.mxu0 %v1372
    %1783 = vmatpush.bf16.msra.mxu0 %v1371
    %1784 = vmatpush.bf16.msra.mxu0 %v1370
    %1785 = vmatmul.bf16.gmra.mxu0 %v475
    %v1786 = vpop.f32.mrf.mxu0
    %v1787 = vadd.f32 %v1773, %v1786
    %v1788 = vpop.f32.mrf.mxu0
    %v1789 = vadd.f32 %v1775, %v1788
    %1790 = vdwg.mxu0
    %1791 = vmatpush.bf16.msra.mxu0 %v1385
    %1792 = vmatpush.bf16.msra.mxu0 %v1384
    %1793 = vmatpush.bf16.msra.mxu0 %v1383
    %1794 = vmatpush.bf16.msra.mxu0 %v1382
    %1795 = vmatpush.bf16.msra.mxu0 %v1381
    %1796 = vmatpush.bf16.msra.mxu0 %v1380
    %1797 = vmatpush.bf16.msra.mxu0 %v1379
    %1798 = vmatpush.bf16.msra.mxu0 %v1378
    %1799 = vmatmul.bf16.gmra.mxu0 %v476
    %v1800 = vpop.f32.mrf.mxu0
    %v1801 = vadd.f32 %v1787, %v1800
    %v1802 = vpop.f32.mrf.mxu0
    %v1803 = vadd.f32 %v1789, %v1802
    %1804 = vdwg.mxu0
    %1805 = vmatpush.bf16.msra.mxu0 %v1393
    %1806 = vmatpush.bf16.msra.mxu0 %v1392
    %1807 = vmatpush.bf16.msra.mxu0 %v1391
    %1808 = vmatpush.bf16.msra.mxu0 %v1390
    %1809 = vmatpush.bf16.msra.mxu0 %v1389
    %1810 = vmatpush.bf16.msra.mxu0 %v1388
    %1811 = vmatpush.bf16.msra.mxu0 %v1387
    %1812 = vmatpush.bf16.msra.mxu0 %v1386
    %1813 = vmatmul.bf16.gmra.mxu0 %v477
    %v1814 = vpop.f32.mrf.mxu0
    %v1815 = vadd.f32 %v1801, %v1814
    %v1816 = vpop.f32.mrf.mxu0
    %v1817 = vadd.f32 %v1803, %v1816
    %1818 = vdwg.mxu0
    %1819 = vmatpush.bf16.msra.mxu0 %v1401
    %1820 = vmatpush.bf16.msra.mxu0 %v1400
    %1821 = vmatpush.bf16.msra.mxu0 %v1399
    %1822 = vmatpush.bf16.msra.mxu0 %v1398
    %1823 = vmatpush.bf16.msra.mxu0 %v1397
    %1824 = vmatpush.bf16.msra.mxu0 %v1396
    %1825 = vmatpush.bf16.msra.mxu0 %v1395
    %1826 = vmatpush.bf16.msra.mxu0 %v1394
    %1827 = vmatmul.bf16.gmra.mxu0 %v478
    %v1828 = vpop.f32.mrf.mxu0
    %v1829 = vadd.f32 %v1815, %v1828
    %v1830 = vpop.f32.mrf.mxu0
    %v1831 = vadd.f32 %v1817, %v1830
    %1832 = vdwg.mxu0
    %1833 = vmatpush.bf16.msra.mxu0 %v1409
    %1834 = vmatpush.bf16.msra.mxu0 %v1408
    %1835 = vmatpush.bf16.msra.mxu0 %v1407
    %1836 = vmatpush.bf16.msra.mxu0 %v1406
    %1837 = vmatpush.bf16.msra.mxu0 %v1405
    %1838 = vmatpush.bf16.msra.mxu0 %v1404
    %1839 = vmatpush.bf16.msra.mxu0 %v1403
    %1840 = vmatpush.bf16.msra.mxu0 %v1402
    %1841 = vmatmul.bf16.gmra.mxu0 %v479
    %v1842 = vpop.f32.mrf.mxu0
    %v1843 = vadd.f32 %v1829, %v1842
    %v1844 = vpop.f32.mrf.mxu0
    %v1845 = vadd.f32 %v1831, %v1844
    %1846 = vdwg.mxu0
    %1847 = vmatpush.bf16.msra.mxu0 %v1417
    %1848 = vmatpush.bf16.msra.mxu0 %v1416
    %1849 = vmatpush.bf16.msra.mxu0 %v1415
    %1850 = vmatpush.bf16.msra.mxu0 %v1414
    %1851 = vmatpush.bf16.msra.mxu0 %v1413
    %1852 = vmatpush.bf16.msra.mxu0 %v1412
    %1853 = vmatpush.bf16.msra.mxu0 %v1411
    %1854 = vmatpush.bf16.msra.mxu0 %v1410
    %1855 = vmatmul.bf16.gmra.mxu0 %v480
    %v1856 = vpop.f32.mrf.mxu0
    %v1857 = vadd.f32 %v1843, %v1856
    %v1858 = vpop.f32.mrf.mxu0
    %v1859 = vadd.f32 %v1845, %v1858
    %1860 = vdwg.mxu0
    %1861 = vmatpush.bf16.msra.mxu0 %v1425
    %1862 = vmatpush.bf16.msra.mxu0 %v1424
    %1863 = vmatpush.bf16.msra.mxu0 %v1423
    %1864 = vmatpush.bf16.msra.mxu0 %v1422
    %1865 = vmatpush.bf16.msra.mxu0 %v1421
    %1866 = vmatpush.bf16.msra.mxu0 %v1420
    %1867 = vmatpush.bf16.msra.mxu0 %v1419
    %1868 = vmatpush.bf16.msra.mxu0 %v1418
    %1869 = vmatmul.bf16.gmra.mxu0 %v497
    %v1870 = vpop.f32.mrf.mxu0
    %v1871 = vadd.f32 %v1857, %v1870
    %v1872 = vpop.f32.mrf.mxu0
    %v1873 = vadd.f32 %v1859, %v1872
    %1874 = vdwg.mxu0
    %1875 = vmatpush.bf16.msra.mxu0 %v1433
    %1876 = vmatpush.bf16.msra.mxu0 %v1432
    %1877 = vmatpush.bf16.msra.mxu0 %v1431
    %1878 = vmatpush.bf16.msra.mxu0 %v1430
    %1879 = vmatpush.bf16.msra.mxu0 %v1429
    %1880 = vmatpush.bf16.msra.mxu0 %v1428
    %1881 = vmatpush.bf16.msra.mxu0 %v1427
    %1882 = vmatpush.bf16.msra.mxu0 %v1426
    %1883 = vmatmul.bf16.gmra.mxu0 %v498
    %v1884 = vpop.f32.mrf.mxu0
    %v1885 = vadd.f32 %v1871, %v1884
    %v1886 = vpop.f32.mrf.mxu0
    %v1887 = vadd.f32 %v1873, %v1886
    %1888 = vdwg.mxu0
    %1889 = vmatpush.bf16.msra.mxu0 %v1441
    %1890 = vmatpush.bf16.msra.mxu0 %v1440
    %1891 = vmatpush.bf16.msra.mxu0 %v1439
    %1892 = vmatpush.bf16.msra.mxu0 %v1438
    %1893 = vmatpush.bf16.msra.mxu0 %v1437
    %1894 = vmatpush.bf16.msra.mxu0 %v1436
    %1895 = vmatpush.bf16.msra.mxu0 %v1435
    %1896 = vmatpush.bf16.msra.mxu0 %v1434
    %1897 = vmatmul.bf16.gmra.mxu0 %v499
    %v1898 = vpop.f32.mrf.mxu0
    %v1899 = vadd.f32 %v1885, %v1898
    %v1900 = vpop.f32.mrf.mxu0
    %v1901 = vadd.f32 %v1887, %v1900
    %1902 = vdwg.mxu0
    %1903 = vmatpush.bf16.msra.mxu0 %v1449
    %1904 = vmatpush.bf16.msra.mxu0 %v1448
    %1905 = vmatpush.bf16.msra.mxu0 %v1447
    %1906 = vmatpush.bf16.msra.mxu0 %v1446
    %1907 = vmatpush.bf16.msra.mxu0 %v1445
    %1908 = vmatpush.bf16.msra.mxu0 %v1444
    %1909 = vmatpush.bf16.msra.mxu0 %v1443
    %1910 = vmatpush.bf16.msra.mxu0 %v1442
    %1911 = vmatmul.bf16.gmra.mxu0 %v500
    %v1912 = vpop.f32.mrf.mxu0
    %v1913 = vadd.f32 %v1899, %v1912
    %v1914 = vpop.f32.mrf.mxu0
    %v1915 = vadd.f32 %v1901, %v1914
    %1916 = vdwg.mxu0
    %1917 = vmatpush.bf16.msra.mxu0 %v1457
    %1918 = vmatpush.bf16.msra.mxu0 %v1456
    %1919 = vmatpush.bf16.msra.mxu0 %v1455
    %1920 = vmatpush.bf16.msra.mxu0 %v1454
    %1921 = vmatpush.bf16.msra.mxu0 %v1453
    %1922 = vmatpush.bf16.msra.mxu0 %v1452
    %1923 = vmatpush.bf16.msra.mxu0 %v1451
    %1924 = vmatpush.bf16.msra.mxu0 %v1450
    %1925 = vmatmul.bf16.gmra.mxu0 %v501
    %v1926 = vpop.f32.mrf.mxu0
    %v1927 = vadd.f32 %v1913, %v1926
    %v1928 = vpop.f32.mrf.mxu0
    %v1929 = vadd.f32 %v1915, %v1928
    %1930 = vdwg.mxu0
    %1931 = vmatpush.bf16.msra.mxu0 %v1465
    %1932 = vmatpush.bf16.msra.mxu0 %v1464
    %1933 = vmatpush.bf16.msra.mxu0 %v1463
    %1934 = vmatpush.bf16.msra.mxu0 %v1462
    %1935 = vmatpush.bf16.msra.mxu0 %v1461
    %1936 = vmatpush.bf16.msra.mxu0 %v1460
    %1937 = vmatpush.bf16.msra.mxu0 %v1459
    %1938 = vmatpush.bf16.msra.mxu0 %v1458
    %1939 = vmatmul.bf16.gmra.mxu0 %v502
    %v1940 = vpop.f32.mrf.mxu0
    %v1941 = vadd.f32 %v1927, %v1940
    %v1942 = vpop.f32.mrf.mxu0
    %v1943 = vadd.f32 %v1929, %v1942
    %1944 = vdwg.mxu0
    %1945 = vmatpush.bf16.msra.mxu0 %v1473
    %1946 = vmatpush.bf16.msra.mxu0 %v1472
    %1947 = vmatpush.bf16.msra.mxu0 %v1471
    %1948 = vmatpush.bf16.msra.mxu0 %v1470
    %1949 = vmatpush.bf16.msra.mxu0 %v1469
    %1950 = vmatpush.bf16.msra.mxu0 %v1468
    %1951 = vmatpush.bf16.msra.mxu0 %v1467
    %1952 = vmatpush.bf16.msra.mxu0 %v1466
    %1953 = vmatmul.bf16.gmra.mxu0 %v503
    %v1954 = vpop.f32.mrf.mxu0
    %v1955 = vadd.f32 %v1941, %v1954
    %v1956 = vpop.f32.mrf.mxu0
    %v1957 = vadd.f32 %v1943, %v1956
    %1958 = vdwg.mxu0
    %1959 = vmatpush.bf16.msra.mxu0 %v1481
    %1960 = vmatpush.bf16.msra.mxu0 %v1480
    %1961 = vmatpush.bf16.msra.mxu0 %v1479
    %1962 = vmatpush.bf16.msra.mxu0 %v1478
    %1963 = vmatpush.bf16.msra.mxu0 %v1477
    %1964 = vmatpush.bf16.msra.mxu0 %v1476
    %1965 = vmatpush.bf16.msra.mxu0 %v1475
    %1966 = vmatpush.bf16.msra.mxu0 %v1474
    %1967 = vmatmul.bf16.gmra.mxu0 %v504
    %v1968 = vpop.f32.mrf.mxu0
    %v1969 = vadd.f32 %v1955, %v1968
    %v1970 = vpop.f32.mrf.mxu0
    %v1971 = vadd.f32 %v1957, %v1970
    %1972 = vdwg.mxu0
    %1973 = vmatpush.bf16.msra.mxu0 %v1489
    %1974 = vmatpush.bf16.msra.mxu0 %v1488
    %1975 = vmatpush.bf16.msra.mxu0 %v1487
    %1976 = vmatpush.bf16.msra.mxu0 %v1486
    %1977 = vmatpush.bf16.msra.mxu0 %v1485
    %1978 = vmatpush.bf16.msra.mxu0 %v1484
    %1979 = vmatpush.bf16.msra.mxu0 %v1483
    %1980 = vmatpush.bf16.msra.mxu0 %v1482
    %1981 = vmatmul.bf16.gmra.mxu0 %v521
    %v1982 = vpop.f32.mrf.mxu0
    %v1983 = vadd.f32 %v1969, %v1982
    %v1984 = vpop.f32.mrf.mxu0
    %v1985 = vadd.f32 %v1971, %v1984
    %1986 = vdwg.mxu0
    %1987 = vmatpush.bf16.msra.mxu0 %v1497
    %1988 = vmatpush.bf16.msra.mxu0 %v1496
    %1989 = vmatpush.bf16.msra.mxu0 %v1495
    %1990 = vmatpush.bf16.msra.mxu0 %v1494
    %1991 = vmatpush.bf16.msra.mxu0 %v1493
    %1992 = vmatpush.bf16.msra.mxu0 %v1492
    %1993 = vmatpush.bf16.msra.mxu0 %v1491
    %1994 = vmatpush.bf16.msra.mxu0 %v1490
    %1995 = vmatmul.bf16.gmra.mxu0 %v522
    %v1996 = vpop.f32.mrf.mxu0
    %v1997 = vadd.f32 %v1983, %v1996
    %v1998 = vpop.f32.mrf.mxu0
    %v1999 = vadd.f32 %v1985, %v1998
    %2000 = vdwg.mxu0
    %2001 = vmatpush.bf16.msra.mxu0 %v1505
    %2002 = vmatpush.bf16.msra.mxu0 %v1504
    %2003 = vmatpush.bf16.msra.mxu0 %v1503
    %2004 = vmatpush.bf16.msra.mxu0 %v1502
    %2005 = vmatpush.bf16.msra.mxu0 %v1501
    %2006 = vmatpush.bf16.msra.mxu0 %v1500
    %2007 = vmatpush.bf16.msra.mxu0 %v1499
    %2008 = vmatpush.bf16.msra.mxu0 %v1498
    %2009 = vmatmul.bf16.gmra.mxu0 %v523
    %v2010 = vpop.f32.mrf.mxu0
    %v2011 = vadd.f32 %v1997, %v2010
    %v2012 = vpop.f32.mrf.mxu0
    %v2013 = vadd.f32 %v1999, %v2012
    %2014 = vdwg.mxu0
    %2015 = vmatpush.bf16.msra.mxu0 %v1513
    %2016 = vmatpush.bf16.msra.mxu0 %v1512
    %2017 = vmatpush.bf16.msra.mxu0 %v1511
    %2018 = vmatpush.bf16.msra.mxu0 %v1510
    %2019 = vmatpush.bf16.msra.mxu0 %v1509
    %2020 = vmatpush.bf16.msra.mxu0 %v1508
    %2021 = vmatpush.bf16.msra.mxu0 %v1507
    %2022 = vmatpush.bf16.msra.mxu0 %v1506
    %2023 = vmatmul.bf16.gmra.mxu0 %v524
    %v2024 = vpop.f32.mrf.mxu0
    %v2025 = vadd.f32 %v2011, %v2024
    %v2026 = vpop.f32.mrf.mxu0
    %v2027 = vadd.f32 %v2013, %v2026
    %2028 = vdwg.mxu0
    %2029 = vmatpush.bf16.msra.mxu0 %v1521
    %2030 = vmatpush.bf16.msra.mxu0 %v1520
    %2031 = vmatpush.bf16.msra.mxu0 %v1519
    %2032 = vmatpush.bf16.msra.mxu0 %v1518
    %2033 = vmatpush.bf16.msra.mxu0 %v1517
    %2034 = vmatpush.bf16.msra.mxu0 %v1516
    %2035 = vmatpush.bf16.msra.mxu0 %v1515
    %2036 = vmatpush.bf16.msra.mxu0 %v1514
    %2037 = vmatmul.bf16.gmra.mxu0 %v525
    %v2038 = vpop.f32.mrf.mxu0
    %v2039 = vadd.f32 %v2025, %v2038
    %v2040 = vpop.f32.mrf.mxu0
    %v2041 = vadd.f32 %v2027, %v2040
    %2042 = vdwg.mxu0
    %2043 = vmatpush.bf16.msra.mxu0 %v1529
    %2044 = vmatpush.bf16.msra.mxu0 %v1528
    %2045 = vmatpush.bf16.msra.mxu0 %v1527
    %2046 = vmatpush.bf16.msra.mxu0 %v1526
    %2047 = vmatpush.bf16.msra.mxu0 %v1525
    %2048 = vmatpush.bf16.msra.mxu0 %v1524
    %2049 = vmatpush.bf16.msra.mxu0 %v1523
    %2050 = vmatpush.bf16.msra.mxu0 %v1522
    %2051 = vmatmul.bf16.gmra.mxu0 %v526
    %v2052 = vpop.f32.mrf.mxu0
    %v2053 = vadd.f32 %v2039, %v2052
    %v2054 = vpop.f32.mrf.mxu0
    %v2055 = vadd.f32 %v2041, %v2054
    %2056 = vdwg.mxu0
    %2057 = vmatpush.bf16.msra.mxu0 %v1537
    %2058 = vmatpush.bf16.msra.mxu0 %v1536
    %2059 = vmatpush.bf16.msra.mxu0 %v1535
    %2060 = vmatpush.bf16.msra.mxu0 %v1534
    %2061 = vmatpush.bf16.msra.mxu0 %v1533
    %2062 = vmatpush.bf16.msra.mxu0 %v1532
    %2063 = vmatpush.bf16.msra.mxu0 %v1531
    %2064 = vmatpush.bf16.msra.mxu0 %v1530
    %2065 = vmatmul.bf16.gmra.mxu0 %v527
    %v2066 = vpop.f32.mrf.mxu0
    %v2067 = vadd.f32 %v2053, %v2066
    %v2068 = vpop.f32.mrf.mxu0
    %v2069 = vadd.f32 %v2055, %v2068
    %2070 = vdwg.mxu0
    %2071 = vmatpush.bf16.msra.mxu0 %v1545
    %2072 = vmatpush.bf16.msra.mxu0 %v1544
    %2073 = vmatpush.bf16.msra.mxu0 %v1543
    %2074 = vmatpush.bf16.msra.mxu0 %v1542
    %2075 = vmatpush.bf16.msra.mxu0 %v1541
    %2076 = vmatpush.bf16.msra.mxu0 %v1540
    %2077 = vmatpush.bf16.msra.mxu0 %v1539
    %2078 = vmatpush.bf16.msra.mxu0 %v1538
    %2079 = vmatmul.bf16.gmra.mxu0 %v528
    %v2080 = vpop.f32.mrf.mxu0
    %v2081 = vadd.f32 %v2067, %v2080
    %v2082 = vpop.f32.mrf.mxu0
    %v2083 = vadd.f32 %v2069, %v2082
    %2084 = vdwg.mxu0
    %2085 = vmatpush.bf16.msra.mxu0 0
    %2086 = vmatpush.bf16.msra.mxu0 0
    %2087 = vmatpush.bf16.msra.mxu0 0
    %2088 = vmatpush.bf16.msra.mxu0 0
    %2089 = vmatpush.bf16.msra.mxu0 %v1549
    %2090 = vmatpush.bf16.msra.mxu0 %v1548
    %2091 = vmatpush.bf16.msra.mxu0 %v1547
    %2092 = vmatpush.bf16.msra.mxu0 %v1546
    %2093 = vmatmul.bf16.gmra.mxu0 %v1747
    %v2094 = vpop.f32.mrf.mxu0
    %v2095 = vadd.f32 %v2081, %v2094
    %v2096 = vpop.f32.mrf.mxu0
    %v2097 = vadd.f32 %v2083, %v2096
    %2098 = vdwg.mxu0
    %v2099 = vmax.f32 %v2095, 0.0
    %v2100 = vmax.f32 %v2097, 0.0
    %v2101 = vpack.c.bf16 %v2100, %v2099
    %v2102 = vld [vmem:[%s3] sm:$0xf]
    %v2103 = vld [vmem:[%s3 + $0x4] sm:$0xf]
    %v2104 = vld [vmem:[%s3 + $0x8] sm:$0xf]
    %v2105 = vld [vmem:[%s3 + $0xc] sm:$0xf]
    %v2106 = vld [vmem:[%s3 + $0x10] sm:$0xf]
    %v2107 = vld [vmem:[%s3 + $0x14] sm:$0xf]
    %v2108 = vld [vmem:[%s3 + $0x18] sm:$0xf]
    %v2109 = vld [vmem:[%s3 + $0x1c] sm:$0xf]
    %v2110 = vld [vmem:[%s3 + $0x20] sm:$0xf]
    %v2111 = vld [vmem:[%s3 + $0x24] sm:$0xf]
    %v2112 = vld [vmem:[%s3 + $0x28] sm:$0xf]
    %v2113 = vld [vmem:[%s3 + $0x2c] sm:$0xf]
    %v2114 = vld [vmem:[%s3 + $0x30] sm:$0xf]
    %v2115 = vld [vmem:[%s3 + $0x34] sm:$0xf]
    %v2116 = vld [vmem:[%s3 + $0x38] sm:$0xf]
    %v2117 = vld [vmem:[%s3 + $0x3c] sm:$0xf]
    %v2118 = vld [vmem:[%s4] sm:$0x1]
    %v2120 = vperm.slane %v2118, 0
    %v2138 = vunpack.c.l.b16 %v2102
    %v2139 = vunpack.c.l.b16 %v2103
    %v2140 = vunpack.c.l.b16 %v2104
    %v2141 = vunpack.c.l.b16 %v2105
    %v2142 = vunpack.c.l.b16 %v2106
    %v2143 = vunpack.c.l.b16 %v2107
    %v2144 = vunpack.c.l.b16 %v2108
    %v2145 = vunpack.c.l.b16 %v2109
    %v2146 = vunpack.c.l.b16 %v2110
    %v2147 = vunpack.c.l.b16 %v2111
    %v2148 = vunpack.c.l.b16 %v2112
    %v2149 = vunpack.c.l.b16 %v2113
    %v2150 = vunpack.c.l.b16 %v2114
    %v2151 = vunpack.c.l.b16 %v2115
    %v2152 = vunpack.c.l.b16 %v2116
    %v2153 = vunpack.c.l.b16 %v2117
    %v2154 = vpack.c.b16 %v2139, %v2138
    %v2155 = vpack.c.b16 %v2141, %v2140
    %v2156 = vpack.c.b16 %v2143, %v2142
    %v2157 = vpack.c.b16 %v2145, %v2144
    %v2158 = vpack.c.b16 %v2147, %v2146
    %v2159 = vpack.c.b16 %v2149, %v2148
    %v2160 = vpack.c.b16 %v2151, %v2150
    %v2161 = vpack.c.b16 %v2153, %v2152
    %2170 = vmatpush.bf16.msra.mxu0 %v2161
    %2171 = vmatpush.bf16.msra.mxu0 %v2160
    %2172 = vmatpush.bf16.msra.mxu0 %v2159
    %2173 = vmatpush.bf16.msra.mxu0 %v2158
    %2174 = vmatpush.bf16.msra.mxu0 %v2157
    %2175 = vmatpush.bf16.msra.mxu0 %v2156
    %2176 = vmatpush.bf16.msra.mxu0 %v2155
    %2177 = vmatpush.bf16.msra.mxu0 %v2154
    %2178 = vmatmul.bf16.gmra.mxu0 %v2101
    %v2179 = vpop.f32.mrf.mxu0
    %v2180 = vadd.f32 %v2120, %v2179
    %v2181 = vpop.f32.mrf.mxu0
    %v2182 = vadd.f32 %v2120, %v2181
    %2183 = vdwg.mxu0
    %2184 = vst [vmem:[#allocation2] sm:$0xff] %v2180
    %2185 = vst [vmem:[#allocation2 + $0x8] sm:$0xff] %v2182
    // Predicated region
    $region22: #{simple_cnn_forward.5} parent=1 // pred_check
      _
    $region23: #{simple_cnn_forward.5} parent=1 // pred_check_branch
      %2187 = sbr.rel (0) target = $region25
    $region24: #{simple_cnn_forward.5} parent=1 // pred_region
      %2189 = vsyncadd [#allocation3], 224
      %s2190 = sshll.u32 [#allocation2], 4
      %s2191 = int_to_ptr.vmem [resolvable:$true] %s2190
      %s2192 = sshll.u32 %s5, 4
      %s2193 = int_to_ptr.hbm [resolvable:$true] %s2192
      %2198 = dma.vmem_to_hbm [thread:$0]  %s2191, 32, %s2193, [#allocation3], 32, 32, 2
    $region25: #{simple_cnn_forward.5} parent=1 // pred_fallthru
      _
    // Predicated region
    $region26: #{simple_cnn_forward.5} parent=1 // pred_check
      _
    $region27: #{simple_cnn_forward.5} parent=1 // pred_check_branch
      %2200 = sbr.rel (0) target = $region29
    $region28: #{simple_cnn_forward.5} parent=1 // pred_region
      %2202 = dma.done [#allocation3], 256
    $region29: #{simple_cnn_forward.5} parent=1 // pred_fallthru
      _
    %2203 = vsyncpa [#allocation3], 1

// kernel: simple_cnn_forward.4
$region0: #{simple_cnn_forward.4}
  #allocation0 [shape = 'u32[]', space=smem, size = 0x4, offset = 0x4, fixed_abs, tag = 'smem constant byte address 0x4 - core index']
  #allocation1 [shape = 'u32[72,128]{1,0:T(1,128)}', space=vmem, size = 0x9000, scoped, tag = 'internal scratch']
  #allocation2 [shape = 'bf16[64,288]{1,0:T(8,128)(2,1)}', space=vmem, size = 0xc000, scoped, tag = 'scratch operand']
  %s0 = inlined_call_operand.vmem [shape: bf16[2,4,80,32], index: 0, kind: input, shape index: {}]
  %s1 = inlined_call_operand.vmem [shape: bf16[288,64], index: 1, kind: input, shape index: {}]
  %s2 = inlined_call_operand.vmem [shape: f32[1,64], index: 2, kind: input, shape index: {}]
  %s3 = inlined_call_operand.vmem [shape: bf16[128,64], index: 3, kind: output, shape index: {}]
  %s4 = sld [smem:[#allocation0]]
  $region45: #{simple_cnn_forward.4} parent=0
    _
  %s6 = ssub.s32 1, %s4
  %s7 = scalar_select 0, %s6, %s4
  loop: start=0, step=1, limit=4
  $region2: #{simple_cnn_forward.4} parent=0 // loop_pre_header
    _
  $region3: #{simple_cnn_forward.4} parent=0 // loop_header
    %s9 = sphi 0, %s13
    %p10 = scmp.ge.s32.totalorder %s9, 4
    %s19 = sphi 0, %s21
    %s22 = sphi 0, %s19
    %s23 = sphi 0, %s22
    %s39 = sphi 0, %s23
    %s43 = sphi 0, %s43
    %s45 = sphi 0, %s43
    %s46 = sphi 0, %s45
    %s60 = sphi 0, %s46
    %s64 = sphi 0, %s64
    %s66 = sphi 0, %s64
    %s67 = sphi 0, %s66
    %s81 = sphi 0, %s67
    %s87 = sphi 0, %s89
    %s90 = sphi 0, %s87
    %s91 = sphi 0, %s90
    %s107 = sphi 0, %s91
  $region4: #{simple_cnn_forward.4} parent=0 // loop_header_branch
    %12 = sbr.rel (%p10) target = $region8
  $region5: #{simple_cnn_forward.4} parent=0 // loop_body
    %s14 = ssub.s32 %s9, 1
    %s15 = ssub.s32 %s9, 2
    %s16 = sadd.s32 %s9, 1
    %s17 = ssub.s32 %s9, %s16
    %p18 = scmp.eq.s32.totalorder %s17, 0
    %s20 = sadd.s32 %s19, 1
    %s21 = scalar_select %p18, %s19, %s20
    %p24 = pneg %p18
    %p25 = scmp.eq.s32.totalorder %s9, 1
    %p26 = por %p24, %p25
    %p27 = scmp.ne.s32.totalorder %s19, %s22
    %p28 = scmp.eq.s32.totalorder %s9, 0
    %p29 = por %p27, %p28
    %p30 = scmp.ne.s32.totalorder %s19, %s22
    %p31 = scmp.eq.s32.totalorder %s14, 1
    %p32 = por %p30, %p31
    %p33 = scmp.ne.s32.totalorder %s22, %s23
    %p34 = scmp.eq.s32.totalorder %s14, 0
    %p35 = por %p33, %p34
    %p36 = scmp.ne.s32.totalorder %s22, %s23
    %p37 = scmp.eq.s32.totalorder %s15, 1
    %p38 = por %p36, %p37
    %p40 = scmp.ne.s32.totalorder %s23, %s39
    %p41 = scmp.eq.s32.totalorder %s15, 0
    %p42 = por %p40, %p41
    %s44 = sadd.s32 %s43, 1
    %p47 = scmp.eq.s32.totalorder %s9, 1
    %p48 = scmp.ne.s32.totalorder %s43, %s45
    %p49 = scmp.eq.s32.totalorder %s9, 0
    %p50 = por %p48, %p49
    %p51 = scmp.ne.s32.totalorder %s43, %s45
    %p52 = scmp.eq.s32.totalorder %s14, 1
    %p53 = por %p51, %p52
    %p54 = scmp.ne.s32.totalorder %s45, %s46
    %p55 = scmp.eq.s32.totalorder %s14, 0
    %p56 = por %p54, %p55
    %p57 = scmp.ne.s32.totalorder %s45, %s46
    %p58 = scmp.eq.s32.totalorder %s15, 1
    %p59 = por %p57, %p58
    %p61 = scmp.ne.s32.totalorder %s46, %s60
    %p62 = scmp.eq.s32.totalorder %s15, 0
    %p63 = por %p61, %p62
    %s65 = sadd.s32 %s64, 1
    %p68 = scmp.eq.s32.totalorder %s9, 1
    %p69 = scmp.ne.s32.totalorder %s64, %s66
    %p70 = scmp.eq.s32.totalorder %s9, 0
    %p71 = por %p69, %p70
    %p72 = scmp.ne.s32.totalorder %s64, %s66
    %p73 = scmp.eq.s32.totalorder %s14, 1
    %p74 = por %p72, %p73
    %p75 = scmp.ne.s32.totalorder %s66, %s67
    %p76 = scmp.eq.s32.totalorder %s14, 0
    %p77 = por %p75, %p76
    %p78 = scmp.ne.s32.totalorder %s66, %s67
    %p79 = scmp.eq.s32.totalorder %s15, 1
    %p80 = por %p78, %p79
    %p82 = scmp.ne.s32.totalorder %s67, %s81
    %p83 = scmp.eq.s32.totalorder %s15, 0
    %p84 = por %p82, %p83
    %s85 = ssub.s32 %s9, %s16
    %p86 = scmp.eq.s32.totalorder %s85, 0
    %s88 = sadd.s32 %s87, 1
    %s89 = scalar_select %p86, %s87, %s88
    %p92 = pneg %p86
    %p93 = scmp.eq.s32.totalorder %s9, 1
    %p94 = por %p92, %p93
    %p95 = scmp.ne.s32.totalorder %s87, %s90
    %p96 = scmp.eq.s32.totalorder %s9, 0
    %p97 = por %p95, %p96
    %p98 = scmp.ne.s32.totalorder %s87, %s90
    %p99 = scmp.eq.s32.totalorder %s14, 1
    %p100 = por %p98, %p99
    %p101 = scmp.ne.s32.totalorder %s90, %s91
    %p102 = scmp.eq.s32.totalorder %s14, 0
    %p103 = por %p101, %p102
    %p104 = scmp.ne.s32.totalorder %s90, %s91
    %p105 = scmp.eq.s32.totalorder %s15, 1
    %p106 = por %p104, %p105
    %p108 = scmp.ne.s32.totalorder %s91, %s107
    %p109 = scmp.eq.s32.totalorder %s15, 0
    %p110 = por %p108, %p109
    %p111 = scmp.le.s32.totalorder 1, %s9
    %p112 = scmp.lt.s32.totalorder %s9, 3
    %p113 = pnand %p111, %p112
    %p114 = pneg %p113
    // Predicated region
    $region9: #{simple_cnn_forward.4} parent=5 // pred_check
      _
    $region10: #{simple_cnn_forward.4} parent=5 // pred_check_branch
      %116 = sbr.rel (%p113) target = $region12
    $region11: #{simple_cnn_forward.4} parent=5 // pred_region
      %s117 = ssub.s32 %s9, 1
      // Predicated region
      $region13: #{simple_cnn_forward.4} parent=11 // pred_check
        %p118 = pneg %p56
      $region14: #{simple_cnn_forward.4} parent=11 // pred_check_branch
        %120 = sbr.rel (%p118) target = $region16
      $region15: #{simple_cnn_forward.4} parent=11 // pred_region
        _
      $region16: #{simple_cnn_forward.4} parent=11 // pred_fallthru
        _
      // Predicated region
      $region17: #{simple_cnn_forward.4} parent=11 // pred_check
        %p121 = pneg %p77
      $region18: #{simple_cnn_forward.4} parent=11 // pred_check_branch
        %123 = sbr.rel (%p121) target = $region20
      $region19: #{simple_cnn_forward.4} parent=11 // pred_region
        _
      $region20: #{simple_cnn_forward.4} parent=11 // pred_fallthru
        _
    $region12: #{simple_cnn_forward.4} parent=5 // pred_fallthru
      _
    %p124 = scmp.lt.s32.totalorder %s9, 2
    // Predicated region
    $region21: #{simple_cnn_forward.4} parent=5 // pred_check
      %p125 = pneg %p124
    $region22: #{simple_cnn_forward.4} parent=5 // pred_check_branch
      %127 = sbr.rel (%p125) target = $region24
    $region23: #{simple_cnn_forward.4} parent=5 // pred_region
      // Predicated region
      $region25: #{simple_cnn_forward.4} parent=23 // pred_check
        %p128 = pneg %p29
      $region26: #{simple_cnn_forward.4} parent=23 // pred_check_branch
        %130 = sbr.rel (%p128) target = $region28
      $region27: #{simple_cnn_forward.4} parent=23 // pred_region
        %p131 = scmp.lt.s32.totalorder %s9, 1
        %s132 = scalar_select %p131, %s9, 1
        %s133 = smul.addr %s132, 40
        %s134 = smul.addr %s133, 4
        %s135 = scalar_lea.vmem %s0, %s134
      $region28: #{simple_cnn_forward.4} parent=23 // pred_fallthru
        _
    $region24: #{simple_cnn_forward.4} parent=5 // pred_fallthru
      _
    %p136 = scmp.le.s32.totalorder 1, %s9
    %p137 = scmp.lt.s32.totalorder %s9, 3
    %p138 = pnand %p136, %p137
    %p139 = pneg %p138
    // Predicated region
    $region29: #{simple_cnn_forward.4} parent=5 // pred_check
      _
    $region30: #{simple_cnn_forward.4} parent=5 // pred_check_branch
      %141 = sbr.rel (%p138) target = $region32
    $region31: #{simple_cnn_forward.4} parent=5 // pred_region
      %s142 = ssub.s32 %s9, 1
      %p143 = scmp.lt.s32.totalorder %s14, 1
      %s144 = scalar_select %p143, %s14, 1
      %s145 = smul.addr %s144, 40
      %s146 = smul.addr %s145, 4
      %s147 = scalar_lea.vmem %s0, %s146
      %p148 = pneg %p35
      %p149 = pneg %p32
      %p150 = pneg %p56
      %p151 = pneg %p53
      %p152 = pneg %p77
      %p153 = pneg %p74
      %p154 = pneg %p103
      %p155 = pneg %p100
      %s156 = smul.u32 8, %s14
      %p157 = scmp.lt.s32.totalorder %s156, 15
      %s158 = scalar_select %p157, %s156, 15
      %s159 = smul.addr %s158, 4
      %s160 = scalar_lea.vmem %s3, %s159
      %p161 = scmp.lt.s32.totalorder %s14, 1
      %s162 = scalar_select %p161, %s14, 1
      %s163 = smul.addr %s162, 40
      %s164 = smul.addr %s163, 4
      %s165 = scalar_lea.vmem %s0, %s164
      %s166 = smul.u32 8, %s14
      %p167 = scmp.lt.s32.totalorder %s166, 15
      %s168 = scalar_select %p167, %s166, 15
      %s169 = smul.addr %s168, 4
      %s170 = scalar_lea.vmem %s3, %s169
      %s171 = smul.u32 8, %s14
      %v173 = vld [vmem:[%s165] sm:$0xf]
      %v174 = vld [vmem:[%s165 + $0x4] sm:$0xf]
      %v175 = vld [vmem:[%s165 + $0x8] sm:$0xf]
      %v176 = vld [vmem:[%s165 + $0xc] sm:$0xf]
      %v177 = vld [vmem:[%s165 + $0x10] sm:$0xf]
      %v178 = vld [vmem:[%s165 + $0x14] sm:$0xf]
      %v179 = vld [vmem:[%s165 + $0x18] sm:$0xf]
      %v180 = vld [vmem:[%s165 + $0x1c] sm:$0xf]
      %vm181 = vcmask 257024
      %182 = vst.msk [vmem:[#allocation2] sm:$0xf] %vm181, %v173
      %183 = vst.msk [vmem:[#allocation2 + $0xc] sm:$0xf] %vm181, %v174
      %184 = vst.msk [vmem:[#allocation2 + $0x18] sm:$0xf] %vm181, %v175
      %185 = vst.msk [vmem:[#allocation2 + $0x24] sm:$0xf] %vm181, %v176
      %186 = vst.msk [vmem:[#allocation2 + $0x30] sm:$0xf] %vm181, %v177
      %187 = vst.msk [vmem:[#allocation2 + $0x3c] sm:$0xf] %vm181, %v178
      %188 = vst.msk [vmem:[#allocation2 + $0x48] sm:$0xf] %vm181, %v179
      %189 = vst.msk [vmem:[#allocation2 + $0x54] sm:$0xf] %vm181, %v180
      %s190 = scalar_lea.vmem %s165, 40
      %v191 = vld [vmem:[%s190] sm:$0xf]
      %v192 = vld [vmem:[%s190 + $0x4] sm:$0xf]
      %v193 = vld [vmem:[%s190 + $0x8] sm:$0xf]
      %v194 = vld [vmem:[%s190 + $0xc] sm:$0xf]
      %v195 = vld [vmem:[%s190 + $0x10] sm:$0xf]
      %v196 = vld [vmem:[%s190 + $0x14] sm:$0xf]
      %v197 = vld [vmem:[%s190 + $0x18] sm:$0xf]
      %v198 = vld [vmem:[%s190 + $0x1c] sm:$0xf]
      %207 = vrot.lane.b32.xlu0 %v191, 32
      %v208 = vpop.permute.xlu0 %207
      %209 = vrot.lane.b32.xlu0 %v192, 32
      %v210 = vpop.permute.xlu0 %209
      %211 = vrot.lane.b32.xlu0 %v193, 32
      %v212 = vpop.permute.xlu0 %211
      %213 = vrot.lane.b32.xlu0 %v194, 32
      %v214 = vpop.permute.xlu0 %213
      %215 = vrot.lane.b32.xlu0 %v195, 32
      %v216 = vpop.permute.xlu0 %215
      %217 = vrot.lane.b32.xlu0 %v196, 32
      %v218 = vpop.permute.xlu0 %217
      %219 = vrot.lane.b32.xlu0 %v197, 32
      %v220 = vpop.permute.xlu0 %219
      %221 = vrot.lane.b32.xlu0 %v198, 32
      %v222 = vpop.permute.xlu0 %221
      %vm231 = vcmask 519424
      %232 = vst.msk [vmem:[#allocation2] sm:$0xf] %vm231, %v208
      %233 = vst.msk [vmem:[#allocation2 + $0xc] sm:$0xf] %vm231, %v210
      %234 = vst.msk [vmem:[#allocation2 + $0x18] sm:$0xf] %vm231, %v212
      %235 = vst.msk [vmem:[#allocation2 + $0x24] sm:$0xf] %vm231, %v214
      %236 = vst.msk [vmem:[#allocation2 + $0x30] sm:$0xf] %vm231, %v216
      %237 = vst.msk [vmem:[#allocation2 + $0x3c] sm:$0xf] %vm231, %v218
      %238 = vst.msk [vmem:[#allocation2 + $0x48] sm:$0xf] %vm231, %v220
      %239 = vst.msk [vmem:[#allocation2 + $0x54] sm:$0xf] %vm231, %v222
      %v240 = vld [vmem:[%s165] sm:$0xf]
      %v241 = vld [vmem:[%s165 + $0x4] sm:$0xf]
      %v242 = vld [vmem:[%s165 + $0x8] sm:$0xf]
      %v243 = vld [vmem:[%s165 + $0xc] sm:$0xf]
      %v244 = vld [vmem:[%s165 + $0x10] sm:$0xf]
      %v245 = vld [vmem:[%s165 + $0x14] sm:$0xf]
      %v246 = vld [vmem:[%s165 + $0x18] sm:$0xf]
      %v247 = vld [vmem:[%s165 + $0x1c] sm:$0xf]
      %v248 = vld [vmem:[%s165 + $0x20] sm:$0x1]
      %vm249 = vsmask.f32 3328
      %vm250 = vsmask.f32 7440
      %vm251 = vmor %vm249, %vm250
      %v253 = vshrl.u32 %v240, 16
      %v255 = vrot.slane %v253, 4
      %v256 = vshll.u32 %v240, 16
      %v258 = vrot.slane %v256, 5
      %v259 = vor.u32 %v255, %v258
      %v260 = vrot.slane %v259, 4
      %v262 = vshll.u32 %v241, 16
      %v264 = vrot.slane %v262, 5
      %v265 = vsel %vm251, %v260, %v264
      %v266 = vshrl.u32 %v241, 16
      %v268 = vrot.slane %v266, 4
      %v269 = vor.u32 %v268, %v264
      %v270 = vrot.slane %v269, 4
      %v272 = vshll.u32 %v242, 16
      %v274 = vrot.slane %v272, 5
      %v275 = vsel %vm251, %v270, %v274
      %v276 = vshrl.u32 %v242, 16
      %v278 = vrot.slane %v276, 4
      %v279 = vor.u32 %v278, %v274
      %v280 = vrot.slane %v279, 4
      %v282 = vshll.u32 %v243, 16
      %v284 = vrot.slane %v282, 5
      %v285 = vsel %vm251, %v280, %v284
      %v286 = vshrl.u32 %v243, 16
      %v288 = vrot.slane %v286, 4
      %v289 = vor.u32 %v288, %v284
      %v290 = vrot.slane %v289, 4
      %v292 = vshll.u32 %v244, 16
      %v294 = vrot.slane %v292, 5
      %v295 = vsel %vm251, %v290, %v294
      %v296 = vshrl.u32 %v244, 16
      %v298 = vrot.slane %v296, 4
      %v299 = vor.u32 %v298, %v294
      %v300 = vrot.slane %v299, 4
      %v302 = vshll.u32 %v245, 16
      %v304 = vrot.slane %v302, 5
      %v305 = vsel %vm251, %v300, %v304
      %v306 = vshrl.u32 %v245, 16
      %v308 = vrot.slane %v306, 4
      %v309 = vor.u32 %v308, %v304
      %v310 = vrot.slane %v309, 4
      %v312 = vshll.u32 %v246, 16
      %v314 = vrot.slane %v312, 5
      %v315 = vsel %vm251, %v310, %v314
      %v316 = vshrl.u32 %v246, 16
      %v318 = vrot.slane %v316, 4
      %v319 = vor.u32 %v318, %v314
      %v320 = vrot.slane %v319, 4
      %v322 = vshll.u32 %v247, 16
      %v324 = vrot.slane %v322, 5
      %v325 = vsel %vm251, %v320, %v324
      %v326 = vshrl.u32 %v247, 16
      %v328 = vrot.slane %v326, 4
      %v329 = vor.u32 %v328, %v324
      %v330 = vrot.slane %v329, 4
      %v332 = vshll.u32 %v248, 16
      %v334 = vrot.slane %v332, 5
      %v335 = vsel %vm251, %v330, %v334
      %336 = vrot.lane.b32.xlu0 %v265, 64
      %v337 = vpop.permute.xlu0 %336
      %338 = vrot.lane.b32.xlu0 %v275, 64
      %v339 = vpop.permute.xlu0 %338
      %340 = vrot.lane.b32.xlu0 %v285, 64
      %v341 = vpop.permute.xlu0 %340
      %342 = vrot.lane.b32.xlu0 %v295, 64
      %v343 = vpop.permute.xlu0 %342
      %344 = vrot.lane.b32.xlu0 %v305, 64
      %v345 = vpop.permute.xlu0 %344
      %346 = vrot.lane.b32.xlu0 %v315, 64
      %v347 = vpop.permute.xlu0 %346
      %348 = vrot.lane.b32.xlu0 %v325, 64
      %v349 = vpop.permute.xlu0 %348
      %350 = vrot.lane.b32.xlu0 %v335, 64
      %v351 = vpop.permute.xlu0 %350
      %vm360 = vcmask 781824
      %361 = vst.msk [vmem:[#allocation2] sm:$0xf] %vm360, %v337
      %362 = vst.msk [vmem:[#allocation2 + $0xc] sm:$0xf] %vm360, %v339
      %363 = vst.msk [vmem:[#allocation2 + $0x18] sm:$0xf] %vm360, %v341
      %364 = vst.msk [vmem:[#allocation2 + $0x24] sm:$0xf] %vm360, %v343
      %365 = vst.msk [vmem:[#allocation2 + $0x30] sm:$0xf] %vm360, %v345
      %366 = vst.msk [vmem:[#allocation2 + $0x3c] sm:$0xf] %vm360, %v347
      %367 = vst.msk [vmem:[#allocation2 + $0x48] sm:$0xf] %vm360, %v349
      %368 = vst.msk [vmem:[#allocation2 + $0x54] sm:$0xf] %vm360, %v351
      %s369 = scalar_lea.vmem %s165, 80
      %v370 = vld [vmem:[%s369] sm:$0xf]
      %v371 = vld [vmem:[%s369 + $0x4] sm:$0xf]
      %v372 = vld [vmem:[%s369 + $0x8] sm:$0xf]
      %v373 = vld [vmem:[%s369 + $0xc] sm:$0xf]
      %v374 = vld [vmem:[%s369 + $0x10] sm:$0xf]
      %v375 = vld [vmem:[%s369 + $0x14] sm:$0xf]
      %v376 = vld [vmem:[%s369 + $0x18] sm:$0xf]
      %v377 = vld [vmem:[%s369 + $0x1c] sm:$0xf]
      %386 = vrot.lane.b32.xlu0 %v370, 96
      %v387 = vpop.permute.xlu0 %386
      %388 = vrot.lane.b32.xlu0 %v371, 96
      %v389 = vpop.permute.xlu0 %388
      %390 = vrot.lane.b32.xlu0 %v372, 96
      %v391 = vpop.permute.xlu0 %390
      %392 = vrot.lane.b32.xlu0 %v373, 96
      %v393 = vpop.permute.xlu0 %392
      %394 = vrot.lane.b32.xlu0 %v374, 96
      %v395 = vpop.permute.xlu0 %394
      %396 = vrot.lane.b32.xlu0 %v375, 96
      %v397 = vpop.permute.xlu0 %396
      %398 = vrot.lane.b32.xlu0 %v376, 96
      %v399 = vpop.permute.xlu0 %398
      %400 = vrot.lane.b32.xlu0 %v377, 96
      %v401 = vpop.permute.xlu0 %400
      %vm410 = vcmask 1044224
      %411 = vst.msk [vmem:[#allocation2] sm:$0xf] %vm410, %v387
      %412 = vst.msk [vmem:[#allocation2 + $0xc] sm:$0xf] %vm410, %v389
      %413 = vst.msk [vmem:[#allocation2 + $0x18] sm:$0xf] %vm410, %v391
      %414 = vst.msk [vmem:[#allocation2 + $0x24] sm:$0xf] %vm410, %v393
      %415 = vst.msk [vmem:[#allocation2 + $0x30] sm:$0xf] %vm410, %v395
      %416 = vst.msk [vmem:[#allocation2 + $0x3c] sm:$0xf] %vm410, %v397
      %417 = vst.msk [vmem:[#allocation2 + $0x48] sm:$0xf] %vm410, %v399
      %418 = vst.msk [vmem:[#allocation2 + $0x54] sm:$0xf] %vm410, %v401
      %s419 = scalar_lea.vmem %s165, 120
      %v420 = vld [vmem:[%s419] sm:$0xf]
      %v421 = vld [vmem:[%s419 + $0x4] sm:$0xf]
      %v422 = vld [vmem:[%s419 + $0x8] sm:$0xf]
      %v423 = vld [vmem:[%s419 + $0xc] sm:$0xf]
      %v424 = vld [vmem:[%s419 + $0x10] sm:$0xf]
      %v425 = vld [vmem:[%s419 + $0x14] sm:$0xf]
      %v426 = vld [vmem:[%s419 + $0x18] sm:$0xf]
      %v427 = vld [vmem:[%s419 + $0x1c] sm:$0xf]
      %428 = vst.msk [vmem:[#allocation2 + $0x4] sm:$0xf] %vm181, %v420
      %429 = vst.msk [vmem:[#allocation2 + $0x10] sm:$0xf] %vm181, %v421
      %430 = vst.msk [vmem:[#allocation2 + $0x1c] sm:$0xf] %vm181, %v422
      %431 = vst.msk [vmem:[#allocation2 + $0x28] sm:$0xf] %vm181, %v423
      %432 = vst.msk [vmem:[#allocation2 + $0x34] sm:$0xf] %vm181, %v424
      %433 = vst.msk [vmem:[#allocation2 + $0x40] sm:$0xf] %vm181, %v425
      %434 = vst.msk [vmem:[#allocation2 + $0x4c] sm:$0xf] %vm181, %v426
      %435 = vst.msk [vmem:[#allocation2 + $0x58] sm:$0xf] %vm181, %v427
      %v436 = vld [vmem:[%s369] sm:$0xf]
      %v437 = vld [vmem:[%s369 + $0x4] sm:$0xf]
      %v438 = vld [vmem:[%s369 + $0x8] sm:$0xf]
      %v439 = vld [vmem:[%s369 + $0xc] sm:$0xf]
      %v440 = vld [vmem:[%s369 + $0x10] sm:$0xf]
      %v441 = vld [vmem:[%s369 + $0x14] sm:$0xf]
      %v442 = vld [vmem:[%s369 + $0x18] sm:$0xf]
      %v443 = vld [vmem:[%s369 + $0x1c] sm:$0xf]
      %v444 = vld [vmem:[%s369 + $0x20] sm:$0x1]
      %v446 = vshrl.u32 %v436, 16
      %v448 = vrot.slane %v446, 4
      %v449 = vshll.u32 %v436, 16
      %v451 = vrot.slane %v449, 5
      %v452 = vor.u32 %v448, %v451
      %v453 = vrot.slane %v452, 4
      %v455 = vshll.u32 %v437, 16
      %v457 = vrot.slane %v455, 5
      %v458 = vsel %vm251, %v453, %v457
      %v459 = vshrl.u32 %v437, 16
      %v461 = vrot.slane %v459, 4
      %v462 = vor.u32 %v461, %v457
      %v463 = vrot.slane %v462, 4
      %v465 = vshll.u32 %v438, 16
      %v467 = vrot.slane %v465, 5
      %v468 = vsel %vm251, %v463, %v467
      %v469 = vshrl.u32 %v438, 16
      %v471 = vrot.slane %v469, 4
      %v472 = vor.u32 %v471, %v467
      %v473 = vrot.slane %v472, 4
      %v475 = vshll.u32 %v439, 16
      %v477 = vrot.slane %v475, 5
      %v478 = vsel %vm251, %v473, %v477
      %v479 = vshrl.u32 %v439, 16
      %v481 = vrot.slane %v479, 4
      %v482 = vor.u32 %v481, %v477
      %v483 = vrot.slane %v482, 4
      %v485 = vshll.u32 %v440, 16
      %v487 = vrot.slane %v485, 5
      %v488 = vsel %vm251, %v483, %v487
      %v489 = vshrl.u32 %v440, 16
      %v491 = vrot.slane %v489, 4
      %v492 = vor.u32 %v491, %v487
      %v493 = vrot.slane %v492, 4
      %v495 = vshll.u32 %v441, 16
      %v497 = vrot.slane %v495, 5
      %v498 = vsel %vm251, %v493, %v497
      %v499 = vshrl.u32 %v441, 16
      %v501 = vrot.slane %v499, 4
      %v502 = vor.u32 %v501, %v497
      %v503 = vrot.slane %v502, 4
      %v505 = vshll.u32 %v442, 16
      %v507 = vrot.slane %v505, 5
      %v508 = vsel %vm251, %v503, %v507
      %v509 = vshrl.u32 %v442, 16
      %v511 = vrot.slane %v509, 4
      %v512 = vor.u32 %v511, %v507
      %v513 = vrot.slane %v512, 4
      %v515 = vshll.u32 %v443, 16
      %v517 = vrot.slane %v515, 5
      %v518 = vsel %vm251, %v513, %v517
      %v519 = vshrl.u32 %v443, 16
      %v521 = vrot.slane %v519, 4
      %v522 = vor.u32 %v521, %v517
      %v523 = vrot.slane %v522, 4
      %v525 = vshll.u32 %v444, 16
      %v527 = vrot.slane %v525, 5
      %v528 = vsel %vm251, %v523, %v527
      %529 = vrot.lane.b32.xlu0 %v458, 32
      %v530 = vpop.permute.xlu0 %529
      %531 = vrot.lane.b32.xlu0 %v468, 32
      %v532 = vpop.permute.xlu0 %531
      %533 = vrot.lane.b32.xlu0 %v478, 32
      %v534 = vpop.permute.xlu0 %533
      %535 = vrot.lane.b32.xlu0 %v488, 32
      %v536 = vpop.permute.xlu0 %535
      %537 = vrot.lane.b32.xlu0 %v498, 32
      %v538 = vpop.permute.xlu0 %537
      %539 = vrot.lane.b32.xlu0 %v508, 32
      %v540 = vpop.permute.xlu0 %539
      %541 = vrot.lane.b32.xlu0 %v518, 32
      %v542 = vpop.permute.xlu0 %541
      %543 = vrot.lane.b32.xlu0 %v528, 32
      %v544 = vpop.permute.xlu0 %543
      %553 = vst.msk [vmem:[#allocation2 + $0x4] sm:$0xf] %vm231, %v530
      %554 = vst.msk [vmem:[#allocation2 + $0x10] sm:$0xf] %vm231, %v532
      %555 = vst.msk [vmem:[#allocation2 + $0x1c] sm:$0xf] %vm231, %v534
      %556 = vst.msk [vmem:[#allocation2 + $0x28] sm:$0xf] %vm231, %v536
      %557 = vst.msk [vmem:[#allocation2 + $0x34] sm:$0xf] %vm231, %v538
      %558 = vst.msk [vmem:[#allocation2 + $0x40] sm:$0xf] %vm231, %v540
      %559 = vst.msk [vmem:[#allocation2 + $0x4c] sm:$0xf] %vm231, %v542
      %560 = vst.msk [vmem:[#allocation2 + $0x58] sm:$0xf] %vm231, %v544
      %v561 = vld [vmem:[%s165 + $0x4] sm:$0xf]
      %v562 = vld [vmem:[%s165 + $0x8] sm:$0xf]
      %v563 = vld [vmem:[%s165 + $0xc] sm:$0xf]
      %v564 = vld [vmem:[%s165 + $0x10] sm:$0xf]
      %v565 = vld [vmem:[%s165 + $0x14] sm:$0xf]
      %v566 = vld [vmem:[%s165 + $0x18] sm:$0xf]
      %v567 = vld [vmem:[%s165 + $0x1c] sm:$0xf]
      %v568 = vld [vmem:[%s165 + $0x20] sm:$0xf]
      %577 = vrot.lane.b32.xlu0 %v561, 64
      %v578 = vpop.permute.xlu0 %577
      %579 = vrot.lane.b32.xlu0 %v562, 64
      %v580 = vpop.permute.xlu0 %579
      %581 = vrot.lane.b32.xlu0 %v563, 64
      %v582 = vpop.permute.xlu0 %581
      %583 = vrot.lane.b32.xlu0 %v564, 64
      %v584 = vpop.permute.xlu0 %583
      %585 = vrot.lane.b32.xlu0 %v565, 64
      %v586 = vpop.permute.xlu0 %585
      %587 = vrot.lane.b32.xlu0 %v566, 64
      %v588 = vpop.permute.xlu0 %587
      %589 = vrot.lane.b32.xlu0 %v567, 64
      %v590 = vpop.permute.xlu0 %589
      %591 = vrot.lane.b32.xlu0 %v568, 64
      %v592 = vpop.permute.xlu0 %591
      %601 = vst.msk [vmem:[#allocation2 + $0x4] sm:$0xf] %vm360, %v578
      %602 = vst.msk [vmem:[#allocation2 + $0x10] sm:$0xf] %vm360, %v580
      %603 = vst.msk [vmem:[#allocation2 + $0x1c] sm:$0xf] %vm360, %v582
      %604 = vst.msk [vmem:[#allocation2 + $0x28] sm:$0xf] %vm360, %v584
      %605 = vst.msk [vmem:[#allocation2 + $0x34] sm:$0xf] %vm360, %v586
      %606 = vst.msk [vmem:[#allocation2 + $0x40] sm:$0xf] %vm360, %v588
      %607 = vst.msk [vmem:[#allocation2 + $0x4c] sm:$0xf] %vm360, %v590
      %608 = vst.msk [vmem:[#allocation2 + $0x58] sm:$0xf] %vm360, %v592
      %v609 = vld [vmem:[%s190 + $0x4] sm:$0xf]
      %v610 = vld [vmem:[%s190 + $0x8] sm:$0xf]
      %v611 = vld [vmem:[%s190 + $0xc] sm:$0xf]
      %v612 = vld [vmem:[%s190 + $0x10] sm:$0xf]
      %v613 = vld [vmem:[%s190 + $0x14] sm:$0xf]
      %v614 = vld [vmem:[%s190 + $0x18] sm:$0xf]
      %v615 = vld [vmem:[%s190 + $0x1c] sm:$0xf]
      %v616 = vld [vmem:[%s190 + $0x20] sm:$0xf]
      %625 = vrot.lane.b32.xlu0 %v609, 96
      %v626 = vpop.permute.xlu0 %625
      %627 = vrot.lane.b32.xlu0 %v610, 96
      %v628 = vpop.permute.xlu0 %627
      %629 = vrot.lane.b32.xlu0 %v611, 96
      %v630 = vpop.permute.xlu0 %629
      %631 = vrot.lane.b32.xlu0 %v612, 96
      %v632 = vpop.permute.xlu0 %631
      %633 = vrot.lane.b32.xlu0 %v613, 96
      %v634 = vpop.permute.xlu0 %633
      %635 = vrot.lane.b32.xlu0 %v614, 96
      %v636 = vpop.permute.xlu0 %635
      %637 = vrot.lane.b32.xlu0 %v615, 96
      %v638 = vpop.permute.xlu0 %637
      %639 = vrot.lane.b32.xlu0 %v616, 96
      %v640 = vpop.permute.xlu0 %639
      %649 = vst.msk [vmem:[#allocation2 + $0x4] sm:$0xf] %vm410, %v626
      %650 = vst.msk [vmem:[#allocation2 + $0x10] sm:$0xf] %vm410, %v628
      %651 = vst.msk [vmem:[#allocation2 + $0x1c] sm:$0xf] %vm410, %v630
      %652 = vst.msk [vmem:[#allocation2 + $0x28] sm:$0xf] %vm410, %v632
      %653 = vst.msk [vmem:[#allocation2 + $0x34] sm:$0xf] %vm410, %v634
      %654 = vst.msk [vmem:[#allocation2 + $0x40] sm:$0xf] %vm410, %v636
      %655 = vst.msk [vmem:[#allocation2 + $0x4c] sm:$0xf] %vm410, %v638
      %656 = vst.msk [vmem:[#allocation2 + $0x58] sm:$0xf] %vm410, %v640
      %v657 = vld [vmem:[%s165 + $0x4] sm:$0xf]
      %v658 = vld [vmem:[%s165 + $0x8] sm:$0xf]
      %v659 = vld [vmem:[%s165 + $0xc] sm:$0xf]
      %v660 = vld [vmem:[%s165 + $0x10] sm:$0xf]
      %v661 = vld [vmem:[%s165 + $0x14] sm:$0xf]
      %v662 = vld [vmem:[%s165 + $0x18] sm:$0xf]
      %v663 = vld [vmem:[%s165 + $0x1c] sm:$0xf]
      %v664 = vld [vmem:[%s165 + $0x20] sm:$0xf]
      %v665 = vld [vmem:[%s165 + $0x24] sm:$0x1]
      %v667 = vshrl.u32 %v657, 16
      %v669 = vrot.slane %v667, 4
      %v670 = vshll.u32 %v657, 16
      %v672 = vrot.slane %v670, 5
      %v673 = vor.u32 %v669, %v672
      %v674 = vrot.slane %v673, 4
      %v676 = vshll.u32 %v658, 16
      %v678 = vrot.slane %v676, 5
      %v679 = vsel %vm251, %v674, %v678
      %v680 = vshrl.u32 %v658, 16
      %v682 = vrot.slane %v680, 4
      %v683 = vor.u32 %v682, %v678
      %v684 = vrot.slane %v683, 4
      %v686 = vshll.u32 %v659, 16
      %v688 = vrot.slane %v686, 5
      %v689 = vsel %vm251, %v684, %v688
      %v690 = vshrl.u32 %v659, 16
      %v692 = vrot.slane %v690, 4
      %v693 = vor.u32 %v692, %v688
      %v694 = vrot.slane %v693, 4
      %v696 = vshll.u32 %v660, 16
      %v698 = vrot.slane %v696, 5
      %v699 = vsel %vm251, %v694, %v698
      %v700 = vshrl.u32 %v660, 16
      %v702 = vrot.slane %v700, 4
      %v703 = vor.u32 %v702, %v698
      %v704 = vrot.slane %v703, 4
      %v706 = vshll.u32 %v661, 16
      %v708 = vrot.slane %v706, 5
      %v709 = vsel %vm251, %v704, %v708
      %v710 = vshrl.u32 %v661, 16
      %v712 = vrot.slane %v710, 4
      %v713 = vor.u32 %v712, %v708
      %v714 = vrot.slane %v713, 4
      %v716 = vshll.u32 %v662, 16
      %v718 = vrot.slane %v716, 5
      %v719 = vsel %vm251, %v714, %v718
      %v720 = vshrl.u32 %v662, 16
      %v722 = vrot.slane %v720, 4
      %v723 = vor.u32 %v722, %v718
      %v724 = vrot.slane %v723, 4
      %v726 = vshll.u32 %v663, 16
      %v728 = vrot.slane %v726, 5
      %v729 = vsel %vm251, %v724, %v728
      %v730 = vshrl.u32 %v663, 16
      %v732 = vrot.slane %v730, 4
      %v733 = vor.u32 %v732, %v728
      %v734 = vrot.slane %v733, 4
      %v736 = vshll.u32 %v664, 16
      %v738 = vrot.slane %v736, 5
      %v739 = vsel %vm251, %v734, %v738
      %v740 = vshrl.u32 %v664, 16
      %v742 = vrot.slane %v740, 4
      %v743 = vor.u32 %v742, %v738
      %v744 = vrot.slane %v743, 4
      %v746 = vshll.u32 %v665, 16
      %v748 = vrot.slane %v746, 5
      %v749 = vsel %vm251, %v744, %v748
      %758 = vst.msk [vmem:[#allocation2 + $0x8] sm:$0xf] %vm181, %v679
      %759 = vst.msk [vmem:[#allocation2 + $0x14] sm:$0xf] %vm181, %v689
      %760 = vst.msk [vmem:[#allocation2 + $0x20] sm:$0xf] %vm181, %v699
      %761 = vst.msk [vmem:[#allocation2 + $0x2c] sm:$0xf] %vm181, %v709
      %762 = vst.msk [vmem:[#allocation2 + $0x38] sm:$0xf] %vm181, %v719
      %763 = vst.msk [vmem:[#allocation2 + $0x44] sm:$0xf] %vm181, %v729
      %764 = vst.msk [vmem:[#allocation2 + $0x50] sm:$0xf] %vm181, %v739
      %765 = vst.msk [vmem:[#allocation2 + $0x5c] sm:$0xf] %vm181, %v749
      %v766 = vld [vmem:[#allocation2] sm:$0xff]
      %v767 = vld [vmem:[#allocation2 + $0x8] sm:$0xf]
      %v768 = vld [vmem:[#allocation2 + $0xc] sm:$0xff]
      %v769 = vld [vmem:[#allocation2 + $0x14] sm:$0xf]
      %v770 = vld [vmem:[#allocation2 + $0x18] sm:$0xff]
      %v771 = vld [vmem:[#allocation2 + $0x20] sm:$0xf]
      %v772 = vld [vmem:[#allocation2 + $0x24] sm:$0xff]
      %v773 = vld [vmem:[#allocation2 + $0x2c] sm:$0xf]
      %v774 = vld [vmem:[#allocation2 + $0x30] sm:$0xff]
      %v775 = vld [vmem:[#allocation2 + $0x38] sm:$0xf]
      %v776 = vld [vmem:[#allocation2 + $0x3c] sm:$0xff]
      %v777 = vld [vmem:[#allocation2 + $0x44] sm:$0xf]
      %v778 = vld [vmem:[#allocation2 + $0x48] sm:$0xff]
      %v779 = vld [vmem:[#allocation2 + $0x50] sm:$0xf]
      %v780 = vld [vmem:[#allocation2 + $0x54] sm:$0xff]
      %v781 = vld [vmem:[#allocation2 + $0x5c] sm:$0xf]
      %v782 = vld [vmem:[%s1] sm:$0xf]
      %v783 = vld [vmem:[%s1 + $0x4] sm:$0xf]
      %v784 = vld [vmem:[%s1 + $0x8] sm:$0xf]
      %v785 = vld [vmem:[%s1 + $0xc] sm:$0xf]
      %v786 = vld [vmem:[%s1 + $0x10] sm:$0xf]
      %v787 = vld [vmem:[%s1 + $0x14] sm:$0xf]
      %v788 = vld [vmem:[%s1 + $0x18] sm:$0xf]
      %v789 = vld [vmem:[%s1 + $0x1c] sm:$0xf]
      %v790 = vld [vmem:[%s1 + $0x20] sm:$0xf]
      %v791 = vld [vmem:[%s1 + $0x24] sm:$0xf]
      %v792 = vld [vmem:[%s1 + $0x28] sm:$0xf]
      %v793 = vld [vmem:[%s1 + $0x2c] sm:$0xf]
      %v794 = vld [vmem:[%s1 + $0x30] sm:$0xf]
      %v795 = vld [vmem:[%s1 + $0x34] sm:$0xf]
      %v796 = vld [vmem:[%s1 + $0x38] sm:$0xf]
      %v797 = vld [vmem:[%s1 + $0x3c] sm:$0xf]
      %v798 = vld [vmem:[%s1 + $0x40] sm:$0xf]
      %v799 = vld [vmem:[%s1 + $0x44] sm:$0xf]
      %v800 = vld [vmem:[%s1 + $0x48] sm:$0xf]
      %v801 = vld [vmem:[%s1 + $0x4c] sm:$0xf]
      %v802 = vld [vmem:[%s1 + $0x50] sm:$0xf]
      %v803 = vld [vmem:[%s1 + $0x54] sm:$0xf]
      %v804 = vld [vmem:[%s1 + $0x58] sm:$0xf]
      %v805 = vld [vmem:[%s1 + $0x5c] sm:$0xf]
      %v806 = vld [vmem:[%s1 + $0x60] sm:$0xf]
      %v807 = vld [vmem:[%s1 + $0x64] sm:$0xf]
      %v808 = vld [vmem:[%s1 + $0x68] sm:$0xf]
      %v809 = vld [vmem:[%s1 + $0x6c] sm:$0xf]
      %v810 = vld [vmem:[%s1 + $0x70] sm:$0xf]
      %v811 = vld [vmem:[%s1 + $0x74] sm:$0xf]
      %v812 = vld [vmem:[%s1 + $0x78] sm:$0xf]
      %v813 = vld [vmem:[%s1 + $0x7c] sm:$0xf]
      %v814 = vld [vmem:[%s1 + $0x80] sm:$0xf]
      %v815 = vld [vmem:[%s1 + $0x84] sm:$0xf]
      %v816 = vld [vmem:[%s1 + $0x88] sm:$0xf]
      %v817 = vld [vmem:[%s1 + $0x8c] sm:$0xf]
      %v834 = vunpack.c.l.b16 %v766
      %v835 = vunpack.c.h.b16 %v766
      %v836 = vunpack.c.l.b16 %v767
      %v837 = vunpack.c.l.b16 %v768
      %v838 = vunpack.c.h.b16 %v768
      %v839 = vunpack.c.l.b16 %v769
      %v840 = vunpack.c.l.b16 %v770
      %v841 = vunpack.c.h.b16 %v770
      %v842 = vunpack.c.l.b16 %v771
      %v843 = vunpack.c.l.b16 %v772
      %v844 = vunpack.c.h.b16 %v772
      %v845 = vunpack.c.l.b16 %v773
      %v846 = vunpack.c.l.b16 %v774
      %v847 = vunpack.c.h.b16 %v774
      %v848 = vunpack.c.l.b16 %v775
      %v849 = vunpack.c.l.b16 %v776
      %v850 = vunpack.c.h.b16 %v776
      %v851 = vunpack.c.l.b16 %v777
      %v852 = vunpack.c.l.b16 %v778
      %v853 = vunpack.c.h.b16 %v778
      %v854 = vunpack.c.l.b16 %v779
      %v855 = vunpack.c.l.b16 %v780
      %v856 = vunpack.c.h.b16 %v780
      %v857 = vunpack.c.l.b16 %v781
      %v858 = vpack.c.b16 %v837, %v834
      %v859 = vpack.c.b16 %v838, %v835
      %v860 = vpack.c.b16 %v839, %v836
      %v861 = vpack.c.b16 %v843, %v840
      %v862 = vpack.c.b16 %v844, %v841
      %v863 = vpack.c.b16 %v845, %v842
      %v864 = vpack.c.b16 %v849, %v846
      %v865 = vpack.c.b16 %v850, %v847
      %v866 = vpack.c.b16 %v851, %v848
      %v867 = vpack.c.b16 %v855, %v852
      %v868 = vpack.c.b16 %v856, %v853
      %v869 = vpack.c.b16 %v857, %v854
      %v914 = vunpack.c.l.b16 %v782
      %v915 = vunpack.c.l.b16 %v783
      %v916 = vunpack.c.l.b16 %v784
      %v917 = vunpack.c.l.b16 %v785
      %v918 = vunpack.c.l.b16 %v786
      %v919 = vunpack.c.l.b16 %v787
      %v920 = vunpack.c.l.b16 %v788
      %v921 = vunpack.c.l.b16 %v789
      %v922 = vunpack.c.l.b16 %v790
      %v923 = vunpack.c.l.b16 %v791
      %v924 = vunpack.c.l.b16 %v792
      %v925 = vunpack.c.l.b16 %v793
      %v926 = vunpack.c.l.b16 %v794
      %v927 = vunpack.c.l.b16 %v795
      %v928 = vunpack.c.l.b16 %v796
      %v929 = vunpack.c.l.b16 %v797
      %v930 = vunpack.c.l.b16 %v798
      %v931 = vunpack.c.l.b16 %v799
      %v932 = vunpack.c.l.b16 %v800
      %v933 = vunpack.c.l.b16 %v801
      %v934 = vunpack.c.l.b16 %v802
      %v935 = vunpack.c.l.b16 %v803
      %v936 = vunpack.c.l.b16 %v804
      %v937 = vunpack.c.l.b16 %v805
      %v938 = vunpack.c.l.b16 %v806
      %v939 = vunpack.c.l.b16 %v807
      %v940 = vunpack.c.l.b16 %v808
      %v941 = vunpack.c.l.b16 %v809
      %v942 = vunpack.c.l.b16 %v810
      %v943 = vunpack.c.l.b16 %v811
      %v944 = vunpack.c.l.b16 %v812
      %v945 = vunpack.c.l.b16 %v813
      %v946 = vunpack.c.l.b16 %v814
      %v947 = vunpack.c.l.b16 %v815
      %v948 = vunpack.c.l.b16 %v816
      %v949 = vunpack.c.l.b16 %v817
      %v950 = vpack.c.b16 %v915, %v914
      %v951 = vpack.c.b16 %v917, %v916
      %v952 = vpack.c.b16 %v919, %v918
      %v953 = vpack.c.b16 %v921, %v920
      %v954 = vpack.c.b16 %v923, %v922
      %v955 = vpack.c.b16 %v925, %v924
      %v956 = vpack.c.b16 %v927, %v926
      %v957 = vpack.c.b16 %v929, %v928
      %v958 = vpack.c.b16 %v931, %v930
      %v959 = vpack.c.b16 %v933, %v932
      %v960 = vpack.c.b16 %v935, %v934
      %v961 = vpack.c.b16 %v937, %v936
      %v962 = vpack.c.b16 %v939, %v938
      %v963 = vpack.c.b16 %v941, %v940
      %v964 = vpack.c.b16 %v943, %v942
      %v965 = vpack.c.b16 %v945, %v944
      %v966 = vpack.c.b16 %v947, %v946
      %v967 = vpack.c.b16 %v949, %v948
      %vm986 = vcmask 261120
      %v988 = vsel %vm986, %v860, 0
      %v991 = vsel %vm986, %v863, 0
      %v994 = vsel %vm986, %v866, 0
      %v997 = vsel %vm986, %v869, 0
      %999 = vmatpush.bf16.msra.mxu0 %v957
      %1000 = vmatpush.bf16.msra.mxu0 %v956
      %1001 = vmatpush.bf16.msra.mxu0 %v955
      %1002 = vmatpush.bf16.msra.mxu0 %v954
      %1003 = vmatpush.bf16.msra.mxu0 %v953
      %1004 = vmatpush.bf16.msra.mxu0 %v952
      %1005 = vmatpush.bf16.msra.mxu0 %v951
      %1006 = vmatpush.bf16.msra.mxu0 %v950
      %1007 = vmatmul.bf16.gmra.mxu0 %v858
      %v1008 = vpop.f32.mrf.mxu0
      %v1009 = vadd.f32 0.0, %v1008
      %v1010 = vpop.f32.mrf.mxu0
      %v1011 = vadd.f32 0.0, %v1010
      %1012 = vmatmul.bf16.gmra.mxu0 %v861
      %v1013 = vpop.f32.mrf.mxu0
      %v1014 = vadd.f32 0.0, %v1013
      %v1015 = vpop.f32.mrf.mxu0
      %v1016 = vadd.f32 0.0, %v1015
      %1017 = vmatmul.bf16.gmra.mxu0 %v864
      %v1018 = vpop.f32.mrf.mxu0
      %v1019 = vadd.f32 0.0, %v1018
      %v1020 = vpop.f32.mrf.mxu0
      %v1021 = vadd.f32 0.0, %v1020
      %1022 = vmatmul.bf16.gmra.mxu0 %v867
      %v1023 = vpop.f32.mrf.mxu0
      %v1024 = vadd.f32 0.0, %v1023
      %v1025 = vpop.f32.mrf.mxu0
      %v1026 = vadd.f32 0.0, %v1025
      %1027 = vdwg.mxu0
      %1028 = vmatpush.bf16.msra.mxu0 %v965
      %1029 = vmatpush.bf16.msra.mxu0 %v964
      %1030 = vmatpush.bf16.msra.mxu0 %v963
      %1031 = vmatpush.bf16.msra.mxu0 %v962
      %1032 = vmatpush.bf16.msra.mxu0 %v961
      %1033 = vmatpush.bf16.msra.mxu0 %v960
      %1034 = vmatpush.bf16.msra.mxu0 %v959
      %1035 = vmatpush.bf16.msra.mxu0 %v958
      %1036 = vmatmul.bf16.gmra.mxu0 %v859
      %v1037 = vpop.f32.mrf.mxu0
      %v1038 = vadd.f32 %v1009, %v1037
      %v1039 = vpop.f32.mrf.mxu0
      %v1040 = vadd.f32 %v1011, %v1039
      %1041 = vmatmul.bf16.gmra.mxu0 %v862
      %v1042 = vpop.f32.mrf.mxu0
      %v1043 = vadd.f32 %v1014, %v1042
      %v1044 = vpop.f32.mrf.mxu0
      %v1045 = vadd.f32 %v1016, %v1044
      %1046 = vmatmul.bf16.gmra.mxu0 %v865
      %v1047 = vpop.f32.mrf.mxu0
      %v1048 = vadd.f32 %v1019, %v1047
      %v1049 = vpop.f32.mrf.mxu0
      %v1050 = vadd.f32 %v1021, %v1049
      %1051 = vmatmul.bf16.gmra.mxu0 %v868
      %v1052 = vpop.f32.mrf.mxu0
      %v1053 = vadd.f32 %v1024, %v1052
      %v1054 = vpop.f32.mrf.mxu0
      %v1055 = vadd.f32 %v1026, %v1054
      %1056 = vdwg.mxu0
      %1057 = vmatpush.bf16.msra.mxu0 0
      %1058 = vmatpush.bf16.msra.mxu0 0
      %1059 = vmatpush.bf16.msra.mxu0 0
      %1060 = vmatpush.bf16.msra.mxu0 0
      %1061 = vmatpush.bf16.msra.mxu0 0
      %1062 = vmatpush.bf16.msra.mxu0 0
      %1063 = vmatpush.bf16.msra.mxu0 %v967
      %1064 = vmatpush.bf16.msra.mxu0 %v966
      %1065 = vmatmul.bf16.gmra.mxu0 %v988
      %v1066 = vpop.f32.mrf.mxu0
      %v1067 = vadd.f32 %v1038, %v1066
      %v1068 = vpop.f32.mrf.mxu0
      %v1069 = vadd.f32 %v1040, %v1068
      %1070 = vmatmul.bf16.gmra.mxu0 %v991
      %v1071 = vpop.f32.mrf.mxu0
      %v1072 = vadd.f32 %v1043, %v1071
      %v1073 = vpop.f32.mrf.mxu0
      %v1074 = vadd.f32 %v1045, %v1073
      %1075 = vmatmul.bf16.gmra.mxu0 %v994
      %v1076 = vpop.f32.mrf.mxu0
      %v1077 = vadd.f32 %v1048, %v1076
      %v1078 = vpop.f32.mrf.mxu0
      %v1079 = vadd.f32 %v1050, %v1078
      %1080 = vmatmul.bf16.gmra.mxu0 %v997
      %v1081 = vpop.f32.mrf.mxu0
      %v1082 = vadd.f32 %v1053, %v1081
      %v1083 = vpop.f32.mrf.mxu0
      %v1084 = vadd.f32 %v1055, %v1083
      %1085 = vdwg.mxu0
      %v1086 = vld [vmem:[%s190] sm:$0xf]
      %v1087 = vld [vmem:[%s190 + $0x4] sm:$0xf]
      %v1088 = vld [vmem:[%s190 + $0x8] sm:$0xf]
      %v1089 = vld [vmem:[%s190 + $0xc] sm:$0xf]
      %v1090 = vld [vmem:[%s190 + $0x10] sm:$0xf]
      %v1091 = vld [vmem:[%s190 + $0x14] sm:$0xf]
      %v1092 = vld [vmem:[%s190 + $0x18] sm:$0xf]
      %v1093 = vld [vmem:[%s190 + $0x1c] sm:$0xf]
      %1094 = vst.msk [vmem:[#allocation2] sm:$0xf] %vm181, %v1086
      %1095 = vst.msk [vmem:[#allocation2 + $0xc] sm:$0xf] %vm181, %v1087
      %1096 = vst.msk [vmem:[#allocation2 + $0x18] sm:$0xf] %vm181, %v1088
      %1097 = vst.msk [vmem:[#allocation2 + $0x24] sm:$0xf] %vm181, %v1089
      %1098 = vst.msk [vmem:[#allocation2 + $0x30] sm:$0xf] %vm181, %v1090
      %1099 = vst.msk [vmem:[#allocation2 + $0x3c] sm:$0xf] %vm181, %v1091
      %1100 = vst.msk [vmem:[#allocation2 + $0x48] sm:$0xf] %vm181, %v1092
      %1101 = vst.msk [vmem:[#allocation2 + $0x54] sm:$0xf] %vm181, %v1093
      %v1102 = vld [vmem:[%s165] sm:$0xf]
      %v1103 = vld [vmem:[%s165 + $0x4] sm:$0xf]
      %v1104 = vld [vmem:[%s165 + $0x8] sm:$0xf]
      %v1105 = vld [vmem:[%s165 + $0xc] sm:$0xf]
      %v1106 = vld [vmem:[%s165 + $0x10] sm:$0xf]
      %v1107 = vld [vmem:[%s165 + $0x14] sm:$0xf]
      %v1108 = vld [vmem:[%s165 + $0x18] sm:$0xf]
      %v1109 = vld [vmem:[%s165 + $0x1c] sm:$0xf]
      %v1110 = vld [vmem:[%s165 + $0x20] sm:$0x1]
      %v1112 = vshrl.u32 %v1102, 16
      %v1114 = vrot.slane %v1112, 4
      %v1115 = vshll.u32 %v1102, 16
      %v1117 = vrot.slane %v1115, 5
      %v1118 = vor.u32 %v1114, %v1117
      %v1119 = vrot.slane %v1118, 4
      %v1121 = vshll.u32 %v1103, 16
      %v1123 = vrot.slane %v1121, 5
      %v1124 = vsel %vm251, %v1119, %v1123
      %v1125 = vshrl.u32 %v1103, 16
      %v1127 = vrot.slane %v1125, 4
      %v1128 = vor.u32 %v1127, %v1123
      %v1129 = vrot.slane %v1128, 4
      %v1131 = vshll.u32 %v1104, 16
      %v1133 = vrot.slane %v1131, 5
      %v1134 = vsel %vm251, %v1129, %v1133
      %v1135 = vshrl.u32 %v1104, 16
      %v1137 = vrot.slane %v1135, 4
      %v1138 = vor.u32 %v1137, %v1133
      %v1139 = vrot.slane %v1138, 4
      %v1141 = vshll.u32 %v1105, 16
      %v1143 = vrot.slane %v1141, 5
      %v1144 = vsel %vm251, %v1139, %v1143
      %v1145 = vshrl.u32 %v1105, 16
      %v1147 = vrot.slane %v1145, 4
      %v1148 = vor.u32 %v1147, %v1143
      %v1149 = vrot.slane %v1148, 4
      %v1151 = vshll.u32 %v1106, 16
      %v1153 = vrot.slane %v1151, 5
      %v1154 = vsel %vm251, %v1149, %v1153
      %v1155 = vshrl.u32 %v1106, 16
      %v1157 = vrot.slane %v1155, 4
      %v1158 = vor.u32 %v1157, %v1153
      %v1159 = vrot.slane %v1158, 4
      %v1161 = vshll.u32 %v1107, 16
      %v1163 = vrot.slane %v1161, 5
      %v1164 = vsel %vm251, %v1159, %v1163
      %v1165 = vshrl.u32 %v1107, 16
      %v1167 = vrot.slane %v1165, 4
      %v1168 = vor.u32 %v1167, %v1163
      %v1169 = vrot.slane %v1168, 4
      %v1171 = vshll.u32 %v1108, 16
      %v1173 = vrot.slane %v1171, 5
      %v1174 = vsel %vm251, %v1169, %v1173
      %v1175 = vshrl.u32 %v1108, 16
      %v1177 = vrot.slane %v1175, 4
      %v1178 = vor.u32 %v1177, %v1173
      %v1179 = vrot.slane %v1178, 4
      %v1181 = vshll.u32 %v1109, 16
      %v1183 = vrot.slane %v1181, 5
      %v1184 = vsel %vm251, %v1179, %v1183
      %v1185 = vshrl.u32 %v1109, 16
      %v1187 = vrot.slane %v1185, 4
      %v1188 = vor.u32 %v1187, %v1183
      %v1189 = vrot.slane %v1188, 4
      %v1191 = vshll.u32 %v1110, 16
      %v1193 = vrot.slane %v1191, 5
      %v1194 = vsel %vm251, %v1189, %v1193
      %1195 = vrot.lane.b32.xlu0 %v1124, 32
      %v1196 = vpop.permute.xlu0 %1195
      %1197 = vrot.lane.b32.xlu0 %v1134, 32
      %v1198 = vpop.permute.xlu0 %1197
      %1199 = vrot.lane.b32.xlu0 %v1144, 32
      %v1200 = vpop.permute.xlu0 %1199
      %1201 = vrot.lane.b32.xlu0 %v1154, 32
      %v1202 = vpop.permute.xlu0 %1201
      %1203 = vrot.lane.b32.xlu0 %v1164, 32
      %v1204 = vpop.permute.xlu0 %1203
      %1205 = vrot.lane.b32.xlu0 %v1174, 32
      %v1206 = vpop.permute.xlu0 %1205
      %1207 = vrot.lane.b32.xlu0 %v1184, 32
      %v1208 = vpop.permute.xlu0 %1207
      %1209 = vrot.lane.b32.xlu0 %v1194, 32
      %v1210 = vpop.permute.xlu0 %1209
      %1219 = vst.msk [vmem:[#allocation2] sm:$0xf] %vm231, %v1196
      %1220 = vst.msk [vmem:[#allocation2 + $0xc] sm:$0xf] %vm231, %v1198
      %1221 = vst.msk [vmem:[#allocation2 + $0x18] sm:$0xf] %vm231, %v1200
      %1222 = vst.msk [vmem:[#allocation2 + $0x24] sm:$0xf] %vm231, %v1202
      %1223 = vst.msk [vmem:[#allocation2 + $0x30] sm:$0xf] %vm231, %v1204
      %1224 = vst.msk [vmem:[#allocation2 + $0x3c] sm:$0xf] %vm231, %v1206
      %1225 = vst.msk [vmem:[#allocation2 + $0x48] sm:$0xf] %vm231, %v1208
      %1226 = vst.msk [vmem:[#allocation2 + $0x54] sm:$0xf] %vm231, %v1210
      %v1227 = vld [vmem:[%s190] sm:$0xf]
      %v1228 = vld [vmem:[%s190 + $0x4] sm:$0xf]
      %v1229 = vld [vmem:[%s190 + $0x8] sm:$0xf]
      %v1230 = vld [vmem:[%s190 + $0xc] sm:$0xf]
      %v1231 = vld [vmem:[%s190 + $0x10] sm:$0xf]
      %v1232 = vld [vmem:[%s190 + $0x14] sm:$0xf]
      %v1233 = vld [vmem:[%s190 + $0x18] sm:$0xf]
      %v1234 = vld [vmem:[%s190 + $0x1c] sm:$0xf]
      %v1235 = vld [vmem:[%s190 + $0x20] sm:$0x1]
      %v1237 = vshrl.u32 %v1227, 16
      %v1239 = vrot.slane %v1237, 4
      %v1240 = vshll.u32 %v1227, 16
      %v1242 = vrot.slane %v1240, 5
      %v1243 = vor.u32 %v1239, %v1242
      %v1244 = vrot.slane %v1243, 4
      %v1246 = vshll.u32 %v1228, 16
      %v1248 = vrot.slane %v1246, 5
      %v1249 = vsel %vm251, %v1244, %v1248
      %v1250 = vshrl.u32 %v1228, 16
      %v1252 = vrot.slane %v1250, 4
      %v1253 = vor.u32 %v1252, %v1248
      %v1254 = vrot.slane %v1253, 4
      %v1256 = vshll.u32 %v1229, 16
      %v1258 = vrot.slane %v1256, 5
      %v1259 = vsel %vm251, %v1254, %v1258
      %v1260 = vshrl.u32 %v1229, 16
      %v1262 = vrot.slane %v1260, 4
      %v1263 = vor.u32 %v1262, %v1258
      %v1264 = vrot.slane %v1263, 4
      %v1266 = vshll.u32 %v1230, 16
      %v1268 = vrot.slane %v1266, 5
      %v1269 = vsel %vm251, %v1264, %v1268
      %v1270 = vshrl.u32 %v1230, 16
      %v1272 = vrot.slane %v1270, 4
      %v1273 = vor.u32 %v1272, %v1268
      %v1274 = vrot.slane %v1273, 4
      %v1276 = vshll.u32 %v1231, 16
      %v1278 = vrot.slane %v1276, 5
      %v1279 = vsel %vm251, %v1274, %v1278
      %v1280 = vshrl.u32 %v1231, 16
      %v1282 = vrot.slane %v1280, 4
      %v1283 = vor.u32 %v1282, %v1278
      %v1284 = vrot.slane %v1283, 4
      %v1286 = vshll.u32 %v1232, 16
      %v1288 = vrot.slane %v1286, 5
      %v1289 = vsel %vm251, %v1284, %v1288
      %v1290 = vshrl.u32 %v1232, 16
      %v1292 = vrot.slane %v1290, 4
      %v1293 = vor.u32 %v1292, %v1288
      %v1294 = vrot.slane %v1293, 4
      %v1296 = vshll.u32 %v1233, 16
      %v1298 = vrot.slane %v1296, 5
      %v1299 = vsel %vm251, %v1294, %v1298
      %v1300 = vshrl.u32 %v1233, 16
      %v1302 = vrot.slane %v1300, 4
      %v1303 = vor.u32 %v1302, %v1298
      %v1304 = vrot.slane %v1303, 4
      %v1306 = vshll.u32 %v1234, 16
      %v1308 = vrot.slane %v1306, 5
      %v1309 = vsel %vm251, %v1304, %v1308
      %v1310 = vshrl.u32 %v1234, 16
      %v1312 = vrot.slane %v1310, 4
      %v1313 = vor.u32 %v1312, %v1308
      %v1314 = vrot.slane %v1313, 4
      %v1316 = vshll.u32 %v1235, 16
      %v1318 = vrot.slane %v1316, 5
      %v1319 = vsel %vm251, %v1314, %v1318
      %1320 = vrot.lane.b32.xlu0 %v1249, 64
      %v1321 = vpop.permute.xlu0 %1320
      %1322 = vrot.lane.b32.xlu0 %v1259, 64
      %v1323 = vpop.permute.xlu0 %1322
      %1324 = vrot.lane.b32.xlu0 %v1269, 64
      %v1325 = vpop.permute.xlu0 %1324
      %1326 = vrot.lane.b32.xlu0 %v1279, 64
      %v1327 = vpop.permute.xlu0 %1326
      %1328 = vrot.lane.b32.xlu0 %v1289, 64
      %v1329 = vpop.permute.xlu0 %1328
      %1330 = vrot.lane.b32.xlu0 %v1299, 64
      %v1331 = vpop.permute.xlu0 %1330
      %1332 = vrot.lane.b32.xlu0 %v1309, 64
      %v1333 = vpop.permute.xlu0 %1332
      %1334 = vrot.lane.b32.xlu0 %v1319, 64
      %v1335 = vpop.permute.xlu0 %1334
      %1344 = vst.msk [vmem:[#allocation2] sm:$0xf] %vm360, %v1321
      %1345 = vst.msk [vmem:[#allocation2 + $0xc] sm:$0xf] %vm360, %v1323
      %1346 = vst.msk [vmem:[#allocation2 + $0x18] sm:$0xf] %vm360, %v1325
      %1347 = vst.msk [vmem:[#allocation2 + $0x24] sm:$0xf] %vm360, %v1327
      %1348 = vst.msk [vmem:[#allocation2 + $0x30] sm:$0xf] %vm360, %v1329
      %1349 = vst.msk [vmem:[#allocation2 + $0x3c] sm:$0xf] %vm360, %v1331
      %1350 = vst.msk [vmem:[#allocation2 + $0x48] sm:$0xf] %vm360, %v1333
      %1351 = vst.msk [vmem:[#allocation2 + $0x54] sm:$0xf] %vm360, %v1335
      %v1352 = vld [vmem:[%s419] sm:$0xf]
      %v1353 = vld [vmem:[%s419 + $0x4] sm:$0xf]
      %v1354 = vld [vmem:[%s419 + $0x8] sm:$0xf]
      %v1355 = vld [vmem:[%s419 + $0xc] sm:$0xf]
      %v1356 = vld [vmem:[%s419 + $0x10] sm:$0xf]
      %v1357 = vld [vmem:[%s419 + $0x14] sm:$0xf]
      %v1358 = vld [vmem:[%s419 + $0x18] sm:$0xf]
      %v1359 = vld [vmem:[%s419 + $0x1c] sm:$0xf]
      %1368 = vrot.lane.b32.xlu0 %v1352, 96
      %v1369 = vpop.permute.xlu0 %1368
      %1370 = vrot.lane.b32.xlu0 %v1353, 96
      %v1371 = vpop.permute.xlu0 %1370
      %1372 = vrot.lane.b32.xlu0 %v1354, 96
      %v1373 = vpop.permute.xlu0 %1372
      %1374 = vrot.lane.b32.xlu0 %v1355, 96
      %v1375 = vpop.permute.xlu0 %1374
      %1376 = vrot.lane.b32.xlu0 %v1356, 96
      %v1377 = vpop.permute.xlu0 %1376
      %1378 = vrot.lane.b32.xlu0 %v1357, 96
      %v1379 = vpop.permute.xlu0 %1378
      %1380 = vrot.lane.b32.xlu0 %v1358, 96
      %v1381 = vpop.permute.xlu0 %1380
      %1382 = vrot.lane.b32.xlu0 %v1359, 96
      %v1383 = vpop.permute.xlu0 %1382
      %1392 = vst.msk [vmem:[#allocation2] sm:$0xf] %vm410, %v1369
      %1393 = vst.msk [vmem:[#allocation2 + $0xc] sm:$0xf] %vm410, %v1371
      %1394 = vst.msk [vmem:[#allocation2 + $0x18] sm:$0xf] %vm410, %v1373
      %1395 = vst.msk [vmem:[#allocation2 + $0x24] sm:$0xf] %vm410, %v1375
      %1396 = vst.msk [vmem:[#allocation2 + $0x30] sm:$0xf] %vm410, %v1377
      %1397 = vst.msk [vmem:[#allocation2 + $0x3c] sm:$0xf] %vm410, %v1379
      %1398 = vst.msk [vmem:[#allocation2 + $0x48] sm:$0xf] %vm410, %v1381
      %1399 = vst.msk [vmem:[#allocation2 + $0x54] sm:$0xf] %vm410, %v1383
      %v1400 = vld [vmem:[%s369] sm:$0xf]
      %v1401 = vld [vmem:[%s369 + $0x4] sm:$0xf]
      %v1402 = vld [vmem:[%s369 + $0x8] sm:$0xf]
      %v1403 = vld [vmem:[%s369 + $0xc] sm:$0xf]
      %v1404 = vld [vmem:[%s369 + $0x10] sm:$0xf]
      %v1405 = vld [vmem:[%s369 + $0x14] sm:$0xf]
      %v1406 = vld [vmem:[%s369 + $0x18] sm:$0xf]
      %v1407 = vld [vmem:[%s369 + $0x1c] sm:$0xf]
      %v1408 = vld [vmem:[%s369 + $0x20] sm:$0x1]
      %v1410 = vshrl.u32 %v1400, 16
      %v1412 = vrot.slane %v1410, 4
      %v1413 = vshll.u32 %v1400, 16
      %v1415 = vrot.slane %v1413, 5
      %v1416 = vor.u32 %v1412, %v1415
      %v1417 = vrot.slane %v1416, 4
      %v1419 = vshll.u32 %v1401, 16
      %v1421 = vrot.slane %v1419, 5
      %v1422 = vsel %vm251, %v1417, %v1421
      %v1423 = vshrl.u32 %v1401, 16
      %v1425 = vrot.slane %v1423, 4
      %v1426 = vor.u32 %v1425, %v1421
      %v1427 = vrot.slane %v1426, 4
      %v1429 = vshll.u32 %v1402, 16
      %v1431 = vrot.slane %v1429, 5
      %v1432 = vsel %vm251, %v1427, %v1431
      %v1433 = vshrl.u32 %v1402, 16
      %v1435 = vrot.slane %v1433, 4
      %v1436 = vor.u32 %v1435, %v1431
      %v1437 = vrot.slane %v1436, 4
      %v1439 = vshll.u32 %v1403, 16
      %v1441 = vrot.slane %v1439, 5
      %v1442 = vsel %vm251, %v1437, %v1441
      %v1443 = vshrl.u32 %v1403, 16
      %v1445 = vrot.slane %v1443, 4
      %v1446 = vor.u32 %v1445, %v1441
      %v1447 = vrot.slane %v1446, 4
      %v1449 = vshll.u32 %v1404, 16
      %v1451 = vrot.slane %v1449, 5
      %v1452 = vsel %vm251, %v1447, %v1451
      %v1453 = vshrl.u32 %v1404, 16
      %v1455 = vrot.slane %v1453, 4
      %v1456 = vor.u32 %v1455, %v1451
      %v1457 = vrot.slane %v1456, 4
      %v1459 = vshll.u32 %v1405, 16
      %v1461 = vrot.slane %v1459, 5
      %v1462 = vsel %vm251, %v1457, %v1461
      %v1463 = vshrl.u32 %v1405, 16
      %v1465 = vrot.slane %v1463, 4
      %v1466 = vor.u32 %v1465, %v1461
      %v1467 = vrot.slane %v1466, 4
      %v1469 = vshll.u32 %v1406, 16
      %v1471 = vrot.slane %v1469, 5
      %v1472 = vsel %vm251, %v1467, %v1471
      %v1473 = vshrl.u32 %v1406, 16
      %v1475 = vrot.slane %v1473, 4
      %v1476 = vor.u32 %v1475, %v1471
      %v1477 = vrot.slane %v1476, 4
      %v1479 = vshll.u32 %v1407, 16
      %v1481 = vrot.slane %v1479, 5
      %v1482 = vsel %vm251, %v1477, %v1481
      %v1483 = vshrl.u32 %v1407, 16
      %v1485 = vrot.slane %v1483, 4
      %v1486 = vor.u32 %v1485, %v1481
      %v1487 = vrot.slane %v1486, 4
      %v1489 = vshll.u32 %v1408, 16
      %v1491 = vrot.slane %v1489, 5
      %v1492 = vsel %vm251, %v1487, %v1491
      %1501 = vst.msk [vmem:[#allocation2 + $0x4] sm:$0xf] %vm181, %v1422
      %1502 = vst.msk [vmem:[#allocation2 + $0x10] sm:$0xf] %vm181, %v1432
      %1503 = vst.msk [vmem:[#allocation2 + $0x1c] sm:$0xf] %vm181, %v1442
      %1504 = vst.msk [vmem:[#allocation2 + $0x28] sm:$0xf] %vm181, %v1452
      %1505 = vst.msk [vmem:[#allocation2 + $0x34] sm:$0xf] %vm181, %v1462
      %1506 = vst.msk [vmem:[#allocation2 + $0x40] sm:$0xf] %vm181, %v1472
      %1507 = vst.msk [vmem:[#allocation2 + $0x4c] sm:$0xf] %vm181, %v1482
      %1508 = vst.msk [vmem:[#allocation2 + $0x58] sm:$0xf] %vm181, %v1492
      %v1509 = vld [vmem:[%s419] sm:$0xf]
      %v1510 = vld [vmem:[%s419 + $0x4] sm:$0xf]
      %v1511 = vld [vmem:[%s419 + $0x8] sm:$0xf]
      %v1512 = vld [vmem:[%s419 + $0xc] sm:$0xf]
      %v1513 = vld [vmem:[%s419 + $0x10] sm:$0xf]
      %v1514 = vld [vmem:[%s419 + $0x14] sm:$0xf]
      %v1515 = vld [vmem:[%s419 + $0x18] sm:$0xf]
      %v1516 = vld [vmem:[%s419 + $0x1c] sm:$0xf]
      %v1517 = vld [vmem:[%s419 + $0x20] sm:$0x1]
      %v1519 = vshrl.u32 %v1509, 16
      %v1521 = vrot.slane %v1519, 4
      %v1522 = vshll.u32 %v1509, 16
      %v1524 = vrot.slane %v1522, 5
      %v1525 = vor.u32 %v1521, %v1524
      %v1526 = vrot.slane %v1525, 4
      %v1528 = vshll.u32 %v1510, 16
      %v1530 = vrot.slane %v1528, 5
      %v1531 = vsel %vm251, %v1526, %v1530
      %v1532 = vshrl.u32 %v1510, 16
      %v1534 = vrot.slane %v1532, 4
      %v1535 = vor.u32 %v1534, %v1530
      %v1536 = vrot.slane %v1535, 4
      %v1538 = vshll.u32 %v1511, 16
      %v1540 = vrot.slane %v1538, 5
      %v1541 = vsel %vm251, %v1536, %v1540
      %v1542 = vshrl.u32 %v1511, 16
      %v1544 = vrot.slane %v1542, 4
      %v1545 = vor.u32 %v1544, %v1540
      %v1546 = vrot.slane %v1545, 4
      %v1548 = vshll.u32 %v1512, 16
      %v1550 = vrot.slane %v1548, 5
      %v1551 = vsel %vm251, %v1546, %v1550
      %v1552 = vshrl.u32 %v1512, 16
      %v1554 = vrot.slane %v1552, 4
      %v1555 = vor.u32 %v1554, %v1550
      %v1556 = vrot.slane %v1555, 4
      %v1558 = vshll.u32 %v1513, 16
      %v1560 = vrot.slane %v1558, 5
      %v1561 = vsel %vm251, %v1556, %v1560
      %v1562 = vshrl.u32 %v1513, 16
      %v1564 = vrot.slane %v1562, 4
      %v1565 = vor.u32 %v1564, %v1560
      %v1566 = vrot.slane %v1565, 4
      %v1568 = vshll.u32 %v1514, 16
      %v1570 = vrot.slane %v1568, 5
      %v1571 = vsel %vm251, %v1566, %v1570
      %v1572 = vshrl.u32 %v1514, 16
      %v1574 = vrot.slane %v1572, 4
      %v1575 = vor.u32 %v1574, %v1570
      %v1576 = vrot.slane %v1575, 4
      %v1578 = vshll.u32 %v1515, 16
      %v1580 = vrot.slane %v1578, 5
      %v1581 = vsel %vm251, %v1576, %v1580
      %v1582 = vshrl.u32 %v1515, 16
      %v1584 = vrot.slane %v1582, 4
      %v1585 = vor.u32 %v1584, %v1580
      %v1586 = vrot.slane %v1585, 4
      %v1588 = vshll.u32 %v1516, 16
      %v1590 = vrot.slane %v1588, 5
      %v1591 = vsel %vm251, %v1586, %v1590
      %v1592 = vshrl.u32 %v1516, 16
      %v1594 = vrot.slane %v1592, 4
      %v1595 = vor.u32 %v1594, %v1590
      %v1596 = vrot.slane %v1595, 4
      %v1598 = vshll.u32 %v1517, 16
      %v1600 = vrot.slane %v1598, 5
      %v1601 = vsel %vm251, %v1596, %v1600
      %1602 = vrot.lane.b32.xlu0 %v1531, 32
      %v1603 = vpop.permute.xlu0 %1602
      %1604 = vrot.lane.b32.xlu0 %v1541, 32
      %v1605 = vpop.permute.xlu0 %1604
      %1606 = vrot.lane.b32.xlu0 %v1551, 32
      %v1607 = vpop.permute.xlu0 %1606
      %1608 = vrot.lane.b32.xlu0 %v1561, 32
      %v1609 = vpop.permute.xlu0 %1608
      %1610 = vrot.lane.b32.xlu0 %v1571, 32
      %v1611 = vpop.permute.xlu0 %1610
      %1612 = vrot.lane.b32.xlu0 %v1581, 32
      %v1613 = vpop.permute.xlu0 %1612
      %1614 = vrot.lane.b32.xlu0 %v1591, 32
      %v1615 = vpop.permute.xlu0 %1614
      %1616 = vrot.lane.b32.xlu0 %v1601, 32
      %v1617 = vpop.permute.xlu0 %1616
      %1626 = vst.msk [vmem:[#allocation2 + $0x4] sm:$0xf] %vm231, %v1603
      %1627 = vst.msk [vmem:[#allocation2 + $0x10] sm:$0xf] %vm231, %v1605
      %1628 = vst.msk [vmem:[#allocation2 + $0x1c] sm:$0xf] %vm231, %v1607
      %1629 = vst.msk [vmem:[#allocation2 + $0x28] sm:$0xf] %vm231, %v1609
      %1630 = vst.msk [vmem:[#allocation2 + $0x34] sm:$0xf] %vm231, %v1611
      %1631 = vst.msk [vmem:[#allocation2 + $0x40] sm:$0xf] %vm231, %v1613
      %1632 = vst.msk [vmem:[#allocation2 + $0x4c] sm:$0xf] %vm231, %v1615
      %1633 = vst.msk [vmem:[#allocation2 + $0x58] sm:$0xf] %vm231, %v1617
      %v1634 = vld [vmem:[%s190 + $0x4] sm:$0xf]
      %v1635 = vld [vmem:[%s190 + $0x8] sm:$0xf]
      %v1636 = vld [vmem:[%s190 + $0xc] sm:$0xf]
      %v1637 = vld [vmem:[%s190 + $0x10] sm:$0xf]
      %v1638 = vld [vmem:[%s190 + $0x14] sm:$0xf]
      %v1639 = vld [vmem:[%s190 + $0x18] sm:$0xf]
      %v1640 = vld [vmem:[%s190 + $0x1c] sm:$0xf]
      %v1641 = vld [vmem:[%s190 + $0x20] sm:$0xf]
      %1650 = vrot.lane.b32.xlu0 %v1634, 64
      %v1651 = vpop.permute.xlu0 %1650
      %1652 = vrot.lane.b32.xlu0 %v1635, 64
      %v1653 = vpop.permute.xlu0 %1652
      %1654 = vrot.lane.b32.xlu0 %v1636, 64
      %v1655 = vpop.permute.xlu0 %1654
      %1656 = vrot.lane.b32.xlu0 %v1637, 64
      %v1657 = vpop.permute.xlu0 %1656
      %1658 = vrot.lane.b32.xlu0 %v1638, 64
      %v1659 = vpop.permute.xlu0 %1658
      %1660 = vrot.lane.b32.xlu0 %v1639, 64
      %v1661 = vpop.permute.xlu0 %1660
      %1662 = vrot.lane.b32.xlu0 %v1640, 64
      %v1663 = vpop.permute.xlu0 %1662
      %1664 = vrot.lane.b32.xlu0 %v1641, 64
      %v1665 = vpop.permute.xlu0 %1664
      %1674 = vst.msk [vmem:[#allocation2 + $0x4] sm:$0xf] %vm360, %v1651
      %1675 = vst.msk [vmem:[#allocation2 + $0x10] sm:$0xf] %vm360, %v1653
      %1676 = vst.msk [vmem:[#allocation2 + $0x1c] sm:$0xf] %vm360, %v1655
      %1677 = vst.msk [vmem:[#allocation2 + $0x28] sm:$0xf] %vm360, %v1657
      %1678 = vst.msk [vmem:[#allocation2 + $0x34] sm:$0xf] %vm360, %v1659
      %1679 = vst.msk [vmem:[#allocation2 + $0x40] sm:$0xf] %vm360, %v1661
      %1680 = vst.msk [vmem:[#allocation2 + $0x4c] sm:$0xf] %vm360, %v1663
      %1681 = vst.msk [vmem:[#allocation2 + $0x58] sm:$0xf] %vm360, %v1665
      %v1682 = vld [vmem:[%s165 + $0x4] sm:$0xf]
      %v1683 = vld [vmem:[%s165 + $0x8] sm:$0xf]
      %v1684 = vld [vmem:[%s165 + $0xc] sm:$0xf]
      %v1685 = vld [vmem:[%s165 + $0x10] sm:$0xf]
      %v1686 = vld [vmem:[%s165 + $0x14] sm:$0xf]
      %v1687 = vld [vmem:[%s165 + $0x18] sm:$0xf]
      %v1688 = vld [vmem:[%s165 + $0x1c] sm:$0xf]
      %v1689 = vld [vmem:[%s165 + $0x20] sm:$0xf]
      %v1690 = vld [vmem:[%s165 + $0x24] sm:$0x1]
      %v1692 = vshrl.u32 %v1682, 16
      %v1694 = vrot.slane %v1692, 4
      %v1695 = vshll.u32 %v1682, 16
      %v1697 = vrot.slane %v1695, 5
      %v1698 = vor.u32 %v1694, %v1697
      %v1699 = vrot.slane %v1698, 4
      %v1701 = vshll.u32 %v1683, 16
      %v1703 = vrot.slane %v1701, 5
      %v1704 = vsel %vm251, %v1699, %v1703
      %v1705 = vshrl.u32 %v1683, 16
      %v1707 = vrot.slane %v1705, 4
      %v1708 = vor.u32 %v1707, %v1703
      %v1709 = vrot.slane %v1708, 4
      %v1711 = vshll.u32 %v1684, 16
      %v1713 = vrot.slane %v1711, 5
      %v1714 = vsel %vm251, %v1709, %v1713
      %v1715 = vshrl.u32 %v1684, 16
      %v1717 = vrot.slane %v1715, 4
      %v1718 = vor.u32 %v1717, %v1713
      %v1719 = vrot.slane %v1718, 4
      %v1721 = vshll.u32 %v1685, 16
      %v1723 = vrot.slane %v1721, 5
      %v1724 = vsel %vm251, %v1719, %v1723
      %v1725 = vshrl.u32 %v1685, 16
      %v1727 = vrot.slane %v1725, 4
      %v1728 = vor.u32 %v1727, %v1723
      %v1729 = vrot.slane %v1728, 4
      %v1731 = vshll.u32 %v1686, 16
      %v1733 = vrot.slane %v1731, 5
      %v1734 = vsel %vm251, %v1729, %v1733
      %v1735 = vshrl.u32 %v1686, 16
      %v1737 = vrot.slane %v1735, 4
      %v1738 = vor.u32 %v1737, %v1733
      %v1739 = vrot.slane %v1738, 4
      %v1741 = vshll.u32 %v1687, 16
      %v1743 = vrot.slane %v1741, 5
      %v1744 = vsel %vm251, %v1739, %v1743
      %v1745 = vshrl.u32 %v1687, 16
      %v1747 = vrot.slane %v1745, 4
      %v1748 = vor.u32 %v1747, %v1743
      %v1749 = vrot.slane %v1748, 4
      %v1751 = vshll.u32 %v1688, 16
      %v1753 = vrot.slane %v1751, 5
      %v1754 = vsel %vm251, %v1749, %v1753
      %v1755 = vshrl.u32 %v1688, 16
      %v1757 = vrot.slane %v1755, 4
      %v1758 = vor.u32 %v1757, %v1753
      %v1759 = vrot.slane %v1758, 4
      %v1761 = vshll.u32 %v1689, 16
      %v1763 = vrot.slane %v1761, 5
      %v1764 = vsel %vm251, %v1759, %v1763
      %v1765 = vshrl.u32 %v1689, 16
      %v1767 = vrot.slane %v1765, 4
      %v1768 = vor.u32 %v1767, %v1763
      %v1769 = vrot.slane %v1768, 4
      %v1771 = vshll.u32 %v1690, 16
      %v1773 = vrot.slane %v1771, 5
      %v1774 = vsel %vm251, %v1769, %v1773
      %1775 = vrot.lane.b32.xlu0 %v1704, 96
      %v1776 = vpop.permute.xlu0 %1775
      %1777 = vrot.lane.b32.xlu0 %v1714, 96
      %v1778 = vpop.permute.xlu0 %1777
      %1779 = vrot.lane.b32.xlu0 %v1724, 96
      %v1780 = vpop.permute.xlu0 %1779
      %1781 = vrot.lane.b32.xlu0 %v1734, 96
      %v1782 = vpop.permute.xlu0 %1781
      %1783 = vrot.lane.b32.xlu0 %v1744, 96
      %v1784 = vpop.permute.xlu0 %1783
      %1785 = vrot.lane.b32.xlu0 %v1754, 96
      %v1786 = vpop.permute.xlu0 %1785
      %1787 = vrot.lane.b32.xlu0 %v1764, 96
      %v1788 = vpop.permute.xlu0 %1787
      %1789 = vrot.lane.b32.xlu0 %v1774, 96
      %v1790 = vpop.permute.xlu0 %1789
      %1799 = vst.msk [vmem:[#allocation2 + $0x4] sm:$0xf] %vm410, %v1776
      %1800 = vst.msk [vmem:[#allocation2 + $0x10] sm:$0xf] %vm410, %v1778
      %1801 = vst.msk [vmem:[#allocation2 + $0x1c] sm:$0xf] %vm410, %v1780
      %1802 = vst.msk [vmem:[#allocation2 + $0x28] sm:$0xf] %vm410, %v1782
      %1803 = vst.msk [vmem:[#allocation2 + $0x34] sm:$0xf] %vm410, %v1784
      %1804 = vst.msk [vmem:[#allocation2 + $0x40] sm:$0xf] %vm410, %v1786
      %1805 = vst.msk [vmem:[#allocation2 + $0x4c] sm:$0xf] %vm410, %v1788
      %1806 = vst.msk [vmem:[#allocation2 + $0x58] sm:$0xf] %vm410, %v1790
      %v1807 = vld [vmem:[%s190 + $0x4] sm:$0xf]
      %v1808 = vld [vmem:[%s190 + $0x8] sm:$0xf]
      %v1809 = vld [vmem:[%s190 + $0xc] sm:$0xf]
      %v1810 = vld [vmem:[%s190 + $0x10] sm:$0xf]
      %v1811 = vld [vmem:[%s190 + $0x14] sm:$0xf]
      %v1812 = vld [vmem:[%s190 + $0x18] sm:$0xf]
      %v1813 = vld [vmem:[%s190 + $0x1c] sm:$0xf]
      %v1814 = vld [vmem:[%s190 + $0x20] sm:$0xf]
      %v1815 = vld [vmem:[%s190 + $0x24] sm:$0x1]
      %v1817 = vshrl.u32 %v1807, 16
      %v1819 = vrot.slane %v1817, 4
      %v1820 = vshll.u32 %v1807, 16
      %v1822 = vrot.slane %v1820, 5
      %v1823 = vor.u32 %v1819, %v1822
      %v1824 = vrot.slane %v1823, 4
      %v1826 = vshll.u32 %v1808, 16
      %v1828 = vrot.slane %v1826, 5
      %v1829 = vsel %vm251, %v1824, %v1828
      %v1830 = vshrl.u32 %v1808, 16
      %v1832 = vrot.slane %v1830, 4
      %v1833 = vor.u32 %v1832, %v1828
      %v1834 = vrot.slane %v1833, 4
      %v1836 = vshll.u32 %v1809, 16
      %v1838 = vrot.slane %v1836, 5
      %v1839 = vsel %vm251, %v1834, %v1838
      %v1840 = vshrl.u32 %v1809, 16
      %v1842 = vrot.slane %v1840, 4
      %v1843 = vor.u32 %v1842, %v1838
      %v1844 = vrot.slane %v1843, 4
      %v1846 = vshll.u32 %v1810, 16
      %v1848 = vrot.slane %v1846, 5
      %v1849 = vsel %vm251, %v1844, %v1848
      %v1850 = vshrl.u32 %v1810, 16
      %v1852 = vrot.slane %v1850, 4
      %v1853 = vor.u32 %v1852, %v1848
      %v1854 = vrot.slane %v1853, 4
      %v1856 = vshll.u32 %v1811, 16
      %v1858 = vrot.slane %v1856, 5
      %v1859 = vsel %vm251, %v1854, %v1858
      %v1860 = vshrl.u32 %v1811, 16
      %v1862 = vrot.slane %v1860, 4
      %v1863 = vor.u32 %v1862, %v1858
      %v1864 = vrot.slane %v1863, 4
      %v1866 = vshll.u32 %v1812, 16
      %v1868 = vrot.slane %v1866, 5
      %v1869 = vsel %vm251, %v1864, %v1868
      %v1870 = vshrl.u32 %v1812, 16
      %v1872 = vrot.slane %v1870, 4
      %v1873 = vor.u32 %v1872, %v1868
      %v1874 = vrot.slane %v1873, 4
      %v1876 = vshll.u32 %v1813, 16
      %v1878 = vrot.slane %v1876, 5
      %v1879 = vsel %vm251, %v1874, %v1878
      %v1880 = vshrl.u32 %v1813, 16
      %v1882 = vrot.slane %v1880, 4
      %v1883 = vor.u32 %v1882, %v1878
      %v1884 = vrot.slane %v1883, 4
      %v1886 = vshll.u32 %v1814, 16
      %v1888 = vrot.slane %v1886, 5
      %v1889 = vsel %vm251, %v1884, %v1888
      %v1890 = vshrl.u32 %v1814, 16
      %v1892 = vrot.slane %v1890, 4
      %v1893 = vor.u32 %v1892, %v1888
      %v1894 = vrot.slane %v1893, 4
      %v1896 = vshll.u32 %v1815, 16
      %v1898 = vrot.slane %v1896, 5
      %v1899 = vsel %vm251, %v1894, %v1898
      %1908 = vst.msk [vmem:[#allocation2 + $0x8] sm:$0xf] %vm181, %v1829
      %1909 = vst.msk [vmem:[#allocation2 + $0x14] sm:$0xf] %vm181, %v1839
      %1910 = vst.msk [vmem:[#allocation2 + $0x20] sm:$0xf] %vm181, %v1849
      %1911 = vst.msk [vmem:[#allocation2 + $0x2c] sm:$0xf] %vm181, %v1859
      %1912 = vst.msk [vmem:[#allocation2 + $0x38] sm:$0xf] %vm181, %v1869
      %1913 = vst.msk [vmem:[#allocation2 + $0x44] sm:$0xf] %vm181, %v1879
      %1914 = vst.msk [vmem:[#allocation2 + $0x50] sm:$0xf] %vm181, %v1889
      %1915 = vst.msk [vmem:[#allocation2 + $0x5c] sm:$0xf] %vm181, %v1899
      %v1916 = vld [vmem:[#allocation2] sm:$0xff]
      %v1917 = vld [vmem:[#allocation2 + $0x8] sm:$0xf]
      %v1918 = vld [vmem:[#allocation2 + $0xc] sm:$0xff]
      %v1919 = vld [vmem:[#allocation2 + $0x14] sm:$0xf]
      %v1920 = vld [vmem:[#allocation2 + $0x18] sm:$0xff]
      %v1921 = vld [vmem:[#allocation2 + $0x20] sm:$0xf]
      %v1922 = vld [vmem:[#allocation2 + $0x24] sm:$0xff]
      %v1923 = vld [vmem:[#allocation2 + $0x2c] sm:$0xf]
      %v1924 = vld [vmem:[#allocation2 + $0x30] sm:$0xff]
      %v1925 = vld [vmem:[#allocation2 + $0x38] sm:$0xf]
      %v1926 = vld [vmem:[#allocation2 + $0x3c] sm:$0xff]
      %v1927 = vld [vmem:[#allocation2 + $0x44] sm:$0xf]
      %v1928 = vld [vmem:[#allocation2 + $0x48] sm:$0xff]
      %v1929 = vld [vmem:[#allocation2 + $0x50] sm:$0xf]
      %v1930 = vld [vmem:[#allocation2 + $0x54] sm:$0xff]
      %v1931 = vld [vmem:[#allocation2 + $0x5c] sm:$0xf]
      %v1932 = vld [vmem:[%s1] sm:$0xf]
      %v1933 = vld [vmem:[%s1 + $0x4] sm:$0xf]
      %v1934 = vld [vmem:[%s1 + $0x8] sm:$0xf]
      %v1935 = vld [vmem:[%s1 + $0xc] sm:$0xf]
      %v1936 = vld [vmem:[%s1 + $0x10] sm:$0xf]
      %v1937 = vld [vmem:[%s1 + $0x14] sm:$0xf]
      %v1938 = vld [vmem:[%s1 + $0x18] sm:$0xf]
      %v1939 = vld [vmem:[%s1 + $0x1c] sm:$0xf]
      %v1940 = vld [vmem:[%s1 + $0x20] sm:$0xf]
      %v1941 = vld [vmem:[%s1 + $0x24] sm:$0xf]
      %v1942 = vld [vmem:[%s1 + $0x28] sm:$0xf]
      %v1943 = vld [vmem:[%s1 + $0x2c] sm:$0xf]
      %v1944 = vld [vmem:[%s1 + $0x30] sm:$0xf]
      %v1945 = vld [vmem:[%s1 + $0x34] sm:$0xf]
      %v1946 = vld [vmem:[%s1 + $0x38] sm:$0xf]
      %v1947 = vld [vmem:[%s1 + $0x3c] sm:$0xf]
      %v1948 = vld [vmem:[%s1 + $0x40] sm:$0xf]
      %v1949 = vld [vmem:[%s1 + $0x44] sm:$0xf]
      %v1950 = vld [vmem:[%s1 + $0x48] sm:$0xf]
      %v1951 = vld [vmem:[%s1 + $0x4c] sm:$0xf]
      %v1952 = vld [vmem:[%s1 + $0x50] sm:$0xf]
      %v1953 = vld [vmem:[%s1 + $0x54] sm:$0xf]
      %v1954 = vld [vmem:[%s1 + $0x58] sm:$0xf]
      %v1955 = vld [vmem:[%s1 + $0x5c] sm:$0xf]
      %v1956 = vld [vmem:[%s1 + $0x60] sm:$0xf]
      %v1957 = vld [vmem:[%s1 + $0x64] sm:$0xf]
      %v1958 = vld [vmem:[%s1 + $0x68] sm:$0xf]
      %v1959 = vld [vmem:[%s1 + $0x6c] sm:$0xf]
      %v1960 = vld [vmem:[%s1 + $0x70] sm:$0xf]
      %v1961 = vld [vmem:[%s1 + $0x74] sm:$0xf]
      %v1962 = vld [vmem:[%s1 + $0x78] sm:$0xf]
      %v1963 = vld [vmem:[%s1 + $0x7c] sm:$0xf]
      %v1964 = vld [vmem:[%s1 + $0x80] sm:$0xf]
      %v1965 = vld [vmem:[%s1 + $0x84] sm:$0xf]
      %v1966 = vld [vmem:[%s1 + $0x88] sm:$0xf]
      %v1967 = vld [vmem:[%s1 + $0x8c] sm:$0xf]
      %v1984 = vunpack.c.l.b16 %v1916
      %v1985 = vunpack.c.h.b16 %v1916
      %v1986 = vunpack.c.l.b16 %v1917
      %v1987 = vunpack.c.l.b16 %v1918
      %v1988 = vunpack.c.h.b16 %v1918
      %v1989 = vunpack.c.l.b16 %v1919
      %v1990 = vunpack.c.l.b16 %v1920
      %v1991 = vunpack.c.h.b16 %v1920
      %v1992 = vunpack.c.l.b16 %v1921
      %v1993 = vunpack.c.l.b16 %v1922
      %v1994 = vunpack.c.h.b16 %v1922
      %v1995 = vunpack.c.l.b16 %v1923
      %v1996 = vunpack.c.l.b16 %v1924
      %v1997 = vunpack.c.h.b16 %v1924
      %v1998 = vunpack.c.l.b16 %v1925
      %v1999 = vunpack.c.l.b16 %v1926
      %v2000 = vunpack.c.h.b16 %v1926
      %v2001 = vunpack.c.l.b16 %v1927
      %v2002 = vunpack.c.l.b16 %v1928
      %v2003 = vunpack.c.h.b16 %v1928
      %v2004 = vunpack.c.l.b16 %v1929
      %v2005 = vunpack.c.l.b16 %v1930
      %v2006 = vunpack.c.h.b16 %v1930
      %v2007 = vunpack.c.l.b16 %v1931
      %v2008 = vpack.c.b16 %v1987, %v1984
      %v2009 = vpack.c.b16 %v1988, %v1985
      %v2010 = vpack.c.b16 %v1989, %v1986
      %v2011 = vpack.c.b16 %v1993, %v1990
      %v2012 = vpack.c.b16 %v1994, %v1991
      %v2013 = vpack.c.b16 %v1995, %v1992
      %v2014 = vpack.c.b16 %v1999, %v1996
      %v2015 = vpack.c.b16 %v2000, %v1997
      %v2016 = vpack.c.b16 %v2001, %v1998
      %v2017 = vpack.c.b16 %v2005, %v2002
      %v2018 = vpack.c.b16 %v2006, %v2003
      %v2019 = vpack.c.b16 %v2007, %v2004
      %v2064 = vunpack.c.l.b16 %v1932
      %v2065 = vunpack.c.l.b16 %v1933
      %v2066 = vunpack.c.l.b16 %v1934
      %v2067 = vunpack.c.l.b16 %v1935
      %v2068 = vunpack.c.l.b16 %v1936
      %v2069 = vunpack.c.l.b16 %v1937
      %v2070 = vunpack.c.l.b16 %v1938
      %v2071 = vunpack.c.l.b16 %v1939
      %v2072 = vunpack.c.l.b16 %v1940
      %v2073 = vunpack.c.l.b16 %v1941
      %v2074 = vunpack.c.l.b16 %v1942
      %v2075 = vunpack.c.l.b16 %v1943
      %v2076 = vunpack.c.l.b16 %v1944
      %v2077 = vunpack.c.l.b16 %v1945
      %v2078 = vunpack.c.l.b16 %v1946
      %v2079 = vunpack.c.l.b16 %v1947
      %v2080 = vunpack.c.l.b16 %v1948
      %v2081 = vunpack.c.l.b16 %v1949
      %v2082 = vunpack.c.l.b16 %v1950
      %v2083 = vunpack.c.l.b16 %v1951
      %v2084 = vunpack.c.l.b16 %v1952
      %v2085 = vunpack.c.l.b16 %v1953
      %v2086 = vunpack.c.l.b16 %v1954
      %v2087 = vunpack.c.l.b16 %v1955
      %v2088 = vunpack.c.l.b16 %v1956
      %v2089 = vunpack.c.l.b16 %v1957
      %v2090 = vunpack.c.l.b16 %v1958
      %v2091 = vunpack.c.l.b16 %v1959
      %v2092 = vunpack.c.l.b16 %v1960
      %v2093 = vunpack.c.l.b16 %v1961
      %v2094 = vunpack.c.l.b16 %v1962
      %v2095 = vunpack.c.l.b16 %v1963
      %v2096 = vunpack.c.l.b16 %v1964
      %v2097 = vunpack.c.l.b16 %v1965
      %v2098 = vunpack.c.l.b16 %v1966
      %v2099 = vunpack.c.l.b16 %v1967
      %v2100 = vpack.c.b16 %v2065, %v2064
      %v2101 = vpack.c.b16 %v2067, %v2066
      %v2102 = vpack.c.b16 %v2069, %v2068
      %v2103 = vpack.c.b16 %v2071, %v2070
      %v2104 = vpack.c.b16 %v2073, %v2072
      %v2105 = vpack.c.b16 %v2075, %v2074
      %v2106 = vpack.c.b16 %v2077, %v2076
      %v2107 = vpack.c.b16 %v2079, %v2078
      %v2108 = vpack.c.b16 %v2081, %v2080
      %v2109 = vpack.c.b16 %v2083, %v2082
      %v2110 = vpack.c.b16 %v2085, %v2084
      %v2111 = vpack.c.b16 %v2087, %v2086
      %v2112 = vpack.c.b16 %v2089, %v2088
      %v2113 = vpack.c.b16 %v2091, %v2090
      %v2114 = vpack.c.b16 %v2093, %v2092
      %v2115 = vpack.c.b16 %v2095, %v2094
      %v2116 = vpack.c.b16 %v2097, %v2096
      %v2117 = vpack.c.b16 %v2099, %v2098
      %v2137 = vsel %vm986, %v2010, 0
      %v2140 = vsel %vm986, %v2013, 0
      %v2143 = vsel %vm986, %v2016, 0
      %v2146 = vsel %vm986, %v2019, 0
      %2148 = vmatpush.bf16.msra.mxu0 %v2107
      %2149 = vmatpush.bf16.msra.mxu0 %v2106
      %2150 = vmatpush.bf16.msra.mxu0 %v2105
      %2151 = vmatpush.bf16.msra.mxu0 %v2104
      %2152 = vmatpush.bf16.msra.mxu0 %v2103
      %2153 = vmatpush.bf16.msra.mxu0 %v2102
      %2154 = vmatpush.bf16.msra.mxu0 %v2101
      %2155 = vmatpush.bf16.msra.mxu0 %v2100
      %2156 = vmatmul.bf16.gmra.mxu0 %v2008
      %v2157 = vpop.f32.mrf.mxu0
      %v2158 = vadd.f32 0.0, %v2157
      %v2159 = vpop.f32.mrf.mxu0
      %v2160 = vadd.f32 0.0, %v2159
      %2161 = vmatmul.bf16.gmra.mxu0 %v2011
      %v2162 = vpop.f32.mrf.mxu0
      %v2163 = vadd.f32 0.0, %v2162
      %v2164 = vpop.f32.mrf.mxu0
      %v2165 = vadd.f32 0.0, %v2164
      %2166 = vmatmul.bf16.gmra.mxu0 %v2014
      %v2167 = vpop.f32.mrf.mxu0
      %v2168 = vadd.f32 0.0, %v2167
      %v2169 = vpop.f32.mrf.mxu0
      %v2170 = vadd.f32 0.0, %v2169
      %2171 = vmatmul.bf16.gmra.mxu0 %v2017
      %v2172 = vpop.f32.mrf.mxu0
      %v2173 = vadd.f32 0.0, %v2172
      %v2174 = vpop.f32.mrf.mxu0
      %v2175 = vadd.f32 0.0, %v2174
      %2176 = vdwg.mxu0
      %2177 = vmatpush.bf16.msra.mxu0 %v2115
      %2178 = vmatpush.bf16.msra.mxu0 %v2114
      %2179 = vmatpush.bf16.msra.mxu0 %v2113
      %2180 = vmatpush.bf16.msra.mxu0 %v2112
      %2181 = vmatpush.bf16.msra.mxu0 %v2111
      %2182 = vmatpush.bf16.msra.mxu0 %v2110
      %2183 = vmatpush.bf16.msra.mxu0 %v2109
      %2184 = vmatpush.bf16.msra.mxu0 %v2108
      %2185 = vmatmul.bf16.gmra.mxu0 %v2009
      %v2186 = vpop.f32.mrf.mxu0
      %v2187 = vadd.f32 %v2158, %v2186
      %v2188 = vpop.f32.mrf.mxu0
      %v2189 = vadd.f32 %v2160, %v2188
      %2190 = vmatmul.bf16.gmra.mxu0 %v2012
      %v2191 = vpop.f32.mrf.mxu0
      %v2192 = vadd.f32 %v2163, %v2191
      %v2193 = vpop.f32.mrf.mxu0
      %v2194 = vadd.f32 %v2165, %v2193
      %2195 = vmatmul.bf16.gmra.mxu0 %v2015
      %v2196 = vpop.f32.mrf.mxu0
      %v2197 = vadd.f32 %v2168, %v2196
      %v2198 = vpop.f32.mrf.mxu0
      %v2199 = vadd.f32 %v2170, %v2198
      %2200 = vmatmul.bf16.gmra.mxu0 %v2018
      %v2201 = vpop.f32.mrf.mxu0
      %v2202 = vadd.f32 %v2173, %v2201
      %v2203 = vpop.f32.mrf.mxu0
      %v2204 = vadd.f32 %v2175, %v2203
      %2205 = vdwg.mxu0
      %2206 = vmatpush.bf16.msra.mxu0 0
      %2207 = vmatpush.bf16.msra.mxu0 0
      %2208 = vmatpush.bf16.msra.mxu0 0
      %2209 = vmatpush.bf16.msra.mxu0 0
      %2210 = vmatpush.bf16.msra.mxu0 0
      %2211 = vmatpush.bf16.msra.mxu0 0
      %2212 = vmatpush.bf16.msra.mxu0 %v2117
      %2213 = vmatpush.bf16.msra.mxu0 %v2116
      %2214 = vmatmul.bf16.gmra.mxu0 %v2137
      %v2215 = vpop.f32.mrf.mxu0
      %v2216 = vadd.f32 %v2187, %v2215
      %v2217 = vpop.f32.mrf.mxu0
      %v2218 = vadd.f32 %v2189, %v2217
      %2219 = vmatmul.bf16.gmra.mxu0 %v2140
      %v2220 = vpop.f32.mrf.mxu0
      %v2221 = vadd.f32 %v2192, %v2220
      %v2222 = vpop.f32.mrf.mxu0
      %v2223 = vadd.f32 %v2194, %v2222
      %2224 = vmatmul.bf16.gmra.mxu0 %v2143
      %v2225 = vpop.f32.mrf.mxu0
      %v2226 = vadd.f32 %v2197, %v2225
      %v2227 = vpop.f32.mrf.mxu0
      %v2228 = vadd.f32 %v2199, %v2227
      %2229 = vmatmul.bf16.gmra.mxu0 %v2146
      %v2230 = vpop.f32.mrf.mxu0
      %v2231 = vadd.f32 %v2202, %v2230
      %v2232 = vpop.f32.mrf.mxu0
      %v2233 = vadd.f32 %v2204, %v2232
      %2234 = vdwg.mxu0
      %v2235 = vmax.f32 %v1067, %v2216
      %v2236 = vmax.f32 %v1069, %v2218
      %v2237 = vmax.f32 %v1072, %v2221
      %v2238 = vmax.f32 %v1074, %v2223
      %v2239 = vmax.f32 %v1077, %v2226
      %v2240 = vmax.f32 %v1079, %v2228
      %v2241 = vmax.f32 %v1082, %v2231
      %v2242 = vmax.f32 %v1084, %v2233
      %v2243 = vld [vmem:[%s369] sm:$0xf]
      %v2244 = vld [vmem:[%s369 + $0x4] sm:$0xf]
      %v2245 = vld [vmem:[%s369 + $0x8] sm:$0xf]
      %v2246 = vld [vmem:[%s369 + $0xc] sm:$0xf]
      %v2247 = vld [vmem:[%s369 + $0x10] sm:$0xf]
      %v2248 = vld [vmem:[%s369 + $0x14] sm:$0xf]
      %v2249 = vld [vmem:[%s369 + $0x18] sm:$0xf]
      %v2250 = vld [vmem:[%s369 + $0x1c] sm:$0xf]
      %2251 = vst.msk [vmem:[#allocation2] sm:$0xf] %vm181, %v2243
      %2252 = vst.msk [vmem:[#allocation2 + $0xc] sm:$0xf] %vm181, %v2244
      %2253 = vst.msk [vmem:[#allocation2 + $0x18] sm:$0xf] %vm181, %v2245
      %2254 = vst.msk [vmem:[#allocation2 + $0x24] sm:$0xf] %vm181, %v2246
      %2255 = vst.msk [vmem:[#allocation2 + $0x30] sm:$0xf] %vm181, %v2247
      %2256 = vst.msk [vmem:[#allocation2 + $0x3c] sm:$0xf] %vm181, %v2248
      %2257 = vst.msk [vmem:[#allocation2 + $0x48] sm:$0xf] %vm181, %v2249
      %2258 = vst.msk [vmem:[#allocation2 + $0x54] sm:$0xf] %vm181, %v2250
      %v2259 = vld [vmem:[%s419] sm:$0xf]
      %v2260 = vld [vmem:[%s419 + $0x4] sm:$0xf]
      %v2261 = vld [vmem:[%s419 + $0x8] sm:$0xf]
      %v2262 = vld [vmem:[%s419 + $0xc] sm:$0xf]
      %v2263 = vld [vmem:[%s419 + $0x10] sm:$0xf]
      %v2264 = vld [vmem:[%s419 + $0x14] sm:$0xf]
      %v2265 = vld [vmem:[%s419 + $0x18] sm:$0xf]
      %v2266 = vld [vmem:[%s419 + $0x1c] sm:$0xf]
      %2275 = vrot.lane.b32.xlu0 %v2259, 32
      %v2276 = vpop.permute.xlu0 %2275
      %2277 = vrot.lane.b32.xlu0 %v2260, 32
      %v2278 = vpop.permute.xlu0 %2277
      %2279 = vrot.lane.b32.xlu0 %v2261, 32
      %v2280 = vpop.permute.xlu0 %2279
      %2281 = vrot.lane.b32.xlu0 %v2262, 32
      %v2282 = vpop.permute.xlu0 %2281
      %2283 = vrot.lane.b32.xlu0 %v2263, 32
      %v2284 = vpop.permute.xlu0 %2283
      %2285 = vrot.lane.b32.xlu0 %v2264, 32
      %v2286 = vpop.permute.xlu0 %2285
      %2287 = vrot.lane.b32.xlu0 %v2265, 32
      %v2288 = vpop.permute.xlu0 %2287
      %2289 = vrot.lane.b32.xlu0 %v2266, 32
      %v2290 = vpop.permute.xlu0 %2289
      %2299 = vst.msk [vmem:[#allocation2] sm:$0xf] %vm231, %v2276
      %2300 = vst.msk [vmem:[#allocation2 + $0xc] sm:$0xf] %vm231, %v2278
      %2301 = vst.msk [vmem:[#allocation2 + $0x18] sm:$0xf] %vm231, %v2280
      %2302 = vst.msk [vmem:[#allocation2 + $0x24] sm:$0xf] %vm231, %v2282
      %2303 = vst.msk [vmem:[#allocation2 + $0x30] sm:$0xf] %vm231, %v2284
      %2304 = vst.msk [vmem:[#allocation2 + $0x3c] sm:$0xf] %vm231, %v2286
      %2305 = vst.msk [vmem:[#allocation2 + $0x48] sm:$0xf] %vm231, %v2288
      %2306 = vst.msk [vmem:[#allocation2 + $0x54] sm:$0xf] %vm231, %v2290
      %v2307 = vld [vmem:[%s369] sm:$0xf]
      %v2308 = vld [vmem:[%s369 + $0x4] sm:$0xf]
      %v2309 = vld [vmem:[%s369 + $0x8] sm:$0xf]
      %v2310 = vld [vmem:[%s369 + $0xc] sm:$0xf]
      %v2311 = vld [vmem:[%s369 + $0x10] sm:$0xf]
      %v2312 = vld [vmem:[%s369 + $0x14] sm:$0xf]
      %v2313 = vld [vmem:[%s369 + $0x18] sm:$0xf]
      %v2314 = vld [vmem:[%s369 + $0x1c] sm:$0xf]
      %v2315 = vld [vmem:[%s369 + $0x20] sm:$0x1]
      %v2317 = vshrl.u32 %v2307, 16
      %v2319 = vrot.slane %v2317, 4
      %v2320 = vshll.u32 %v2307, 16
      %v2322 = vrot.slane %v2320, 5
      %v2323 = vor.u32 %v2319, %v2322
      %v2324 = vrot.slane %v2323, 4
      %v2326 = vshll.u32 %v2308, 16
      %v2328 = vrot.slane %v2326, 5
      %v2329 = vsel %vm251, %v2324, %v2328
      %v2330 = vshrl.u32 %v2308, 16
      %v2332 = vrot.slane %v2330, 4
      %v2333 = vor.u32 %v2332, %v2328
      %v2334 = vrot.slane %v2333, 4
      %v2336 = vshll.u32 %v2309, 16
      %v2338 = vrot.slane %v2336, 5
      %v2339 = vsel %vm251, %v2334, %v2338
      %v2340 = vshrl.u32 %v2309, 16
      %v2342 = vrot.slane %v2340, 4
      %v2343 = vor.u32 %v2342, %v2338
      %v2344 = vrot.slane %v2343, 4
      %v2346 = vshll.u32 %v2310, 16
      %v2348 = vrot.slane %v2346, 5
      %v2349 = vsel %vm251, %v2344, %v2348
      %v2350 = vshrl.u32 %v2310, 16
      %v2352 = vrot.slane %v2350, 4
      %v2353 = vor.u32 %v2352, %v2348
      %v2354 = vrot.slane %v2353, 4
      %v2356 = vshll.u32 %v2311, 16
      %v2358 = vrot.slane %v2356, 5
      %v2359 = vsel %vm251, %v2354, %v2358
      %v2360 = vshrl.u32 %v2311, 16
      %v2362 = vrot.slane %v2360, 4
      %v2363 = vor.u32 %v2362, %v2358
      %v2364 = vrot.slane %v2363, 4
      %v2366 = vshll.u32 %v2312, 16
      %v2368 = vrot.slane %v2366, 5
      %v2369 = vsel %vm251, %v2364, %v2368
      %v2370 = vshrl.u32 %v2312, 16
      %v2372 = vrot.slane %v2370, 4
      %v2373 = vor.u32 %v2372, %v2368
      %v2374 = vrot.slane %v2373, 4
      %v2376 = vshll.u32 %v2313, 16
      %v2378 = vrot.slane %v2376, 5
      %v2379 = vsel %vm251, %v2374, %v2378
      %v2380 = vshrl.u32 %v2313, 16
      %v2382 = vrot.slane %v2380, 4
      %v2383 = vor.u32 %v2382, %v2378
      %v2384 = vrot.slane %v2383, 4
      %v2386 = vshll.u32 %v2314, 16
      %v2388 = vrot.slane %v2386, 5
      %v2389 = vsel %vm251, %v2384, %v2388
      %v2390 = vshrl.u32 %v2314, 16
      %v2392 = vrot.slane %v2390, 4
      %v2393 = vor.u32 %v2392, %v2388
      %v2394 = vrot.slane %v2393, 4
      %v2396 = vshll.u32 %v2315, 16
      %v2398 = vrot.slane %v2396, 5
      %v2399 = vsel %vm251, %v2394, %v2398
      %2400 = vrot.lane.b32.xlu0 %v2329, 64
      %v2401 = vpop.permute.xlu0 %2400
      %2402 = vrot.lane.b32.xlu0 %v2339, 64
      %v2403 = vpop.permute.xlu0 %2402
      %2404 = vrot.lane.b32.xlu0 %v2349, 64
      %v2405 = vpop.permute.xlu0 %2404
      %2406 = vrot.lane.b32.xlu0 %v2359, 64
      %v2407 = vpop.permute.xlu0 %2406
      %2408 = vrot.lane.b32.xlu0 %v2369, 64
      %v2409 = vpop.permute.xlu0 %2408
      %2410 = vrot.lane.b32.xlu0 %v2379, 64
      %v2411 = vpop.permute.xlu0 %2410
      %2412 = vrot.lane.b32.xlu0 %v2389, 64
      %v2413 = vpop.permute.xlu0 %2412
      %2414 = vrot.lane.b32.xlu0 %v2399, 64
      %v2415 = vpop.permute.xlu0 %2414
      %2424 = vst.msk [vmem:[#allocation2] sm:$0xf] %vm360, %v2401
      %2425 = vst.msk [vmem:[#allocation2 + $0xc] sm:$0xf] %vm360, %v2403
      %2426 = vst.msk [vmem:[#allocation2 + $0x18] sm:$0xf] %vm360, %v2405
      %2427 = vst.msk [vmem:[#allocation2 + $0x24] sm:$0xf] %vm360, %v2407
      %2428 = vst.msk [vmem:[#allocation2 + $0x30] sm:$0xf] %vm360, %v2409
      %2429 = vst.msk [vmem:[#allocation2 + $0x3c] sm:$0xf] %vm360, %v2411
      %2430 = vst.msk [vmem:[#allocation2 + $0x48] sm:$0xf] %vm360, %v2413
      %2431 = vst.msk [vmem:[#allocation2 + $0x54] sm:$0xf] %vm360, %v2415
      %v2432 = vld [vmem:[%s165 + $0x4] sm:$0xf]
      %v2433 = vld [vmem:[%s165 + $0x8] sm:$0xf]
      %v2434 = vld [vmem:[%s165 + $0xc] sm:$0xf]
      %v2435 = vld [vmem:[%s165 + $0x10] sm:$0xf]
      %v2436 = vld [vmem:[%s165 + $0x14] sm:$0xf]
      %v2437 = vld [vmem:[%s165 + $0x18] sm:$0xf]
      %v2438 = vld [vmem:[%s165 + $0x1c] sm:$0xf]
      %v2439 = vld [vmem:[%s165 + $0x20] sm:$0xf]
      %2448 = vrot.lane.b32.xlu0 %v2432, 96
      %v2449 = vpop.permute.xlu0 %2448
      %2450 = vrot.lane.b32.xlu0 %v2433, 96
      %v2451 = vpop.permute.xlu0 %2450
      %2452 = vrot.lane.b32.xlu0 %v2434, 96
      %v2453 = vpop.permute.xlu0 %2452
      %2454 = vrot.lane.b32.xlu0 %v2435, 96
      %v2455 = vpop.permute.xlu0 %2454
      %2456 = vrot.lane.b32.xlu0 %v2436, 96
      %v2457 = vpop.permute.xlu0 %2456
      %2458 = vrot.lane.b32.xlu0 %v2437, 96
      %v2459 = vpop.permute.xlu0 %2458
      %2460 = vrot.lane.b32.xlu0 %v2438, 96
      %v2461 = vpop.permute.xlu0 %2460
      %2462 = vrot.lane.b32.xlu0 %v2439, 96
      %v2463 = vpop.permute.xlu0 %2462
      %2472 = vst.msk [vmem:[#allocation2] sm:$0xf] %vm410, %v2449
      %2473 = vst.msk [vmem:[#allocation2 + $0xc] sm:$0xf] %vm410, %v2451
      %2474 = vst.msk [vmem:[#allocation2 + $0x18] sm:$0xf] %vm410, %v2453
      %2475 = vst.msk [vmem:[#allocation2 + $0x24] sm:$0xf] %vm410, %v2455
      %2476 = vst.msk [vmem:[#allocation2 + $0x30] sm:$0xf] %vm410, %v2457
      %2477 = vst.msk [vmem:[#allocation2 + $0x3c] sm:$0xf] %vm410, %v2459
      %2478 = vst.msk [vmem:[#allocation2 + $0x48] sm:$0xf] %vm410, %v2461
      %2479 = vst.msk [vmem:[#allocation2 + $0x54] sm:$0xf] %vm410, %v2463
      %v2480 = vld [vmem:[%s190 + $0x4] sm:$0xf]
      %v2481 = vld [vmem:[%s190 + $0x8] sm:$0xf]
      %v2482 = vld [vmem:[%s190 + $0xc] sm:$0xf]
      %v2483 = vld [vmem:[%s190 + $0x10] sm:$0xf]
      %v2484 = vld [vmem:[%s190 + $0x14] sm:$0xf]
      %v2485 = vld [vmem:[%s190 + $0x18] sm:$0xf]
      %v2486 = vld [vmem:[%s190 + $0x1c] sm:$0xf]
      %v2487 = vld [vmem:[%s190 + $0x20] sm:$0xf]
      %2488 = vst.msk [vmem:[#allocation2 + $0x4] sm:$0xf] %vm181, %v2480
      %2489 = vst.msk [vmem:[#allocation2 + $0x10] sm:$0xf] %vm181, %v2481
      %2490 = vst.msk [vmem:[#allocation2 + $0x1c] sm:$0xf] %vm181, %v2482
      %2491 = vst.msk [vmem:[#allocation2 + $0x28] sm:$0xf] %vm181, %v2483
      %2492 = vst.msk [vmem:[#allocation2 + $0x34] sm:$0xf] %vm181, %v2484
      %2493 = vst.msk [vmem:[#allocation2 + $0x40] sm:$0xf] %vm181, %v2485
      %2494 = vst.msk [vmem:[#allocation2 + $0x4c] sm:$0xf] %vm181, %v2486
      %2495 = vst.msk [vmem:[#allocation2 + $0x58] sm:$0xf] %vm181, %v2487
      %v2496 = vld [vmem:[%s165 + $0x4] sm:$0xf]
      %v2497 = vld [vmem:[%s165 + $0x8] sm:$0xf]
      %v2498 = vld [vmem:[%s165 + $0xc] sm:$0xf]
      %v2499 = vld [vmem:[%s165 + $0x10] sm:$0xf]
      %v2500 = vld [vmem:[%s165 + $0x14] sm:$0xf]
      %v2501 = vld [vmem:[%s165 + $0x18] sm:$0xf]
      %v2502 = vld [vmem:[%s165 + $0x1c] sm:$0xf]
      %v2503 = vld [vmem:[%s165 + $0x20] sm:$0xf]
      %v2504 = vld [vmem:[%s165 + $0x24] sm:$0x1]
      %v2506 = vshrl.u32 %v2496, 16
      %v2508 = vrot.slane %v2506, 4
      %v2509 = vshll.u32 %v2496, 16
      %v2511 = vrot.slane %v2509, 5
      %v2512 = vor.u32 %v2508, %v2511
      %v2513 = vrot.slane %v2512, 4
      %v2515 = vshll.u32 %v2497, 16
      %v2517 = vrot.slane %v2515, 5
      %v2518 = vsel %vm251, %v2513, %v2517
      %v2519 = vshrl.u32 %v2497, 16
      %v2521 = vrot.slane %v2519, 4
      %v2522 = vor.u32 %v2521, %v2517
      %v2523 = vrot.slane %v2522, 4
      %v2525 = vshll.u32 %v2498, 16
      %v2527 = vrot.slane %v2525, 5
      %v2528 = vsel %vm251, %v2523, %v2527
      %v2529 = vshrl.u32 %v2498, 16
      %v2531 = vrot.slane %v2529, 4
      %v2532 = vor.u32 %v2531, %v2527
      %v2533 = vrot.slane %v2532, 4
      %v2535 = vshll.u32 %v2499, 16
      %v2537 = vrot.slane %v2535, 5
      %v2538 = vsel %vm251, %v2533, %v2537
      %v2539 = vshrl.u32 %v2499, 16
      %v2541 = vrot.slane %v2539, 4
      %v2542 = vor.u32 %v2541, %v2537
      %v2543 = vrot.slane %v2542, 4
      %v2545 = vshll.u32 %v2500, 16
      %v2547 = vrot.slane %v2545, 5
      %v2548 = vsel %vm251, %v2543, %v2547
      %v2549 = vshrl.u32 %v2500, 16
      %v2551 = vrot.slane %v2549, 4
      %v2552 = vor.u32 %v2551, %v2547
      %v2553 = vrot.slane %v2552, 4
      %v2555 = vshll.u32 %v2501, 16
      %v2557 = vrot.slane %v2555, 5
      %v2558 = vsel %vm251, %v2553, %v2557
      %v2559 = vshrl.u32 %v2501, 16
      %v2561 = vrot.slane %v2559, 4
      %v2562 = vor.u32 %v2561, %v2557
      %v2563 = vrot.slane %v2562, 4
      %v2565 = vshll.u32 %v2502, 16
      %v2567 = vrot.slane %v2565, 5
      %v2568 = vsel %vm251, %v2563, %v2567
      %v2569 = vshrl.u32 %v2502, 16
      %v2571 = vrot.slane %v2569, 4
      %v2572 = vor.u32 %v2571, %v2567
      %v2573 = vrot.slane %v2572, 4
      %v2575 = vshll.u32 %v2503, 16
      %v2577 = vrot.slane %v2575, 5
      %v2578 = vsel %vm251, %v2573, %v2577
      %v2579 = vshrl.u32 %v2503, 16
      %v2581 = vrot.slane %v2579, 4
      %v2582 = vor.u32 %v2581, %v2577
      %v2583 = vrot.slane %v2582, 4
      %v2585 = vshll.u32 %v2504, 16
      %v2587 = vrot.slane %v2585, 5
      %v2588 = vsel %vm251, %v2583, %v2587
      %2589 = vrot.lane.b32.xlu0 %v2518, 32
      %v2590 = vpop.permute.xlu0 %2589
      %2591 = vrot.lane.b32.xlu0 %v2528, 32
      %v2592 = vpop.permute.xlu0 %2591
      %2593 = vrot.lane.b32.xlu0 %v2538, 32
      %v2594 = vpop.permute.xlu0 %2593
      %2595 = vrot.lane.b32.xlu0 %v2548, 32
      %v2596 = vpop.permute.xlu0 %2595
      %2597 = vrot.lane.b32.xlu0 %v2558, 32
      %v2598 = vpop.permute.xlu0 %2597
      %2599 = vrot.lane.b32.xlu0 %v2568, 32
      %v2600 = vpop.permute.xlu0 %2599
      %2601 = vrot.lane.b32.xlu0 %v2578, 32
      %v2602 = vpop.permute.xlu0 %2601
      %2603 = vrot.lane.b32.xlu0 %v2588, 32
      %v2604 = vpop.permute.xlu0 %2603
      %2613 = vst.msk [vmem:[#allocation2 + $0x4] sm:$0xf] %vm231, %v2590
      %2614 = vst.msk [vmem:[#allocation2 + $0x10] sm:$0xf] %vm231, %v2592
      %2615 = vst.msk [vmem:[#allocation2 + $0x1c] sm:$0xf] %vm231, %v2594
      %2616 = vst.msk [vmem:[#allocation2 + $0x28] sm:$0xf] %vm231, %v2596
      %2617 = vst.msk [vmem:[#allocation2 + $0x34] sm:$0xf] %vm231, %v2598
      %2618 = vst.msk [vmem:[#allocation2 + $0x40] sm:$0xf] %vm231, %v2600
      %2619 = vst.msk [vmem:[#allocation2 + $0x4c] sm:$0xf] %vm231, %v2602
      %2620 = vst.msk [vmem:[#allocation2 + $0x58] sm:$0xf] %vm231, %v2604
      %v2621 = vld [vmem:[%s369 + $0x4] sm:$0xf]
      %v2622 = vld [vmem:[%s369 + $0x8] sm:$0xf]
      %v2623 = vld [vmem:[%s369 + $0xc] sm:$0xf]
      %v2624 = vld [vmem:[%s369 + $0x10] sm:$0xf]
      %v2625 = vld [vmem:[%s369 + $0x14] sm:$0xf]
      %v2626 = vld [vmem:[%s369 + $0x18] sm:$0xf]
      %v2627 = vld [vmem:[%s369 + $0x1c] sm:$0xf]
      %v2628 = vld [vmem:[%s369 + $0x20] sm:$0xf]
      %2637 = vrot.lane.b32.xlu0 %v2621, 64
      %v2638 = vpop.permute.xlu0 %2637
      %2639 = vrot.lane.b32.xlu0 %v2622, 64
      %v2640 = vpop.permute.xlu0 %2639
      %2641 = vrot.lane.b32.xlu0 %v2623, 64
      %v2642 = vpop.permute.xlu0 %2641
      %2643 = vrot.lane.b32.xlu0 %v2624, 64
      %v2644 = vpop.permute.xlu0 %2643
      %2645 = vrot.lane.b32.xlu0 %v2625, 64
      %v2646 = vpop.permute.xlu0 %2645
      %2647 = vrot.lane.b32.xlu0 %v2626, 64
      %v2648 = vpop.permute.xlu0 %2647
      %2649 = vrot.lane.b32.xlu0 %v2627, 64
      %v2650 = vpop.permute.xlu0 %2649
      %2651 = vrot.lane.b32.xlu0 %v2628, 64
      %v2652 = vpop.permute.xlu0 %2651
      %2661 = vst.msk [vmem:[#allocation2 + $0x4] sm:$0xf] %vm360, %v2638
      %2662 = vst.msk [vmem:[#allocation2 + $0x10] sm:$0xf] %vm360, %v2640
      %2663 = vst.msk [vmem:[#allocation2 + $0x1c] sm:$0xf] %vm360, %v2642
      %2664 = vst.msk [vmem:[#allocation2 + $0x28] sm:$0xf] %vm360, %v2644
      %2665 = vst.msk [vmem:[#allocation2 + $0x34] sm:$0xf] %vm360, %v2646
      %2666 = vst.msk [vmem:[#allocation2 + $0x40] sm:$0xf] %vm360, %v2648
      %2667 = vst.msk [vmem:[#allocation2 + $0x4c] sm:$0xf] %vm360, %v2650
      %2668 = vst.msk [vmem:[#allocation2 + $0x58] sm:$0xf] %vm360, %v2652
      %v2669 = vld [vmem:[%s419 + $0x4] sm:$0xf]
      %v2670 = vld [vmem:[%s419 + $0x8] sm:$0xf]
      %v2671 = vld [vmem:[%s419 + $0xc] sm:$0xf]
      %v2672 = vld [vmem:[%s419 + $0x10] sm:$0xf]
      %v2673 = vld [vmem:[%s419 + $0x14] sm:$0xf]
      %v2674 = vld [vmem:[%s419 + $0x18] sm:$0xf]
      %v2675 = vld [vmem:[%s419 + $0x1c] sm:$0xf]
      %v2676 = vld [vmem:[%s419 + $0x20] sm:$0xf]
      %2685 = vrot.lane.b32.xlu0 %v2669, 96
      %v2686 = vpop.permute.xlu0 %2685
      %2687 = vrot.lane.b32.xlu0 %v2670, 96
      %v2688 = vpop.permute.xlu0 %2687
      %2689 = vrot.lane.b32.xlu0 %v2671, 96
      %v2690 = vpop.permute.xlu0 %2689
      %2691 = vrot.lane.b32.xlu0 %v2672, 96
      %v2692 = vpop.permute.xlu0 %2691
      %2693 = vrot.lane.b32.xlu0 %v2673, 96
      %v2694 = vpop.permute.xlu0 %2693
      %2695 = vrot.lane.b32.xlu0 %v2674, 96
      %v2696 = vpop.permute.xlu0 %2695
      %2697 = vrot.lane.b32.xlu0 %v2675, 96
      %v2698 = vpop.permute.xlu0 %2697
      %2699 = vrot.lane.b32.xlu0 %v2676, 96
      %v2700 = vpop.permute.xlu0 %2699
      %2709 = vst.msk [vmem:[#allocation2 + $0x4] sm:$0xf] %vm410, %v2686
      %2710 = vst.msk [vmem:[#allocation2 + $0x10] sm:$0xf] %vm410, %v2688
      %2711 = vst.msk [vmem:[#allocation2 + $0x1c] sm:$0xf] %vm410, %v2690
      %2712 = vst.msk [vmem:[#allocation2 + $0x28] sm:$0xf] %vm410, %v2692
      %2713 = vst.msk [vmem:[#allocation2 + $0x34] sm:$0xf] %vm410, %v2694
      %2714 = vst.msk [vmem:[#allocation2 + $0x40] sm:$0xf] %vm410, %v2696
      %2715 = vst.msk [vmem:[#allocation2 + $0x4c] sm:$0xf] %vm410, %v2698
      %2716 = vst.msk [vmem:[#allocation2 + $0x58] sm:$0xf] %vm410, %v2700
      %v2717 = vld [vmem:[%s369 + $0x4] sm:$0xf]
      %v2718 = vld [vmem:[%s369 + $0x8] sm:$0xf]
      %v2719 = vld [vmem:[%s369 + $0xc] sm:$0xf]
      %v2720 = vld [vmem:[%s369 + $0x10] sm:$0xf]
      %v2721 = vld [vmem:[%s369 + $0x14] sm:$0xf]
      %v2722 = vld [vmem:[%s369 + $0x18] sm:$0xf]
      %v2723 = vld [vmem:[%s369 + $0x1c] sm:$0xf]
      %v2724 = vld [vmem:[%s369 + $0x20] sm:$0xf]
      %v2725 = vld [vmem:[%s369 + $0x24] sm:$0x1]
      %v2727 = vshrl.u32 %v2717, 16
      %v2729 = vrot.slane %v2727, 4
      %v2730 = vshll.u32 %v2717, 16
      %v2732 = vrot.slane %v2730, 5
      %v2733 = vor.u32 %v2729, %v2732
      %v2734 = vrot.slane %v2733, 4
      %v2736 = vshll.u32 %v2718, 16
      %v2738 = vrot.slane %v2736, 5
      %v2739 = vsel %vm251, %v2734, %v2738
      %v2740 = vshrl.u32 %v2718, 16
      %v2742 = vrot.slane %v2740, 4
      %v2743 = vor.u32 %v2742, %v2738
      %v2744 = vrot.slane %v2743, 4
      %v2746 = vshll.u32 %v2719, 16
      %v2748 = vrot.slane %v2746, 5
      %v2749 = vsel %vm251, %v2744, %v2748
      %v2750 = vshrl.u32 %v2719, 16
      %v2752 = vrot.slane %v2750, 4
      %v2753 = vor.u32 %v2752, %v2748
      %v2754 = vrot.slane %v2753, 4
      %v2756 = vshll.u32 %v2720, 16
      %v2758 = vrot.slane %v2756, 5
      %v2759 = vsel %vm251, %v2754, %v2758
      %v2760 = vshrl.u32 %v2720, 16
      %v2762 = vrot.slane %v2760, 4
      %v2763 = vor.u32 %v2762, %v2758
      %v2764 = vrot.slane %v2763, 4
      %v2766 = vshll.u32 %v2721, 16
      %v2768 = vrot.slane %v2766, 5
      %v2769 = vsel %vm251, %v2764, %v2768
      %v2770 = vshrl.u32 %v2721, 16
      %v2772 = vrot.slane %v2770, 4
      %v2773 = vor.u32 %v2772, %v2768
      %v2774 = vrot.slane %v2773, 4
      %v2776 = vshll.u32 %v2722, 16
      %v2778 = vrot.slane %v2776, 5
      %v2779 = vsel %vm251, %v2774, %v2778
      %v2780 = vshrl.u32 %v2722, 16
      %v2782 = vrot.slane %v2780, 4
      %v2783 = vor.u32 %v2782, %v2778
      %v2784 = vrot.slane %v2783, 4
      %v2786 = vshll.u32 %v2723, 16
      %v2788 = vrot.slane %v2786, 5
      %v2789 = vsel %vm251, %v2784, %v2788
      %v2790 = vshrl.u32 %v2723, 16
      %v2792 = vrot.slane %v2790, 4
      %v2793 = vor.u32 %v2792, %v2788
      %v2794 = vrot.slane %v2793, 4
      %v2796 = vshll.u32 %v2724, 16
      %v2798 = vrot.slane %v2796, 5
      %v2799 = vsel %vm251, %v2794, %v2798
      %v2800 = vshrl.u32 %v2724, 16
      %v2802 = vrot.slane %v2800, 4
      %v2803 = vor.u32 %v2802, %v2798
      %v2804 = vrot.slane %v2803, 4
      %v2806 = vshll.u32 %v2725, 16
      %v2808 = vrot.slane %v2806, 5
      %v2809 = vsel %vm251, %v2804, %v2808
      %2818 = vst.msk [vmem:[#allocation2 + $0x8] sm:$0xf] %vm181, %v2739
      %2819 = vst.msk [vmem:[#allocation2 + $0x14] sm:$0xf] %vm181, %v2749
      %2820 = vst.msk [vmem:[#allocation2 + $0x20] sm:$0xf] %vm181, %v2759
      %2821 = vst.msk [vmem:[#allocation2 + $0x2c] sm:$0xf] %vm181, %v2769
      %2822 = vst.msk [vmem:[#allocation2 + $0x38] sm:$0xf] %vm181, %v2779
      %2823 = vst.msk [vmem:[#allocation2 + $0x44] sm:$0xf] %vm181, %v2789
      %2824 = vst.msk [vmem:[#allocation2 + $0x50] sm:$0xf] %vm181, %v2799
      %2825 = vst.msk [vmem:[#allocation2 + $0x5c] sm:$0xf] %vm181, %v2809
      %v2826 = vld [vmem:[#allocation2] sm:$0xff]
      %v2827 = vld [vmem:[#allocation2 + $0x8] sm:$0xf]
      %v2828 = vld [vmem:[#allocation2 + $0xc] sm:$0xff]
      %v2829 = vld [vmem:[#allocation2 + $0x14] sm:$0xf]
      %v2830 = vld [vmem:[#allocation2 + $0x18] sm:$0xff]
      %v2831 = vld [vmem:[#allocation2 + $0x20] sm:$0xf]
      %v2832 = vld [vmem:[#allocation2 + $0x24] sm:$0xff]
      %v2833 = vld [vmem:[#allocation2 + $0x2c] sm:$0xf]
      %v2834 = vld [vmem:[#allocation2 + $0x30] sm:$0xff]
      %v2835 = vld [vmem:[#allocation2 + $0x38] sm:$0xf]
      %v2836 = vld [vmem:[#allocation2 + $0x3c] sm:$0xff]
      %v2837 = vld [vmem:[#allocation2 + $0x44] sm:$0xf]
      %v2838 = vld [vmem:[#allocation2 + $0x48] sm:$0xff]
      %v2839 = vld [vmem:[#allocation2 + $0x50] sm:$0xf]
      %v2840 = vld [vmem:[#allocation2 + $0x54] sm:$0xff]
      %v2841 = vld [vmem:[#allocation2 + $0x5c] sm:$0xf]
      %v2842 = vld [vmem:[%s1] sm:$0xf]
      %v2843 = vld [vmem:[%s1 + $0x4] sm:$0xf]
      %v2844 = vld [vmem:[%s1 + $0x8] sm:$0xf]
      %v2845 = vld [vmem:[%s1 + $0xc] sm:$0xf]
      %v2846 = vld [vmem:[%s1 + $0x10] sm:$0xf]
      %v2847 = vld [vmem:[%s1 + $0x14] sm:$0xf]
      %v2848 = vld [vmem:[%s1 + $0x18] sm:$0xf]
      %v2849 = vld [vmem:[%s1 + $0x1c] sm:$0xf]
      %v2850 = vld [vmem:[%s1 + $0x20] sm:$0xf]
      %v2851 = vld [vmem:[%s1 + $0x24] sm:$0xf]
      %v2852 = vld [vmem:[%s1 + $0x28] sm:$0xf]
      %v2853 = vld [vmem:[%s1 + $0x2c] sm:$0xf]
      %v2854 = vld [vmem:[%s1 + $0x30] sm:$0xf]
      %v2855 = vld [vmem:[%s1 + $0x34] sm:$0xf]
      %v2856 = vld [vmem:[%s1 + $0x38] sm:$0xf]
      %v2857 = vld [vmem:[%s1 + $0x3c] sm:$0xf]
      %v2858 = vld [vmem:[%s1 + $0x40] sm:$0xf]
      %v2859 = vld [vmem:[%s1 + $0x44] sm:$0xf]
      %v2860 = vld [vmem:[%s1 + $0x48] sm:$0xf]
      %v2861 = vld [vmem:[%s1 + $0x4c] sm:$0xf]
      %v2862 = vld [vmem:[%s1 + $0x50] sm:$0xf]
      %v2863 = vld [vmem:[%s1 + $0x54] sm:$0xf]
      %v2864 = vld [vmem:[%s1 + $0x58] sm:$0xf]
      %v2865 = vld [vmem:[%s1 + $0x5c] sm:$0xf]
      %v2866 = vld [vmem:[%s1 + $0x60] sm:$0xf]
      %v2867 = vld [vmem:[%s1 + $0x64] sm:$0xf]
      %v2868 = vld [vmem:[%s1 + $0x68] sm:$0xf]
      %v2869 = vld [vmem:[%s1 + $0x6c] sm:$0xf]
      %v2870 = vld [vmem:[%s1 + $0x70] sm:$0xf]
      %v2871 = vld [vmem:[%s1 + $0x74] sm:$0xf]
      %v2872 = vld [vmem:[%s1 + $0x78] sm:$0xf]
      %v2873 = vld [vmem:[%s1 + $0x7c] sm:$0xf]
      %v2874 = vld [vmem:[%s1 + $0x80] sm:$0xf]
      %v2875 = vld [vmem:[%s1 + $0x84] sm:$0xf]
      %v2876 = vld [vmem:[%s1 + $0x88] sm:$0xf]
      %v2877 = vld [vmem:[%s1 + $0x8c] sm:$0xf]
      %v2894 = vunpack.c.l.b16 %v2826
      %v2895 = vunpack.c.h.b16 %v2826
      %v2896 = vunpack.c.l.b16 %v2827
      %v2897 = vunpack.c.l.b16 %v2828
      %v2898 = vunpack.c.h.b16 %v2828
      %v2899 = vunpack.c.l.b16 %v2829
      %v2900 = vunpack.c.l.b16 %v2830
      %v2901 = vunpack.c.h.b16 %v2830
      %v2902 = vunpack.c.l.b16 %v2831
      %v2903 = vunpack.c.l.b16 %v2832
      %v2904 = vunpack.c.h.b16 %v2832
      %v2905 = vunpack.c.l.b16 %v2833
      %v2906 = vunpack.c.l.b16 %v2834
      %v2907 = vunpack.c.h.b16 %v2834
      %v2908 = vunpack.c.l.b16 %v2835
      %v2909 = vunpack.c.l.b16 %v2836
      %v2910 = vunpack.c.h.b16 %v2836
      %v2911 = vunpack.c.l.b16 %v2837
      %v2912 = vunpack.c.l.b16 %v2838
      %v2913 = vunpack.c.h.b16 %v2838
      %v2914 = vunpack.c.l.b16 %v2839
      %v2915 = vunpack.c.l.b16 %v2840
      %v2916 = vunpack.c.h.b16 %v2840
      %v2917 = vunpack.c.l.b16 %v2841
      %v2918 = vpack.c.b16 %v2897, %v2894
      %v2919 = vpack.c.b16 %v2898, %v2895
      %v2920 = vpack.c.b16 %v2899, %v2896
      %v2921 = vpack.c.b16 %v2903, %v2900
      %v2922 = vpack.c.b16 %v2904, %v2901
      %v2923 = vpack.c.b16 %v2905, %v2902
      %v2924 = vpack.c.b16 %v2909, %v2906
      %v2925 = vpack.c.b16 %v2910, %v2907
      %v2926 = vpack.c.b16 %v2911, %v2908
      %v2927 = vpack.c.b16 %v2915, %v2912
      %v2928 = vpack.c.b16 %v2916, %v2913
      %v2929 = vpack.c.b16 %v2917, %v2914
      %v2974 = vunpack.c.l.b16 %v2842
      %v2975 = vunpack.c.l.b16 %v2843
      %v2976 = vunpack.c.l.b16 %v2844
      %v2977 = vunpack.c.l.b16 %v2845
      %v2978 = vunpack.c.l.b16 %v2846
      %v2979 = vunpack.c.l.b16 %v2847
      %v2980 = vunpack.c.l.b16 %v2848
      %v2981 = vunpack.c.l.b16 %v2849
      %v2982 = vunpack.c.l.b16 %v2850
      %v2983 = vunpack.c.l.b16 %v2851
      %v2984 = vunpack.c.l.b16 %v2852
      %v2985 = vunpack.c.l.b16 %v2853
      %v2986 = vunpack.c.l.b16 %v2854
      %v2987 = vunpack.c.l.b16 %v2855
      %v2988 = vunpack.c.l.b16 %v2856
      %v2989 = vunpack.c.l.b16 %v2857
      %v2990 = vunpack.c.l.b16 %v2858
      %v2991 = vunpack.c.l.b16 %v2859
      %v2992 = vunpack.c.l.b16 %v2860
      %v2993 = vunpack.c.l.b16 %v2861
      %v2994 = vunpack.c.l.b16 %v2862
      %v2995 = vunpack.c.l.b16 %v2863
      %v2996 = vunpack.c.l.b16 %v2864
      %v2997 = vunpack.c.l.b16 %v2865
      %v2998 = vunpack.c.l.b16 %v2866
      %v2999 = vunpack.c.l.b16 %v2867
      %v3000 = vunpack.c.l.b16 %v2868
      %v3001 = vunpack.c.l.b16 %v2869
      %v3002 = vunpack.c.l.b16 %v2870
      %v3003 = vunpack.c.l.b16 %v2871
      %v3004 = vunpack.c.l.b16 %v2872
      %v3005 = vunpack.c.l.b16 %v2873
      %v3006 = vunpack.c.l.b16 %v2874
      %v3007 = vunpack.c.l.b16 %v2875
      %v3008 = vunpack.c.l.b16 %v2876
      %v3009 = vunpack.c.l.b16 %v2877
      %v3010 = vpack.c.b16 %v2975, %v2974
      %v3011 = vpack.c.b16 %v2977, %v2976
      %v3012 = vpack.c.b16 %v2979, %v2978
      %v3013 = vpack.c.b16 %v2981, %v2980
      %v3014 = vpack.c.b16 %v2983, %v2982
      %v3015 = vpack.c.b16 %v2985, %v2984
      %v3016 = vpack.c.b16 %v2987, %v2986
      %v3017 = vpack.c.b16 %v2989, %v2988
      %v3018 = vpack.c.b16 %v2991, %v2990
      %v3019 = vpack.c.b16 %v2993, %v2992
      %v3020 = vpack.c.b16 %v2995, %v2994
      %v3021 = vpack.c.b16 %v2997, %v2996
      %v3022 = vpack.c.b16 %v2999, %v2998
      %v3023 = vpack.c.b16 %v3001, %v3000
      %v3024 = vpack.c.b16 %v3003, %v3002
      %v3025 = vpack.c.b16 %v3005, %v3004
      %v3026 = vpack.c.b16 %v3007, %v3006
      %v3027 = vpack.c.b16 %v3009, %v3008
      %v3047 = vsel %vm986, %v2920, 0
      %v3050 = vsel %vm986, %v2923, 0
      %v3053 = vsel %vm986, %v2926, 0
      %v3056 = vsel %vm986, %v2929, 0
      %3058 = vmatpush.bf16.msra.mxu0 %v3017
      %3059 = vmatpush.bf16.msra.mxu0 %v3016
      %3060 = vmatpush.bf16.msra.mxu0 %v3015
      %3061 = vmatpush.bf16.msra.mxu0 %v3014
      %3062 = vmatpush.bf16.msra.mxu0 %v3013
      %3063 = vmatpush.bf16.msra.mxu0 %v3012
      %3064 = vmatpush.bf16.msra.mxu0 %v3011
      %3065 = vmatpush.bf16.msra.mxu0 %v3010
      %3066 = vmatmul.bf16.gmra.mxu0 %v2918
      %v3067 = vpop.f32.mrf.mxu0
      %v3068 = vadd.f32 0.0, %v3067
      %v3069 = vpop.f32.mrf.mxu0
      %v3070 = vadd.f32 0.0, %v3069
      %3071 = vmatmul.bf16.gmra.mxu0 %v2921
      %v3072 = vpop.f32.mrf.mxu0
      %v3073 = vadd.f32 0.0, %v3072
      %v3074 = vpop.f32.mrf.mxu0
      %v3075 = vadd.f32 0.0, %v3074
      %3076 = vmatmul.bf16.gmra.mxu0 %v2924
      %v3077 = vpop.f32.mrf.mxu0
      %v3078 = vadd.f32 0.0, %v3077
      %v3079 = vpop.f32.mrf.mxu0
      %v3080 = vadd.f32 0.0, %v3079
      %3081 = vmatmul.bf16.gmra.mxu0 %v2927
      %v3082 = vpop.f32.mrf.mxu0
      %v3083 = vadd.f32 0.0, %v3082
      %v3084 = vpop.f32.mrf.mxu0
      %v3085 = vadd.f32 0.0, %v3084
      %3086 = vdwg.mxu0
      %3087 = vmatpush.bf16.msra.mxu0 %v3025
      %3088 = vmatpush.bf16.msra.mxu0 %v3024
      %3089 = vmatpush.bf16.msra.mxu0 %v3023
      %3090 = vmatpush.bf16.msra.mxu0 %v3022
      %3091 = vmatpush.bf16.msra.mxu0 %v3021
      %3092 = vmatpush.bf16.msra.mxu0 %v3020
      %3093 = vmatpush.bf16.msra.mxu0 %v3019
      %3094 = vmatpush.bf16.msra.mxu0 %v3018
      %3095 = vmatmul.bf16.gmra.mxu0 %v2919
      %v3096 = vpop.f32.mrf.mxu0
      %v3097 = vadd.f32 %v3068, %v3096
      %v3098 = vpop.f32.mrf.mxu0
      %v3099 = vadd.f32 %v3070, %v3098
      %3100 = vmatmul.bf16.gmra.mxu0 %v2922
      %v3101 = vpop.f32.mrf.mxu0
      %v3102 = vadd.f32 %v3073, %v3101
      %v3103 = vpop.f32.mrf.mxu0
      %v3104 = vadd.f32 %v3075, %v3103
      %3105 = vmatmul.bf16.gmra.mxu0 %v2925
      %v3106 = vpop.f32.mrf.mxu0
      %v3107 = vadd.f32 %v3078, %v3106
      %v3108 = vpop.f32.mrf.mxu0
      %v3109 = vadd.f32 %v3080, %v3108
      %3110 = vmatmul.bf16.gmra.mxu0 %v2928
      %v3111 = vpop.f32.mrf.mxu0
      %v3112 = vadd.f32 %v3083, %v3111
      %v3113 = vpop.f32.mrf.mxu0
      %v3114 = vadd.f32 %v3085, %v3113
      %3115 = vdwg.mxu0
      %3116 = vmatpush.bf16.msra.mxu0 0
      %3117 = vmatpush.bf16.msra.mxu0 0
      %3118 = vmatpush.bf16.msra.mxu0 0
      %3119 = vmatpush.bf16.msra.mxu0 0
      %3120 = vmatpush.bf16.msra.mxu0 0
      %3121 = vmatpush.bf16.msra.mxu0 0
      %3122 = vmatpush.bf16.msra.mxu0 %v3027
      %3123 = vmatpush.bf16.msra.mxu0 %v3026
      %3124 = vmatmul.bf16.gmra.mxu0 %v3047
      %v3125 = vpop.f32.mrf.mxu0
      %v3126 = vadd.f32 %v3097, %v3125
      %v3127 = vpop.f32.mrf.mxu0
      %v3128 = vadd.f32 %v3099, %v3127
      %3129 = vmatmul.bf16.gmra.mxu0 %v3050
      %v3130 = vpop.f32.mrf.mxu0
      %v3131 = vadd.f32 %v3102, %v3130
      %v3132 = vpop.f32.mrf.mxu0
      %v3133 = vadd.f32 %v3104, %v3132
      %3134 = vmatmul.bf16.gmra.mxu0 %v3053
      %v3135 = vpop.f32.mrf.mxu0
      %v3136 = vadd.f32 %v3107, %v3135
      %v3137 = vpop.f32.mrf.mxu0
      %v3138 = vadd.f32 %v3109, %v3137
      %3139 = vmatmul.bf16.gmra.mxu0 %v3056
      %v3140 = vpop.f32.mrf.mxu0
      %v3141 = vadd.f32 %v3112, %v3140
      %v3142 = vpop.f32.mrf.mxu0
      %v3143 = vadd.f32 %v3114, %v3142
      %3144 = vdwg.mxu0
      %v3145 = vmax.f32 %v2235, %v3126
      %v3146 = vmax.f32 %v2236, %v3128
      %v3147 = vmax.f32 %v2237, %v3131
      %v3148 = vmax.f32 %v2238, %v3133
      %v3149 = vmax.f32 %v2239, %v3136
      %v3150 = vmax.f32 %v2240, %v3138
      %v3151 = vmax.f32 %v2241, %v3141
      %v3152 = vmax.f32 %v2242, %v3143
      %v3153 = vld [vmem:[%s419] sm:$0xf]
      %v3154 = vld [vmem:[%s419 + $0x4] sm:$0xf]
      %v3155 = vld [vmem:[%s419 + $0x8] sm:$0xf]
      %v3156 = vld [vmem:[%s419 + $0xc] sm:$0xf]
      %v3157 = vld [vmem:[%s419 + $0x10] sm:$0xf]
      %v3158 = vld [vmem:[%s419 + $0x14] sm:$0xf]
      %v3159 = vld [vmem:[%s419 + $0x18] sm:$0xf]
      %v3160 = vld [vmem:[%s419 + $0x1c] sm:$0xf]
      %3161 = vst.msk [vmem:[#allocation2] sm:$0xf] %vm181, %v3153
      %3162 = vst.msk [vmem:[#allocation2 + $0xc] sm:$0xf] %vm181, %v3154
      %3163 = vst.msk [vmem:[#allocation2 + $0x18] sm:$0xf] %vm181, %v3155
      %3164 = vst.msk [vmem:[#allocation2 + $0x24] sm:$0xf] %vm181, %v3156
      %3165 = vst.msk [vmem:[#allocation2 + $0x30] sm:$0xf] %vm181, %v3157
      %3166 = vst.msk [vmem:[#allocation2 + $0x3c] sm:$0xf] %vm181, %v3158
      %3167 = vst.msk [vmem:[#allocation2 + $0x48] sm:$0xf] %vm181, %v3159
      %3168 = vst.msk [vmem:[#allocation2 + $0x54] sm:$0xf] %vm181, %v3160
      %v3169 = vld [vmem:[%s369] sm:$0xf]
      %v3170 = vld [vmem:[%s369 + $0x4] sm:$0xf]
      %v3171 = vld [vmem:[%s369 + $0x8] sm:$0xf]
      %v3172 = vld [vmem:[%s369 + $0xc] sm:$0xf]
      %v3173 = vld [vmem:[%s369 + $0x10] sm:$0xf]
      %v3174 = vld [vmem:[%s369 + $0x14] sm:$0xf]
      %v3175 = vld [vmem:[%s369 + $0x18] sm:$0xf]
      %v3176 = vld [vmem:[%s369 + $0x1c] sm:$0xf]
      %v3177 = vld [vmem:[%s369 + $0x20] sm:$0x1]
      %v3179 = vshrl.u32 %v3169, 16
      %v3181 = vrot.slane %v3179, 4
      %v3182 = vshll.u32 %v3169, 16
      %v3184 = vrot.slane %v3182, 5
      %v3185 = vor.u32 %v3181, %v3184
      %v3186 = vrot.slane %v3185, 4
      %v3188 = vshll.u32 %v3170, 16
      %v3190 = vrot.slane %v3188, 5
      %v3191 = vsel %vm251, %v3186, %v3190
      %v3192 = vshrl.u32 %v3170, 16
      %v3194 = vrot.slane %v3192, 4
      %v3195 = vor.u32 %v3194, %v3190
      %v3196 = vrot.slane %v3195, 4
      %v3198 = vshll.u32 %v3171, 16
      %v3200 = vrot.slane %v3198, 5
      %v3201 = vsel %vm251, %v3196, %v3200
      %v3202 = vshrl.u32 %v3171, 16
      %v3204 = vrot.slane %v3202, 4
      %v3205 = vor.u32 %v3204, %v3200
      %v3206 = vrot.slane %v3205, 4
      %v3208 = vshll.u32 %v3172, 16
      %v3210 = vrot.slane %v3208, 5
      %v3211 = vsel %vm251, %v3206, %v3210
      %v3212 = vshrl.u32 %v3172, 16
      %v3214 = vrot.slane %v3212, 4
      %v3215 = vor.u32 %v3214, %v3210
      %v3216 = vrot.slane %v3215, 4
      %v3218 = vshll.u32 %v3173, 16
      %v3220 = vrot.slane %v3218, 5
      %v3221 = vsel %vm251, %v3216, %v3220
      %v3222 = vshrl.u32 %v3173, 16
      %v3224 = vrot.slane %v3222, 4
      %v3225 = vor.u32 %v3224, %v3220
      %v3226 = vrot.slane %v3225, 4
      %v3228 = vshll.u32 %v3174, 16
      %v3230 = vrot.slane %v3228, 5
      %v3231 = vsel %vm251, %v3226, %v3230
      %v3232 = vshrl.u32 %v3174, 16
      %v3234 = vrot.slane %v3232, 4
      %v3235 = vor.u32 %v3234, %v3230
      %v3236 = vrot.slane %v3235, 4
      %v3238 = vshll.u32 %v3175, 16
      %v3240 = vrot.slane %v3238, 5
      %v3241 = vsel %vm251, %v3236, %v3240
      %v3242 = vshrl.u32 %v3175, 16
      %v3244 = vrot.slane %v3242, 4
      %v3245 = vor.u32 %v3244, %v3240
      %v3246 = vrot.slane %v3245, 4
      %v3248 = vshll.u32 %v3176, 16
      %v3250 = vrot.slane %v3248, 5
      %v3251 = vsel %vm251, %v3246, %v3250
      %v3252 = vshrl.u32 %v3176, 16
      %v3254 = vrot.slane %v3252, 4
      %v3255 = vor.u32 %v3254, %v3250
      %v3256 = vrot.slane %v3255, 4
      %v3258 = vshll.u32 %v3177, 16
      %v3260 = vrot.slane %v3258, 5
      %v3261 = vsel %vm251, %v3256, %v3260
      %3262 = vrot.lane.b32.xlu0 %v3191, 32
      %v3263 = vpop.permute.xlu0 %3262
      %3264 = vrot.lane.b32.xlu0 %v3201, 32
      %v3265 = vpop.permute.xlu0 %3264
      %3266 = vrot.lane.b32.xlu0 %v3211, 32
      %v3267 = vpop.permute.xlu0 %3266
      %3268 = vrot.lane.b32.xlu0 %v3221, 32
      %v3269 = vpop.permute.xlu0 %3268
      %3270 = vrot.lane.b32.xlu0 %v3231, 32
      %v3271 = vpop.permute.xlu0 %3270
      %3272 = vrot.lane.b32.xlu0 %v3241, 32
      %v3273 = vpop.permute.xlu0 %3272
      %3274 = vrot.lane.b32.xlu0 %v3251, 32
      %v3275 = vpop.permute.xlu0 %3274
      %3276 = vrot.lane.b32.xlu0 %v3261, 32
      %v3277 = vpop.permute.xlu0 %3276
      %3286 = vst.msk [vmem:[#allocation2] sm:$0xf] %vm231, %v3263
      %3287 = vst.msk [vmem:[#allocation2 + $0xc] sm:$0xf] %vm231, %v3265
      %3288 = vst.msk [vmem:[#allocation2 + $0x18] sm:$0xf] %vm231, %v3267
      %3289 = vst.msk [vmem:[#allocation2 + $0x24] sm:$0xf] %vm231, %v3269
      %3290 = vst.msk [vmem:[#allocation2 + $0x30] sm:$0xf] %vm231, %v3271
      %3291 = vst.msk [vmem:[#allocation2 + $0x3c] sm:$0xf] %vm231, %v3273
      %3292 = vst.msk [vmem:[#allocation2 + $0x48] sm:$0xf] %vm231, %v3275
      %3293 = vst.msk [vmem:[#allocation2 + $0x54] sm:$0xf] %vm231, %v3277
      %v3294 = vld [vmem:[%s419] sm:$0xf]
      %v3295 = vld [vmem:[%s419 + $0x4] sm:$0xf]
      %v3296 = vld [vmem:[%s419 + $0x8] sm:$0xf]
      %v3297 = vld [vmem:[%s419 + $0xc] sm:$0xf]
      %v3298 = vld [vmem:[%s419 + $0x10] sm:$0xf]
      %v3299 = vld [vmem:[%s419 + $0x14] sm:$0xf]
      %v3300 = vld [vmem:[%s419 + $0x18] sm:$0xf]
      %v3301 = vld [vmem:[%s419 + $0x1c] sm:$0xf]
      %v3302 = vld [vmem:[%s419 + $0x20] sm:$0x1]
      %v3304 = vshrl.u32 %v3294, 16
      %v3306 = vrot.slane %v3304, 4
      %v3307 = vshll.u32 %v3294, 16
      %v3309 = vrot.slane %v3307, 5
      %v3310 = vor.u32 %v3306, %v3309
      %v3311 = vrot.slane %v3310, 4
      %v3313 = vshll.u32 %v3295, 16
      %v3315 = vrot.slane %v3313, 5
      %v3316 = vsel %vm251, %v3311, %v3315
      %v3317 = vshrl.u32 %v3295, 16
      %v3319 = vrot.slane %v3317, 4
      %v3320 = vor.u32 %v3319, %v3315
      %v3321 = vrot.slane %v3320, 4
      %v3323 = vshll.u32 %v3296, 16
      %v3325 = vrot.slane %v3323, 5
      %v3326 = vsel %vm251, %v3321, %v3325
      %v3327 = vshrl.u32 %v3296, 16
      %v3329 = vrot.slane %v3327, 4
      %v3330 = vor.u32 %v3329, %v3325
      %v3331 = vrot.slane %v3330, 4
      %v3333 = vshll.u32 %v3297, 16
      %v3335 = vrot.slane %v3333, 5
      %v3336 = vsel %vm251, %v3331, %v3335
      %v3337 = vshrl.u32 %v3297, 16
      %v3339 = vrot.slane %v3337, 4
      %v3340 = vor.u32 %v3339, %v3335
      %v3341 = vrot.slane %v3340, 4
      %v3343 = vshll.u32 %v3298, 16
      %v3345 = vrot.slane %v3343, 5
      %v3346 = vsel %vm251, %v3341, %v3345
      %v3347 = vshrl.u32 %v3298, 16
      %v3349 = vrot.slane %v3347, 4
      %v3350 = vor.u32 %v3349, %v3345
      %v3351 = vrot.slane %v3350, 4
      %v3353 = vshll.u32 %v3299, 16
      %v3355 = vrot.slane %v3353, 5
      %v3356 = vsel %vm251, %v3351, %v3355
      %v3357 = vshrl.u32 %v3299, 16
      %v3359 = vrot.slane %v3357, 4
      %v3360 = vor.u32 %v3359, %v3355
      %v3361 = vrot.slane %v3360, 4
      %v3363 = vshll.u32 %v3300, 16
      %v3365 = vrot.slane %v3363, 5
      %v3366 = vsel %vm251, %v3361, %v3365
      %v3367 = vshrl.u32 %v3300, 16
      %v3369 = vrot.slane %v3367, 4
      %v3370 = vor.u32 %v3369, %v3365
      %v3371 = vrot.slane %v3370, 4
      %v3373 = vshll.u32 %v3301, 16
      %v3375 = vrot.slane %v3373, 5
      %v3376 = vsel %vm251, %v3371, %v3375
      %v3377 = vshrl.u32 %v3301, 16
      %v3379 = vrot.slane %v3377, 4
      %v3380 = vor.u32 %v3379, %v3375
      %v3381 = vrot.slane %v3380, 4
      %v3383 = vshll.u32 %v3302, 16
      %v3385 = vrot.slane %v3383, 5
      %v3386 = vsel %vm251, %v3381, %v3385
      %3387 = vrot.lane.b32.xlu0 %v3316, 64
      %v3388 = vpop.permute.xlu0 %3387
      %3389 = vrot.lane.b32.xlu0 %v3326, 64
      %v3390 = vpop.permute.xlu0 %3389
      %3391 = vrot.lane.b32.xlu0 %v3336, 64
      %v3392 = vpop.permute.xlu0 %3391
      %3393 = vrot.lane.b32.xlu0 %v3346, 64
      %v3394 = vpop.permute.xlu0 %3393
      %3395 = vrot.lane.b32.xlu0 %v3356, 64
      %v3396 = vpop.permute.xlu0 %3395
      %3397 = vrot.lane.b32.xlu0 %v3366, 64
      %v3398 = vpop.permute.xlu0 %3397
      %3399 = vrot.lane.b32.xlu0 %v3376, 64
      %v3400 = vpop.permute.xlu0 %3399
      %3401 = vrot.lane.b32.xlu0 %v3386, 64
      %v3402 = vpop.permute.xlu0 %3401
      %3411 = vst.msk [vmem:[#allocation2] sm:$0xf] %vm360, %v3388
      %3412 = vst.msk [vmem:[#allocation2 + $0xc] sm:$0xf] %vm360, %v3390
      %3413 = vst.msk [vmem:[#allocation2 + $0x18] sm:$0xf] %vm360, %v3392
      %3414 = vst.msk [vmem:[#allocation2 + $0x24] sm:$0xf] %vm360, %v3394
      %3415 = vst.msk [vmem:[#allocation2 + $0x30] sm:$0xf] %vm360, %v3396
      %3416 = vst.msk [vmem:[#allocation2 + $0x3c] sm:$0xf] %vm360, %v3398
      %3417 = vst.msk [vmem:[#allocation2 + $0x48] sm:$0xf] %vm360, %v3400
      %3418 = vst.msk [vmem:[#allocation2 + $0x54] sm:$0xf] %vm360, %v3402
      %v3419 = vld [vmem:[%s190 + $0x4] sm:$0xf]
      %v3420 = vld [vmem:[%s190 + $0x8] sm:$0xf]
      %v3421 = vld [vmem:[%s190 + $0xc] sm:$0xf]
      %v3422 = vld [vmem:[%s190 + $0x10] sm:$0xf]
      %v3423 = vld [vmem:[%s190 + $0x14] sm:$0xf]
      %v3424 = vld [vmem:[%s190 + $0x18] sm:$0xf]
      %v3425 = vld [vmem:[%s190 + $0x1c] sm:$0xf]
      %v3426 = vld [vmem:[%s190 + $0x20] sm:$0xf]
      %3435 = vrot.lane.b32.xlu0 %v3419, 96
      %v3436 = vpop.permute.xlu0 %3435
      %3437 = vrot.lane.b32.xlu0 %v3420, 96
      %v3438 = vpop.permute.xlu0 %3437
      %3439 = vrot.lane.b32.xlu0 %v3421, 96
      %v3440 = vpop.permute.xlu0 %3439
      %3441 = vrot.lane.b32.xlu0 %v3422, 96
      %v3442 = vpop.permute.xlu0 %3441
      %3443 = vrot.lane.b32.xlu0 %v3423, 96
      %v3444 = vpop.permute.xlu0 %3443
      %3445 = vrot.lane.b32.xlu0 %v3424, 96
      %v3446 = vpop.permute.xlu0 %3445
      %3447 = vrot.lane.b32.xlu0 %v3425, 96
      %v3448 = vpop.permute.xlu0 %3447
      %3449 = vrot.lane.b32.xlu0 %v3426, 96
      %v3450 = vpop.permute.xlu0 %3449
      %3459 = vst.msk [vmem:[#allocation2] sm:$0xf] %vm410, %v3436
      %3460 = vst.msk [vmem:[#allocation2 + $0xc] sm:$0xf] %vm410, %v3438
      %3461 = vst.msk [vmem:[#allocation2 + $0x18] sm:$0xf] %vm410, %v3440
      %3462 = vst.msk [vmem:[#allocation2 + $0x24] sm:$0xf] %vm410, %v3442
      %3463 = vst.msk [vmem:[#allocation2 + $0x30] sm:$0xf] %vm410, %v3444
      %3464 = vst.msk [vmem:[#allocation2 + $0x3c] sm:$0xf] %vm410, %v3446
      %3465 = vst.msk [vmem:[#allocation2 + $0x48] sm:$0xf] %vm410, %v3448
      %3466 = vst.msk [vmem:[#allocation2 + $0x54] sm:$0xf] %vm410, %v3450
      %v3467 = vld [vmem:[%s165 + $0x4] sm:$0xf]
      %v3468 = vld [vmem:[%s165 + $0x8] sm:$0xf]
      %v3469 = vld [vmem:[%s165 + $0xc] sm:$0xf]
      %v3470 = vld [vmem:[%s165 + $0x10] sm:$0xf]
      %v3471 = vld [vmem:[%s165 + $0x14] sm:$0xf]
      %v3472 = vld [vmem:[%s165 + $0x18] sm:$0xf]
      %v3473 = vld [vmem:[%s165 + $0x1c] sm:$0xf]
      %v3474 = vld [vmem:[%s165 + $0x20] sm:$0xf]
      %v3475 = vld [vmem:[%s165 + $0x24] sm:$0x1]
      %v3477 = vshrl.u32 %v3467, 16
      %v3479 = vrot.slane %v3477, 4
      %v3480 = vshll.u32 %v3467, 16
      %v3482 = vrot.slane %v3480, 5
      %v3483 = vor.u32 %v3479, %v3482
      %v3484 = vrot.slane %v3483, 4
      %v3486 = vshll.u32 %v3468, 16
      %v3488 = vrot.slane %v3486, 5
      %v3489 = vsel %vm251, %v3484, %v3488
      %v3490 = vshrl.u32 %v3468, 16
      %v3492 = vrot.slane %v3490, 4
      %v3493 = vor.u32 %v3492, %v3488
      %v3494 = vrot.slane %v3493, 4
      %v3496 = vshll.u32 %v3469, 16
      %v3498 = vrot.slane %v3496, 5
      %v3499 = vsel %vm251, %v3494, %v3498
      %v3500 = vshrl.u32 %v3469, 16
      %v3502 = vrot.slane %v3500, 4
      %v3503 = vor.u32 %v3502, %v3498
      %v3504 = vrot.slane %v3503, 4
      %v3506 = vshll.u32 %v3470, 16
      %v3508 = vrot.slane %v3506, 5
      %v3509 = vsel %vm251, %v3504, %v3508
      %v3510 = vshrl.u32 %v3470, 16
      %v3512 = vrot.slane %v3510, 4
      %v3513 = vor.u32 %v3512, %v3508
      %v3514 = vrot.slane %v3513, 4
      %v3516 = vshll.u32 %v3471, 16
      %v3518 = vrot.slane %v3516, 5
      %v3519 = vsel %vm251, %v3514, %v3518
      %v3520 = vshrl.u32 %v3471, 16
      %v3522 = vrot.slane %v3520, 4
      %v3523 = vor.u32 %v3522, %v3518
      %v3524 = vrot.slane %v3523, 4
      %v3526 = vshll.u32 %v3472, 16
      %v3528 = vrot.slane %v3526, 5
      %v3529 = vsel %vm251, %v3524, %v3528
      %v3530 = vshrl.u32 %v3472, 16
      %v3532 = vrot.slane %v3530, 4
      %v3533 = vor.u32 %v3532, %v3528
      %v3534 = vrot.slane %v3533, 4
      %v3536 = vshll.u32 %v3473, 16
      %v3538 = vrot.slane %v3536, 5
      %v3539 = vsel %vm251, %v3534, %v3538
      %v3540 = vshrl.u32 %v3473, 16
      %v3542 = vrot.slane %v3540, 4
      %v3543 = vor.u32 %v3542, %v3538
      %v3544 = vrot.slane %v3543, 4
      %v3546 = vshll.u32 %v3474, 16
      %v3548 = vrot.slane %v3546, 5
      %v3549 = vsel %vm251, %v3544, %v3548
      %v3550 = vshrl.u32 %v3474, 16
      %v3552 = vrot.slane %v3550, 4
      %v3553 = vor.u32 %v3552, %v3548
      %v3554 = vrot.slane %v3553, 4
      %v3556 = vshll.u32 %v3475, 16
      %v3558 = vrot.slane %v3556, 5
      %v3559 = vsel %vm251, %v3554, %v3558
      %3568 = vst.msk [vmem:[#allocation2 + $0x4] sm:$0xf] %vm181, %v3489
      %3569 = vst.msk [vmem:[#allocation2 + $0x10] sm:$0xf] %vm181, %v3499
      %3570 = vst.msk [vmem:[#allocation2 + $0x1c] sm:$0xf] %vm181, %v3509
      %3571 = vst.msk [vmem:[#allocation2 + $0x28] sm:$0xf] %vm181, %v3519
      %3572 = vst.msk [vmem:[#allocation2 + $0x34] sm:$0xf] %vm181, %v3529
      %3573 = vst.msk [vmem:[#allocation2 + $0x40] sm:$0xf] %vm181, %v3539
      %3574 = vst.msk [vmem:[#allocation2 + $0x4c] sm:$0xf] %vm181, %v3549
      %3575 = vst.msk [vmem:[#allocation2 + $0x58] sm:$0xf] %vm181, %v3559
      %v3576 = vld [vmem:[%s190 + $0x4] sm:$0xf]
      %v3577 = vld [vmem:[%s190 + $0x8] sm:$0xf]
      %v3578 = vld [vmem:[%s190 + $0xc] sm:$0xf]
      %v3579 = vld [vmem:[%s190 + $0x10] sm:$0xf]
      %v3580 = vld [vmem:[%s190 + $0x14] sm:$0xf]
      %v3581 = vld [vmem:[%s190 + $0x18] sm:$0xf]
      %v3582 = vld [vmem:[%s190 + $0x1c] sm:$0xf]
      %v3583 = vld [vmem:[%s190 + $0x20] sm:$0xf]
      %v3584 = vld [vmem:[%s190 + $0x24] sm:$0x1]
      %v3586 = vshrl.u32 %v3576, 16
      %v3588 = vrot.slane %v3586, 4
      %v3589 = vshll.u32 %v3576, 16
      %v3591 = vrot.slane %v3589, 5
      %v3592 = vor.u32 %v3588, %v3591
      %v3593 = vrot.slane %v3592, 4
      %v3595 = vshll.u32 %v3577, 16
      %v3597 = vrot.slane %v3595, 5
      %v3598 = vsel %vm251, %v3593, %v3597
      %v3599 = vshrl.u32 %v3577, 16
      %v3601 = vrot.slane %v3599, 4
      %v3602 = vor.u32 %v3601, %v3597
      %v3603 = vrot.slane %v3602, 4
      %v3605 = vshll.u32 %v3578, 16
      %v3607 = vrot.slane %v3605, 5
      %v3608 = vsel %vm251, %v3603, %v3607
      %v3609 = vshrl.u32 %v3578, 16
      %v3611 = vrot.slane %v3609, 4
      %v3612 = vor.u32 %v3611, %v3607
      %v3613 = vrot.slane %v3612, 4
      %v3615 = vshll.u32 %v3579, 16
      %v3617 = vrot.slane %v3615, 5
      %v3618 = vsel %vm251, %v3613, %v3617
      %v3619 = vshrl.u32 %v3579, 16
      %v3621 = vrot.slane %v3619, 4
      %v3622 = vor.u32 %v3621, %v3617
      %v3623 = vrot.slane %v3622, 4
      %v3625 = vshll.u32 %v3580, 16
      %v3627 = vrot.slane %v3625, 5
      %v3628 = vsel %vm251, %v3623, %v3627
      %v3629 = vshrl.u32 %v3580, 16
      %v3631 = vrot.slane %v3629, 4
      %v3632 = vor.u32 %v3631, %v3627
      %v3633 = vrot.slane %v3632, 4
      %v3635 = vshll.u32 %v3581, 16
      %v3637 = vrot.slane %v3635, 5
      %v3638 = vsel %vm251, %v3633, %v3637
      %v3639 = vshrl.u32 %v3581, 16
      %v3641 = vrot.slane %v3639, 4
      %v3642 = vor.u32 %v3641, %v3637
      %v3643 = vrot.slane %v3642, 4
      %v3645 = vshll.u32 %v3582, 16
      %v3647 = vrot.slane %v3645, 5
      %v3648 = vsel %vm251, %v3643, %v3647
      %v3649 = vshrl.u32 %v3582, 16
      %v3651 = vrot.slane %v3649, 4
      %v3652 = vor.u32 %v3651, %v3647
      %v3653 = vrot.slane %v3652, 4
      %v3655 = vshll.u32 %v3583, 16
      %v3657 = vrot.slane %v3655, 5
      %v3658 = vsel %vm251, %v3653, %v3657
      %v3659 = vshrl.u32 %v3583, 16
      %v3661 = vrot.slane %v3659, 4
      %v3662 = vor.u32 %v3661, %v3657
      %v3663 = vrot.slane %v3662, 4
      %v3665 = vshll.u32 %v3584, 16
      %v3667 = vrot.slane %v3665, 5
      %v3668 = vsel %vm251, %v3663, %v3667
      %3669 = vrot.lane.b32.xlu0 %v3598, 32
      %v3670 = vpop.permute.xlu0 %3669
      %3671 = vrot.lane.b32.xlu0 %v3608, 32
      %v3672 = vpop.permute.xlu0 %3671
      %3673 = vrot.lane.b32.xlu0 %v3618, 32
      %v3674 = vpop.permute.xlu0 %3673
      %3675 = vrot.lane.b32.xlu0 %v3628, 32
      %v3676 = vpop.permute.xlu0 %3675
      %3677 = vrot.lane.b32.xlu0 %v3638, 32
      %v3678 = vpop.permute.xlu0 %3677
      %3679 = vrot.lane.b32.xlu0 %v3648, 32
      %v3680 = vpop.permute.xlu0 %3679
      %3681 = vrot.lane.b32.xlu0 %v3658, 32
      %v3682 = vpop.permute.xlu0 %3681
      %3683 = vrot.lane.b32.xlu0 %v3668, 32
      %v3684 = vpop.permute.xlu0 %3683
      %3693 = vst.msk [vmem:[#allocation2 + $0x4] sm:$0xf] %vm231, %v3670
      %3694 = vst.msk [vmem:[#allocation2 + $0x10] sm:$0xf] %vm231, %v3672
      %3695 = vst.msk [vmem:[#allocation2 + $0x1c] sm:$0xf] %vm231, %v3674
      %3696 = vst.msk [vmem:[#allocation2 + $0x28] sm:$0xf] %vm231, %v3676
      %3697 = vst.msk [vmem:[#allocation2 + $0x34] sm:$0xf] %vm231, %v3678
      %3698 = vst.msk [vmem:[#allocation2 + $0x40] sm:$0xf] %vm231, %v3680
      %3699 = vst.msk [vmem:[#allocation2 + $0x4c] sm:$0xf] %vm231, %v3682
      %3700 = vst.msk [vmem:[#allocation2 + $0x58] sm:$0xf] %vm231, %v3684
      %v3701 = vld [vmem:[%s419 + $0x4] sm:$0xf]
      %v3702 = vld [vmem:[%s419 + $0x8] sm:$0xf]
      %v3703 = vld [vmem:[%s419 + $0xc] sm:$0xf]
      %v3704 = vld [vmem:[%s419 + $0x10] sm:$0xf]
      %v3705 = vld [vmem:[%s419 + $0x14] sm:$0xf]
      %v3706 = vld [vmem:[%s419 + $0x18] sm:$0xf]
      %v3707 = vld [vmem:[%s419 + $0x1c] sm:$0xf]
      %v3708 = vld [vmem:[%s419 + $0x20] sm:$0xf]
      %3717 = vrot.lane.b32.xlu0 %v3701, 64
      %v3718 = vpop.permute.xlu0 %3717
      %3719 = vrot.lane.b32.xlu0 %v3702, 64
      %v3720 = vpop.permute.xlu0 %3719
      %3721 = vrot.lane.b32.xlu0 %v3703, 64
      %v3722 = vpop.permute.xlu0 %3721
      %3723 = vrot.lane.b32.xlu0 %v3704, 64
      %v3724 = vpop.permute.xlu0 %3723
      %3725 = vrot.lane.b32.xlu0 %v3705, 64
      %v3726 = vpop.permute.xlu0 %3725
      %3727 = vrot.lane.b32.xlu0 %v3706, 64
      %v3728 = vpop.permute.xlu0 %3727
      %3729 = vrot.lane.b32.xlu0 %v3707, 64
      %v3730 = vpop.permute.xlu0 %3729
      %3731 = vrot.lane.b32.xlu0 %v3708, 64
      %v3732 = vpop.permute.xlu0 %3731
      %3741 = vst.msk [vmem:[#allocation2 + $0x4] sm:$0xf] %vm360, %v3718
      %3742 = vst.msk [vmem:[#allocation2 + $0x10] sm:$0xf] %vm360, %v3720
      %3743 = vst.msk [vmem:[#allocation2 + $0x1c] sm:$0xf] %vm360, %v3722
      %3744 = vst.msk [vmem:[#allocation2 + $0x28] sm:$0xf] %vm360, %v3724
      %3745 = vst.msk [vmem:[#allocation2 + $0x34] sm:$0xf] %vm360, %v3726
      %3746 = vst.msk [vmem:[#allocation2 + $0x40] sm:$0xf] %vm360, %v3728
      %3747 = vst.msk [vmem:[#allocation2 + $0x4c] sm:$0xf] %vm360, %v3730
      %3748 = vst.msk [vmem:[#allocation2 + $0x58] sm:$0xf] %vm360, %v3732
      %v3749 = vld [vmem:[%s369 + $0x4] sm:$0xf]
      %v3750 = vld [vmem:[%s369 + $0x8] sm:$0xf]
      %v3751 = vld [vmem:[%s369 + $0xc] sm:$0xf]
      %v3752 = vld [vmem:[%s369 + $0x10] sm:$0xf]
      %v3753 = vld [vmem:[%s369 + $0x14] sm:$0xf]
      %v3754 = vld [vmem:[%s369 + $0x18] sm:$0xf]
      %v3755 = vld [vmem:[%s369 + $0x1c] sm:$0xf]
      %v3756 = vld [vmem:[%s369 + $0x20] sm:$0xf]
      %v3757 = vld [vmem:[%s369 + $0x24] sm:$0x1]
      %v3759 = vshrl.u32 %v3749, 16
      %v3761 = vrot.slane %v3759, 4
      %v3762 = vshll.u32 %v3749, 16
      %v3764 = vrot.slane %v3762, 5
      %v3765 = vor.u32 %v3761, %v3764
      %v3766 = vrot.slane %v3765, 4
      %v3768 = vshll.u32 %v3750, 16
      %v3770 = vrot.slane %v3768, 5
      %v3771 = vsel %vm251, %v3766, %v3770
      %v3772 = vshrl.u32 %v3750, 16
      %v3774 = vrot.slane %v3772, 4
      %v3775 = vor.u32 %v3774, %v3770
      %v3776 = vrot.slane %v3775, 4
      %v3778 = vshll.u32 %v3751, 16
      %v3780 = vrot.slane %v3778, 5
      %v3781 = vsel %vm251, %v3776, %v3780
      %v3782 = vshrl.u32 %v3751, 16
      %v3784 = vrot.slane %v3782, 4
      %v3785 = vor.u32 %v3784, %v3780
      %v3786 = vrot.slane %v3785, 4
      %v3788 = vshll.u32 %v3752, 16
      %v3790 = vrot.slane %v3788, 5
      %v3791 = vsel %vm251, %v3786, %v3790
      %v3792 = vshrl.u32 %v3752, 16
      %v3794 = vrot.slane %v3792, 4
      %v3795 = vor.u32 %v3794, %v3790
      %v3796 = vrot.slane %v3795, 4
      %v3798 = vshll.u32 %v3753, 16
      %v3800 = vrot.slane %v3798, 5
      %v3801 = vsel %vm251, %v3796, %v3800
      %v3802 = vshrl.u32 %v3753, 16
      %v3804 = vrot.slane %v3802, 4
      %v3805 = vor.u32 %v3804, %v3800
      %v3806 = vrot.slane %v3805, 4
      %v3808 = vshll.u32 %v3754, 16
      %v3810 = vrot.slane %v3808, 5
      %v3811 = vsel %vm251, %v3806, %v3810
      %v3812 = vshrl.u32 %v3754, 16
      %v3814 = vrot.slane %v3812, 4
      %v3815 = vor.u32 %v3814, %v3810
      %v3816 = vrot.slane %v3815, 4
      %v3818 = vshll.u32 %v3755, 16
      %v3820 = vrot.slane %v3818, 5
      %v3821 = vsel %vm251, %v3816, %v3820
      %v3822 = vshrl.u32 %v3755, 16
      %v3824 = vrot.slane %v3822, 4
      %v3825 = vor.u32 %v3824, %v3820
      %v3826 = vrot.slane %v3825, 4
      %v3828 = vshll.u32 %v3756, 16
      %v3830 = vrot.slane %v3828, 5
      %v3831 = vsel %vm251, %v3826, %v3830
      %v3832 = vshrl.u32 %v3756, 16
      %v3834 = vrot.slane %v3832, 4
      %v3835 = vor.u32 %v3834, %v3830
      %v3836 = vrot.slane %v3835, 4
      %v3838 = vshll.u32 %v3757, 16
      %v3840 = vrot.slane %v3838, 5
      %v3841 = vsel %vm251, %v3836, %v3840
      %3842 = vrot.lane.b32.xlu0 %v3771, 96
      %v3843 = vpop.permute.xlu0 %3842
      %3844 = vrot.lane.b32.xlu0 %v3781, 96
      %v3845 = vpop.permute.xlu0 %3844
      %3846 = vrot.lane.b32.xlu0 %v3791, 96
      %v3847 = vpop.permute.xlu0 %3846
      %3848 = vrot.lane.b32.xlu0 %v3801, 96
      %v3849 = vpop.permute.xlu0 %3848
      %3850 = vrot.lane.b32.xlu0 %v3811, 96
      %v3851 = vpop.permute.xlu0 %3850
      %3852 = vrot.lane.b32.xlu0 %v3821, 96
      %v3853 = vpop.permute.xlu0 %3852
      %3854 = vrot.lane.b32.xlu0 %v3831, 96
      %v3855 = vpop.permute.xlu0 %3854
      %3856 = vrot.lane.b32.xlu0 %v3841, 96
      %v3857 = vpop.permute.xlu0 %3856
      %3866 = vst.msk [vmem:[#allocation2 + $0x4] sm:$0xf] %vm410, %v3843
      %3867 = vst.msk [vmem:[#allocation2 + $0x10] sm:$0xf] %vm410, %v3845
      %3868 = vst.msk [vmem:[#allocation2 + $0x1c] sm:$0xf] %vm410, %v3847
      %3869 = vst.msk [vmem:[#allocation2 + $0x28] sm:$0xf] %vm410, %v3849
      %3870 = vst.msk [vmem:[#allocation2 + $0x34] sm:$0xf] %vm410, %v3851
      %3871 = vst.msk [vmem:[#allocation2 + $0x40] sm:$0xf] %vm410, %v3853
      %3872 = vst.msk [vmem:[#allocation2 + $0x4c] sm:$0xf] %vm410, %v3855
      %3873 = vst.msk [vmem:[#allocation2 + $0x58] sm:$0xf] %vm410, %v3857
      %v3874 = vld [vmem:[%s419 + $0x4] sm:$0xf]
      %v3875 = vld [vmem:[%s419 + $0x8] sm:$0xf]
      %v3876 = vld [vmem:[%s419 + $0xc] sm:$0xf]
      %v3877 = vld [vmem:[%s419 + $0x10] sm:$0xf]
      %v3878 = vld [vmem:[%s419 + $0x14] sm:$0xf]
      %v3879 = vld [vmem:[%s419 + $0x18] sm:$0xf]
      %v3880 = vld [vmem:[%s419 + $0x1c] sm:$0xf]
      %v3881 = vld [vmem:[%s419 + $0x20] sm:$0xf]
      %v3882 = vld [vmem:[%s419 + $0x24] sm:$0x1]
      %v3884 = vshrl.u32 %v3874, 16
      %v3886 = vrot.slane %v3884, 4
      %v3887 = vshll.u32 %v3874, 16
      %v3889 = vrot.slane %v3887, 5
      %v3890 = vor.u32 %v3886, %v3889
      %v3891 = vrot.slane %v3890, 4
      %v3893 = vshll.u32 %v3875, 16
      %v3895 = vrot.slane %v3893, 5
      %v3896 = vsel %vm251, %v3891, %v3895
      %v3897 = vshrl.u32 %v3875, 16
      %v3899 = vrot.slane %v3897, 4
      %v3900 = vor.u32 %v3899, %v3895
      %v3901 = vrot.slane %v3900, 4
      %v3903 = vshll.u32 %v3876, 16
      %v3905 = vrot.slane %v3903, 5
      %v3906 = vsel %vm251, %v3901, %v3905
      %v3907 = vshrl.u32 %v3876, 16
      %v3909 = vrot.slane %v3907, 4
      %v3910 = vor.u32 %v3909, %v3905
      %v3911 = vrot.slane %v3910, 4
      %v3913 = vshll.u32 %v3877, 16
      %v3915 = vrot.slane %v3913, 5
      %v3916 = vsel %vm251, %v3911, %v3915
      %v3917 = vshrl.u32 %v3877, 16
      %v3919 = vrot.slane %v3917, 4
      %v3920 = vor.u32 %v3919, %v3915
      %v3921 = vrot.slane %v3920, 4
      %v3923 = vshll.u32 %v3878, 16
      %v3925 = vrot.slane %v3923, 5
      %v3926 = vsel %vm251, %v3921, %v3925
      %v3927 = vshrl.u32 %v3878, 16
      %v3929 = vrot.slane %v3927, 4
      %v3930 = vor.u32 %v3929, %v3925
      %v3931 = vrot.slane %v3930, 4
      %v3933 = vshll.u32 %v3879, 16
      %v3935 = vrot.slane %v3933, 5
      %v3936 = vsel %vm251, %v3931, %v3935
      %v3937 = vshrl.u32 %v3879, 16
      %v3939 = vrot.slane %v3937, 4
      %v3940 = vor.u32 %v3939, %v3935
      %v3941 = vrot.slane %v3940, 4
      %v3943 = vshll.u32 %v3880, 16
      %v3945 = vrot.slane %v3943, 5
      %v3946 = vsel %vm251, %v3941, %v3945
      %v3947 = vshrl.u32 %v3880, 16
      %v3949 = vrot.slane %v3947, 4
      %v3950 = vor.u32 %v3949, %v3945
      %v3951 = vrot.slane %v3950, 4
      %v3953 = vshll.u32 %v3881, 16
      %v3955 = vrot.slane %v3953, 5
      %v3956 = vsel %vm251, %v3951, %v3955
      %v3957 = vshrl.u32 %v3881, 16
      %v3959 = vrot.slane %v3957, 4
      %v3960 = vor.u32 %v3959, %v3955
      %v3961 = vrot.slane %v3960, 4
      %v3963 = vshll.u32 %v3882, 16
      %v3965 = vrot.slane %v3963, 5
      %v3966 = vsel %vm251, %v3961, %v3965
      %3975 = vst.msk [vmem:[#allocation2 + $0x8] sm:$0xf] %vm181, %v3896
      %3976 = vst.msk [vmem:[#allocation2 + $0x14] sm:$0xf] %vm181, %v3906
      %3977 = vst.msk [vmem:[#allocation2 + $0x20] sm:$0xf] %vm181, %v3916
      %3978 = vst.msk [vmem:[#allocation2 + $0x2c] sm:$0xf] %vm181, %v3926
      %3979 = vst.msk [vmem:[#allocation2 + $0x38] sm:$0xf] %vm181, %v3936
      %3980 = vst.msk [vmem:[#allocation2 + $0x44] sm:$0xf] %vm181, %v3946
      %3981 = vst.msk [vmem:[#allocation2 + $0x50] sm:$0xf] %vm181, %v3956
      %3982 = vst.msk [vmem:[#allocation2 + $0x5c] sm:$0xf] %vm181, %v3966
      %v3983 = vld [vmem:[#allocation2] sm:$0xff]
      %v3984 = vld [vmem:[#allocation2 + $0x8] sm:$0xf]
      %v3985 = vld [vmem:[#allocation2 + $0xc] sm:$0xff]
      %v3986 = vld [vmem:[#allocation2 + $0x14] sm:$0xf]
      %v3987 = vld [vmem:[#allocation2 + $0x18] sm:$0xff]
      %v3988 = vld [vmem:[#allocation2 + $0x20] sm:$0xf]
      %v3989 = vld [vmem:[#allocation2 + $0x24] sm:$0xff]
      %v3990 = vld [vmem:[#allocation2 + $0x2c] sm:$0xf]
      %v3991 = vld [vmem:[#allocation2 + $0x30] sm:$0xff]
      %v3992 = vld [vmem:[#allocation2 + $0x38] sm:$0xf]
      %v3993 = vld [vmem:[#allocation2 + $0x3c] sm:$0xff]
      %v3994 = vld [vmem:[#allocation2 + $0x44] sm:$0xf]
      %v3995 = vld [vmem:[#allocation2 + $0x48] sm:$0xff]
      %v3996 = vld [vmem:[#allocation2 + $0x50] sm:$0xf]
      %v3997 = vld [vmem:[#allocation2 + $0x54] sm:$0xff]
      %v3998 = vld [vmem:[#allocation2 + $0x5c] sm:$0xf]
      %v3999 = vld [vmem:[%s1] sm:$0xf]
      %v4000 = vld [vmem:[%s1 + $0x4] sm:$0xf]
      %v4001 = vld [vmem:[%s1 + $0x8] sm:$0xf]
      %v4002 = vld [vmem:[%s1 + $0xc] sm:$0xf]
      %v4003 = vld [vmem:[%s1 + $0x10] sm:$0xf]
      %v4004 = vld [vmem:[%s1 + $0x14] sm:$0xf]
      %v4005 = vld [vmem:[%s1 + $0x18] sm:$0xf]
      %v4006 = vld [vmem:[%s1 + $0x1c] sm:$0xf]
      %v4007 = vld [vmem:[%s1 + $0x20] sm:$0xf]
      %v4008 = vld [vmem:[%s1 + $0x24] sm:$0xf]
      %v4009 = vld [vmem:[%s1 + $0x28] sm:$0xf]
      %v4010 = vld [vmem:[%s1 + $0x2c] sm:$0xf]
      %v4011 = vld [vmem:[%s1 + $0x30] sm:$0xf]
      %v4012 = vld [vmem:[%s1 + $0x34] sm:$0xf]
      %v4013 = vld [vmem:[%s1 + $0x38] sm:$0xf]
      %v4014 = vld [vmem:[%s1 + $0x3c] sm:$0xf]
      %v4015 = vld [vmem:[%s1 + $0x40] sm:$0xf]
      %v4016 = vld [vmem:[%s1 + $0x44] sm:$0xf]
      %v4017 = vld [vmem:[%s1 + $0x48] sm:$0xf]
      %v4018 = vld [vmem:[%s1 + $0x4c] sm:$0xf]
      %v4019 = vld [vmem:[%s1 + $0x50] sm:$0xf]
      %v4020 = vld [vmem:[%s1 + $0x54] sm:$0xf]
      %v4021 = vld [vmem:[%s1 + $0x58] sm:$0xf]
      %v4022 = vld [vmem:[%s1 + $0x5c] sm:$0xf]
      %v4023 = vld [vmem:[%s1 + $0x60] sm:$0xf]
      %v4024 = vld [vmem:[%s1 + $0x64] sm:$0xf]
      %v4025 = vld [vmem:[%s1 + $0x68] sm:$0xf]
      %v4026 = vld [vmem:[%s1 + $0x6c] sm:$0xf]
      %v4027 = vld [vmem:[%s1 + $0x70] sm:$0xf]
      %v4028 = vld [vmem:[%s1 + $0x74] sm:$0xf]
      %v4029 = vld [vmem:[%s1 + $0x78] sm:$0xf]
      %v4030 = vld [vmem:[%s1 + $0x7c] sm:$0xf]
      %v4031 = vld [vmem:[%s1 + $0x80] sm:$0xf]
      %v4032 = vld [vmem:[%s1 + $0x84] sm:$0xf]
      %v4033 = vld [vmem:[%s1 + $0x88] sm:$0xf]
      %v4034 = vld [vmem:[%s1 + $0x8c] sm:$0xf]
      %v4051 = vunpack.c.l.b16 %v3983
      %v4052 = vunpack.c.h.b16 %v3983
      %v4053 = vunpack.c.l.b16 %v3984
      %v4054 = vunpack.c.l.b16 %v3985
      %v4055 = vunpack.c.h.b16 %v3985
      %v4056 = vunpack.c.l.b16 %v3986
      %v4057 = vunpack.c.l.b16 %v3987
      %v4058 = vunpack.c.h.b16 %v3987
      %v4059 = vunpack.c.l.b16 %v3988
      %v4060 = vunpack.c.l.b16 %v3989
      %v4061 = vunpack.c.h.b16 %v3989
      %v4062 = vunpack.c.l.b16 %v3990
      %v4063 = vunpack.c.l.b16 %v3991
      %v4064 = vunpack.c.h.b16 %v3991
      %v4065 = vunpack.c.l.b16 %v3992
      %v4066 = vunpack.c.l.b16 %v3993
      %v4067 = vunpack.c.h.b16 %v3993
      %v4068 = vunpack.c.l.b16 %v3994
      %v4069 = vunpack.c.l.b16 %v3995
      %v4070 = vunpack.c.h.b16 %v3995
      %v4071 = vunpack.c.l.b16 %v3996
      %v4072 = vunpack.c.l.b16 %v3997
      %v4073 = vunpack.c.h.b16 %v3997
      %v4074 = vunpack.c.l.b16 %v3998
      %v4075 = vpack.c.b16 %v4054, %v4051
      %v4076 = vpack.c.b16 %v4055, %v4052
      %v4077 = vpack.c.b16 %v4056, %v4053
      %v4078 = vpack.c.b16 %v4060, %v4057
      %v4079 = vpack.c.b16 %v4061, %v4058
      %v4080 = vpack.c.b16 %v4062, %v4059
      %v4081 = vpack.c.b16 %v4066, %v4063
      %v4082 = vpack.c.b16 %v4067, %v4064
      %v4083 = vpack.c.b16 %v4068, %v4065
      %v4084 = vpack.c.b16 %v4072, %v4069
      %v4085 = vpack.c.b16 %v4073, %v4070
      %v4086 = vpack.c.b16 %v4074, %v4071
      %v4131 = vunpack.c.l.b16 %v3999
      %v4132 = vunpack.c.l.b16 %v4000
      %v4133 = vunpack.c.l.b16 %v4001
      %v4134 = vunpack.c.l.b16 %v4002
      %v4135 = vunpack.c.l.b16 %v4003
      %v4136 = vunpack.c.l.b16 %v4004
      %v4137 = vunpack.c.l.b16 %v4005
      %v4138 = vunpack.c.l.b16 %v4006
      %v4139 = vunpack.c.l.b16 %v4007
      %v4140 = vunpack.c.l.b16 %v4008
      %v4141 = vunpack.c.l.b16 %v4009
      %v4142 = vunpack.c.l.b16 %v4010
      %v4143 = vunpack.c.l.b16 %v4011
      %v4144 = vunpack.c.l.b16 %v4012
      %v4145 = vunpack.c.l.b16 %v4013
      %v4146 = vunpack.c.l.b16 %v4014
      %v4147 = vunpack.c.l.b16 %v4015
      %v4148 = vunpack.c.l.b16 %v4016
      %v4149 = vunpack.c.l.b16 %v4017
      %v4150 = vunpack.c.l.b16 %v4018
      %v4151 = vunpack.c.l.b16 %v4019
      %v4152 = vunpack.c.l.b16 %v4020
      %v4153 = vunpack.c.l.b16 %v4021
      %v4154 = vunpack.c.l.b16 %v4022
      %v4155 = vunpack.c.l.b16 %v4023
      %v4156 = vunpack.c.l.b16 %v4024
      %v4157 = vunpack.c.l.b16 %v4025
      %v4158 = vunpack.c.l.b16 %v4026
      %v4159 = vunpack.c.l.b16 %v4027
      %v4160 = vunpack.c.l.b16 %v4028
      %v4161 = vunpack.c.l.b16 %v4029
      %v4162 = vunpack.c.l.b16 %v4030
      %v4163 = vunpack.c.l.b16 %v4031
      %v4164 = vunpack.c.l.b16 %v4032
      %v4165 = vunpack.c.l.b16 %v4033
      %v4166 = vunpack.c.l.b16 %v4034
      %v4167 = vpack.c.b16 %v4132, %v4131
      %v4168 = vpack.c.b16 %v4134, %v4133
      %v4169 = vpack.c.b16 %v4136, %v4135
      %v4170 = vpack.c.b16 %v4138, %v4137
      %v4171 = vpack.c.b16 %v4140, %v4139
      %v4172 = vpack.c.b16 %v4142, %v4141
      %v4173 = vpack.c.b16 %v4144, %v4143
      %v4174 = vpack.c.b16 %v4146, %v4145
      %v4175 = vpack.c.b16 %v4148, %v4147
      %v4176 = vpack.c.b16 %v4150, %v4149
      %v4177 = vpack.c.b16 %v4152, %v4151
      %v4178 = vpack.c.b16 %v4154, %v4153
      %v4179 = vpack.c.b16 %v4156, %v4155
      %v4180 = vpack.c.b16 %v4158, %v4157
      %v4181 = vpack.c.b16 %v4160, %v4159
      %v4182 = vpack.c.b16 %v4162, %v4161
      %v4183 = vpack.c.b16 %v4164, %v4163
      %v4184 = vpack.c.b16 %v4166, %v4165
      %v4204 = vsel %vm986, %v4077, 0
      %v4207 = vsel %vm986, %v4080, 0
      %v4210 = vsel %vm986, %v4083, 0
      %v4213 = vsel %vm986, %v4086, 0
      %4215 = vmatpush.bf16.msra.mxu0 %v4174
      %4216 = vmatpush.bf16.msra.mxu0 %v4173
      %4217 = vmatpush.bf16.msra.mxu0 %v4172
      %4218 = vmatpush.bf16.msra.mxu0 %v4171
      %4219 = vmatpush.bf16.msra.mxu0 %v4170
      %4220 = vmatpush.bf16.msra.mxu0 %v4169
      %4221 = vmatpush.bf16.msra.mxu0 %v4168
      %4222 = vmatpush.bf16.msra.mxu0 %v4167
      %4223 = vmatmul.bf16.gmra.mxu0 %v4075
      %v4224 = vpop.f32.mrf.mxu0
      %v4225 = vadd.f32 0.0, %v4224
      %v4226 = vpop.f32.mrf.mxu0
      %v4227 = vadd.f32 0.0, %v4226
      %4228 = vmatmul.bf16.gmra.mxu0 %v4078
      %v4229 = vpop.f32.mrf.mxu0
      %v4230 = vadd.f32 0.0, %v4229
      %v4231 = vpop.f32.mrf.mxu0
      %v4232 = vadd.f32 0.0, %v4231
      %4233 = vmatmul.bf16.gmra.mxu0 %v4081
      %v4234 = vpop.f32.mrf.mxu0
      %v4235 = vadd.f32 0.0, %v4234
      %v4236 = vpop.f32.mrf.mxu0
      %v4237 = vadd.f32 0.0, %v4236
      %4238 = vmatmul.bf16.gmra.mxu0 %v4084
      %v4239 = vpop.f32.mrf.mxu0
      %v4240 = vadd.f32 0.0, %v4239
      %v4241 = vpop.f32.mrf.mxu0
      %v4242 = vadd.f32 0.0, %v4241
      %4243 = vdwg.mxu0
      %4244 = vmatpush.bf16.msra.mxu0 %v4182
      %4245 = vmatpush.bf16.msra.mxu0 %v4181
      %4246 = vmatpush.bf16.msra.mxu0 %v4180
      %4247 = vmatpush.bf16.msra.mxu0 %v4179
      %4248 = vmatpush.bf16.msra.mxu0 %v4178
      %4249 = vmatpush.bf16.msra.mxu0 %v4177
      %4250 = vmatpush.bf16.msra.mxu0 %v4176
      %4251 = vmatpush.bf16.msra.mxu0 %v4175
      %4252 = vmatmul.bf16.gmra.mxu0 %v4076
      %v4253 = vpop.f32.mrf.mxu0
      %v4254 = vadd.f32 %v4225, %v4253
      %v4255 = vpop.f32.mrf.mxu0
      %v4256 = vadd.f32 %v4227, %v4255
      %4257 = vmatmul.bf16.gmra.mxu0 %v4079
      %v4258 = vpop.f32.mrf.mxu0
      %v4259 = vadd.f32 %v4230, %v4258
      %v4260 = vpop.f32.mrf.mxu0
      %v4261 = vadd.f32 %v4232, %v4260
      %4262 = vmatmul.bf16.gmra.mxu0 %v4082
      %v4263 = vpop.f32.mrf.mxu0
      %v4264 = vadd.f32 %v4235, %v4263
      %v4265 = vpop.f32.mrf.mxu0
      %v4266 = vadd.f32 %v4237, %v4265
      %4267 = vmatmul.bf16.gmra.mxu0 %v4085
      %v4268 = vpop.f32.mrf.mxu0
      %v4269 = vadd.f32 %v4240, %v4268
      %v4270 = vpop.f32.mrf.mxu0
      %v4271 = vadd.f32 %v4242, %v4270
      %4272 = vdwg.mxu0
      %4273 = vmatpush.bf16.msra.mxu0 0
      %4274 = vmatpush.bf16.msra.mxu0 0
      %4275 = vmatpush.bf16.msra.mxu0 0
      %4276 = vmatpush.bf16.msra.mxu0 0
      %4277 = vmatpush.bf16.msra.mxu0 0
      %4278 = vmatpush.bf16.msra.mxu0 0
      %4279 = vmatpush.bf16.msra.mxu0 %v4184
      %4280 = vmatpush.bf16.msra.mxu0 %v4183
      %4281 = vmatmul.bf16.gmra.mxu0 %v4204
      %v4282 = vpop.f32.mrf.mxu0
      %v4283 = vadd.f32 %v4254, %v4282
      %v4284 = vpop.f32.mrf.mxu0
      %v4285 = vadd.f32 %v4256, %v4284
      %4286 = vmatmul.bf16.gmra.mxu0 %v4207
      %v4287 = vpop.f32.mrf.mxu0
      %v4288 = vadd.f32 %v4259, %v4287
      %v4289 = vpop.f32.mrf.mxu0
      %v4290 = vadd.f32 %v4261, %v4289
      %4291 = vmatmul.bf16.gmra.mxu0 %v4210
      %v4292 = vpop.f32.mrf.mxu0
      %v4293 = vadd.f32 %v4264, %v4292
      %v4294 = vpop.f32.mrf.mxu0
      %v4295 = vadd.f32 %v4266, %v4294
      %4296 = vmatmul.bf16.gmra.mxu0 %v4213
      %v4297 = vpop.f32.mrf.mxu0
      %v4298 = vadd.f32 %v4269, %v4297
      %v4299 = vpop.f32.mrf.mxu0
      %v4300 = vadd.f32 %v4271, %v4299
      %4301 = vdwg.mxu0
      %v4302 = vmax.f32 %v3145, %v4283
      %v4303 = vmax.f32 %v3146, %v4285
      %v4304 = vmax.f32 %v3147, %v4288
      %v4305 = vmax.f32 %v3148, %v4290
      %v4306 = vmax.f32 %v3149, %v4293
      %v4307 = vmax.f32 %v3150, %v4295
      %v4308 = vmax.f32 %v3151, %v4298
      %v4309 = vmax.f32 %v3152, %v4300
      %v4310 = vld [vmem:[%s2] sm:$0x1]
      %v4312 = vperm.slane %v4310, 0
      %v4314 = vadd.f32 %v4302, %v4312
      %v4315 = vadd.f32 %v4303, %v4312
      %v4316 = vadd.f32 %v4304, %v4312
      %v4317 = vadd.f32 %v4305, %v4312
      %v4318 = vadd.f32 %v4306, %v4312
      %v4319 = vadd.f32 %v4307, %v4312
      %v4320 = vadd.f32 %v4308, %v4312
      %v4321 = vadd.f32 %v4309, %v4312
      %v4322 = vmax.f32 %v4314, 0.0
      %v4323 = vmax.f32 %v4315, 0.0
      %v4324 = vmax.f32 %v4316, 0.0
      %v4325 = vmax.f32 %v4317, 0.0
      %v4326 = vmax.f32 %v4318, 0.0
      %v4327 = vmax.f32 %v4319, 0.0
      %v4328 = vmax.f32 %v4320, 0.0
      %v4329 = vmax.f32 %v4321, 0.0
      %v4330 = vpack.c.bf16 %v4322, %v4322
      %v4331 = vpack.c.bf16 %v4323, %v4323
      %v4332 = vpack.c.bf16 %v4324, %v4324
      %v4333 = vpack.c.bf16 %v4325, %v4325
      %v4334 = vpack.c.bf16 %v4326, %v4326
      %v4335 = vpack.c.bf16 %v4327, %v4327
      %v4336 = vpack.c.bf16 %v4328, %v4328
      %v4337 = vpack.c.bf16 %v4329, %v4329
      %vm4338 = vcmask 519168
      %4339 = vst.msk [vmem:[%s170] sm:$0xf] %vm4338, %v4330
      %4340 = vst.msk [vmem:[%s170 + $0x4] sm:$0xf] %vm4338, %v4331
      %4341 = vst.msk [vmem:[%s170 + $0x8] sm:$0xf] %vm4338, %v4332
      %4342 = vst.msk [vmem:[%s170 + $0xc] sm:$0xf] %vm4338, %v4333
      %4343 = vst.msk [vmem:[%s170 + $0x10] sm:$0xf] %vm4338, %v4334
      %4344 = vst.msk [vmem:[%s170 + $0x14] sm:$0xf] %vm4338, %v4335
      %4345 = vst.msk [vmem:[%s170 + $0x18] sm:$0xf] %vm4338, %v4336
      %4346 = vst.msk [vmem:[%s170 + $0x1c] sm:$0xf] %vm4338, %v4337
      %s4347 = smul.u32 8, %s14
      %p4348 = scmp.lt.s32.totalorder %s4347, 15
      %s4349 = scalar_select %p4348, %s4347, 15
      %s4350 = smul.addr %s4349, 4
      %s4351 = scalar_lea.vmem %s3, %s4350
      // Predicated region
      $region33: #{simple_cnn_forward.4} parent=31 // pred_check
        %p4352 = pneg %p100
      $region34: #{simple_cnn_forward.4} parent=31 // pred_check_branch
        %4354 = sbr.rel (%p4352) target = $region36
      $region35: #{simple_cnn_forward.4} parent=31 // pred_region
        %s4355 = smul.u32 8, %s14
      $region36: #{simple_cnn_forward.4} parent=31 // pred_fallthru
        _
    $region32: #{simple_cnn_forward.4} parent=5 // pred_fallthru
      _
    %p4356 = scmp.le.s32.totalorder 2, %s9
    // Predicated region
    $region37: #{simple_cnn_forward.4} parent=5 // pred_check
      %p4357 = pneg %p4356
    $region38: #{simple_cnn_forward.4} parent=5 // pred_check_branch
      %4359 = sbr.rel (%p4357) target = $region40
    $region39: #{simple_cnn_forward.4} parent=5 // pred_region
      %s4360 = ssub.s32 %s9, 2
      // Predicated region
      $region41: #{simple_cnn_forward.4} parent=39 // pred_check
        %p4361 = pneg %p106
      $region42: #{simple_cnn_forward.4} parent=39 // pred_check_branch
        %4363 = sbr.rel (%p4361) target = $region44
      $region43: #{simple_cnn_forward.4} parent=39 // pred_region
        %s4364 = smul.u32 8, %s15
        %p4365 = scmp.lt.s32.totalorder %s4364, 15
        %s4366 = scalar_select %p4365, %s4364, 15
        %s4367 = smul.addr %s4366, 4
        %s4368 = scalar_lea.vmem %s3, %s4367
      $region44: #{simple_cnn_forward.4} parent=39 // pred_fallthru
        _
    $region40: #{simple_cnn_forward.4} parent=5 // pred_fallthru
      _
  $region6: #{simple_cnn_forward.4} parent=0 // loop_footer
    %s13 = sadd.s32 1, %s9
  $region7: #{simple_cnn_forward.4} parent=0 // loop_footer_branch
    %8 = sbr.rel target = $region3
  $region8: #{simple_cnn_forward.4} parent=0 // loop_exit
    _

</llo_original>
